<compile_context>
chip_gen: v5e
topology: v5e:2x2
jax: 0.10.0
libtpu: 0.0.40
codegen_flags: <defaults>
</compile_context>

<pallas_src>
import functools

import jax
import jax.numpy as jnp
import numpy as np
from jax.experimental import pallas as pl
from jax.experimental.pallas import tpu as pltpu

EPS = 1e-5
K = 3                                   # Conv3d kernel_size


def _vmem_limit_bytes():
    """Per-generation scoped-VMEM limit (v5e default is only 16 MiB; v6e has headroom;
    v7x physical VMEM is 64 MiB).  Falls back to a safe fixed limit."""
    try:
        info = pltpu.get_tpu_info()
        for name in ("vmem_capacity_bytes", "vmem_size_bytes", "vmem_bytes"):
            cap = getattr(info, name, None)
            if cap:
                return int(min(cap * 3 // 4, 100 * 1024 * 1024))
    except Exception:
        pass
    return 32 * 1024 * 1024


def _conv3d_fused_kernel(x_ref, w_ref, scale_ref, shift_ref, alpha_ref,
                         y_ref, stat_ref, xp_ref, *, D, dil):
    """One batch element per grid step (batch axis is 'parallel').

    Applies the previous layer's BN affine + PReLU to the loaded raw-conv tile, writes
    it into a D-halo-only padded VMEM scratch (H/W padding is folded into the weight),
    then computes the 3x3x3 dilated conv as 3 bf16 MXU matmuls (one per kd tap) with
    contraction dim H*W*cin and f32 accumulation.  Emits the raw conv output plus
    lane-dense per-batch-element partial BN statistics."""
    hw_cin = xp_ref.shape[1]
    hw_cout = y_ref.shape[-1]

    # --- fused (previous layer) BN affine + PReLU, applied right after load (f32) ---
    x = x_ref[0]                                          # (D, H*W*cin) f32
    z = x * scale_ref[...] + shift_ref[...]
    xa = jnp.where(z >= 0, z, alpha_ref[...] * z)

    # --- padded scratch: D halo only; zero just the halo rows (interior overwritten) ---
    zero_halo = jnp.zeros((dil, hw_cin), xp_ref.dtype)
    xp_ref[0:dil, :] = zero_halo
    xp_ref[dil + D:dil + D + dil, :] = zero_halo
    xp_ref[dil:dil + D, :] = xa

    # --- conv: 3 kd taps, each a big-K bf16 matmul (kh/kw taps + H/W padding folded
    #     into w_ref); kd shift = leading-dim offset into the scratch (cheap).
    #     Bias omitted: it cancels exactly under training-mode BatchNorm. ---
    acc = None
    for t in range(K):
        xs = xp_ref[t * dil:t * dil + D, :].astype(jnp.bfloat16)
        part = jnp.dot(xs, w_ref[t], preferred_element_type=jnp.float32)
        acc = part if acc is None else acc + part

    # --- lane-dense stores: raw conv output + packed partial BN statistics ---
    y_ref[0] = acc                                        # (D, H*W*cout) f32
    stat_ref[0, :, 0:hw_cout] = jnp.sum(acc, axis=0, keepdims=True)
    stat_ref[0, :, hw_cout:2 * hw_cout] = jnp.sum(acc * acc, axis=0, keepdims=True)


def _bn_prelu_kernel(y_ref, scale_ref, shift_ref, alpha_ref, o_ref):
    """Fused BatchNorm affine (pre-folded scale/shift) + per-channel PReLU on
    lane-dense (D, H*W*C) blocks -- only used for the final layer."""
    z = y_ref[...] * scale_ref[...] + shift_ref[...]
    o_ref[...] = jnp.where(z >= 0, z, alpha_ref[...] * z)


def _fold_weights(w, dil, H, W):
    """(3,3,3,cin,cout) -> (3, H*W*cin, H*W*cout) bf16.

    Folds the kh/kw taps AND the H/W zero padding into a (mostly-zero) block weight:
    place[k, out, in] = 1 iff in == out + (k-1)*dil is in range.  The conv then needs
    no H/W halos, no im2col buffer and no lane-misaligned stores; only the D halo
    remains in the kernel scratch.  (Appropriate for small H*W only -- see TODO above.)"""
    cin, cout = w.shape[3], w.shape[4]

    def place(L):
        m = np.zeros((K, L, L), np.float32)
        for k in range(K):
            for o in range(L):
                i = o + (k - 1) * dil
                if 0 <= i < L:
                    m[k, o, i] = 1.0
        return jnp.asarray(m)

    ph = place(H)                                         # ph[kh, h_out, h_in]
    pw = place(W)                                         # pw[kw, w_out, w_in]
    big = jnp.einsum('khp,cwq,dkcio->dpqihwo', ph, pw, w)
    return big.reshape(K, H * W * cin, H * W * cout).astype(jnp.bfloat16)


def _conv_layer(x, w, in_scale, in_shift, in_alpha, dil, H, W):
    """x: (N, D, H*W*cin) raw (pre-BN) output of the previous layer (or the network
    input with an identity transform).  Returns the raw conv output (N, D, H*W*cout)
    and per-batch-element partial BN stats packed as (N, 1, 2*H*W*cout)."""
    N, D, HWcin = x.shape
    cin, cout = w.shape[3], w.shape[4]
    HWcout = H * W * cout
    Dp = D + 2 * dil

    wbig = _fold_weights(w, dil, H, W)                    # (3, H*W*cin, H*W*cout) bf16
    sc = jnp.tile(in_scale, H * W).reshape(1, HWcin)
    sh = jnp.tile(in_shift, H * W).reshape(1, HWcin)
    al = jnp.tile(in_alpha, H * W).reshape(1, HWcin)

    y, stats = pl.pallas_call(
        functools.partial(_conv3d_fused_kernel, D=D, dil=dil),
        grid=(N,),
        in_specs=[
            pl.BlockSpec((1, D, HWcin), lambda n: (n, 0, 0)),
            # Constant-index folded weight (stays resident across steps).
            pl.BlockSpec((K, HWcin, HWcout), lambda n: (0, 0, 0)),
            pl.BlockSpec((1, HWcin), lambda n: (0, 0)),
            pl.BlockSpec((1, HWcin), lambda n: (0, 0)),
            pl.BlockSpec((1, HWcin), lambda n: (0, 0)),
        ],
        out_specs=(
            pl.BlockSpec((1, D, HWcout), lambda n: (n, 0, 0)),
            pl.BlockSpec((1, 1, 2 * HWcout), lambda n: (n, 0, 0)),  # per-step partials
        ),
        out_shape=(
            jax.ShapeDtypeStruct((N, D, HWcout), jnp.float32),
            jax.ShapeDtypeStruct((N, 1, 2 * HWcout), jnp.float32),
        ),
        scratch_shapes=[pltpu.VMEM((Dp, HWcin), jnp.float32)],
        compiler_params=pltpu.CompilerParams(
            dimension_semantics=("parallel",),
            vmem_limit_bytes=_vmem_limit_bytes()),
    )(x, wbig, sc, sh, al)
    return y, stats


def _bn_prelu(y, scale, shift, alpha, HW):
    """Standalone BN affine + PReLU for the LAST layer, on lane-dense flat blocks."""
    N, D, HWC = y.shape
    sc = jnp.tile(scale, HW).reshape(1, HWC)
    sh = jnp.tile(shift, HW).reshape(1, HWC)
    al = jnp.tile(alpha, HW).reshape(1, HWC)
    return pl.pallas_call(
        _bn_prelu_kernel,
        grid=(N,),
        in_specs=[
            pl.BlockSpec((1, D, HWC), lambda n: (n, 0, 0)),
            pl.BlockSpec((1, HWC), lambda n: (0, 0)),
            pl.BlockSpec((1, HWC), lambda n: (0, 0)),
            pl.BlockSpec((1, HWC), lambda n: (0, 0)),
        ],
        out_specs=pl.BlockSpec((1, D, HWC), lambda n: (n, 0, 0)),
        out_shape=jax.ShapeDtypeStruct((N, D, HWC), jnp.float32),
        compiler_params=pltpu.CompilerParams(
            dimension_semantics=("parallel",),
            vmem_limit_bytes=_vmem_limit_bytes()),
    )(y, sc, sh, al)


def encoder_stage_forward_channels_last(x_flat, params, H, W):
    """Forward on channels-last-flat activations (N, D, H*W*Cin) -> (N, D, H*W*Cout).
    Use this entry point to avoid the NCDHW <-> channels-last boundary transposes."""
    N, D, _ = x_flat.shape

    # Identity "previous layer" transform for the first conv (PReLU alpha=1 == identity).
    cin0 = params[0][0].shape[3]
    in_scale = jnp.ones((cin0,), jnp.float32)
    in_shift = jnp.zeros((cin0,), jnp.float32)
    in_alpha = jnp.ones((cin0,), jnp.float32)

    x = x_flat
    cnt = float(N * D * H * W)
    for (w, _b, gamma, beta, alpha), dil in zip(params, (1, 2, 4)):
        cout = w.shape[4]
        y, stats = _conv_layer(x, w, in_scale, in_shift, in_alpha, dil, H, W)

        # Training-mode BatchNorm3d statistics (biased variance), reduced in the
        # wrapper from lane-dense per-batch partials.  Conv bias is intentionally
        # unused -- it cancels exactly under the batch-mean subtraction.
        st = stats.reshape(N, 2, H * W, cout)
        s = jnp.sum(st[:, 0], axis=(0, 1))
        ss = jnp.sum(st[:, 1], axis=(0, 1))
        mean = s / cnt
        # TODO(synk): E[y^2]-E[y]^2 in f32 can lose precision if conv outputs acquire
        # a large common offset; use a shifted/two-pass variance if tolerances tighten.
        var = jnp.maximum(ss / cnt - mean * mean, 0.0)
        bn_scale = gamma / jnp.sqrt(var + EPS)
        bn_shift = beta - mean * bn_scale

        # This layer's BN + PReLU gets fused into the NEXT conv's input path.
        in_scale, in_shift, in_alpha = bn_scale, bn_shift, alpha
        x = y

    return _bn_prelu(x, in_scale, in_shift, in_alpha, H * W)


@jax.jit
def encoder_stage_forward(x_ncdhw, params):
    """PyTorch-equivalent forward.  x_ncdhw: (N, Cin, D, H, W) -> (N, Cout, D, H, W)."""
    N, Cin, D, H, W = x_ncdhw.shape
    x = jnp.transpose(x_ncdhw, (0, 2, 3, 4, 1)).astype(jnp.float32)
    x = x.reshape(N, D, H * W * Cin)                      # lane dim = H*W*C
    out = encoder_stage_forward_channels_last(x, params, H, W)
    cout = params[-1][0].shape[4]
    out = out.reshape(N, D, H, W, cout)
    return jnp.transpose(out, (0, 4, 1, 2, 3))


def init_params(key, ch_in, ch_out):
    """Deterministic synthetic parameters; weights stored as (3,3,3,Cin,Cout)."""
    params = []
    cin = ch_in
    for _ in range(3):
        key, k1, k2, k3, k4 = jax.random.split(key, 5)
        fan_in = cin * K * K * K
        w = jax.random.normal(k1, (K, K, K, cin, ch_out), jnp.float32) / (fan_in ** 0.5)
        b = 0.1 * jax.random.normal(k2, (ch_out,), jnp.float32)
        gamma = 1.0 + 0.1 * jax.random.normal(k3, (ch_out,), jnp.float32)
        beta = 0.1 * jax.random.normal(k4, (ch_out,), jnp.float32)
        alpha = jnp.full((ch_out,), 0.25, jnp.float32)    # nn.PReLU default init
        params.append((w, b, gamma, beta, alpha))
        cin = ch_out
    return params


def reference_forward(x_ncdhw, params):
    """Pure-JAX f32 reference mirroring the PyTorch forward semantics (with conv bias)."""
    x = jnp.transpose(x_ncdhw, (0, 2, 3, 4, 1)).astype(jnp.float32)
    for (w, b, gamma, beta, alpha), dil in zip(params, (1, 2, 4)):
        y = jax.lax.conv_general_dilated(
            x, w, window_strides=(1, 1, 1), padding=[(dil, dil)] * 3,
            rhs_dilation=(dil, dil, dil),
            dimension_numbers=("NDHWC", "DHWIO", "NDHWC"),
            precision=jax.lax.Precision.HIGHEST) + b
        mean = jnp.mean(y, axis=(0, 1, 2, 3))
        var = jnp.mean((y - mean) ** 2, axis=(0, 1, 2, 3))
        z = (y - mean) / jnp.sqrt(var + EPS) * gamma + beta
        x = jnp.where(z >= 0, z, alpha * z)
    return jnp.transpose(x, (0, 4, 1, 2, 3))


if __name__ == "__main__":
    N, Cin, Cout = 2, 4, 8
    D = H = W = 8

    key = jax.random.PRNGKey(0)
    kx, kp = jax.random.split(key)
    x = jax.random.normal(kx, (N, Cin, D, H, W), jnp.float32)   # PyTorch NCDHW
    params = init_params(kp, Cin, Cout)

    out = encoder_stage_forward(x, params)
    out = jax.block_until_ready(out)
    assert out.shape == (N, Cout, D, H, W)

    ref = reference_forward(x, params)
    err = float(jnp.max(jnp.abs(out - ref)))
    # bf16 MXU inputs with f32 accumulation and f32 BN statistics: observed max-abs
    # error vs the f32 reference is ~1e-2 at these O(1) activations; 5e-2 bound.
    assert err < 5e-2, f"mismatch vs reference: max abs err = {err}"

    print("KERNEL_OK")
</pallas_src>

<mosaic_0001>
module attributes {stable_mosaic.version = 11 : i64} {
  func.func @_conv3d_fused_kernel(%arg0: i32, %arg1: memref<1x8x256xf32, #tpu.memory_space<vmem>>, %arg2: memref<3x256x512xbf16, #tpu.memory_space<vmem>>, %arg3: memref<1x256xf32, #tpu.memory_space<vmem>>, %arg4: memref<1x256xf32, #tpu.memory_space<vmem>>, %arg5: memref<1x256xf32, #tpu.memory_space<vmem>>, %arg6: memref<1x8x512xf32, #tpu.memory_space<vmem>>, %arg7: memref<1x1x1024xf32, #tpu.memory_space<vmem>>, %arg8: memref<10x256xf32, #tpu.memory_space<vmem>>) attributes {dimension_semantics = [#tpu.dimension_semantics<parallel>], iteration_bounds = array<i64: 2>, scalar_prefetch = 0 : i64, scratch_operands = 1 : i64, tpu.core_type = #tpu.core_type<tc>, window_params = [{transform_indices = @transform_0, window_bounds = array<i64: 1, 8, 256>}, {pipeline_mode = #tpu.pipeline_mode<synchronous>, transform_indices = @transform_1, window_bounds = array<i64: 3, 256, 512>}, {pipeline_mode = #tpu.pipeline_mode<synchronous>, transform_indices = @transform_2, window_bounds = array<i64: 1, 256>}, {pipeline_mode = #tpu.pipeline_mode<synchronous>, transform_indices = @transform_3, window_bounds = array<i64: 1, 256>}, {pipeline_mode = #tpu.pipeline_mode<synchronous>, transform_indices = @transform_4, window_bounds = array<i64: 1, 256>}, {transform_indices = @transform_5, window_bounds = array<i64: 1, 8, 512>}, {transform_indices = @transform_6, window_bounds = array<i64: 1, 1, 1024>}]} {
    %c0 = arith.constant 0 : index
    %c0_0 = arith.constant 0 : index
    %c0_1 = arith.constant 0 : index
    %0 = vector.load %arg1[%c0, %c0_0, %c0_1] : memref<1x8x256xf32, #tpu.memory_space<vmem>>, vector<1x8x256xf32>
    %1 = vector.shape_cast %0 : vector<1x8x256xf32> to vector<8x256xf32>
    %c0_2 = arith.constant 0 : index
    %c0_3 = arith.constant 0 : index
    %2 = vector.load %arg3[%c0_2, %c0_3] : memref<1x256xf32, #tpu.memory_space<vmem>>, vector<1x256xf32>
    %3 = vector.broadcast %2 : vector<1x256xf32> to vector<8x256xf32>
    %4 = arith.mulf %1, %3 : vector<8x256xf32>
    %c0_4 = arith.constant 0 : index
    %c0_5 = arith.constant 0 : index
    %5 = vector.load %arg4[%c0_4, %c0_5] : memref<1x256xf32, #tpu.memory_space<vmem>>, vector<1x256xf32>
    %6 = vector.broadcast %5 : vector<1x256xf32> to vector<8x256xf32>
    %7 = arith.addf %4, %6 : vector<8x256xf32>
    %cst = arith.constant 0.000000e+00 : f32
    %8 = vector.broadcast %cst : f32 to vector<8x256xf32>
    %9 = arith.cmpf oge, %7, %8 : vector<8x256xf32>
    %c0_6 = arith.constant 0 : index
    %c0_7 = arith.constant 0 : index
    %10 = vector.load %arg5[%c0_6, %c0_7] : memref<1x256xf32, #tpu.memory_space<vmem>>, vector<1x256xf32>
    %11 = vector.broadcast %10 : vector<1x256xf32> to vector<8x256xf32>
    %12 = arith.mulf %11, %7 : vector<8x256xf32>
    %13 = arith.select %9, %7, %12 : vector<8x256xi1>, vector<8x256xf32>
    %cst_8 = arith.constant 0.000000e+00 : f32
    %14 = vector.broadcast %cst_8 : f32 to vector<1x256xf32>
    %c0_9 = arith.constant 0 : index
    %c0_10 = arith.constant 0 : index
    %15 = vector.load %arg8[%c0_9, %c0_10] : memref<10x256xf32, #tpu.memory_space<vmem>>, vector<1x256xf32>
    tpu.vector_store %arg8[%c0_9, %c0_10], %14 {strides = array<i32>} : memref<10x256xf32, #tpu.memory_space<vmem>>, vector<1x256xf32>,
    %c9 = arith.constant 9 : index
    %c0_11 = arith.constant 0 : index
    %16 = vector.load %arg8[%c9, %c0_11] : memref<10x256xf32, #tpu.memory_space<vmem>>, vector<1x256xf32>
    tpu.vector_store %arg8[%c9, %c0_11], %14 {strides = array<i32>} : memref<10x256xf32, #tpu.memory_space<vmem>>, vector<1x256xf32>,
    %c1 = arith.constant 1 : index
    %c0_12 = arith.constant 0 : index
    %17 = vector.load %arg8[%c1, %c0_12] : memref<10x256xf32, #tpu.memory_space<vmem>>, vector<8x256xf32>
    tpu.vector_store %arg8[%c1, %c0_12], %13 {strides = array<i32>} : memref<10x256xf32, #tpu.memory_space<vmem>>, vector<8x256xf32>,
    %c0_13 = arith.constant 0 : index
    %c0_14 = arith.constant 0 : index
    %18 = vector.load %arg8[%c0_13, %c0_14] : memref<10x256xf32, #tpu.memory_space<vmem>>, vector<8x256xf32>
    %19 = arith.truncf %18 : vector<8x256xf32> to vector<8x256xbf16>
    %c0_15 = arith.constant 0 : index
    %c0_16 = arith.constant 0 : index
    %c0_17 = arith.constant 0 : index
    %20 = vector.load %arg2[%c0_15, %c0_16, %c0_17] : memref<3x256x512xbf16, #tpu.memory_space<vmem>>, vector<1x256x512xbf16>
    %21 = vector.shape_cast %20 : vector<1x256x512xbf16> to vector<256x512xbf16>
    %cst_18 = arith.constant dense<0.000000e+00> : vector<8x512xf32>
    %22 = tpu.matmul %19, %21, %cst_18 {dimension_numbers = #tpu.dot_dimension_numbers<[1], [0], [0], [1], [0, 0, 1, 1], [], []>} : vector<8x256xbf16>, vector<256x512xbf16>, vector<8x512xf32> -> vector<8x512xf32>
    %c1_19 = arith.constant 1 : index
    %c0_20 = arith.constant 0 : index
    %23 = vector.load %arg8[%c1_19, %c0_20] : memref<10x256xf32, #tpu.memory_space<vmem>>, vector<8x256xf32>
    %24 = arith.truncf %23 : vector<8x256xf32> to vector<8x256xbf16>
    %c1_21 = arith.constant 1 : index
    %c0_22 = arith.constant 0 : index
    %c0_23 = arith.constant 0 : index
    %25 = vector.load %arg2[%c1_21, %c0_22, %c0_23] : memref<3x256x512xbf16, #tpu.memory_space<vmem>>, vector<1x256x512xbf16>
    %26 = vector.shape_cast %25 : vector<1x256x512xbf16> to vector<256x512xbf16>
    %cst_24 = arith.constant dense<0.000000e+00> : vector<8x512xf32>
    %27 = tpu.matmul %24, %26, %cst_24 {dimension_numbers = #tpu.dot_dimension_numbers<[1], [0], [0], [1], [0, 0, 1, 1], [], []>} : vector<8x256xbf16>, vector<256x512xbf16>, vector<8x512xf32> -> vector<8x512xf32>
    %28 = arith.addf %22, %27 : vector<8x512xf32>
    %c2 = arith.constant 2 : index
    %c0_25 = arith.constant 0 : index
    %29 = vector.load %arg8[%c2, %c0_25] : memref<10x256xf32, #tpu.memory_space<vmem>>, vector<8x256xf32>
    %30 = arith.truncf %29 : vector<8x256xf32> to vector<8x256xbf16>
    %c2_26 = arith.constant 2 : index
    %c0_27 = arith.constant 0 : index
    %c0_28 = arith.constant 0 : index
    %31 = vector.load %arg2[%c2_26, %c0_27, %c0_28] : memref<3x256x512xbf16, #tpu.memory_space<vmem>>, vector<1x256x512xbf16>
    %32 = vector.shape_cast %31 : vector<1x256x512xbf16> to vector<256x512xbf16>
    %cst_29 = arith.constant dense<0.000000e+00> : vector<8x512xf32>
    %33 = tpu.matmul %30, %32, %cst_29 {dimension_numbers = #tpu.dot_dimension_numbers<[1], [0], [0], [1], [0, 0, 1, 1], [], []>} : vector<8x256xbf16>, vector<256x512xbf16>, vector<8x512xf32> -> vector<8x512xf32>
    %34 = arith.addf %28, %33 : vector<8x512xf32>
    %c0_30 = arith.constant 0 : index
    %c0_31 = arith.constant 0 : index
    %c0_32 = arith.constant 0 : index
    %35 = vector.load %arg6[%c0_30, %c0_31, %c0_32] : memref<1x8x512xf32, #tpu.memory_space<vmem>>, vector<1x8x512xf32>
    %36 = vector.shape_cast %35 : vector<1x8x512xf32> to vector<8x512xf32>
    %37 = vector.shape_cast %34 : vector<8x512xf32> to vector<1x8x512xf32>
    tpu.vector_store %arg6[%c0_30, %c0_31, %c0_32], %37 {strides = array<i32>} : memref<1x8x512xf32, #tpu.memory_space<vmem>>, vector<1x8x512xf32>,
    %cst_33 = arith.constant dense<0.000000e+00> : vector<512xf32>
    %38 = vector.multi_reduction <add>, %34, %cst_33 [0] : vector<8x512xf32> to vector<512xf32>
    %39 = vector.shape_cast %38 : vector<512xf32> to vector<1x512xf32>
    %c0_34 = arith.constant 0 : index
    %c0_35 = arith.constant 0 : index
    %c0_36 = arith.constant 0 : index
    %40 = vector.load %arg7[%c0_34, %c0_35, %c0_36] : memref<1x1x1024xf32, #tpu.memory_space<vmem>>, vector<1x1x512xf32>
    %41 = vector.shape_cast %40 : vector<1x1x512xf32> to vector<1x512xf32>
    %42 = vector.shape_cast %39 : vector<1x512xf32> to vector<1x1x512xf32>
    tpu.vector_store %arg7[%c0_34, %c0_35, %c0_36], %42 {strides = array<i32>} : memref<1x1x1024xf32, #tpu.memory_space<vmem>>, vector<1x1x512xf32>,
    %43 = arith.mulf %34, %34 : vector<8x512xf32>
    %cst_37 = arith.constant dense<0.000000e+00> : vector<512xf32>
    %44 = vector.multi_reduction <add>, %43, %cst_37 [0] : vector<8x512xf32> to vector<512xf32>
    %45 = vector.shape_cast %44 : vector<512xf32> to vector<1x512xf32>
    %c0_38 = arith.constant 0 : index
    %c0_39 = arith.constant 0 : index
    %c512 = arith.constant 512 : index
    %46 = vector.load %arg7[%c0_38, %c0_39, %c512] : memref<1x1x1024xf32, #tpu.memory_space<vmem>>, vector<1x1x512xf32>
    %47 = vector.shape_cast %46 : vector<1x1x512xf32> to vector<1x512xf32>
    %48 = vector.shape_cast %45 : vector<1x512xf32> to vector<1x1x512xf32>
    tpu.vector_store %arg7[%c0_38, %c0_39, %c512], %48 {strides = array<i32>} : memref<1x1x1024xf32, #tpu.memory_space<vmem>>, vector<1x1x512xf32>,
    return
  }
  func.func @transform_0(%arg0: i32) -> (i32, i32, i32) {
    %c0_i32 = arith.constant 0 : i32
    %c0_i32_0 = arith.constant 0 : i32
    %c0_i32_1 = arith.constant 0 : i32
    return %arg0, %c0_i32, %c0_i32_0 : i32, i32, i32
  }
  func.func @transform_1(%arg0: i32) -> (i32, i32, i32) {
    %c0_i32 = arith.constant 0 : i32
    %c0_i32_0 = arith.constant 0 : i32
    %c0_i32_1 = arith.constant 0 : i32
    %c0_i32_2 = arith.constant 0 : i32
    return %c0_i32, %c0_i32_0, %c0_i32_1 : i32, i32, i32
  }
  func.func @transform_2(%arg0: i32) -> (i32, i32) {
    %c0_i32 = arith.constant 0 : i32
    %c0_i32_0 = arith.constant 0 : i32
    %c0_i32_1 = arith.constant 0 : i32
    return %c0_i32, %c0_i32_0 : i32, i32
  }
  func.func @transform_3(%arg0: i32) -> (i32, i32) {
    %c0_i32 = arith.constant 0 : i32
    %c0_i32_0 = arith.constant 0 : i32
    %c0_i32_1 = arith.constant 0 : i32
    return %c0_i32, %c0_i32_0 : i32, i32
  }
  func.func @transform_4(%arg0: i32) -> (i32, i32) {
    %c0_i32 = arith.constant 0 : i32
    %c0_i32_0 = arith.constant 0 : i32
    %c0_i32_1 = arith.constant 0 : i32
    return %c0_i32, %c0_i32_0 : i32, i32
  }
  func.func @transform_5(%arg0: i32) -> (i32, i32, i32) {
    %c0_i32 = arith.constant 0 : i32
    %c0_i32_0 = arith.constant 0 : i32
    %c0_i32_1 = arith.constant 0 : i32
    return %arg0, %c0_i32, %c0_i32_0 : i32, i32, i32
  }
  func.func @transform_6(%arg0: i32) -> (i32, i32, i32) {
    %c0_i32 = arith.constant 0 : i32
    %c0_i32_0 = arith.constant 0 : i32
    %c0_i32_1 = arith.constant 0 : i32
    return %arg0, %c0_i32, %c0_i32_0 : i32, i32, i32
  }
}

module attributes {stable_mosaic.version = 11 : i64} {
  func.func @_conv3d_fused_kernel(%arg0: i32, %arg1: memref<1x8x512xf32, #tpu.memory_space<vmem>>, %arg2: memref<3x512x512xbf16, #tpu.memory_space<vmem>>, %arg3: memref<1x512xf32, #tpu.memory_space<vmem>>, %arg4: memref<1x512xf32, #tpu.memory_space<vmem>>, %arg5: memref<1x512xf32, #tpu.memory_space<vmem>>, %arg6: memref<1x8x512xf32, #tpu.memory_space<vmem>>, %arg7: memref<1x1x1024xf32, #tpu.memory_space<vmem>>, %arg8: memref<12x512xf32, #tpu.memory_space<vmem>>) attributes {dimension_semantics = [#tpu.dimension_semantics<parallel>], iteration_bounds = array<i64: 2>, scalar_prefetch = 0 : i64, scratch_operands = 1 : i64, tpu.core_type = #tpu.core_type<tc>, window_params = [{transform_indices = @transform_0, window_bounds = array<i64: 1, 8, 512>}, {pipeline_mode = #tpu.pipeline_mode<synchronous>, transform_indices = @transform_1, window_bounds = array<i64: 3, 512, 512>}, {pipeline_mode = #tpu.pipeline_mode<synchronous>, transform_indices = @transform_2, window_bounds = array<i64: 1, 512>}, {pipeline_mode = #tpu.pipeline_mode<synchronous>, transform_indices = @transform_3, window_bounds = array<i64: 1, 512>}, {pipeline_mode = #tpu.pipeline_mode<synchronous>, transform_indices = @transform_4, window_bounds = array<i64: 1, 512>}, {transform_indices = @transform_5, window_bounds = array<i64: 1, 8, 512>}, {transform_indices = @transform_6, window_bounds = array<i64: 1, 1, 1024>}]} {
    %c0 = arith.constant 0 : index
    %c0_0 = arith.constant 0 : index
    %c0_1 = arith.constant 0 : index
    %0 = vector.load %arg1[%c0, %c0_0, %c0_1] : memref<1x8x512xf32, #tpu.memory_space<vmem>>, vector<1x8x512xf32>
    %1 = vector.shape_cast %0 : vector<1x8x512xf32> to vector<8x512xf32>
    %c0_2 = arith.constant 0 : index
    %c0_3 = arith.constant 0 : index
    %2 = vector.load %arg3[%c0_2, %c0_3] : memref<1x512xf32, #tpu.memory_space<vmem>>, vector<1x512xf32>
    %3 = vector.broadcast %2 : vector<1x512xf32> to vector<8x512xf32>
    %4 = arith.mulf %1, %3 : vector<8x512xf32>
    %c0_4 = arith.constant 0 : index
    %c0_5 = arith.constant 0 : index
    %5 = vector.load %arg4[%c0_4, %c0_5] : memref<1x512xf32, #tpu.memory_space<vmem>>, vector<1x512xf32>
    %6 = vector.broadcast %5 : vector<1x512xf32> to vector<8x512xf32>
    %7 = arith.addf %4, %6 : vector<8x512xf32>
    %cst = arith.constant 0.000000e+00 : f32
    %8 = vector.broadcast %cst : f32 to vector<8x512xf32>
    %9 = arith.cmpf oge, %7, %8 : vector<8x512xf32>
    %c0_6 = arith.constant 0 : index
    %c0_7 = arith.constant 0 : index
    %10 = vector.load %arg5[%c0_6, %c0_7] : memref<1x512xf32, #tpu.memory_space<vmem>>, vector<1x512xf32>
    %11 = vector.broadcast %10 : vector<1x512xf32> to vector<8x512xf32>
    %12 = arith.mulf %11, %7 : vector<8x512xf32>
    %13 = arith.select %9, %7, %12 : vector<8x512xi1>, vector<8x512xf32>
    %cst_8 = arith.constant 0.000000e+00 : f32
    %14 = vector.broadcast %cst_8 : f32 to vector<2x512xf32>
    %c0_9 = arith.constant 0 : index
    %c0_10 = arith.constant 0 : index
    %15 = vector.load %arg8[%c0_9, %c0_10] : memref<12x512xf32, #tpu.memory_space<vmem>>, vector<2x512xf32>
    tpu.vector_store %arg8[%c0_9, %c0_10], %14 {strides = array<i32>} : memref<12x512xf32, #tpu.memory_space<vmem>>, vector<2x512xf32>,
    %c10 = arith.constant 10 : index
    %c0_11 = arith.constant 0 : index
    %16 = vector.load %arg8[%c10, %c0_11] : memref<12x512xf32, #tpu.memory_space<vmem>>, vector<2x512xf32>
    tpu.vector_store %arg8[%c10, %c0_11], %14 {strides = array<i32>} : memref<12x512xf32, #tpu.memory_space<vmem>>, vector<2x512xf32>,
    %c2 = arith.constant 2 : index
    %c0_12 = arith.constant 0 : index
    %17 = vector.load %arg8[%c2, %c0_12] : memref<12x512xf32, #tpu.memory_space<vmem>>, vector<8x512xf32>
    tpu.vector_store %arg8[%c2, %c0_12], %13 {strides = array<i32>} : memref<12x512xf32, #tpu.memory_space<vmem>>, vector<8x512xf32>,
    %c0_13 = arith.constant 0 : index
    %c0_14 = arith.constant 0 : index
    %18 = vector.load %arg8[%c0_13, %c0_14] : memref<12x512xf32, #tpu.memory_space<vmem>>, vector<8x512xf32>
    %19 = arith.truncf %18 : vector<8x512xf32> to vector<8x512xbf16>
    %c0_15 = arith.constant 0 : index
    %c0_16 = arith.constant 0 : index
    %c0_17 = arith.constant 0 : index
    %20 = vector.load %arg2[%c0_15, %c0_16, %c0_17] : memref<3x512x512xbf16, #tpu.memory_space<vmem>>, vector<1x512x512xbf16>
    %21 = vector.shape_cast %20 : vector<1x512x512xbf16> to vector<512x512xbf16>
    %cst_18 = arith.constant dense<0.000000e+00> : vector<8x512xf32>
    %22 = tpu.matmul %19, %21, %cst_18 {dimension_numbers = #tpu.dot_dimension_numbers<[1], [0], [0], [1], [0, 0, 1, 1], [], []>} : vector<8x512xbf16>, vector<512x512xbf16>, vector<8x512xf32> -> vector<8x512xf32>
    %c2_19 = arith.constant 2 : index
    %c0_20 = arith.constant 0 : index
    %23 = vector.load %arg8[%c2_19, %c0_20] : memref<12x512xf32, #tpu.memory_space<vmem>>, vector<8x512xf32>
    %24 = arith.truncf %23 : vector<8x512xf32> to vector<8x512xbf16>
    %c1 = arith.constant 1 : index
    %c0_21 = arith.constant 0 : index
    %c0_22 = arith.constant 0 : index
    %25 = vector.load %arg2[%c1, %c0_21, %c0_22] : memref<3x512x512xbf16, #tpu.memory_space<vmem>>, vector<1x512x512xbf16>
    %26 = vector.shape_cast %25 : vector<1x512x512xbf16> to vector<512x512xbf16>
    %cst_23 = arith.constant dense<0.000000e+00> : vector<8x512xf32>
    %27 = tpu.matmul %24, %26, %cst_23 {dimension_numbers = #tpu.dot_dimension_numbers<[1], [0], [0], [1], [0, 0, 1, 1], [], []>} : vector<8x512xbf16>, vector<512x512xbf16>, vector<8x512xf32> -> vector<8x512xf32>
    %28 = arith.addf %22, %27 : vector<8x512xf32>
    %c4 = arith.constant 4 : index
    %c0_24 = arith.constant 0 : index
    %29 = vector.load %arg8[%c4, %c0_24] : memref<12x512xf32, #tpu.memory_space<vmem>>, vector<8x512xf32>
    %30 = arith.truncf %29 : vector<8x512xf32> to vector<8x512xbf16>
    %c2_25 = arith.constant 2 : index
    %c0_26 = arith.constant 0 : index
    %c0_27 = arith.constant 0 : index
    %31 = vector.load %arg2[%c2_25, %c0_26, %c0_27] : memref<3x512x512xbf16, #tpu.memory_space<vmem>>, vector<1x512x512xbf16>
    %32 = vector.shape_cast %31 : vector<1x512x512xbf16> to vector<512x512xbf16>
    %cst_28 = arith.constant dense<0.000000e+00> : vector<8x512xf32>
    %33 = tpu.matmul %30, %32, %cst_28 {dimension_numbers = #tpu.dot_dimension_numbers<[1], [0], [0], [1], [0, 0, 1, 1], [], []>} : vector<8x512xbf16>, vector<512x512xbf16>, vector<8x512xf32> -> vector<8x512xf32>
    %34 = arith.addf %28, %33 : vector<8x512xf32>
    %c0_29 = arith.constant 0 : index
    %c0_30 = arith.constant 0 : index
    %c0_31 = arith.constant 0 : index
    %35 = vector.load %arg6[%c0_29, %c0_30, %c0_31] : memref<1x8x512xf32, #tpu.memory_space<vmem>>, vector<1x8x512xf32>
    %36 = vector.shape_cast %35 : vector<1x8x512xf32> to vector<8x512xf32>
    %37 = vector.shape_cast %34 : vector<8x512xf32> to vector<1x8x512xf32>
    tpu.vector_store %arg6[%c0_29, %c0_30, %c0_31], %37 {strides = array<i32>} : memref<1x8x512xf32, #tpu.memory_space<vmem>>, vector<1x8x512xf32>,
    %cst_32 = arith.constant dense<0.000000e+00> : vector<512xf32>
    %38 = vector.multi_reduction <add>, %34, %cst_32 [0] : vector<8x512xf32> to vector<512xf32>
    %39 = vector.shape_cast %38 : vector<512xf32> to vector<1x512xf32>
    %c0_33 = arith.constant 0 : index
    %c0_34 = arith.constant 0 : index
    %c0_35 = arith.constant 0 : index
    %40 = vector.load %arg7[%c0_33, %c0_34, %c0_35] : memref<1x1x1024xf32, #tpu.memory_space<vmem>>, vector<1x1x512xf32>
    %41 = vector.shape_cast %40 : vector<1x1x512xf32> to vector<1x512xf32>
    %42 = vector.shape_cast %39 : vector<1x512xf32> to vector<1x1x512xf32>
    tpu.vector_store %arg7[%c0_33, %c0_34, %c0_35], %42 {strides = array<i32>} : memref<1x1x1024xf32, #tpu.memory_space<vmem>>, vector<1x1x512xf32>,
    %43 = arith.mulf %34, %34 : vector<8x512xf32>
    %cst_36 = arith.constant dense<0.000000e+00> : vector<512xf32>
    %44 = vector.multi_reduction <add>, %43, %cst_36 [0] : vector<8x512xf32> to vector<512xf32>
    %45 = vector.shape_cast %44 : vector<512xf32> to vector<1x512xf32>
    %c0_37 = arith.constant 0 : index
    %c0_38 = arith.constant 0 : index
    %c512 = arith.constant 512 : index
    %46 = vector.load %arg7[%c0_37, %c0_38, %c512] : memref<1x1x1024xf32, #tpu.memory_space<vmem>>, vector<1x1x512xf32>
    %47 = vector.shape_cast %46 : vector<1x1x512xf32> to vector<1x512xf32>
    %48 = vector.shape_cast %45 : vector<1x512xf32> to vector<1x1x512xf32>
    tpu.vector_store %arg7[%c0_37, %c0_38, %c512], %48 {strides = array<i32>} : memref<1x1x1024xf32, #tpu.memory_space<vmem>>, vector<1x1x512xf32>,
    return
  }
  func.func @transform_0(%arg0: i32) -> (i32, i32, i32) {
    %c0_i32 = arith.constant 0 : i32
    %c0_i32_0 = arith.constant 0 : i32
    %c0_i32_1 = arith.constant 0 : i32
    return %arg0, %c0_i32, %c0_i32_0 : i32, i32, i32
  }
  func.func @transform_1(%arg0: i32) -> (i32, i32, i32) {
    %c0_i32 = arith.constant 0 : i32
    %c0_i32_0 = arith.constant 0 : i32
    %c0_i32_1 = arith.constant 0 : i32
    %c0_i32_2 = arith.constant 0 : i32
    return %c0_i32, %c0_i32_0, %c0_i32_1 : i32, i32, i32
  }
  func.func @transform_2(%arg0: i32) -> (i32, i32) {
    %c0_i32 = arith.constant 0 : i32
    %c0_i32_0 = arith.constant 0 : i32
    %c0_i32_1 = arith.constant 0 : i32
    return %c0_i32, %c0_i32_0 : i32, i32
  }
  func.func @transform_3(%arg0: i32) -> (i32, i32) {
    %c0_i32 = arith.constant 0 : i32
    %c0_i32_0 = arith.constant 0 : i32
    %c0_i32_1 = arith.constant 0 : i32
    return %c0_i32, %c0_i32_0 : i32, i32
  }
  func.func @transform_4(%arg0: i32) -> (i32, i32) {
    %c0_i32 = arith.constant 0 : i32
    %c0_i32_0 = arith.constant 0 : i32
    %c0_i32_1 = arith.constant 0 : i32
    return %c0_i32, %c0_i32_0 : i32, i32
  }
  func.func @transform_5(%arg0: i32) -> (i32, i32, i32) {
    %c0_i32 = arith.constant 0 : i32
    %c0_i32_0 = arith.constant 0 : i32
    %c0_i32_1 = arith.constant 0 : i32
    return %arg0, %c0_i32, %c0_i32_0 : i32, i32, i32
  }
  func.func @transform_6(%arg0: i32) -> (i32, i32, i32) {
    %c0_i32 = arith.constant 0 : i32
    %c0_i32_0 = arith.constant 0 : i32
    %c0_i32_1 = arith.constant 0 : i32
    return %arg0, %c0_i32, %c0_i32_0 : i32, i32, i32
  }
}

module attributes {stable_mosaic.version = 11 : i64} {
  func.func @_conv3d_fused_kernel(%arg0: i32, %arg1: memref<1x8x512xf32, #tpu.memory_space<vmem>>, %arg2: memref<3x512x512xbf16, #tpu.memory_space<vmem>>, %arg3: memref<1x512xf32, #tpu.memory_space<vmem>>, %arg4: memref<1x512xf32, #tpu.memory_space<vmem>>, %arg5: memref<1x512xf32, #tpu.memory_space<vmem>>, %arg6: memref<1x8x512xf32, #tpu.memory_space<vmem>>, %arg7: memref<1x1x1024xf32, #tpu.memory_space<vmem>>, %arg8: memref<16x512xf32, #tpu.memory_space<vmem>>) attributes {dimension_semantics = [#tpu.dimension_semantics<parallel>], iteration_bounds = array<i64: 2>, scalar_prefetch = 0 : i64, scratch_operands = 1 : i64, tpu.core_type = #tpu.core_type<tc>, window_params = [{transform_indices = @transform_0, window_bounds = array<i64: 1, 8, 512>}, {pipeline_mode = #tpu.pipeline_mode<synchronous>, transform_indices = @transform_1, window_bounds = array<i64: 3, 512, 512>}, {pipeline_mode = #tpu.pipeline_mode<synchronous>, transform_indices = @transform_2, window_bounds = array<i64: 1, 512>}, {pipeline_mode = #tpu.pipeline_mode<synchronous>, transform_indices = @transform_3, window_bounds = array<i64: 1, 512>}, {pipeline_mode = #tpu.pipeline_mode<synchronous>, transform_indices = @transform_4, window_bounds = array<i64: 1, 512>}, {transform_indices = @transform_5, window_bounds = array<i64: 1, 8, 512>}, {transform_indices = @transform_6, window_bounds = array<i64: 1, 1, 1024>}]} {
    %c0 = arith.constant 0 : index
    %c0_0 = arith.constant 0 : index
    %c0_1 = arith.constant 0 : index
    %0 = vector.load %arg1[%c0, %c0_0, %c0_1] : memref<1x8x512xf32, #tpu.memory_space<vmem>>, vector<1x8x512xf32>
    %1 = vector.shape_cast %0 : vector<1x8x512xf32> to vector<8x512xf32>
    %c0_2 = arith.constant 0 : index
    %c0_3 = arith.constant 0 : index
    %2 = vector.load %arg3[%c0_2, %c0_3] : memref<1x512xf32, #tpu.memory_space<vmem>>, vector<1x512xf32>
    %3 = vector.broadcast %2 : vector<1x512xf32> to vector<8x512xf32>
    %4 = arith.mulf %1, %3 : vector<8x512xf32>
    %c0_4 = arith.constant 0 : index
    %c0_5 = arith.constant 0 : index
    %5 = vector.load %arg4[%c0_4, %c0_5] : memref<1x512xf32, #tpu.memory_space<vmem>>, vector<1x512xf32>
    %6 = vector.broadcast %5 : vector<1x512xf32> to vector<8x512xf32>
    %7 = arith.addf %4, %6 : vector<8x512xf32>
    %cst = arith.constant 0.000000e+00 : f32
    %8 = vector.broadcast %cst : f32 to vector<8x512xf32>
    %9 = arith.cmpf oge, %7, %8 : vector<8x512xf32>
    %c0_6 = arith.constant 0 : index
    %c0_7 = arith.constant 0 : index
    %10 = vector.load %arg5[%c0_6, %c0_7] : memref<1x512xf32, #tpu.memory_space<vmem>>, vector<1x512xf32>
    %11 = vector.broadcast %10 : vector<1x512xf32> to vector<8x512xf32>
    %12 = arith.mulf %11, %7 : vector<8x512xf32>
    %13 = arith.select %9, %7, %12 : vector<8x512xi1>, vector<8x512xf32>
    %cst_8 = arith.constant 0.000000e+00 : f32
    %14 = vector.broadcast %cst_8 : f32 to vector<4x512xf32>
    %c0_9 = arith.constant 0 : index
    %c0_10 = arith.constant 0 : index
    %15 = vector.load %arg8[%c0_9, %c0_10] : memref<16x512xf32, #tpu.memory_space<vmem>>, vector<4x512xf32>
    tpu.vector_store %arg8[%c0_9, %c0_10], %14 {strides = array<i32>} : memref<16x512xf32, #tpu.memory_space<vmem>>, vector<4x512xf32>,
    %c12 = arith.constant 12 : index
    %c0_11 = arith.constant 0 : index
    %16 = vector.load %arg8[%c12, %c0_11] : memref<16x512xf32, #tpu.memory_space<vmem>>, vector<4x512xf32>
    tpu.vector_store %arg8[%c12, %c0_11], %14 {strides = array<i32>} : memref<16x512xf32, #tpu.memory_space<vmem>>, vector<4x512xf32>,
    %c4 = arith.constant 4 : index
    %c0_12 = arith.constant 0 : index
    %17 = vector.load %arg8[%c4, %c0_12] : memref<16x512xf32, #tpu.memory_space<vmem>>, vector<8x512xf32>
    tpu.vector_store %arg8[%c4, %c0_12], %13 {strides = array<i32>} : memref<16x512xf32, #tpu.memory_space<vmem>>, vector<8x512xf32>,
    %c0_13 = arith.constant 0 : index
    %c0_14 = arith.constant 0 : index
    %18 = vector.load %arg8[%c0_13, %c0_14] : memref<16x512xf32, #tpu.memory_space<vmem>>, vector<8x512xf32>
    %19 = arith.truncf %18 : vector<8x512xf32> to vector<8x512xbf16>
    %c0_15 = arith.constant 0 : index
    %c0_16 = arith.constant 0 : index
    %c0_17 = arith.constant 0 : index
    %20 = vector.load %arg2[%c0_15, %c0_16, %c0_17] : memref<3x512x512xbf16, #tpu.memory_space<vmem>>, vector<1x512x512xbf16>
    %21 = vector.shape_cast %20 : vector<1x512x512xbf16> to vector<512x512xbf16>
    %cst_18 = arith.constant dense<0.000000e+00> : vector<8x512xf32>
    %22 = tpu.matmul %19, %21, %cst_18 {dimension_numbers = #tpu.dot_dimension_numbers<[1], [0], [0], [1], [0, 0, 1, 1], [], []>} : vector<8x512xbf16>, vector<512x512xbf16>, vector<8x512xf32> -> vector<8x512xf32>
    %c4_19 = arith.constant 4 : index
    %c0_20 = arith.constant 0 : index
    %23 = vector.load %arg8[%c4_19, %c0_20] : memref<16x512xf32, #tpu.memory_space<vmem>>, vector<8x512xf32>
    %24 = arith.truncf %23 : vector<8x512xf32> to vector<8x512xbf16>
    %c1 = arith.constant 1 : index
    %c0_21 = arith.constant 0 : index
    %c0_22 = arith.constant 0 : index
    %25 = vector.load %arg2[%c1, %c0_21, %c0_22] : memref<3x512x512xbf16, #tpu.memory_space<vmem>>, vector<1x512x512xbf16>
    %26 = vector.shape_cast %25 : vector<1x512x512xbf16> to vector<512x512xbf16>
    %cst_23 = arith.constant dense<0.000000e+00> : vector<8x512xf32>
    %27 = tpu.matmul %24, %26, %cst_23 {dimension_numbers = #tpu.dot_dimension_numbers<[1], [0], [0], [1], [0, 0, 1, 1], [], []>} : vector<8x512xbf16>, vector<512x512xbf16>, vector<8x512xf32> -> vector<8x512xf32>
    %28 = arith.addf %22, %27 : vector<8x512xf32>
    %c8 = arith.constant 8 : index
    %c0_24 = arith.constant 0 : index
    %29 = vector.load %arg8[%c8, %c0_24] : memref<16x512xf32, #tpu.memory_space<vmem>>, vector<8x512xf32>
    %30 = arith.truncf %29 : vector<8x512xf32> to vector<8x512xbf16>
    %c2 = arith.constant 2 : index
    %c0_25 = arith.constant 0 : index
    %c0_26 = arith.constant 0 : index
    %31 = vector.load %arg2[%c2, %c0_25, %c0_26] : memref<3x512x512xbf16, #tpu.memory_space<vmem>>, vector<1x512x512xbf16>
    %32 = vector.shape_cast %31 : vector<1x512x512xbf16> to vector<512x512xbf16>
    %cst_27 = arith.constant dense<0.000000e+00> : vector<8x512xf32>
    %33 = tpu.matmul %30, %32, %cst_27 {dimension_numbers = #tpu.dot_dimension_numbers<[1], [0], [0], [1], [0, 0, 1, 1], [], []>} : vector<8x512xbf16>, vector<512x512xbf16>, vector<8x512xf32> -> vector<8x512xf32>
    %34 = arith.addf %28, %33 : vector<8x512xf32>
    %c0_28 = arith.constant 0 : index
    %c0_29 = arith.constant 0 : index
    %c0_30 = arith.constant 0 : index
    %35 = vector.load %arg6[%c0_28, %c0_29, %c0_30] : memref<1x8x512xf32, #tpu.memory_space<vmem>>, vector<1x8x512xf32>
    %36 = vector.shape_cast %35 : vector<1x8x512xf32> to vector<8x512xf32>
    %37 = vector.shape_cast %34 : vector<8x512xf32> to vector<1x8x512xf32>
    tpu.vector_store %arg6[%c0_28, %c0_29, %c0_30], %37 {strides = array<i32>} : memref<1x8x512xf32, #tpu.memory_space<vmem>>, vector<1x8x512xf32>,
    %cst_31 = arith.constant dense<0.000000e+00> : vector<512xf32>
    %38 = vector.multi_reduction <add>, %34, %cst_31 [0] : vector<8x512xf32> to vector<512xf32>
    %39 = vector.shape_cast %38 : vector<512xf32> to vector<1x512xf32>
    %c0_32 = arith.constant 0 : index
    %c0_33 = arith.constant 0 : index
    %c0_34 = arith.constant 0 : index
    %40 = vector.load %arg7[%c0_32, %c0_33, %c0_34] : memref<1x1x1024xf32, #tpu.memory_space<vmem>>, vector<1x1x512xf32>
    %41 = vector.shape_cast %40 : vector<1x1x512xf32> to vector<1x512xf32>
    %42 = vector.shape_cast %39 : vector<1x512xf32> to vector<1x1x512xf32>
    tpu.vector_store %arg7[%c0_32, %c0_33, %c0_34], %42 {strides = array<i32>} : memref<1x1x1024xf32, #tpu.memory_space<vmem>>, vector<1x1x512xf32>,
    %43 = arith.mulf %34, %34 : vector<8x512xf32>
    %cst_35 = arith.constant dense<0.000000e+00> : vector<512xf32>
    %44 = vector.multi_reduction <add>, %43, %cst_35 [0] : vector<8x512xf32> to vector<512xf32>
    %45 = vector.shape_cast %44 : vector<512xf32> to vector<1x512xf32>
    %c0_36 = arith.constant 0 : index
    %c0_37 = arith.constant 0 : index
    %c512 = arith.constant 512 : index
    %46 = vector.load %arg7[%c0_36, %c0_37, %c512] : memref<1x1x1024xf32, #tpu.memory_space<vmem>>, vector<1x1x512xf32>
    %47 = vector.shape_cast %46 : vector<1x1x512xf32> to vector<1x512xf32>
    %48 = vector.shape_cast %45 : vector<1x512xf32> to vector<1x1x512xf32>
    tpu.vector_store %arg7[%c0_36, %c0_37, %c512], %48 {strides = array<i32>} : memref<1x1x1024xf32, #tpu.memory_space<vmem>>, vector<1x1x512xf32>,
    return
  }
  func.func @transform_0(%arg0: i32) -> (i32, i32, i32) {
    %c0_i32 = arith.constant 0 : i32
    %c0_i32_0 = arith.constant 0 : i32
    %c0_i32_1 = arith.constant 0 : i32
    return %arg0, %c0_i32, %c0_i32_0 : i32, i32, i32
  }
  func.func @transform_1(%arg0: i32) -> (i32, i32, i32) {
    %c0_i32 = arith.constant 0 : i32
    %c0_i32_0 = arith.constant 0 : i32
    %c0_i32_1 = arith.constant 0 : i32
    %c0_i32_2 = arith.constant 0 : i32
    return %c0_i32, %c0_i32_0, %c0_i32_1 : i32, i32, i32
  }
  func.func @transform_2(%arg0: i32) -> (i32, i32) {
    %c0_i32 = arith.constant 0 : i32
    %c0_i32_0 = arith.constant 0 : i32
    %c0_i32_1 = arith.constant 0 : i32
    return %c0_i32, %c0_i32_0 : i32, i32
  }
  func.func @transform_3(%arg0: i32) -> (i32, i32) {
    %c0_i32 = arith.constant 0 : i32
    %c0_i32_0 = arith.constant 0 : i32
    %c0_i32_1 = arith.constant 0 : i32
    return %c0_i32, %c0_i32_0 : i32, i32
  }
  func.func @transform_4(%arg0: i32) -> (i32, i32) {
    %c0_i32 = arith.constant 0 : i32
    %c0_i32_0 = arith.constant 0 : i32
    %c0_i32_1 = arith.constant 0 : i32
    return %c0_i32, %c0_i32_0 : i32, i32
  }
  func.func @transform_5(%arg0: i32) -> (i32, i32, i32) {
    %c0_i32 = arith.constant 0 : i32
    %c0_i32_0 = arith.constant 0 : i32
    %c0_i32_1 = arith.constant 0 : i32
    return %arg0, %c0_i32, %c0_i32_0 : i32, i32, i32
  }
  func.func @transform_6(%arg0: i32) -> (i32, i32, i32) {
    %c0_i32 = arith.constant 0 : i32
    %c0_i32_0 = arith.constant 0 : i32
    %c0_i32_1 = arith.constant 0 : i32
    return %arg0, %c0_i32, %c0_i32_0 : i32, i32, i32
  }
}

module attributes {stable_mosaic.version = 11 : i64} {
  func.func @_bn_prelu_kernel(%arg0: i32, %arg1: memref<1x8x512xf32, #tpu.memory_space<vmem>>, %arg2: memref<1x512xf32, #tpu.memory_space<vmem>>, %arg3: memref<1x512xf32, #tpu.memory_space<vmem>>, %arg4: memref<1x512xf32, #tpu.memory_space<vmem>>, %arg5: memref<1x8x512xf32, #tpu.memory_space<vmem>>) attributes {dimension_semantics = [#tpu.dimension_semantics<parallel>], iteration_bounds = array<i64: 2>, scalar_prefetch = 0 : i64, scratch_operands = 0 : i64, tpu.core_type = #tpu.core_type<tc>, window_params = [{transform_indices = @transform_0, window_bounds = array<i64: 1, 8, 512>}, {pipeline_mode = #tpu.pipeline_mode<synchronous>, transform_indices = @transform_1, window_bounds = array<i64: 1, 512>}, {pipeline_mode = #tpu.pipeline_mode<synchronous>, transform_indices = @transform_2, window_bounds = array<i64: 1, 512>}, {pipeline_mode = #tpu.pipeline_mode<synchronous>, transform_indices = @transform_3, window_bounds = array<i64: 1, 512>}, {transform_indices = @transform_4, window_bounds = array<i64: 1, 8, 512>}]} {
    %c0 = arith.constant 0 : index
    %c0_0 = arith.constant 0 : index
    %c0_1 = arith.constant 0 : index
    %0 = vector.load %arg1[%c0, %c0_0, %c0_1] : memref<1x8x512xf32, #tpu.memory_space<vmem>>, vector<1x8x512xf32>
    %c0_2 = arith.constant 0 : index
    %c0_3 = arith.constant 0 : index
    %1 = vector.load %arg2[%c0_2, %c0_3] : memref<1x512xf32, #tpu.memory_space<vmem>>, vector<1x512xf32>
    %2 = vector.shape_cast %1 : vector<1x512xf32> to vector<1x1x512xf32>
    %3 = vector.broadcast %2 : vector<1x1x512xf32> to vector<1x8x512xf32>
    %4 = arith.mulf %0, %3 : vector<1x8x512xf32>
    %c0_4 = arith.constant 0 : index
    %c0_5 = arith.constant 0 : index
    %5 = vector.load %arg3[%c0_4, %c0_5] : memref<1x512xf32, #tpu.memory_space<vmem>>, vector<1x512xf32>
    %6 = vector.shape_cast %5 : vector<1x512xf32> to vector<1x1x512xf32>
    %7 = vector.broadcast %6 : vector<1x1x512xf32> to vector<1x8x512xf32>
    %8 = arith.addf %4, %7 : vector<1x8x512xf32>
    %cst = arith.constant 0.000000e+00 : f32
    %9 = vector.broadcast %cst : f32 to vector<1x8x512xf32>
    %10 = arith.cmpf oge, %8, %9 : vector<1x8x512xf32>
    %c0_6 = arith.constant 0 : index
    %c0_7 = arith.constant 0 : index
    %11 = vector.load %arg4[%c0_6, %c0_7] : memref<1x512xf32, #tpu.memory_space<vmem>>, vector<1x512xf32>
    %12 = vector.shape_cast %11 : vector<1x512xf32> to vector<1x1x512xf32>
    %13 = vector.broadcast %12 : vector<1x1x512xf32> to vector<1x8x512xf32>
    %14 = arith.mulf %13, %8 : vector<1x8x512xf32>
    %15 = arith.select %10, %8, %14 : vector<1x8x512xi1>, vector<1x8x512xf32>
    %c0_8 = arith.constant 0 : index
    %c0_9 = arith.constant 0 : index
    %c0_10 = arith.constant 0 : index
    %16 = vector.load %arg5[%c0_8, %c0_9, %c0_10] : memref<1x8x512xf32, #tpu.memory_space<vmem>>, vector<1x8x512xf32>
    tpu.vector_store %arg5[%c0_8, %c0_9, %c0_10], %15 {strides = array<i32>} : memref<1x8x512xf32, #tpu.memory_space<vmem>>, vector<1x8x512xf32>,
    return
  }
  func.func @transform_0(%arg0: i32) -> (i32, i32, i32) {
    %c0_i32 = arith.constant 0 : i32
    %c0_i32_0 = arith.constant 0 : i32
    %c0_i32_1 = arith.constant 0 : i32
    return %arg0, %c0_i32, %c0_i32_0 : i32, i32, i32
  }
  func.func @transform_1(%arg0: i32) -> (i32, i32) {
    %c0_i32 = arith.constant 0 : i32
    %c0_i32_0 = arith.constant 0 : i32
    %c0_i32_1 = arith.constant 0 : i32
    return %c0_i32, %c0_i32_0 : i32, i32
  }
  func.func @transform_2(%arg0: i32) -> (i32, i32) {
    %c0_i32 = arith.constant 0 : i32
    %c0_i32_0 = arith.constant 0 : i32
    %c0_i32_1 = arith.constant 0 : i32
    return %c0_i32, %c0_i32_0 : i32, i32
  }
  func.func @transform_3(%arg0: i32) -> (i32, i32) {
    %c0_i32 = arith.constant 0 : i32
    %c0_i32_0 = arith.constant 0 : i32
    %c0_i32_1 = arith.constant 0 : i32
    return %c0_i32, %c0_i32_0 : i32, i32
  }
  func.func @transform_4(%arg0: i32) -> (i32, i32, i32) {
    %c0_i32 = arith.constant 0 : i32
    %c0_i32_0 = arith.constant 0 : i32
    %c0_i32_1 = arith.constant 0 : i32
    return %arg0, %c0_i32, %c0_i32_0 : i32, i32, i32
  }
}

</mosaic_0001>

<llo_original>
// kernel: tile.50
$region0: #{tile.50}
  #allocation0 [shape = 's32[1]{0}', space=sflag, size = 0x4, scoped, tag = 'scoped memory for tile.50']
  %s0 = inlined_call_operand.vmem [shape: f32[8], index: 0, kind: input, shape index: {}]
  %s1 = inlined_call_operand.vmem [shape: f32[64,8], index: 1, kind: output, shape index: {}]
  // Predicated region
  $region2: #{tile.50} parent=0 // pred_check
    _
  $region3: #{tile.50} parent=0 // pred_check_branch
    %3 = sbr.rel (0) target = $region5
  $region4: #{tile.50} parent=0 // pred_region
    _
  $region5: #{tile.50} parent=0 // pred_fallthru
    _
  %v4 = vld [vmem:[%s0] ss:$0 sm:$0xff]
  %5 = vst [vmem:[%s1] sm:$0xff] %v4
  %s6 = scalar_lea.vmem %s1, 8
  %7 = vst [vmem:[%s6] sm:$0xff] %v4
  %s8 = scalar_lea.vmem %s1, 16
  %9 = vst [vmem:[%s8] sm:$0xff] %v4
  %s10 = scalar_lea.vmem %s1, 24
  %11 = vst [vmem:[%s10] sm:$0xff] %v4
  %s12 = scalar_lea.vmem %s1, 32
  %13 = vst [vmem:[%s12] sm:$0xff] %v4
  %s14 = scalar_lea.vmem %s1, 40
  %15 = vst [vmem:[%s14] sm:$0xff] %v4
  %s16 = scalar_lea.vmem %s1, 48
  %17 = vst [vmem:[%s16] sm:$0xff] %v4
  %s18 = scalar_lea.vmem %s1, 56
  %19 = vst [vmem:[%s18] sm:$0xff] %v4

// kernel: tile.51
$region0: #{tile.51}
  %s0 = inlined_call_operand.vmem [shape: f32[64,8], index: 0, kind: input, shape index: {}]
  %s1 = inlined_call_operand.vmem [shape: f32[1,512], index: 1, kind: output, shape index: {}]
  $region1: #{tile.51} parent=0
    #allocation0 [shape = 'u8[16384]{0}', space=vmem, size = 0x4000, scoped, tag = 'scoped mem for output reshape']
    %s2 = smov 3
    %v3 = vld [vmem:[%s0] ss:$16 sm:%s2]
    %s4 = smov 12
    %v5 = vld [vmem:[%s0] ss:$16 sm:%s4]
    %vm6 = vcmask 1043458
    %v7 = vsel %vm6, %v5, %v3
    %vm8 = vcmask 64512
    %9 = vst.msk [vmem:[#allocation0] ss:$8 sm:$0xf] %vm8, %v7
    %s10 = scalar_lea.vmem %s0, 15
    %s11 = smov 3
    %v12 = vld [vmem:[%s10] ss:$16 sm:%s11]
    %s13 = scalar_lea.vmem %s0, 15
    %s14 = smov 12
    %v15 = vld [vmem:[%s13] ss:$16 sm:%s14]
    %vm16 = vcmask 1043458
    %v17 = vsel %vm16, %v15, %v12
    %18 = vrot.lane.b32.xlu0 %v17, 120
    %v19 = vpop.permute.xlu0 %18
    %vm20 = vcmask 1048512
    %21 = vst.msk [vmem:[#allocation0] ss:$8 sm:$0xf] %vm20, %v19
    %s22 = scalar_lea.vmem %s0, 14
    %s23 = smov 3
    %v24 = vld [vmem:[%s22] ss:$16 sm:%s23]
    %s25 = scalar_lea.vmem %s0, 14
    %s26 = smov 12
    %v27 = vld [vmem:[%s25] ss:$16 sm:%s26]
    %vm28 = vcmask 1043458
    %v29 = vsel %vm28, %v27, %v24
    %30 = vrot.lane.b32.xlu0 %v29, 112
    %v31 = vpop.permute.xlu0 %30
    %vm32 = vcmask 982912
    %33 = vst.msk [vmem:[#allocation0] ss:$8 sm:$0xf] %vm32, %v31
    %s34 = scalar_lea.vmem %s0, 13
    %s35 = smov 3
    %v36 = vld [vmem:[%s34] ss:$16 sm:%s35]
    %s37 = scalar_lea.vmem %s0, 13
    %s38 = smov 12
    %v39 = vld [vmem:[%s37] ss:$16 sm:%s38]
    %vm40 = vcmask 1043458
    %v41 = vsel %vm40, %v39, %v36
    %42 = vrot.lane.b32.xlu0 %v41, 104
    %v43 = vpop.permute.xlu0 %42
    %vm44 = vcmask 917312
    %45 = vst.msk [vmem:[#allocation0] ss:$8 sm:$0xf] %vm44, %v43
    %s46 = scalar_lea.vmem %s0, 12
    %s47 = smov 3
    %v48 = vld [vmem:[%s46] ss:$16 sm:%s47]
    %s49 = scalar_lea.vmem %s0, 12
    %s50 = smov 12
    %v51 = vld [vmem:[%s49] ss:$16 sm:%s50]
    %vm52 = vcmask 1043458
    %v53 = vsel %vm52, %v51, %v48
    %54 = vrot.lane.b32.xlu0 %v53, 96
    %v55 = vpop.permute.xlu0 %54
    %vm56 = vcmask 851712
    %57 = vst.msk [vmem:[#allocation0] ss:$8 sm:$0xf] %vm56, %v55
    %s58 = scalar_lea.vmem %s0, 11
    %s59 = smov 3
    %v60 = vld [vmem:[%s58] ss:$16 sm:%s59]
    %s61 = scalar_lea.vmem %s0, 11
    %s62 = smov 12
    %v63 = vld [vmem:[%s61] ss:$16 sm:%s62]
    %vm64 = vcmask 1043458
    %v65 = vsel %vm64, %v63, %v60
    %66 = vrot.lane.b32.xlu0 %v65, 88
    %v67 = vpop.permute.xlu0 %66
    %vm68 = vcmask 786112
    %69 = vst.msk [vmem:[#allocation0] ss:$8 sm:$0xf] %vm68, %v67
    %s70 = scalar_lea.vmem %s0, 10
    %s71 = smov 3
    %v72 = vld [vmem:[%s70] ss:$16 sm:%s71]
    %s73 = scalar_lea.vmem %s0, 10
    %s74 = smov 12
    %v75 = vld [vmem:[%s73] ss:$16 sm:%s74]
    %vm76 = vcmask 1043458
    %v77 = vsel %vm76, %v75, %v72
    %78 = vrot.lane.b32.xlu0 %v77, 80
    %v79 = vpop.permute.xlu0 %78
    %vm80 = vcmask 720512
    %81 = vst.msk [vmem:[#allocation0] ss:$8 sm:$0xf] %vm80, %v79
    %s82 = scalar_lea.vmem %s0, 9
    %s83 = smov 3
    %v84 = vld [vmem:[%s82] ss:$16 sm:%s83]
    %s85 = scalar_lea.vmem %s0, 9
    %s86 = smov 12
    %v87 = vld [vmem:[%s85] ss:$16 sm:%s86]
    %vm88 = vcmask 1043458
    %v89 = vsel %vm88, %v87, %v84
    %90 = vrot.lane.b32.xlu0 %v89, 72
    %v91 = vpop.permute.xlu0 %90
    %vm92 = vcmask 654912
    %93 = vst.msk [vmem:[#allocation0] ss:$8 sm:$0xf] %vm92, %v91
    %s94 = scalar_lea.vmem %s0, 8
    %s95 = smov 3
    %v96 = vld [vmem:[%s94] ss:$16 sm:%s95]
    %s97 = scalar_lea.vmem %s0, 8
    %s98 = smov 12
    %v99 = vld [vmem:[%s97] ss:$16 sm:%s98]
    %vm100 = vcmask 1043458
    %v101 = vsel %vm100, %v99, %v96
    %102 = vrot.lane.b32.xlu0 %v101, 64
    %v103 = vpop.permute.xlu0 %102
    %vm104 = vcmask 589312
    %105 = vst.msk [vmem:[#allocation0] ss:$8 sm:$0xf] %vm104, %v103
    %s106 = scalar_lea.vmem %s0, 7
    %s107 = smov 3
    %v108 = vld [vmem:[%s106] ss:$16 sm:%s107]
    %s109 = scalar_lea.vmem %s0, 7
    %s110 = smov 12
    %v111 = vld [vmem:[%s109] ss:$16 sm:%s110]
    %vm112 = vcmask 1043458
    %v113 = vsel %vm112, %v111, %v108
    %114 = vrot.lane.b32.xlu0 %v113, 56
    %v115 = vpop.permute.xlu0 %114
    %vm116 = vcmask 523712
    %117 = vst.msk [vmem:[#allocation0] ss:$8 sm:$0xf] %vm116, %v115
    %s118 = scalar_lea.vmem %s0, 6
    %s119 = smov 3
    %v120 = vld [vmem:[%s118] ss:$16 sm:%s119]
    %s121 = scalar_lea.vmem %s0, 6
    %s122 = smov 12
    %v123 = vld [vmem:[%s121] ss:$16 sm:%s122]
    %vm124 = vcmask 1043458
    %v125 = vsel %vm124, %v123, %v120
    %126 = vrot.lane.b32.xlu0 %v125, 48
    %v127 = vpop.permute.xlu0 %126
    %vm128 = vcmask 458112
    %129 = vst.msk [vmem:[#allocation0] ss:$8 sm:$0xf] %vm128, %v127
    %s130 = scalar_lea.vmem %s0, 5
    %s131 = smov 3
    %v132 = vld [vmem:[%s130] ss:$16 sm:%s131]
    %s133 = scalar_lea.vmem %s0, 5
    %s134 = smov 12
    %v135 = vld [vmem:[%s133] ss:$16 sm:%s134]
    %vm136 = vcmask 1043458
    %v137 = vsel %vm136, %v135, %v132
    %138 = vrot.lane.b32.xlu0 %v137, 40
    %v139 = vpop.permute.xlu0 %138
    %vm140 = vcmask 392512
    %141 = vst.msk [vmem:[#allocation0] ss:$8 sm:$0xf] %vm140, %v139
    %s142 = scalar_lea.vmem %s0, 4
    %s143 = smov 3
    %v144 = vld [vmem:[%s142] ss:$16 sm:%s143]
    %s145 = scalar_lea.vmem %s0, 4
    %s146 = smov 12
    %v147 = vld [vmem:[%s145] ss:$16 sm:%s146]
    %vm148 = vcmask 1043458
    %v149 = vsel %vm148, %v147, %v144
    %150 = vrot.lane.b32.xlu0 %v149, 32
    %v151 = vpop.permute.xlu0 %150
    %vm152 = vcmask 326912
    %153 = vst.msk [vmem:[#allocation0] ss:$8 sm:$0xf] %vm152, %v151
    %s154 = scalar_lea.vmem %s0, 3
    %s155 = smov 3
    %v156 = vld [vmem:[%s154] ss:$16 sm:%s155]
    %s157 = scalar_lea.vmem %s0, 3
    %s158 = smov 12
    %v159 = vld [vmem:[%s157] ss:$16 sm:%s158]
    %vm160 = vcmask 1043458
    %v161 = vsel %vm160, %v159, %v156
    %162 = vrot.lane.b32.xlu0 %v161, 24
    %v163 = vpop.permute.xlu0 %162
    %vm164 = vcmask 261312
    %165 = vst.msk [vmem:[#allocation0] ss:$8 sm:$0xf] %vm164, %v163
    %s166 = scalar_lea.vmem %s0, 2
    %s167 = smov 3
    %v168 = vld [vmem:[%s166] ss:$16 sm:%s167]
    %s169 = scalar_lea.vmem %s0, 2
    %s170 = smov 12
    %v171 = vld [vmem:[%s169] ss:$16 sm:%s170]
    %vm172 = vcmask 1043458
    %v173 = vsel %vm172, %v171, %v168
    %174 = vrot.lane.b32.xlu0 %v173, 16
    %v175 = vpop.permute.xlu0 %174
    %vm176 = vcmask 195712
    %177 = vst.msk [vmem:[#allocation0] ss:$8 sm:$0xf] %vm176, %v175
    %s178 = scalar_lea.vmem %s0, 1
    %s179 = smov 3
    %v180 = vld [vmem:[%s178] ss:$16 sm:%s179]
    %s181 = scalar_lea.vmem %s0, 1
    %s182 = smov 12
    %v183 = vld [vmem:[%s181] ss:$16 sm:%s182]
    %vm184 = vcmask 1043458
    %v185 = vsel %vm184, %v183, %v180
    %186 = vrot.lane.b32.xlu0 %v185, 8
    %v187 = vpop.permute.xlu0 %186
    %vm188 = vcmask 130112
    %189 = vst.msk [vmem:[#allocation0] ss:$8 sm:$0xf] %vm188, %v187
    %s191 = ssub.s32 2, 1
    %v192 = vld [vmem:[#allocation0] sm:%s191]
    %s194 = ssub.s32 2, 1
    %195 = vst [vmem:[%s1] sm:%s194] %v192
    %s196 = scalar_lea.vmem [#allocation0], 8
    %v197 = vld [vmem:[%s196] sm:%s191]
    %s199 = ssub.s32 2, 1
    %s200 = scalar_lea.vmem %s1, 1
    %201 = vst [vmem:[%s200] sm:%s199] %v197
    %s202 = scalar_lea.vmem [#allocation0], 16
    %v203 = vld [vmem:[%s202] sm:%s191]
    %s205 = ssub.s32 2, 1
    %s206 = scalar_lea.vmem %s1, 2
    %207 = vst [vmem:[%s206] sm:%s205] %v203
    %s208 = scalar_lea.vmem [#allocation0], 24
    %v209 = vld [vmem:[%s208] sm:%s191]
    %s211 = ssub.s32 2, 1
    %s212 = scalar_lea.vmem %s1, 3
    %213 = vst [vmem:[%s212] sm:%s211] %v209

// kernel: encoder_stage_forward.4
$region0: #{encoder_stage_forward.4}
  #allocation0 [shape = 'u32[]', space=smem, size = 0x4, offset = 0x4, fixed_abs, tag = 'smem constant byte address 0x4 - core index']
  #allocation1 [shape = 'u32[72,128]{1,0:T(1,128)}', space=vmem, size = 0x9000, scoped, tag = 'internal scratch']
  #allocation2 [shape = 'f32[10,256]{1,0:T(8,128)}', space=vmem, size = 0x4000, scoped, tag = 'scratch operand']
  %s0 = inlined_call_operand.vmem [shape: f32[2,8,256], index: 0, kind: input, shape index: {}]
  %s1 = inlined_call_operand.vmem [shape: bf16[3,256,512], index: 1, kind: input, shape index: {}]
  %s2 = inlined_call_operand.vmem [shape: f32[1,256], index: 2, kind: input, shape index: {}, may-alias: {2,4}]
  %s3 = inlined_call_operand.vmem [shape: f32[1,256], index: 3, kind: input, shape index: {}]
  %s4 = inlined_call_operand.vmem [shape: f32[1,256], index: 4, kind: input, shape index: {}, may-alias: {2,4}]
  %s5 = inlined_call_operand.vmem [shape: f32[2,8,512], index: 5, kind: output, shape index: {0}]
  %s6 = inlined_call_operand.vmem [shape: f32[2,1,1024], index: 6, kind: output, shape index: {1}]
  %7 = xla_tuple %s5, %s6
  %s8 = sld [smem:[#allocation0]]
  $region61: #{encoder_stage_forward.4} parent=0
    _
  %s10 = ssub.s32 1, %s8
  %s11 = scalar_select 0, %s10, %s8
  loop: start=0, step=1, limit=4
  $region2: #{encoder_stage_forward.4} parent=0 // loop_pre_header
    _
  $region3: #{encoder_stage_forward.4} parent=0 // loop_header
    %s13 = sphi 0, %s17
    %p14 = scmp.ge.s32.totalorder %s13, 4
    %s23 = sphi 0, %s25
    %s26 = sphi 0, %s23
    %s27 = sphi 0, %s26
    %s43 = sphi 0, %s27
    %s47 = sphi 0, %s47
    %s49 = sphi 0, %s47
    %s50 = sphi 0, %s49
    %s64 = sphi 0, %s50
    %s68 = sphi 0, %s68
    %s70 = sphi 0, %s68
    %s71 = sphi 0, %s70
    %s85 = sphi 0, %s71
    %s89 = sphi 0, %s89
    %s91 = sphi 0, %s89
    %s92 = sphi 0, %s91
    %s106 = sphi 0, %s92
    %s110 = sphi 0, %s110
    %s112 = sphi 0, %s110
    %s113 = sphi 0, %s112
    %s127 = sphi 0, %s113
    %s133 = sphi 0, %s135
    %s136 = sphi 0, %s133
    %s137 = sphi 0, %s136
    %s153 = sphi 0, %s137
    %s159 = sphi 0, %s161
    %s162 = sphi 0, %s159
    %s163 = sphi 0, %s162
    %s179 = sphi 0, %s163
  $region4: #{encoder_stage_forward.4} parent=0 // loop_header_branch
    %16 = sbr.rel (%p14) target = $region8
  $region5: #{encoder_stage_forward.4} parent=0 // loop_body
    %s18 = ssub.s32 %s13, 1
    %s19 = ssub.s32 %s13, 2
    %s20 = sadd.s32 %s13, 1
    %s21 = ssub.s32 %s13, %s20
    %p22 = scmp.eq.s32.totalorder %s21, 0
    %s24 = sadd.s32 %s23, 1
    %s25 = scalar_select %p22, %s23, %s24
    %p28 = pneg %p22
    %p29 = scmp.eq.s32.totalorder %s13, 1
    %p30 = por %p28, %p29
    %p31 = scmp.ne.s32.totalorder %s23, %s26
    %p32 = scmp.eq.s32.totalorder %s13, 0
    %p33 = por %p31, %p32
    %p34 = scmp.ne.s32.totalorder %s23, %s26
    %p35 = scmp.eq.s32.totalorder %s18, 1
    %p36 = por %p34, %p35
    %p37 = scmp.ne.s32.totalorder %s26, %s27
    %p38 = scmp.eq.s32.totalorder %s18, 0
    %p39 = por %p37, %p38
    %p40 = scmp.ne.s32.totalorder %s26, %s27
    %p41 = scmp.eq.s32.totalorder %s19, 1
    %p42 = por %p40, %p41
    %p44 = scmp.ne.s32.totalorder %s27, %s43
    %p45 = scmp.eq.s32.totalorder %s19, 0
    %p46 = por %p44, %p45
    %s48 = sadd.s32 %s47, 1
    %p51 = scmp.eq.s32.totalorder %s13, 1
    %p52 = scmp.ne.s32.totalorder %s47, %s49
    %p53 = scmp.eq.s32.totalorder %s13, 0
    %p54 = por %p52, %p53
    %p55 = scmp.ne.s32.totalorder %s47, %s49
    %p56 = scmp.eq.s32.totalorder %s18, 1
    %p57 = por %p55, %p56
    %p58 = scmp.ne.s32.totalorder %s49, %s50
    %p59 = scmp.eq.s32.totalorder %s18, 0
    %p60 = por %p58, %p59
    %p61 = scmp.ne.s32.totalorder %s49, %s50
    %p62 = scmp.eq.s32.totalorder %s19, 1
    %p63 = por %p61, %p62
    %p65 = scmp.ne.s32.totalorder %s50, %s64
    %p66 = scmp.eq.s32.totalorder %s19, 0
    %p67 = por %p65, %p66
    %s69 = sadd.s32 %s68, 1
    %p72 = scmp.eq.s32.totalorder %s13, 1
    %p73 = scmp.ne.s32.totalorder %s68, %s70
    %p74 = scmp.eq.s32.totalorder %s13, 0
    %p75 = por %p73, %p74
    %p76 = scmp.ne.s32.totalorder %s68, %s70
    %p77 = scmp.eq.s32.totalorder %s18, 1
    %p78 = por %p76, %p77
    %p79 = scmp.ne.s32.totalorder %s70, %s71
    %p80 = scmp.eq.s32.totalorder %s18, 0
    %p81 = por %p79, %p80
    %p82 = scmp.ne.s32.totalorder %s70, %s71
    %p83 = scmp.eq.s32.totalorder %s19, 1
    %p84 = por %p82, %p83
    %p86 = scmp.ne.s32.totalorder %s71, %s85
    %p87 = scmp.eq.s32.totalorder %s19, 0
    %p88 = por %p86, %p87
    %s90 = sadd.s32 %s89, 1
    %p93 = scmp.eq.s32.totalorder %s13, 1
    %p94 = scmp.ne.s32.totalorder %s89, %s91
    %p95 = scmp.eq.s32.totalorder %s13, 0
    %p96 = por %p94, %p95
    %p97 = scmp.ne.s32.totalorder %s89, %s91
    %p98 = scmp.eq.s32.totalorder %s18, 1
    %p99 = por %p97, %p98
    %p100 = scmp.ne.s32.totalorder %s91, %s92
    %p101 = scmp.eq.s32.totalorder %s18, 0
    %p102 = por %p100, %p101
    %p103 = scmp.ne.s32.totalorder %s91, %s92
    %p104 = scmp.eq.s32.totalorder %s19, 1
    %p105 = por %p103, %p104
    %p107 = scmp.ne.s32.totalorder %s92, %s106
    %p108 = scmp.eq.s32.totalorder %s19, 0
    %p109 = por %p107, %p108
    %s111 = sadd.s32 %s110, 1
    %p114 = scmp.eq.s32.totalorder %s13, 1
    %p115 = scmp.ne.s32.totalorder %s110, %s112
    %p116 = scmp.eq.s32.totalorder %s13, 0
    %p117 = por %p115, %p116
    %p118 = scmp.ne.s32.totalorder %s110, %s112
    %p119 = scmp.eq.s32.totalorder %s18, 1
    %p120 = por %p118, %p119
    %p121 = scmp.ne.s32.totalorder %s112, %s113
    %p122 = scmp.eq.s32.totalorder %s18, 0
    %p123 = por %p121, %p122
    %p124 = scmp.ne.s32.totalorder %s112, %s113
    %p125 = scmp.eq.s32.totalorder %s19, 1
    %p126 = por %p124, %p125
    %p128 = scmp.ne.s32.totalorder %s113, %s127
    %p129 = scmp.eq.s32.totalorder %s19, 0
    %p130 = por %p128, %p129
    %s131 = ssub.s32 %s13, %s20
    %p132 = scmp.eq.s32.totalorder %s131, 0
    %s134 = sadd.s32 %s133, 1
    %s135 = scalar_select %p132, %s133, %s134
    %p138 = pneg %p132
    %p139 = scmp.eq.s32.totalorder %s13, 1
    %p140 = por %p138, %p139
    %p141 = scmp.ne.s32.totalorder %s133, %s136
    %p142 = scmp.eq.s32.totalorder %s13, 0
    %p143 = por %p141, %p142
    %p144 = scmp.ne.s32.totalorder %s133, %s136
    %p145 = scmp.eq.s32.totalorder %s18, 1
    %p146 = por %p144, %p145
    %p147 = scmp.ne.s32.totalorder %s136, %s137
    %p148 = scmp.eq.s32.totalorder %s18, 0
    %p149 = por %p147, %p148
    %p150 = scmp.ne.s32.totalorder %s136, %s137
    %p151 = scmp.eq.s32.totalorder %s19, 1
    %p152 = por %p150, %p151
    %p154 = scmp.ne.s32.totalorder %s137, %s153
    %p155 = scmp.eq.s32.totalorder %s19, 0
    %p156 = por %p154, %p155
    %s157 = ssub.s32 %s13, %s20
    %p158 = scmp.eq.s32.totalorder %s157, 0
    %s160 = sadd.s32 %s159, 1
    %s161 = scalar_select %p158, %s159, %s160
    %p164 = pneg %p158
    %p165 = scmp.eq.s32.totalorder %s13, 1
    %p166 = por %p164, %p165
    %p167 = scmp.ne.s32.totalorder %s159, %s162
    %p168 = scmp.eq.s32.totalorder %s13, 0
    %p169 = por %p167, %p168
    %p170 = scmp.ne.s32.totalorder %s159, %s162
    %p171 = scmp.eq.s32.totalorder %s18, 1
    %p172 = por %p170, %p171
    %p173 = scmp.ne.s32.totalorder %s162, %s163
    %p174 = scmp.eq.s32.totalorder %s18, 0
    %p175 = por %p173, %p174
    %p176 = scmp.ne.s32.totalorder %s162, %s163
    %p177 = scmp.eq.s32.totalorder %s19, 1
    %p178 = por %p176, %p177
    %p180 = scmp.ne.s32.totalorder %s163, %s179
    %p181 = scmp.eq.s32.totalorder %s19, 0
    %p182 = por %p180, %p181
    %p183 = scmp.le.s32.totalorder 1, %s13
    %p184 = scmp.lt.s32.totalorder %s13, 3
    %p185 = pnand %p183, %p184
    %p186 = pneg %p185
    // Predicated region
    $region9: #{encoder_stage_forward.4} parent=5 // pred_check
      _
    $region10: #{encoder_stage_forward.4} parent=5 // pred_check_branch
      %188 = sbr.rel (%p185) target = $region12
    $region11: #{encoder_stage_forward.4} parent=5 // pred_region
      %s189 = ssub.s32 %s13, 1
      // Predicated region
      $region13: #{encoder_stage_forward.4} parent=11 // pred_check
        %p190 = pneg %p60
      $region14: #{encoder_stage_forward.4} parent=11 // pred_check_branch
        %192 = sbr.rel (%p190) target = $region16
      $region15: #{encoder_stage_forward.4} parent=11 // pred_region
        _
      $region16: #{encoder_stage_forward.4} parent=11 // pred_fallthru
        _
      // Predicated region
      $region17: #{encoder_stage_forward.4} parent=11 // pred_check
        %p193 = pneg %p81
      $region18: #{encoder_stage_forward.4} parent=11 // pred_check_branch
        %195 = sbr.rel (%p193) target = $region20
      $region19: #{encoder_stage_forward.4} parent=11 // pred_region
        _
      $region20: #{encoder_stage_forward.4} parent=11 // pred_fallthru
        _
      // Predicated region
      $region21: #{encoder_stage_forward.4} parent=11 // pred_check
        %p196 = pneg %p102
      $region22: #{encoder_stage_forward.4} parent=11 // pred_check_branch
        %198 = sbr.rel (%p196) target = $region24
      $region23: #{encoder_stage_forward.4} parent=11 // pred_region
        _
      $region24: #{encoder_stage_forward.4} parent=11 // pred_fallthru
        _
      // Predicated region
      $region25: #{encoder_stage_forward.4} parent=11 // pred_check
        %p199 = pneg %p123
      $region26: #{encoder_stage_forward.4} parent=11 // pred_check_branch
        %201 = sbr.rel (%p199) target = $region28
      $region27: #{encoder_stage_forward.4} parent=11 // pred_region
        _
      $region28: #{encoder_stage_forward.4} parent=11 // pred_fallthru
        _
    $region12: #{encoder_stage_forward.4} parent=5 // pred_fallthru
      _
    %p202 = scmp.lt.s32.totalorder %s13, 2
    // Predicated region
    $region29: #{encoder_stage_forward.4} parent=5 // pred_check
      %p203 = pneg %p202
    $region30: #{encoder_stage_forward.4} parent=5 // pred_check_branch
      %205 = sbr.rel (%p203) target = $region32
    $region31: #{encoder_stage_forward.4} parent=5 // pred_region
      // Predicated region
      $region33: #{encoder_stage_forward.4} parent=31 // pred_check
        %p206 = pneg %p33
      $region34: #{encoder_stage_forward.4} parent=31 // pred_check_branch
        %208 = sbr.rel (%p206) target = $region36
      $region35: #{encoder_stage_forward.4} parent=31 // pred_region
        %p209 = scmp.lt.s32.totalorder %s13, 1
        %s210 = scalar_select %p209, %s13, 1
        %s211 = smul.addr %s210, 2
        %s212 = smul.addr %s211, 8
        %s213 = scalar_lea.vmem %s0, %s212
      $region36: #{encoder_stage_forward.4} parent=31 // pred_fallthru
        _
    $region32: #{encoder_stage_forward.4} parent=5 // pred_fallthru
      _
    %p214 = scmp.le.s32.totalorder 1, %s13
    %p215 = scmp.lt.s32.totalorder %s13, 3
    %p216 = pnand %p214, %p215
    %p217 = pneg %p216
    // Predicated region
    $region37: #{encoder_stage_forward.4} parent=5 // pred_check
      _
    $region38: #{encoder_stage_forward.4} parent=5 // pred_check_branch
      %219 = sbr.rel (%p216) target = $region40
    $region39: #{encoder_stage_forward.4} parent=5 // pred_region
      %s220 = ssub.s32 %s13, 1
      %p221 = scmp.lt.s32.totalorder %s18, 1
      %s222 = scalar_select %p221, %s18, 1
      %s223 = smul.addr %s222, 2
      %s224 = smul.addr %s223, 8
      %s225 = scalar_lea.vmem %s0, %s224
      %p226 = pneg %p39
      %p227 = pneg %p36
      %p228 = pneg %p60
      %p229 = pneg %p57
      %p230 = pneg %p81
      %p231 = pneg %p78
      %p232 = pneg %p102
      %p233 = pneg %p99
      %p234 = pneg %p123
      %p235 = pneg %p120
      %p236 = pneg %p149
      %p237 = pneg %p146
      %p238 = scmp.lt.s32.totalorder %s18, 1
      %s239 = scalar_select %p238, %s18, 1
      %s240 = smul.addr %s239, 4
      %s241 = smul.addr %s240, 8
      %s242 = scalar_lea.vmem %s5, %s241
      %p243 = pneg %p175
      %p244 = pneg %p172
      %p245 = scmp.lt.s32.totalorder %s18, 1
      %s246 = scalar_select %p245, %s18, 1
      %s247 = smul.addr %s246, 8
      %s248 = scalar_lea.vmem %s6, %s247
      %p249 = scmp.lt.s32.totalorder %s18, 1
      %s250 = scalar_select %p249, %s18, 1
      %s251 = smul.addr %s250, 2
      %s252 = smul.addr %s251, 8
      %s253 = scalar_lea.vmem %s0, %s252
      %p254 = scmp.lt.s32.totalorder %s18, 1
      %s255 = scalar_select %p254, %s18, 1
      %s256 = smul.addr %s255, 4
      %s257 = smul.addr %s256, 8
      %s258 = scalar_lea.vmem %s5, %s257
      %p259 = scmp.lt.s32.totalorder %s18, 1
      %s260 = scalar_select %p259, %s18, 1
      %s261 = smul.addr %s260, 8
      %s262 = scalar_lea.vmem %s6, %s261
      %v263 = vld [vmem:[%s253] sm:$0xff]
      %v264 = vld [vmem:[%s253 + $0x8] sm:$0xff]
      %v265 = vld [vmem:[%s2] sm:$0x3]
      %v267 = vperm.slane %v265, 0
      %v268 = vperm.slane %v265, 1
      %v271 = vmul.f32 %v263, %v267
      %v272 = vmul.f32 %v264, %v268
      %v273 = vld [vmem:[%s3] sm:$0x3]
      %v275 = vperm.slane %v273, 0
      %v276 = vperm.slane %v273, 1
      %v279 = vadd.f32 %v271, %v275
      %v280 = vadd.f32 %v272, %v276
      %vm281 = vcmp.ge.f32.partialorder %v279, 0.0
      %vm282 = vcmp.ge.f32.partialorder %v280, 0.0
      %v283 = vld [vmem:[%s4] sm:$0x3]
      %v285 = vperm.slane %v283, 0
      %v286 = vperm.slane %v283, 1
      %v289 = vmul.f32 %v285, %v279
      %v290 = vmul.f32 %v286, %v280
      %v291 = vsel %vm281, %v279, %v289
      %v292 = vsel %vm282, %v280, %v290
      %v293 = vlaneseq
      %vm294 = vcmp.ge.s32.totalorder %v293, 0
      %vm295 = vcmp.lt.s32.totalorder %v293, 256
      %vm296 = vmand %vm294, %vm295
      %297 = vst.msk [vmem:[#allocation2] ss:$8 sm:$0x3] %vm296, 0.0
      %298 = vst.msk [vmem:[#allocation2] ss:$8 sm:$0x0] %vm296, 0.0
      %s299 = scalar_lea.vmem [#allocation2], 17
      %300 = vst.msk [vmem:[%s299] ss:$8 sm:$0x3] %vm296, 0.0
      %301 = vst.msk [vmem:[%s299] ss:$8 sm:$0x0] %vm296, 0.0
      %v304 = vrot.slane %v291, 7
      %v305 = vrot.slane %v292, 7
      %308 = vst [vmem:[#allocation2] sm:$0xfe] %v304
      %309 = vst [vmem:[#allocation2 + $0x8] sm:$0xfe] %v305
      %310 = vst [vmem:[#allocation2 + $0x10] sm:$0x1] %v304
      %311 = vst [vmem:[#allocation2 + $0x18] sm:$0x1] %v305
      %v312 = vld [vmem:[#allocation2] sm:$0xff]
      %v313 = vld [vmem:[#allocation2 + $0x8] sm:$0xff]
      %v314 = vpack.c.bf16 %v312, %v312
      %v315 = vpack.c.bf16 %v313, %v313
      %v316 = vld [vmem:[%s1] sm:$0xff]
      %v317 = vld [vmem:[%s1 + $0x8] sm:$0xff]
      %v318 = vld [vmem:[%s1 + $0x10] sm:$0xff]
      %v319 = vld [vmem:[%s1 + $0x18] sm:$0xff]
      %v320 = vld [vmem:[%s1 + $0x20] sm:$0xff]
      %v321 = vld [vmem:[%s1 + $0x28] sm:$0xff]
      %v322 = vld [vmem:[%s1 + $0x30] sm:$0xff]
      %v323 = vld [vmem:[%s1 + $0x38] sm:$0xff]
      %v324 = vld [vmem:[%s1 + $0x40] sm:$0xff]
      %v325 = vld [vmem:[%s1 + $0x48] sm:$0xff]
      %v326 = vld [vmem:[%s1 + $0x50] sm:$0xff]
      %v327 = vld [vmem:[%s1 + $0x58] sm:$0xff]
      %v328 = vld [vmem:[%s1 + $0x60] sm:$0xff]
      %v329 = vld [vmem:[%s1 + $0x68] sm:$0xff]
      %v330 = vld [vmem:[%s1 + $0x70] sm:$0xff]
      %v331 = vld [vmem:[%s1 + $0x78] sm:$0xff]
      %v332 = vld [vmem:[%s1 + $0x80] sm:$0xff]
      %v333 = vld [vmem:[%s1 + $0x88] sm:$0xff]
      %v334 = vld [vmem:[%s1 + $0x90] sm:$0xff]
      %v335 = vld [vmem:[%s1 + $0x98] sm:$0xff]
      %v336 = vld [vmem:[%s1 + $0xa0] sm:$0xff]
      %v337 = vld [vmem:[%s1 + $0xa8] sm:$0xff]
      %v338 = vld [vmem:[%s1 + $0xb0] sm:$0xff]
      %v339 = vld [vmem:[%s1 + $0xb8] sm:$0xff]
      %v340 = vld [vmem:[%s1 + $0xc0] sm:$0xff]
      %v341 = vld [vmem:[%s1 + $0xc8] sm:$0xff]
      %v342 = vld [vmem:[%s1 + $0xd0] sm:$0xff]
      %v343 = vld [vmem:[%s1 + $0xd8] sm:$0xff]
      %v344 = vld [vmem:[%s1 + $0xe0] sm:$0xff]
      %v345 = vld [vmem:[%s1 + $0xe8] sm:$0xff]
      %v346 = vld [vmem:[%s1 + $0xf0] sm:$0xff]
      %v347 = vld [vmem:[%s1 + $0xf8] sm:$0xff]
      %v348 = vld [vmem:[%s1 + $0x100] sm:$0xff]
      %v349 = vld [vmem:[%s1 + $0x108] sm:$0xff]
      %v350 = vld [vmem:[%s1 + $0x110] sm:$0xff]
      %v351 = vld [vmem:[%s1 + $0x118] sm:$0xff]
      %v352 = vld [vmem:[%s1 + $0x120] sm:$0xff]
      %v353 = vld [vmem:[%s1 + $0x128] sm:$0xff]
      %v354 = vld [vmem:[%s1 + $0x130] sm:$0xff]
      %v355 = vld [vmem:[%s1 + $0x138] sm:$0xff]
      %v356 = vld [vmem:[%s1 + $0x140] sm:$0xff]
      %v357 = vld [vmem:[%s1 + $0x148] sm:$0xff]
      %v358 = vld [vmem:[%s1 + $0x150] sm:$0xff]
      %v359 = vld [vmem:[%s1 + $0x158] sm:$0xff]
      %v360 = vld [vmem:[%s1 + $0x160] sm:$0xff]
      %v361 = vld [vmem:[%s1 + $0x168] sm:$0xff]
      %v362 = vld [vmem:[%s1 + $0x170] sm:$0xff]
      %v363 = vld [vmem:[%s1 + $0x178] sm:$0xff]
      %v364 = vld [vmem:[%s1 + $0x180] sm:$0xff]
      %v365 = vld [vmem:[%s1 + $0x188] sm:$0xff]
      %v366 = vld [vmem:[%s1 + $0x190] sm:$0xff]
      %v367 = vld [vmem:[%s1 + $0x198] sm:$0xff]
      %v368 = vld [vmem:[%s1 + $0x1a0] sm:$0xff]
      %v369 = vld [vmem:[%s1 + $0x1a8] sm:$0xff]
      %v370 = vld [vmem:[%s1 + $0x1b0] sm:$0xff]
      %v371 = vld [vmem:[%s1 + $0x1b8] sm:$0xff]
      %v372 = vld [vmem:[%s1 + $0x1c0] sm:$0xff]
      %v373 = vld [vmem:[%s1 + $0x1c8] sm:$0xff]
      %v374 = vld [vmem:[%s1 + $0x1d0] sm:$0xff]
      %v375 = vld [vmem:[%s1 + $0x1d8] sm:$0xff]
      %v376 = vld [vmem:[%s1 + $0x1e0] sm:$0xff]
      %v377 = vld [vmem:[%s1 + $0x1e8] sm:$0xff]
      %v378 = vld [vmem:[%s1 + $0x1f0] sm:$0xff]
      %v379 = vld [vmem:[%s1 + $0x1f8] sm:$0xff]
      %v380 = vld [vmem:[#allocation2] sm:$0xfe]
      %v381 = vld [vmem:[#allocation2 + $0x8] sm:$0xfe]
      %v382 = vld [vmem:[#allocation2 + $0x10] sm:$0x1]
      %v383 = vld [vmem:[#allocation2 + $0x18] sm:$0x1]
      %v384 = vpack.c.bf16 %v382, %v380
      %v385 = vpack.c.bf16 %v383, %v381
      %s386 = scalar_lea.vmem %s1, 512
      %v387 = vld [vmem:[%s386] sm:$0xff]
      %v388 = vld [vmem:[%s386 + $0x8] sm:$0xff]
      %v389 = vld [vmem:[%s386 + $0x10] sm:$0xff]
      %v390 = vld [vmem:[%s386 + $0x18] sm:$0xff]
      %v391 = vld [vmem:[%s386 + $0x20] sm:$0xff]
      %v392 = vld [vmem:[%s386 + $0x28] sm:$0xff]
      %v393 = vld [vmem:[%s386 + $0x30] sm:$0xff]
      %v394 = vld [vmem:[%s386 + $0x38] sm:$0xff]
      %v395 = vld [vmem:[%s386 + $0x40] sm:$0xff]
      %v396 = vld [vmem:[%s386 + $0x48] sm:$0xff]
      %v397 = vld [vmem:[%s386 + $0x50] sm:$0xff]
      %v398 = vld [vmem:[%s386 + $0x58] sm:$0xff]
      %v399 = vld [vmem:[%s386 + $0x60] sm:$0xff]
      %v400 = vld [vmem:[%s386 + $0x68] sm:$0xff]
      %v401 = vld [vmem:[%s386 + $0x70] sm:$0xff]
      %v402 = vld [vmem:[%s386 + $0x78] sm:$0xff]
      %v403 = vld [vmem:[%s386 + $0x80] sm:$0xff]
      %v404 = vld [vmem:[%s386 + $0x88] sm:$0xff]
      %v405 = vld [vmem:[%s386 + $0x90] sm:$0xff]
      %v406 = vld [vmem:[%s386 + $0x98] sm:$0xff]
      %v407 = vld [vmem:[%s386 + $0xa0] sm:$0xff]
      %v408 = vld [vmem:[%s386 + $0xa8] sm:$0xff]
      %v409 = vld [vmem:[%s386 + $0xb0] sm:$0xff]
      %v410 = vld [vmem:[%s386 + $0xb8] sm:$0xff]
      %v411 = vld [vmem:[%s386 + $0xc0] sm:$0xff]
      %v412 = vld [vmem:[%s386 + $0xc8] sm:$0xff]
      %v413 = vld [vmem:[%s386 + $0xd0] sm:$0xff]
      %v414 = vld [vmem:[%s386 + $0xd8] sm:$0xff]
      %v415 = vld [vmem:[%s386 + $0xe0] sm:$0xff]
      %v416 = vld [vmem:[%s386 + $0xe8] sm:$0xff]
      %v417 = vld [vmem:[%s386 + $0xf0] sm:$0xff]
      %v418 = vld [vmem:[%s386 + $0xf8] sm:$0xff]
      %v419 = vld [vmem:[%s386 + $0x100] sm:$0xff]
      %v420 = vld [vmem:[%s386 + $0x108] sm:$0xff]
      %v421 = vld [vmem:[%s386 + $0x110] sm:$0xff]
      %v422 = vld [vmem:[%s386 + $0x118] sm:$0xff]
      %v423 = vld [vmem:[%s386 + $0x120] sm:$0xff]
      %v424 = vld [vmem:[%s386 + $0x128] sm:$0xff]
      %v425 = vld [vmem:[%s386 + $0x130] sm:$0xff]
      %v426 = vld [vmem:[%s386 + $0x138] sm:$0xff]
      %v427 = vld [vmem:[%s386 + $0x140] sm:$0xff]
      %v428 = vld [vmem:[%s386 + $0x148] sm:$0xff]
      %v429 = vld [vmem:[%s386 + $0x150] sm:$0xff]
      %v430 = vld [vmem:[%s386 + $0x158] sm:$0xff]
      %v431 = vld [vmem:[%s386 + $0x160] sm:$0xff]
      %v432 = vld [vmem:[%s386 + $0x168] sm:$0xff]
      %v433 = vld [vmem:[%s386 + $0x170] sm:$0xff]
      %v434 = vld [vmem:[%s386 + $0x178] sm:$0xff]
      %v435 = vld [vmem:[%s386 + $0x180] sm:$0xff]
      %v436 = vld [vmem:[%s386 + $0x188] sm:$0xff]
      %v437 = vld [vmem:[%s386 + $0x190] sm:$0xff]
      %v438 = vld [vmem:[%s386 + $0x198] sm:$0xff]
      %v439 = vld [vmem:[%s386 + $0x1a0] sm:$0xff]
      %v440 = vld [vmem:[%s386 + $0x1a8] sm:$0xff]
      %v441 = vld [vmem:[%s386 + $0x1b0] sm:$0xff]
      %v442 = vld [vmem:[%s386 + $0x1b8] sm:$0xff]
      %v443 = vld [vmem:[%s386 + $0x1c0] sm:$0xff]
      %v444 = vld [vmem:[%s386 + $0x1c8] sm:$0xff]
      %v445 = vld [vmem:[%s386 + $0x1d0] sm:$0xff]
      %v446 = vld [vmem:[%s386 + $0x1d8] sm:$0xff]
      %v447 = vld [vmem:[%s386 + $0x1e0] sm:$0xff]
      %v448 = vld [vmem:[%s386 + $0x1e8] sm:$0xff]
      %v449 = vld [vmem:[%s386 + $0x1f0] sm:$0xff]
      %v450 = vld [vmem:[%s386 + $0x1f8] sm:$0xff]
      %v452 = vshrl.u32 %v384, 16
      %v454 = vshll.u32 %v384, 16
      %v456 = vrot.slane %v454, 1
      %v457 = vor.u32 %v452, %v456
      %v459 = vshrl.u32 %v385, 16
      %v461 = vshll.u32 %v385, 16
      %v463 = vrot.slane %v461, 1
      %v464 = vor.u32 %v459, %v463
      %v531 = vunpack.c.l.b16 %v387
      %v532 = vunpack.c.h.b16 %v387
      %v533 = vunpack.c.l.b16 %v388
      %v534 = vunpack.c.h.b16 %v388
      %v535 = vunpack.c.l.b16 %v389
      %v536 = vunpack.c.h.b16 %v389
      %v537 = vunpack.c.l.b16 %v390
      %v538 = vunpack.c.h.b16 %v390
      %v539 = vunpack.c.l.b16 %v391
      %v540 = vunpack.c.h.b16 %v391
      %v541 = vunpack.c.l.b16 %v392
      %v542 = vunpack.c.h.b16 %v392
      %v543 = vunpack.c.l.b16 %v393
      %v544 = vunpack.c.h.b16 %v393
      %v545 = vunpack.c.l.b16 %v394
      %v546 = vunpack.c.h.b16 %v394
      %v547 = vunpack.c.l.b16 %v395
      %v548 = vunpack.c.h.b16 %v395
      %v549 = vunpack.c.l.b16 %v396
      %v550 = vunpack.c.h.b16 %v396
      %v551 = vunpack.c.l.b16 %v397
      %v552 = vunpack.c.h.b16 %v397
      %v553 = vunpack.c.l.b16 %v398
      %v554 = vunpack.c.h.b16 %v398
      %v555 = vunpack.c.l.b16 %v399
      %v556 = vunpack.c.h.b16 %v399
      %v557 = vunpack.c.l.b16 %v400
      %v558 = vunpack.c.h.b16 %v400
      %v559 = vunpack.c.l.b16 %v401
      %v560 = vunpack.c.h.b16 %v401
      %v561 = vunpack.c.l.b16 %v402
      %v562 = vunpack.c.h.b16 %v402
      %v563 = vunpack.c.l.b16 %v403
      %v564 = vunpack.c.h.b16 %v403
      %v565 = vunpack.c.l.b16 %v404
      %v566 = vunpack.c.h.b16 %v404
      %v567 = vunpack.c.l.b16 %v405
      %v568 = vunpack.c.h.b16 %v405
      %v569 = vunpack.c.l.b16 %v406
      %v570 = vunpack.c.h.b16 %v406
      %v571 = vunpack.c.l.b16 %v407
      %v572 = vunpack.c.h.b16 %v407
      %v573 = vunpack.c.l.b16 %v408
      %v574 = vunpack.c.h.b16 %v408
      %v575 = vunpack.c.l.b16 %v409
      %v576 = vunpack.c.h.b16 %v409
      %v577 = vunpack.c.l.b16 %v410
      %v578 = vunpack.c.h.b16 %v410
      %v579 = vunpack.c.l.b16 %v411
      %v580 = vunpack.c.h.b16 %v411
      %v581 = vunpack.c.l.b16 %v412
      %v582 = vunpack.c.h.b16 %v412
      %v583 = vunpack.c.l.b16 %v413
      %v584 = vunpack.c.h.b16 %v413
      %v585 = vunpack.c.l.b16 %v414
      %v586 = vunpack.c.h.b16 %v414
      %v587 = vunpack.c.l.b16 %v415
      %v588 = vunpack.c.h.b16 %v415
      %v589 = vunpack.c.l.b16 %v416
      %v590 = vunpack.c.h.b16 %v416
      %v591 = vunpack.c.l.b16 %v417
      %v592 = vunpack.c.h.b16 %v417
      %v593 = vunpack.c.l.b16 %v418
      %v594 = vunpack.c.h.b16 %v418
      %v595 = vunpack.c.l.b16 %v419
      %v596 = vunpack.c.h.b16 %v419
      %v597 = vunpack.c.l.b16 %v420
      %v598 = vunpack.c.h.b16 %v420
      %v599 = vunpack.c.l.b16 %v421
      %v600 = vunpack.c.h.b16 %v421
      %v601 = vunpack.c.l.b16 %v422
      %v602 = vunpack.c.h.b16 %v422
      %v603 = vunpack.c.l.b16 %v423
      %v604 = vunpack.c.h.b16 %v423
      %v605 = vunpack.c.l.b16 %v424
      %v606 = vunpack.c.h.b16 %v424
      %v607 = vunpack.c.l.b16 %v425
      %v608 = vunpack.c.h.b16 %v425
      %v609 = vunpack.c.l.b16 %v426
      %v610 = vunpack.c.h.b16 %v426
      %v611 = vunpack.c.l.b16 %v427
      %v612 = vunpack.c.h.b16 %v427
      %v613 = vunpack.c.l.b16 %v428
      %v614 = vunpack.c.h.b16 %v428
      %v615 = vunpack.c.l.b16 %v429
      %v616 = vunpack.c.h.b16 %v429
      %v617 = vunpack.c.l.b16 %v430
      %v618 = vunpack.c.h.b16 %v430
      %v619 = vunpack.c.l.b16 %v431
      %v620 = vunpack.c.h.b16 %v431
      %v621 = vunpack.c.l.b16 %v432
      %v622 = vunpack.c.h.b16 %v432
      %v623 = vunpack.c.l.b16 %v433
      %v624 = vunpack.c.h.b16 %v433
      %v625 = vunpack.c.l.b16 %v434
      %v626 = vunpack.c.h.b16 %v434
      %v627 = vunpack.c.l.b16 %v435
      %v628 = vunpack.c.h.b16 %v435
      %v629 = vunpack.c.l.b16 %v436
      %v630 = vunpack.c.h.b16 %v436
      %v631 = vunpack.c.l.b16 %v437
      %v632 = vunpack.c.h.b16 %v437
      %v633 = vunpack.c.l.b16 %v438
      %v634 = vunpack.c.h.b16 %v438
      %v635 = vunpack.c.l.b16 %v439
      %v636 = vunpack.c.h.b16 %v439
      %v637 = vunpack.c.l.b16 %v440
      %v638 = vunpack.c.h.b16 %v440
      %v639 = vunpack.c.l.b16 %v441
      %v640 = vunpack.c.h.b16 %v441
      %v641 = vunpack.c.l.b16 %v442
      %v642 = vunpack.c.h.b16 %v442
      %v643 = vunpack.c.l.b16 %v443
      %v644 = vunpack.c.h.b16 %v443
      %v645 = vunpack.c.l.b16 %v444
      %v646 = vunpack.c.h.b16 %v444
      %v647 = vunpack.c.l.b16 %v445
      %v648 = vunpack.c.h.b16 %v445
      %v649 = vunpack.c.l.b16 %v446
      %v650 = vunpack.c.h.b16 %v446
      %v651 = vunpack.c.l.b16 %v447
      %v652 = vunpack.c.h.b16 %v447
      %v653 = vunpack.c.l.b16 %v448
      %v654 = vunpack.c.h.b16 %v448
      %v655 = vunpack.c.l.b16 %v449
      %v656 = vunpack.c.h.b16 %v449
      %v657 = vunpack.c.l.b16 %v450
      %v658 = vunpack.c.h.b16 %v450
      %v659 = vpack.c.b16 %v535, %v531
      %v660 = vpack.c.b16 %v536, %v532
      %v661 = vpack.c.b16 %v537, %v533
      %v662 = vpack.c.b16 %v538, %v534
      %v663 = vpack.c.b16 %v543, %v539
      %v664 = vpack.c.b16 %v544, %v540
      %v665 = vpack.c.b16 %v545, %v541
      %v666 = vpack.c.b16 %v546, %v542
      %v667 = vpack.c.b16 %v551, %v547
      %v668 = vpack.c.b16 %v552, %v548
      %v669 = vpack.c.b16 %v553, %v549
      %v670 = vpack.c.b16 %v554, %v550
      %v671 = vpack.c.b16 %v559, %v555
      %v672 = vpack.c.b16 %v560, %v556
      %v673 = vpack.c.b16 %v561, %v557
      %v674 = vpack.c.b16 %v562, %v558
      %v675 = vpack.c.b16 %v567, %v563
      %v676 = vpack.c.b16 %v568, %v564
      %v677 = vpack.c.b16 %v569, %v565
      %v678 = vpack.c.b16 %v570, %v566
      %v679 = vpack.c.b16 %v575, %v571
      %v680 = vpack.c.b16 %v576, %v572
      %v681 = vpack.c.b16 %v577, %v573
      %v682 = vpack.c.b16 %v578, %v574
      %v683 = vpack.c.b16 %v583, %v579
      %v684 = vpack.c.b16 %v584, %v580
      %v685 = vpack.c.b16 %v585, %v581
      %v686 = vpack.c.b16 %v586, %v582
      %v687 = vpack.c.b16 %v591, %v587
      %v688 = vpack.c.b16 %v592, %v588
      %v689 = vpack.c.b16 %v593, %v589
      %v690 = vpack.c.b16 %v594, %v590
      %v691 = vpack.c.b16 %v599, %v595
      %v692 = vpack.c.b16 %v600, %v596
      %v693 = vpack.c.b16 %v601, %v597
      %v694 = vpack.c.b16 %v602, %v598
      %v695 = vpack.c.b16 %v607, %v603
      %v696 = vpack.c.b16 %v608, %v604
      %v697 = vpack.c.b16 %v609, %v605
      %v698 = vpack.c.b16 %v610, %v606
      %v699 = vpack.c.b16 %v615, %v611
      %v700 = vpack.c.b16 %v616, %v612
      %v701 = vpack.c.b16 %v617, %v613
      %v702 = vpack.c.b16 %v618, %v614
      %v703 = vpack.c.b16 %v623, %v619
      %v704 = vpack.c.b16 %v624, %v620
      %v705 = vpack.c.b16 %v625, %v621
      %v706 = vpack.c.b16 %v626, %v622
      %v707 = vpack.c.b16 %v631, %v627
      %v708 = vpack.c.b16 %v632, %v628
      %v709 = vpack.c.b16 %v633, %v629
      %v710 = vpack.c.b16 %v634, %v630
      %v711 = vpack.c.b16 %v639, %v635
      %v712 = vpack.c.b16 %v640, %v636
      %v713 = vpack.c.b16 %v641, %v637
      %v714 = vpack.c.b16 %v642, %v638
      %v715 = vpack.c.b16 %v647, %v643
      %v716 = vpack.c.b16 %v648, %v644
      %v717 = vpack.c.b16 %v649, %v645
      %v718 = vpack.c.b16 %v650, %v646
      %v719 = vpack.c.b16 %v655, %v651
      %v720 = vpack.c.b16 %v656, %v652
      %v721 = vpack.c.b16 %v657, %v653
      %v722 = vpack.c.b16 %v658, %v654
      %787 = vmatpush.bf16.msra.mxu0 %v687
      %788 = vmatpush.bf16.msra.mxu0 %v683
      %789 = vmatpush.bf16.msra.mxu0 %v679
      %790 = vmatpush.bf16.msra.mxu0 %v675
      %791 = vmatpush.bf16.msra.mxu0 %v671
      %792 = vmatpush.bf16.msra.mxu0 %v667
      %793 = vmatpush.bf16.msra.mxu0 %v663
      %794 = vmatpush.bf16.msra.mxu0 %v659
      %795 = vmatmul.bf16.gmra.mxu0 %v457
      %v796 = vpop.f32.mrf.mxu0
      %v797 = vadd.f32 0.0, %v796
      %v798 = vpop.f32.mrf.mxu0
      %799 = vdwg.mxu0
      %800 = vmatpush.bf16.msra.mxu0 %v719
      %801 = vmatpush.bf16.msra.mxu0 %v715
      %802 = vmatpush.bf16.msra.mxu0 %v711
      %803 = vmatpush.bf16.msra.mxu0 %v707
      %804 = vmatpush.bf16.msra.mxu0 %v703
      %805 = vmatpush.bf16.msra.mxu0 %v699
      %806 = vmatpush.bf16.msra.mxu0 %v695
      %807 = vmatpush.bf16.msra.mxu0 %v691
      %808 = vmatmul.bf16.gmra.mxu0 %v464
      %v809 = vpop.f32.mrf.mxu0
      %v810 = vadd.f32 %v797, %v809
      %v811 = vpop.f32.mrf.mxu0
      %812 = vdwg.mxu0
      %813 = vmatpush.bf16.msra.mxu0 %v688
      %814 = vmatpush.bf16.msra.mxu0 %v684
      %815 = vmatpush.bf16.msra.mxu0 %v680
      %816 = vmatpush.bf16.msra.mxu0 %v676
      %817 = vmatpush.bf16.msra.mxu0 %v672
      %818 = vmatpush.bf16.msra.mxu0 %v668
      %819 = vmatpush.bf16.msra.mxu0 %v664
      %820 = vmatpush.bf16.msra.mxu0 %v660
      %821 = vmatmul.bf16.gmra.mxu0 %v457
      %v822 = vpop.f32.mrf.mxu0
      %v823 = vadd.f32 0.0, %v822
      %v824 = vpop.f32.mrf.mxu0
      %825 = vdwg.mxu0
      %826 = vmatpush.bf16.msra.mxu0 %v720
      %827 = vmatpush.bf16.msra.mxu0 %v716
      %828 = vmatpush.bf16.msra.mxu0 %v712
      %829 = vmatpush.bf16.msra.mxu0 %v708
      %830 = vmatpush.bf16.msra.mxu0 %v704
      %831 = vmatpush.bf16.msra.mxu0 %v700
      %832 = vmatpush.bf16.msra.mxu0 %v696
      %833 = vmatpush.bf16.msra.mxu0 %v692
      %834 = vmatmul.bf16.gmra.mxu0 %v464
      %v835 = vpop.f32.mrf.mxu0
      %v836 = vadd.f32 %v823, %v835
      %v837 = vpop.f32.mrf.mxu0
      %838 = vdwg.mxu0
      %839 = vmatpush.bf16.msra.mxu0 %v689
      %840 = vmatpush.bf16.msra.mxu0 %v685
      %841 = vmatpush.bf16.msra.mxu0 %v681
      %842 = vmatpush.bf16.msra.mxu0 %v677
      %843 = vmatpush.bf16.msra.mxu0 %v673
      %844 = vmatpush.bf16.msra.mxu0 %v669
      %845 = vmatpush.bf16.msra.mxu0 %v665
      %846 = vmatpush.bf16.msra.mxu0 %v661
      %847 = vmatmul.bf16.gmra.mxu0 %v457
      %v848 = vpop.f32.mrf.mxu0
      %v849 = vadd.f32 0.0, %v848
      %v850 = vpop.f32.mrf.mxu0
      %851 = vdwg.mxu0
      %852 = vmatpush.bf16.msra.mxu0 %v721
      %853 = vmatpush.bf16.msra.mxu0 %v717
      %854 = vmatpush.bf16.msra.mxu0 %v713
      %855 = vmatpush.bf16.msra.mxu0 %v709
      %856 = vmatpush.bf16.msra.mxu0 %v705
      %857 = vmatpush.bf16.msra.mxu0 %v701
      %858 = vmatpush.bf16.msra.mxu0 %v697
      %859 = vmatpush.bf16.msra.mxu0 %v693
      %860 = vmatmul.bf16.gmra.mxu0 %v464
      %v861 = vpop.f32.mrf.mxu0
      %v862 = vadd.f32 %v849, %v861
      %v863 = vpop.f32.mrf.mxu0
      %864 = vdwg.mxu0
      %865 = vmatpush.bf16.msra.mxu0 %v690
      %866 = vmatpush.bf16.msra.mxu0 %v686
      %867 = vmatpush.bf16.msra.mxu0 %v682
      %868 = vmatpush.bf16.msra.mxu0 %v678
      %869 = vmatpush.bf16.msra.mxu0 %v674
      %870 = vmatpush.bf16.msra.mxu0 %v670
      %871 = vmatpush.bf16.msra.mxu0 %v666
      %872 = vmatpush.bf16.msra.mxu0 %v662
      %873 = vmatmul.bf16.gmra.mxu0 %v457
      %v874 = vpop.f32.mrf.mxu0
      %v875 = vadd.f32 0.0, %v874
      %v876 = vpop.f32.mrf.mxu0
      %877 = vdwg.mxu0
      %878 = vmatpush.bf16.msra.mxu0 %v722
      %879 = vmatpush.bf16.msra.mxu0 %v718
      %880 = vmatpush.bf16.msra.mxu0 %v714
      %881 = vmatpush.bf16.msra.mxu0 %v710
      %882 = vmatpush.bf16.msra.mxu0 %v706
      %883 = vmatpush.bf16.msra.mxu0 %v702
      %884 = vmatpush.bf16.msra.mxu0 %v698
      %885 = vmatpush.bf16.msra.mxu0 %v694
      %886 = vmatmul.bf16.gmra.mxu0 %v464
      %v887 = vpop.f32.mrf.mxu0
      %v888 = vadd.f32 %v875, %v887
      %v889 = vpop.f32.mrf.mxu0
      %890 = vdwg.mxu0
      %v955 = vunpack.c.l.b16 %v316
      %v956 = vunpack.c.h.b16 %v316
      %v957 = vunpack.c.l.b16 %v317
      %v958 = vunpack.c.h.b16 %v317
      %v959 = vunpack.c.l.b16 %v318
      %v960 = vunpack.c.h.b16 %v318
      %v961 = vunpack.c.l.b16 %v319
      %v962 = vunpack.c.h.b16 %v319
      %v963 = vunpack.c.l.b16 %v320
      %v964 = vunpack.c.h.b16 %v320
      %v965 = vunpack.c.l.b16 %v321
      %v966 = vunpack.c.h.b16 %v321
      %v967 = vunpack.c.l.b16 %v322
      %v968 = vunpack.c.h.b16 %v322
      %v969 = vunpack.c.l.b16 %v323
      %v970 = vunpack.c.h.b16 %v323
      %v971 = vunpack.c.l.b16 %v324
      %v972 = vunpack.c.h.b16 %v324
      %v973 = vunpack.c.l.b16 %v325
      %v974 = vunpack.c.h.b16 %v325
      %v975 = vunpack.c.l.b16 %v326
      %v976 = vunpack.c.h.b16 %v326
      %v977 = vunpack.c.l.b16 %v327
      %v978 = vunpack.c.h.b16 %v327
      %v979 = vunpack.c.l.b16 %v328
      %v980 = vunpack.c.h.b16 %v328
      %v981 = vunpack.c.l.b16 %v329
      %v982 = vunpack.c.h.b16 %v329
      %v983 = vunpack.c.l.b16 %v330
      %v984 = vunpack.c.h.b16 %v330
      %v985 = vunpack.c.l.b16 %v331
      %v986 = vunpack.c.h.b16 %v331
      %v987 = vunpack.c.l.b16 %v332
      %v988 = vunpack.c.h.b16 %v332
      %v989 = vunpack.c.l.b16 %v333
      %v990 = vunpack.c.h.b16 %v333
      %v991 = vunpack.c.l.b16 %v334
      %v992 = vunpack.c.h.b16 %v334
      %v993 = vunpack.c.l.b16 %v335
      %v994 = vunpack.c.h.b16 %v335
      %v995 = vunpack.c.l.b16 %v336
      %v996 = vunpack.c.h.b16 %v336
      %v997 = vunpack.c.l.b16 %v337
      %v998 = vunpack.c.h.b16 %v337
      %v999 = vunpack.c.l.b16 %v338
      %v1000 = vunpack.c.h.b16 %v338
      %v1001 = vunpack.c.l.b16 %v339
      %v1002 = vunpack.c.h.b16 %v339
      %v1003 = vunpack.c.l.b16 %v340
      %v1004 = vunpack.c.h.b16 %v340
      %v1005 = vunpack.c.l.b16 %v341
      %v1006 = vunpack.c.h.b16 %v341
      %v1007 = vunpack.c.l.b16 %v342
      %v1008 = vunpack.c.h.b16 %v342
      %v1009 = vunpack.c.l.b16 %v343
      %v1010 = vunpack.c.h.b16 %v343
      %v1011 = vunpack.c.l.b16 %v344
      %v1012 = vunpack.c.h.b16 %v344
      %v1013 = vunpack.c.l.b16 %v345
      %v1014 = vunpack.c.h.b16 %v345
      %v1015 = vunpack.c.l.b16 %v346
      %v1016 = vunpack.c.h.b16 %v346
      %v1017 = vunpack.c.l.b16 %v347
      %v1018 = vunpack.c.h.b16 %v347
      %v1019 = vunpack.c.l.b16 %v348
      %v1020 = vunpack.c.h.b16 %v348
      %v1021 = vunpack.c.l.b16 %v349
      %v1022 = vunpack.c.h.b16 %v349
      %v1023 = vunpack.c.l.b16 %v350
      %v1024 = vunpack.c.h.b16 %v350
      %v1025 = vunpack.c.l.b16 %v351
      %v1026 = vunpack.c.h.b16 %v351
      %v1027 = vunpack.c.l.b16 %v352
      %v1028 = vunpack.c.h.b16 %v352
      %v1029 = vunpack.c.l.b16 %v353
      %v1030 = vunpack.c.h.b16 %v353
      %v1031 = vunpack.c.l.b16 %v354
      %v1032 = vunpack.c.h.b16 %v354
      %v1033 = vunpack.c.l.b16 %v355
      %v1034 = vunpack.c.h.b16 %v355
      %v1035 = vunpack.c.l.b16 %v356
      %v1036 = vunpack.c.h.b16 %v356
      %v1037 = vunpack.c.l.b16 %v357
      %v1038 = vunpack.c.h.b16 %v357
      %v1039 = vunpack.c.l.b16 %v358
      %v1040 = vunpack.c.h.b16 %v358
      %v1041 = vunpack.c.l.b16 %v359
      %v1042 = vunpack.c.h.b16 %v359
      %v1043 = vunpack.c.l.b16 %v360
      %v1044 = vunpack.c.h.b16 %v360
      %v1045 = vunpack.c.l.b16 %v361
      %v1046 = vunpack.c.h.b16 %v361
      %v1047 = vunpack.c.l.b16 %v362
      %v1048 = vunpack.c.h.b16 %v362
      %v1049 = vunpack.c.l.b16 %v363
      %v1050 = vunpack.c.h.b16 %v363
      %v1051 = vunpack.c.l.b16 %v364
      %v1052 = vunpack.c.h.b16 %v364
      %v1053 = vunpack.c.l.b16 %v365
      %v1054 = vunpack.c.h.b16 %v365
      %v1055 = vunpack.c.l.b16 %v366
      %v1056 = vunpack.c.h.b16 %v366
      %v1057 = vunpack.c.l.b16 %v367
      %v1058 = vunpack.c.h.b16 %v367
      %v1059 = vunpack.c.l.b16 %v368
      %v1060 = vunpack.c.h.b16 %v368
      %v1061 = vunpack.c.l.b16 %v369
      %v1062 = vunpack.c.h.b16 %v369
      %v1063 = vunpack.c.l.b16 %v370
      %v1064 = vunpack.c.h.b16 %v370
      %v1065 = vunpack.c.l.b16 %v371
      %v1066 = vunpack.c.h.b16 %v371
      %v1067 = vunpack.c.l.b16 %v372
      %v1068 = vunpack.c.h.b16 %v372
      %v1069 = vunpack.c.l.b16 %v373
      %v1070 = vunpack.c.h.b16 %v373
      %v1071 = vunpack.c.l.b16 %v374
      %v1072 = vunpack.c.h.b16 %v374
      %v1073 = vunpack.c.l.b16 %v375
      %v1074 = vunpack.c.h.b16 %v375
      %v1075 = vunpack.c.l.b16 %v376
      %v1076 = vunpack.c.h.b16 %v376
      %v1077 = vunpack.c.l.b16 %v377
      %v1078 = vunpack.c.h.b16 %v377
      %v1079 = vunpack.c.l.b16 %v378
      %v1080 = vunpack.c.h.b16 %v378
      %v1081 = vunpack.c.l.b16 %v379
      %v1082 = vunpack.c.h.b16 %v379
      %v1083 = vpack.c.b16 %v959, %v955
      %v1084 = vpack.c.b16 %v960, %v956
      %v1085 = vpack.c.b16 %v961, %v957
      %v1086 = vpack.c.b16 %v962, %v958
      %v1087 = vpack.c.b16 %v967, %v963
      %v1088 = vpack.c.b16 %v968, %v964
      %v1089 = vpack.c.b16 %v969, %v965
      %v1090 = vpack.c.b16 %v970, %v966
      %v1091 = vpack.c.b16 %v975, %v971
      %v1092 = vpack.c.b16 %v976, %v972
      %v1093 = vpack.c.b16 %v977, %v973
      %v1094 = vpack.c.b16 %v978, %v974
      %v1095 = vpack.c.b16 %v983, %v979
      %v1096 = vpack.c.b16 %v984, %v980
      %v1097 = vpack.c.b16 %v985, %v981
      %v1098 = vpack.c.b16 %v986, %v982
      %v1099 = vpack.c.b16 %v991, %v987
      %v1100 = vpack.c.b16 %v992, %v988
      %v1101 = vpack.c.b16 %v993, %v989
      %v1102 = vpack.c.b16 %v994, %v990
      %v1103 = vpack.c.b16 %v999, %v995
      %v1104 = vpack.c.b16 %v1000, %v996
      %v1105 = vpack.c.b16 %v1001, %v997
      %v1106 = vpack.c.b16 %v1002, %v998
      %v1107 = vpack.c.b16 %v1007, %v1003
      %v1108 = vpack.c.b16 %v1008, %v1004
      %v1109 = vpack.c.b16 %v1009, %v1005
      %v1110 = vpack.c.b16 %v1010, %v1006
      %v1111 = vpack.c.b16 %v1015, %v1011
      %v1112 = vpack.c.b16 %v1016, %v1012
      %v1113 = vpack.c.b16 %v1017, %v1013
      %v1114 = vpack.c.b16 %v1018, %v1014
      %v1115 = vpack.c.b16 %v1023, %v1019
      %v1116 = vpack.c.b16 %v1024, %v1020
      %v1117 = vpack.c.b16 %v1025, %v1021
      %v1118 = vpack.c.b16 %v1026, %v1022
      %v1119 = vpack.c.b16 %v1031, %v1027
      %v1120 = vpack.c.b16 %v1032, %v1028
      %v1121 = vpack.c.b16 %v1033, %v1029
      %v1122 = vpack.c.b16 %v1034, %v1030
      %v1123 = vpack.c.b16 %v1039, %v1035
      %v1124 = vpack.c.b16 %v1040, %v1036
      %v1125 = vpack.c.b16 %v1041, %v1037
      %v1126 = vpack.c.b16 %v1042, %v1038
      %v1127 = vpack.c.b16 %v1047, %v1043
      %v1128 = vpack.c.b16 %v1048, %v1044
      %v1129 = vpack.c.b16 %v1049, %v1045
      %v1130 = vpack.c.b16 %v1050, %v1046
      %v1131 = vpack.c.b16 %v1055, %v1051
      %v1132 = vpack.c.b16 %v1056, %v1052
      %v1133 = vpack.c.b16 %v1057, %v1053
      %v1134 = vpack.c.b16 %v1058, %v1054
      %v1135 = vpack.c.b16 %v1063, %v1059
      %v1136 = vpack.c.b16 %v1064, %v1060
      %v1137 = vpack.c.b16 %v1065, %v1061
      %v1138 = vpack.c.b16 %v1066, %v1062
      %v1139 = vpack.c.b16 %v1071, %v1067
      %v1140 = vpack.c.b16 %v1072, %v1068
      %v1141 = vpack.c.b16 %v1073, %v1069
      %v1142 = vpack.c.b16 %v1074, %v1070
      %v1143 = vpack.c.b16 %v1079, %v1075
      %v1144 = vpack.c.b16 %v1080, %v1076
      %v1145 = vpack.c.b16 %v1081, %v1077
      %v1146 = vpack.c.b16 %v1082, %v1078
      %1211 = vmatpush.bf16.msra.mxu0 %v1111
      %1212 = vmatpush.bf16.msra.mxu0 %v1107
      %1213 = vmatpush.bf16.msra.mxu0 %v1103
      %1214 = vmatpush.bf16.msra.mxu0 %v1099
      %1215 = vmatpush.bf16.msra.mxu0 %v1095
      %1216 = vmatpush.bf16.msra.mxu0 %v1091
      %1217 = vmatpush.bf16.msra.mxu0 %v1087
      %1218 = vmatpush.bf16.msra.mxu0 %v1083
      %1219 = vmatmul.bf16.gmra.mxu0 %v314
      %v1220 = vpop.f32.mrf.mxu0
      %v1221 = vadd.f32 %v810, %v1220
      %v1222 = vpop.f32.mrf.mxu0
      %1223 = vdwg.mxu0
      %1224 = vmatpush.bf16.msra.mxu0 %v1143
      %1225 = vmatpush.bf16.msra.mxu0 %v1139
      %1226 = vmatpush.bf16.msra.mxu0 %v1135
      %1227 = vmatpush.bf16.msra.mxu0 %v1131
      %1228 = vmatpush.bf16.msra.mxu0 %v1127
      %1229 = vmatpush.bf16.msra.mxu0 %v1123
      %1230 = vmatpush.bf16.msra.mxu0 %v1119
      %1231 = vmatpush.bf16.msra.mxu0 %v1115
      %1232 = vmatmul.bf16.gmra.mxu0 %v315
      %v1233 = vpop.f32.mrf.mxu0
      %v1234 = vadd.f32 %v1221, %v1233
      %v1235 = vpop.f32.mrf.mxu0
      %1236 = vdwg.mxu0
      %1237 = vmatpush.bf16.msra.mxu0 %v1112
      %1238 = vmatpush.bf16.msra.mxu0 %v1108
      %1239 = vmatpush.bf16.msra.mxu0 %v1104
      %1240 = vmatpush.bf16.msra.mxu0 %v1100
      %1241 = vmatpush.bf16.msra.mxu0 %v1096
      %1242 = vmatpush.bf16.msra.mxu0 %v1092
      %1243 = vmatpush.bf16.msra.mxu0 %v1088
      %1244 = vmatpush.bf16.msra.mxu0 %v1084
      %1245 = vmatmul.bf16.gmra.mxu0 %v314
      %v1246 = vpop.f32.mrf.mxu0
      %v1247 = vadd.f32 %v836, %v1246
      %v1248 = vpop.f32.mrf.mxu0
      %1249 = vdwg.mxu0
      %1250 = vmatpush.bf16.msra.mxu0 %v1144
      %1251 = vmatpush.bf16.msra.mxu0 %v1140
      %1252 = vmatpush.bf16.msra.mxu0 %v1136
      %1253 = vmatpush.bf16.msra.mxu0 %v1132
      %1254 = vmatpush.bf16.msra.mxu0 %v1128
      %1255 = vmatpush.bf16.msra.mxu0 %v1124
      %1256 = vmatpush.bf16.msra.mxu0 %v1120
      %1257 = vmatpush.bf16.msra.mxu0 %v1116
      %1258 = vmatmul.bf16.gmra.mxu0 %v315
      %v1259 = vpop.f32.mrf.mxu0
      %v1260 = vadd.f32 %v1247, %v1259
      %v1261 = vpop.f32.mrf.mxu0
      %1262 = vdwg.mxu0
      %1263 = vmatpush.bf16.msra.mxu0 %v1113
      %1264 = vmatpush.bf16.msra.mxu0 %v1109
      %1265 = vmatpush.bf16.msra.mxu0 %v1105
      %1266 = vmatpush.bf16.msra.mxu0 %v1101
      %1267 = vmatpush.bf16.msra.mxu0 %v1097
      %1268 = vmatpush.bf16.msra.mxu0 %v1093
      %1269 = vmatpush.bf16.msra.mxu0 %v1089
      %1270 = vmatpush.bf16.msra.mxu0 %v1085
      %1271 = vmatmul.bf16.gmra.mxu0 %v314
      %v1272 = vpop.f32.mrf.mxu0
      %v1273 = vadd.f32 %v862, %v1272
      %v1274 = vpop.f32.mrf.mxu0
      %1275 = vdwg.mxu0
      %1276 = vmatpush.bf16.msra.mxu0 %v1145
      %1277 = vmatpush.bf16.msra.mxu0 %v1141
      %1278 = vmatpush.bf16.msra.mxu0 %v1137
      %1279 = vmatpush.bf16.msra.mxu0 %v1133
      %1280 = vmatpush.bf16.msra.mxu0 %v1129
      %1281 = vmatpush.bf16.msra.mxu0 %v1125
      %1282 = vmatpush.bf16.msra.mxu0 %v1121
      %1283 = vmatpush.bf16.msra.mxu0 %v1117
      %1284 = vmatmul.bf16.gmra.mxu0 %v315
      %v1285 = vpop.f32.mrf.mxu0
      %v1286 = vadd.f32 %v1273, %v1285
      %v1287 = vpop.f32.mrf.mxu0
      %1288 = vdwg.mxu0
      %1289 = vmatpush.bf16.msra.mxu0 %v1114
      %1290 = vmatpush.bf16.msra.mxu0 %v1110
      %1291 = vmatpush.bf16.msra.mxu0 %v1106
      %1292 = vmatpush.bf16.msra.mxu0 %v1102
      %1293 = vmatpush.bf16.msra.mxu0 %v1098
      %1294 = vmatpush.bf16.msra.mxu0 %v1094
      %1295 = vmatpush.bf16.msra.mxu0 %v1090
      %1296 = vmatpush.bf16.msra.mxu0 %v1086
      %1297 = vmatmul.bf16.gmra.mxu0 %v314
      %v1298 = vpop.f32.mrf.mxu0
      %v1299 = vadd.f32 %v888, %v1298
      %v1300 = vpop.f32.mrf.mxu0
      %1301 = vdwg.mxu0
      %1302 = vmatpush.bf16.msra.mxu0 %v1146
      %1303 = vmatpush.bf16.msra.mxu0 %v1142
      %1304 = vmatpush.bf16.msra.mxu0 %v1138
      %1305 = vmatpush.bf16.msra.mxu0 %v1134
      %1306 = vmatpush.bf16.msra.mxu0 %v1130
      %1307 = vmatpush.bf16.msra.mxu0 %v1126
      %1308 = vmatpush.bf16.msra.mxu0 %v1122
      %1309 = vmatpush.bf16.msra.mxu0 %v1118
      %1310 = vmatmul.bf16.gmra.mxu0 %v315
      %v1311 = vpop.f32.mrf.mxu0
      %v1312 = vadd.f32 %v1299, %v1311
      %v1313 = vpop.f32.mrf.mxu0
      %1314 = vdwg.mxu0
      %v1315 = vld [vmem:[#allocation2] sm:$0xfc]
      %v1316 = vld [vmem:[#allocation2 + $0x8] sm:$0xfc]
      %v1317 = vld [vmem:[#allocation2 + $0x10] sm:$0x3]
      %v1318 = vld [vmem:[#allocation2 + $0x18] sm:$0x3]
      %v1319 = vpack.c.bf16 %v1317, %v1315
      %v1320 = vpack.c.bf16 %v1318, %v1316
      %s1321 = scalar_lea.vmem %s1, 1024
      %v1322 = vld [vmem:[%s1321] sm:$0xff]
      %v1323 = vld [vmem:[%s1321 + $0x8] sm:$0xff]
      %v1324 = vld [vmem:[%s1321 + $0x10] sm:$0xff]
      %v1325 = vld [vmem:[%s1321 + $0x18] sm:$0xff]
      %v1326 = vld [vmem:[%s1321 + $0x20] sm:$0xff]
      %v1327 = vld [vmem:[%s1321 + $0x28] sm:$0xff]
      %v1328 = vld [vmem:[%s1321 + $0x30] sm:$0xff]
      %v1329 = vld [vmem:[%s1321 + $0x38] sm:$0xff]
      %v1330 = vld [vmem:[%s1321 + $0x40] sm:$0xff]
      %v1331 = vld [vmem:[%s1321 + $0x48] sm:$0xff]
      %v1332 = vld [vmem:[%s1321 + $0x50] sm:$0xff]
      %v1333 = vld [vmem:[%s1321 + $0x58] sm:$0xff]
      %v1334 = vld [vmem:[%s1321 + $0x60] sm:$0xff]
      %v1335 = vld [vmem:[%s1321 + $0x68] sm:$0xff]
      %v1336 = vld [vmem:[%s1321 + $0x70] sm:$0xff]
      %v1337 = vld [vmem:[%s1321 + $0x78] sm:$0xff]
      %v1338 = vld [vmem:[%s1321 + $0x80] sm:$0xff]
      %v1339 = vld [vmem:[%s1321 + $0x88] sm:$0xff]
      %v1340 = vld [vmem:[%s1321 + $0x90] sm:$0xff]
      %v1341 = vld [vmem:[%s1321 + $0x98] sm:$0xff]
      %v1342 = vld [vmem:[%s1321 + $0xa0] sm:$0xff]
      %v1343 = vld [vmem:[%s1321 + $0xa8] sm:$0xff]
      %v1344 = vld [vmem:[%s1321 + $0xb0] sm:$0xff]
      %v1345 = vld [vmem:[%s1321 + $0xb8] sm:$0xff]
      %v1346 = vld [vmem:[%s1321 + $0xc0] sm:$0xff]
      %v1347 = vld [vmem:[%s1321 + $0xc8] sm:$0xff]
      %v1348 = vld [vmem:[%s1321 + $0xd0] sm:$0xff]
      %v1349 = vld [vmem:[%s1321 + $0xd8] sm:$0xff]
      %v1350 = vld [vmem:[%s1321 + $0xe0] sm:$0xff]
      %v1351 = vld [vmem:[%s1321 + $0xe8] sm:$0xff]
      %v1352 = vld [vmem:[%s1321 + $0xf0] sm:$0xff]
      %v1353 = vld [vmem:[%s1321 + $0xf8] sm:$0xff]
      %v1354 = vld [vmem:[%s1321 + $0x100] sm:$0xff]
      %v1355 = vld [vmem:[%s1321 + $0x108] sm:$0xff]
      %v1356 = vld [vmem:[%s1321 + $0x110] sm:$0xff]
      %v1357 = vld [vmem:[%s1321 + $0x118] sm:$0xff]
      %v1358 = vld [vmem:[%s1321 + $0x120] sm:$0xff]
      %v1359 = vld [vmem:[%s1321 + $0x128] sm:$0xff]
      %v1360 = vld [vmem:[%s1321 + $0x130] sm:$0xff]
      %v1361 = vld [vmem:[%s1321 + $0x138] sm:$0xff]
      %v1362 = vld [vmem:[%s1321 + $0x140] sm:$0xff]
      %v1363 = vld [vmem:[%s1321 + $0x148] sm:$0xff]
      %v1364 = vld [vmem:[%s1321 + $0x150] sm:$0xff]
      %v1365 = vld [vmem:[%s1321 + $0x158] sm:$0xff]
      %v1366 = vld [vmem:[%s1321 + $0x160] sm:$0xff]
      %v1367 = vld [vmem:[%s1321 + $0x168] sm:$0xff]
      %v1368 = vld [vmem:[%s1321 + $0x170] sm:$0xff]
      %v1369 = vld [vmem:[%s1321 + $0x178] sm:$0xff]
      %v1370 = vld [vmem:[%s1321 + $0x180] sm:$0xff]
      %v1371 = vld [vmem:[%s1321 + $0x188] sm:$0xff]
      %v1372 = vld [vmem:[%s1321 + $0x190] sm:$0xff]
      %v1373 = vld [vmem:[%s1321 + $0x198] sm:$0xff]
      %v1374 = vld [vmem:[%s1321 + $0x1a0] sm:$0xff]
      %v1375 = vld [vmem:[%s1321 + $0x1a8] sm:$0xff]
      %v1376 = vld [vmem:[%s1321 + $0x1b0] sm:$0xff]
      %v1377 = vld [vmem:[%s1321 + $0x1b8] sm:$0xff]
      %v1378 = vld [vmem:[%s1321 + $0x1c0] sm:$0xff]
      %v1379 = vld [vmem:[%s1321 + $0x1c8] sm:$0xff]
      %v1380 = vld [vmem:[%s1321 + $0x1d0] sm:$0xff]
      %v1381 = vld [vmem:[%s1321 + $0x1d8] sm:$0xff]
      %v1382 = vld [vmem:[%s1321 + $0x1e0] sm:$0xff]
      %v1383 = vld [vmem:[%s1321 + $0x1e8] sm:$0xff]
      %v1384 = vld [vmem:[%s1321 + $0x1f0] sm:$0xff]
      %v1385 = vld [vmem:[%s1321 + $0x1f8] sm:$0xff]
      %v1388 = vrot.slane %v1319, 1
      %v1389 = vrot.slane %v1320, 1
      %v1456 = vunpack.c.l.b16 %v1322
      %v1457 = vunpack.c.h.b16 %v1322
      %v1458 = vunpack.c.l.b16 %v1323
      %v1459 = vunpack.c.h.b16 %v1323
      %v1460 = vunpack.c.l.b16 %v1324
      %v1461 = vunpack.c.h.b16 %v1324
      %v1462 = vunpack.c.l.b16 %v1325
      %v1463 = vunpack.c.h.b16 %v1325
      %v1464 = vunpack.c.l.b16 %v1326
      %v1465 = vunpack.c.h.b16 %v1326
      %v1466 = vunpack.c.l.b16 %v1327
      %v1467 = vunpack.c.h.b16 %v1327
      %v1468 = vunpack.c.l.b16 %v1328
      %v1469 = vunpack.c.h.b16 %v1328
      %v1470 = vunpack.c.l.b16 %v1329
      %v1471 = vunpack.c.h.b16 %v1329
      %v1472 = vunpack.c.l.b16 %v1330
      %v1473 = vunpack.c.h.b16 %v1330
      %v1474 = vunpack.c.l.b16 %v1331
      %v1475 = vunpack.c.h.b16 %v1331
      %v1476 = vunpack.c.l.b16 %v1332
      %v1477 = vunpack.c.h.b16 %v1332
      %v1478 = vunpack.c.l.b16 %v1333
      %v1479 = vunpack.c.h.b16 %v1333
      %v1480 = vunpack.c.l.b16 %v1334
      %v1481 = vunpack.c.h.b16 %v1334
      %v1482 = vunpack.c.l.b16 %v1335
      %v1483 = vunpack.c.h.b16 %v1335
      %v1484 = vunpack.c.l.b16 %v1336
      %v1485 = vunpack.c.h.b16 %v1336
      %v1486 = vunpack.c.l.b16 %v1337
      %v1487 = vunpack.c.h.b16 %v1337
      %v1488 = vunpack.c.l.b16 %v1338
      %v1489 = vunpack.c.h.b16 %v1338
      %v1490 = vunpack.c.l.b16 %v1339
      %v1491 = vunpack.c.h.b16 %v1339
      %v1492 = vunpack.c.l.b16 %v1340
      %v1493 = vunpack.c.h.b16 %v1340
      %v1494 = vunpack.c.l.b16 %v1341
      %v1495 = vunpack.c.h.b16 %v1341
      %v1496 = vunpack.c.l.b16 %v1342
      %v1497 = vunpack.c.h.b16 %v1342
      %v1498 = vunpack.c.l.b16 %v1343
      %v1499 = vunpack.c.h.b16 %v1343
      %v1500 = vunpack.c.l.b16 %v1344
      %v1501 = vunpack.c.h.b16 %v1344
      %v1502 = vunpack.c.l.b16 %v1345
      %v1503 = vunpack.c.h.b16 %v1345
      %v1504 = vunpack.c.l.b16 %v1346
      %v1505 = vunpack.c.h.b16 %v1346
      %v1506 = vunpack.c.l.b16 %v1347
      %v1507 = vunpack.c.h.b16 %v1347
      %v1508 = vunpack.c.l.b16 %v1348
      %v1509 = vunpack.c.h.b16 %v1348
      %v1510 = vunpack.c.l.b16 %v1349
      %v1511 = vunpack.c.h.b16 %v1349
      %v1512 = vunpack.c.l.b16 %v1350
      %v1513 = vunpack.c.h.b16 %v1350
      %v1514 = vunpack.c.l.b16 %v1351
      %v1515 = vunpack.c.h.b16 %v1351
      %v1516 = vunpack.c.l.b16 %v1352
      %v1517 = vunpack.c.h.b16 %v1352
      %v1518 = vunpack.c.l.b16 %v1353
      %v1519 = vunpack.c.h.b16 %v1353
      %v1520 = vunpack.c.l.b16 %v1354
      %v1521 = vunpack.c.h.b16 %v1354
      %v1522 = vunpack.c.l.b16 %v1355
      %v1523 = vunpack.c.h.b16 %v1355
      %v1524 = vunpack.c.l.b16 %v1356
      %v1525 = vunpack.c.h.b16 %v1356
      %v1526 = vunpack.c.l.b16 %v1357
      %v1527 = vunpack.c.h.b16 %v1357
      %v1528 = vunpack.c.l.b16 %v1358
      %v1529 = vunpack.c.h.b16 %v1358
      %v1530 = vunpack.c.l.b16 %v1359
      %v1531 = vunpack.c.h.b16 %v1359
      %v1532 = vunpack.c.l.b16 %v1360
      %v1533 = vunpack.c.h.b16 %v1360
      %v1534 = vunpack.c.l.b16 %v1361
      %v1535 = vunpack.c.h.b16 %v1361
      %v1536 = vunpack.c.l.b16 %v1362
      %v1537 = vunpack.c.h.b16 %v1362
      %v1538 = vunpack.c.l.b16 %v1363
      %v1539 = vunpack.c.h.b16 %v1363
      %v1540 = vunpack.c.l.b16 %v1364
      %v1541 = vunpack.c.h.b16 %v1364
      %v1542 = vunpack.c.l.b16 %v1365
      %v1543 = vunpack.c.h.b16 %v1365
      %v1544 = vunpack.c.l.b16 %v1366
      %v1545 = vunpack.c.h.b16 %v1366
      %v1546 = vunpack.c.l.b16 %v1367
      %v1547 = vunpack.c.h.b16 %v1367
      %v1548 = vunpack.c.l.b16 %v1368
      %v1549 = vunpack.c.h.b16 %v1368
      %v1550 = vunpack.c.l.b16 %v1369
      %v1551 = vunpack.c.h.b16 %v1369
      %v1552 = vunpack.c.l.b16 %v1370
      %v1553 = vunpack.c.h.b16 %v1370
      %v1554 = vunpack.c.l.b16 %v1371
      %v1555 = vunpack.c.h.b16 %v1371
      %v1556 = vunpack.c.l.b16 %v1372
      %v1557 = vunpack.c.h.b16 %v1372
      %v1558 = vunpack.c.l.b16 %v1373
      %v1559 = vunpack.c.h.b16 %v1373
      %v1560 = vunpack.c.l.b16 %v1374
      %v1561 = vunpack.c.h.b16 %v1374
      %v1562 = vunpack.c.l.b16 %v1375
      %v1563 = vunpack.c.h.b16 %v1375
      %v1564 = vunpack.c.l.b16 %v1376
      %v1565 = vunpack.c.h.b16 %v1376
      %v1566 = vunpack.c.l.b16 %v1377
      %v1567 = vunpack.c.h.b16 %v1377
      %v1568 = vunpack.c.l.b16 %v1378
      %v1569 = vunpack.c.h.b16 %v1378
      %v1570 = vunpack.c.l.b16 %v1379
      %v1571 = vunpack.c.h.b16 %v1379
      %v1572 = vunpack.c.l.b16 %v1380
      %v1573 = vunpack.c.h.b16 %v1380
      %v1574 = vunpack.c.l.b16 %v1381
      %v1575 = vunpack.c.h.b16 %v1381
      %v1576 = vunpack.c.l.b16 %v1382
      %v1577 = vunpack.c.h.b16 %v1382
      %v1578 = vunpack.c.l.b16 %v1383
      %v1579 = vunpack.c.h.b16 %v1383
      %v1580 = vunpack.c.l.b16 %v1384
      %v1581 = vunpack.c.h.b16 %v1384
      %v1582 = vunpack.c.l.b16 %v1385
      %v1583 = vunpack.c.h.b16 %v1385
      %v1584 = vpack.c.b16 %v1460, %v1456
      %v1585 = vpack.c.b16 %v1461, %v1457
      %v1586 = vpack.c.b16 %v1462, %v1458
      %v1587 = vpack.c.b16 %v1463, %v1459
      %v1588 = vpack.c.b16 %v1468, %v1464
      %v1589 = vpack.c.b16 %v1469, %v1465
      %v1590 = vpack.c.b16 %v1470, %v1466
      %v1591 = vpack.c.b16 %v1471, %v1467
      %v1592 = vpack.c.b16 %v1476, %v1472
      %v1593 = vpack.c.b16 %v1477, %v1473
      %v1594 = vpack.c.b16 %v1478, %v1474
      %v1595 = vpack.c.b16 %v1479, %v1475
      %v1596 = vpack.c.b16 %v1484, %v1480
      %v1597 = vpack.c.b16 %v1485, %v1481
      %v1598 = vpack.c.b16 %v1486, %v1482
      %v1599 = vpack.c.b16 %v1487, %v1483
      %v1600 = vpack.c.b16 %v1492, %v1488
      %v1601 = vpack.c.b16 %v1493, %v1489
      %v1602 = vpack.c.b16 %v1494, %v1490
      %v1603 = vpack.c.b16 %v1495, %v1491
      %v1604 = vpack.c.b16 %v1500, %v1496
      %v1605 = vpack.c.b16 %v1501, %v1497
      %v1606 = vpack.c.b16 %v1502, %v1498
      %v1607 = vpack.c.b16 %v1503, %v1499
      %v1608 = vpack.c.b16 %v1508, %v1504
      %v1609 = vpack.c.b16 %v1509, %v1505
      %v1610 = vpack.c.b16 %v1510, %v1506
      %v1611 = vpack.c.b16 %v1511, %v1507
      %v1612 = vpack.c.b16 %v1516, %v1512
      %v1613 = vpack.c.b16 %v1517, %v1513
      %v1614 = vpack.c.b16 %v1518, %v1514
      %v1615 = vpack.c.b16 %v1519, %v1515
      %v1616 = vpack.c.b16 %v1524, %v1520
      %v1617 = vpack.c.b16 %v1525, %v1521
      %v1618 = vpack.c.b16 %v1526, %v1522
      %v1619 = vpack.c.b16 %v1527, %v1523
      %v1620 = vpack.c.b16 %v1532, %v1528
      %v1621 = vpack.c.b16 %v1533, %v1529
      %v1622 = vpack.c.b16 %v1534, %v1530
      %v1623 = vpack.c.b16 %v1535, %v1531
      %v1624 = vpack.c.b16 %v1540, %v1536
      %v1625 = vpack.c.b16 %v1541, %v1537
      %v1626 = vpack.c.b16 %v1542, %v1538
      %v1627 = vpack.c.b16 %v1543, %v1539
      %v1628 = vpack.c.b16 %v1548, %v1544
      %v1629 = vpack.c.b16 %v1549, %v1545
      %v1630 = vpack.c.b16 %v1550, %v1546
      %v1631 = vpack.c.b16 %v1551, %v1547
      %v1632 = vpack.c.b16 %v1556, %v1552
      %v1633 = vpack.c.b16 %v1557, %v1553
      %v1634 = vpack.c.b16 %v1558, %v1554
      %v1635 = vpack.c.b16 %v1559, %v1555
      %v1636 = vpack.c.b16 %v1564, %v1560
      %v1637 = vpack.c.b16 %v1565, %v1561
      %v1638 = vpack.c.b16 %v1566, %v1562
      %v1639 = vpack.c.b16 %v1567, %v1563
      %v1640 = vpack.c.b16 %v1572, %v1568
      %v1641 = vpack.c.b16 %v1573, %v1569
      %v1642 = vpack.c.b16 %v1574, %v1570
      %v1643 = vpack.c.b16 %v1575, %v1571
      %v1644 = vpack.c.b16 %v1580, %v1576
      %v1645 = vpack.c.b16 %v1581, %v1577
      %v1646 = vpack.c.b16 %v1582, %v1578
      %v1647 = vpack.c.b16 %v1583, %v1579
      %1712 = vmatpush.bf16.msra.mxu0 %v1612
      %1713 = vmatpush.bf16.msra.mxu0 %v1608
      %1714 = vmatpush.bf16.msra.mxu0 %v1604
      %1715 = vmatpush.bf16.msra.mxu0 %v1600
      %1716 = vmatpush.bf16.msra.mxu0 %v1596
      %1717 = vmatpush.bf16.msra.mxu0 %v1592
      %1718 = vmatpush.bf16.msra.mxu0 %v1588
      %1719 = vmatpush.bf16.msra.mxu0 %v1584
      %1720 = vmatmul.bf16.gmra.mxu0 %v1388
      %v1721 = vpop.f32.mrf.mxu0
      %v1722 = vadd.f32 0.0, %v1721
      %v1723 = vpop.f32.mrf.mxu0
      %1724 = vdwg.mxu0
      %1725 = vmatpush.bf16.msra.mxu0 %v1644
      %1726 = vmatpush.bf16.msra.mxu0 %v1640
      %1727 = vmatpush.bf16.msra.mxu0 %v1636
      %1728 = vmatpush.bf16.msra.mxu0 %v1632
      %1729 = vmatpush.bf16.msra.mxu0 %v1628
      %1730 = vmatpush.bf16.msra.mxu0 %v1624
      %1731 = vmatpush.bf16.msra.mxu0 %v1620
      %1732 = vmatpush.bf16.msra.mxu0 %v1616
      %1733 = vmatmul.bf16.gmra.mxu0 %v1389
      %v1734 = vpop.f32.mrf.mxu0
      %v1735 = vadd.f32 %v1722, %v1734
      %v1736 = vpop.f32.mrf.mxu0
      %1737 = vdwg.mxu0
      %1738 = vmatpush.bf16.msra.mxu0 %v1613
      %1739 = vmatpush.bf16.msra.mxu0 %v1609
      %1740 = vmatpush.bf16.msra.mxu0 %v1605
      %1741 = vmatpush.bf16.msra.mxu0 %v1601
      %1742 = vmatpush.bf16.msra.mxu0 %v1597
      %1743 = vmatpush.bf16.msra.mxu0 %v1593
      %1744 = vmatpush.bf16.msra.mxu0 %v1589
      %1745 = vmatpush.bf16.msra.mxu0 %v1585
      %1746 = vmatmul.bf16.gmra.mxu0 %v1388
      %v1747 = vpop.f32.mrf.mxu0
      %v1748 = vadd.f32 0.0, %v1747
      %v1749 = vpop.f32.mrf.mxu0
      %1750 = vdwg.mxu0
      %1751 = vmatpush.bf16.msra.mxu0 %v1645
      %1752 = vmatpush.bf16.msra.mxu0 %v1641
      %1753 = vmatpush.bf16.msra.mxu0 %v1637
      %1754 = vmatpush.bf16.msra.mxu0 %v1633
      %1755 = vmatpush.bf16.msra.mxu0 %v1629
      %1756 = vmatpush.bf16.msra.mxu0 %v1625
      %1757 = vmatpush.bf16.msra.mxu0 %v1621
      %1758 = vmatpush.bf16.msra.mxu0 %v1617
      %1759 = vmatmul.bf16.gmra.mxu0 %v1389
      %v1760 = vpop.f32.mrf.mxu0
      %v1761 = vadd.f32 %v1748, %v1760
      %v1762 = vpop.f32.mrf.mxu0
      %1763 = vdwg.mxu0
      %1764 = vmatpush.bf16.msra.mxu0 %v1614
      %1765 = vmatpush.bf16.msra.mxu0 %v1610
      %1766 = vmatpush.bf16.msra.mxu0 %v1606
      %1767 = vmatpush.bf16.msra.mxu0 %v1602
      %1768 = vmatpush.bf16.msra.mxu0 %v1598
      %1769 = vmatpush.bf16.msra.mxu0 %v1594
      %1770 = vmatpush.bf16.msra.mxu0 %v1590
      %1771 = vmatpush.bf16.msra.mxu0 %v1586
      %1772 = vmatmul.bf16.gmra.mxu0 %v1388
      %v1773 = vpop.f32.mrf.mxu0
      %v1774 = vadd.f32 0.0, %v1773
      %v1775 = vpop.f32.mrf.mxu0
      %1776 = vdwg.mxu0
      %1777 = vmatpush.bf16.msra.mxu0 %v1646
      %1778 = vmatpush.bf16.msra.mxu0 %v1642
      %1779 = vmatpush.bf16.msra.mxu0 %v1638
      %1780 = vmatpush.bf16.msra.mxu0 %v1634
      %1781 = vmatpush.bf16.msra.mxu0 %v1630
      %1782 = vmatpush.bf16.msra.mxu0 %v1626
      %1783 = vmatpush.bf16.msra.mxu0 %v1622
      %1784 = vmatpush.bf16.msra.mxu0 %v1618
      %1785 = vmatmul.bf16.gmra.mxu0 %v1389
      %v1786 = vpop.f32.mrf.mxu0
      %v1787 = vadd.f32 %v1774, %v1786
      %v1788 = vpop.f32.mrf.mxu0
      %1789 = vdwg.mxu0
      %1790 = vmatpush.bf16.msra.mxu0 %v1615
      %1791 = vmatpush.bf16.msra.mxu0 %v1611
      %1792 = vmatpush.bf16.msra.mxu0 %v1607
      %1793 = vmatpush.bf16.msra.mxu0 %v1603
      %1794 = vmatpush.bf16.msra.mxu0 %v1599
      %1795 = vmatpush.bf16.msra.mxu0 %v1595
      %1796 = vmatpush.bf16.msra.mxu0 %v1591
      %1797 = vmatpush.bf16.msra.mxu0 %v1587
      %1798 = vmatmul.bf16.gmra.mxu0 %v1388
      %v1799 = vpop.f32.mrf.mxu0
      %v1800 = vadd.f32 0.0, %v1799
      %v1801 = vpop.f32.mrf.mxu0
      %1802 = vdwg.mxu0
      %1803 = vmatpush.bf16.msra.mxu0 %v1647
      %1804 = vmatpush.bf16.msra.mxu0 %v1643
      %1805 = vmatpush.bf16.msra.mxu0 %v1639
      %1806 = vmatpush.bf16.msra.mxu0 %v1635
      %1807 = vmatpush.bf16.msra.mxu0 %v1631
      %1808 = vmatpush.bf16.msra.mxu0 %v1627
      %1809 = vmatpush.bf16.msra.mxu0 %v1623
      %1810 = vmatpush.bf16.msra.mxu0 %v1619
      %1811 = vmatmul.bf16.gmra.mxu0 %v1389
      %v1812 = vpop.f32.mrf.mxu0
      %v1813 = vadd.f32 %v1800, %v1812
      %v1814 = vpop.f32.mrf.mxu0
      %1815 = vdwg.mxu0
      %v1816 = vadd.f32 %v1234, %v1735
      %v1817 = vadd.f32 %v1260, %v1761
      %v1818 = vadd.f32 %v1286, %v1787
      %v1819 = vadd.f32 %v1312, %v1813
      %1820 = vst [vmem:[%s258] sm:$0xff] %v1816
      %1821 = vst [vmem:[%s258 + $0x8] sm:$0xff] %v1817
      %1822 = vst [vmem:[%s258 + $0x10] sm:$0xff] %v1818
      %1823 = vst [vmem:[%s258 + $0x18] sm:$0xff] %v1819
      %v1824 = vrot.slane %v1816, 4
      %v1825 = vadd.f32 %v1816, %v1824
      %v1826 = vrot.slane %v1825, 2
      %v1827 = vadd.f32 %v1825, %v1826
      %v1828 = vrot.slane %v1827, 1
      %v1829 = vadd.f32 %v1827, %v1828
      %v1830 = vrot.slane %v1817, 4
      %v1831 = vadd.f32 %v1817, %v1830
      %v1832 = vrot.slane %v1831, 2
      %v1833 = vadd.f32 %v1831, %v1832
      %v1834 = vrot.slane %v1833, 1
      %v1835 = vadd.f32 %v1833, %v1834
      %v1836 = vrot.slane %v1818, 4
      %v1837 = vadd.f32 %v1818, %v1836
      %v1838 = vrot.slane %v1837, 2
      %v1839 = vadd.f32 %v1837, %v1838
      %v1840 = vrot.slane %v1839, 1
      %v1841 = vadd.f32 %v1839, %v1840
      %v1842 = vrot.slane %v1819, 4
      %v1843 = vadd.f32 %v1819, %v1842
      %v1844 = vrot.slane %v1843, 2
      %v1845 = vadd.f32 %v1843, %v1844
      %v1846 = vrot.slane %v1845, 1
      %v1847 = vadd.f32 %v1845, %v1846
      %v1852 = vrot.slane %v1835, 7
      %v1853 = vrot.slane %v1841, 6
      %v1854 = vrot.slane %v1847, 5
      %vm1855 = vcmask 1040384
      %v1856 = vsel %vm1855, %v1829, %v1852
      %vm1857 = vcmask 1042434
      %v1858 = vsel %vm1857, %v1853, %v1854
      %vm1859 = vcmask 1041408
      %v1860 = vsel %vm1859, %v1856, %v1858
      %vm1862 = vcmp.lt.s32.totalorder %v293, 512
      %vm1863 = vmand %vm294, %vm1862
      %1864 = vst.msk [vmem:[%s262] sm:$0xf] %vm1863, %v1860
      %v1865 = vmul.f32 %v1816, %v1816
      %v1866 = vmul.f32 %v1817, %v1817
      %v1867 = vmul.f32 %v1818, %v1818
      %v1868 = vmul.f32 %v1819, %v1819
      %v1869 = vrot.slane %v1865, 4
      %v1870 = vadd.f32 %v1865, %v1869
      %v1871 = vrot.slane %v1870, 2
      %v1872 = vadd.f32 %v1870, %v1871
      %v1873 = vrot.slane %v1872, 1
      %v1874 = vadd.f32 %v1872, %v1873
      %v1875 = vrot.slane %v1866, 4
      %v1876 = vadd.f32 %v1866, %v1875
      %v1877 = vrot.slane %v1876, 2
      %v1878 = vadd.f32 %v1876, %v1877
      %v1879 = vrot.slane %v1878, 1
      %v1880 = vadd.f32 %v1878, %v1879
      %v1881 = vrot.slane %v1867, 4
      %v1882 = vadd.f32 %v1867, %v1881
      %v1883 = vrot.slane %v1882, 2
      %v1884 = vadd.f32 %v1882, %v1883
      %v1885 = vrot.slane %v1884, 1
      %v1886 = vadd.f32 %v1884, %v1885
      %v1887 = vrot.slane %v1868, 4
      %v1888 = vadd.f32 %v1868, %v1887
      %v1889 = vrot.slane %v1888, 2
      %v1890 = vadd.f32 %v1888, %v1889
      %v1891 = vrot.slane %v1890, 1
      %v1892 = vadd.f32 %v1890, %v1891
      %v1897 = vrot.slane %v1880, 7
      %v1898 = vrot.slane %v1886, 6
      %v1899 = vrot.slane %v1892, 5
      %v1900 = vsel %vm1855, %v1874, %v1897
      %v1901 = vsel %vm1857, %v1898, %v1899
      %v1902 = vsel %vm1859, %v1900, %v1901
      %1904 = vst.msk [vmem:[%s262 + $0x4] sm:$0xf] %vm1863, %v1902
      %p1905 = scmp.lt.s32.totalorder %s18, 1
      %s1906 = scalar_select %p1905, %s18, 1
      %s1907 = smul.addr %s1906, 4
      %s1908 = smul.addr %s1907, 8
      %s1909 = scalar_lea.vmem %s5, %s1908
      %p1910 = scmp.lt.s32.totalorder %s18, 1
      %s1911 = scalar_select %p1910, %s18, 1
      %s1912 = smul.addr %s1911, 8
      %s1913 = scalar_lea.vmem %s6, %s1912
      // Predicated region
      $region41: #{encoder_stage_forward.4} parent=39 // pred_check
        %p1914 = pneg %p146
      $region42: #{encoder_stage_forward.4} parent=39 // pred_check_branch
        %1916 = sbr.rel (%p1914) target = $region44
      $region43: #{encoder_stage_forward.4} parent=39 // pred_region
        _
      $region44: #{encoder_stage_forward.4} parent=39 // pred_fallthru
        _
      // Predicated region
      $region45: #{encoder_stage_forward.4} parent=39 // pred_check
        %p1917 = pneg %p172
      $region46: #{encoder_stage_forward.4} parent=39 // pred_check_branch
        %1919 = sbr.rel (%p1917) target = $region48
      $region47: #{encoder_stage_forward.4} parent=39 // pred_region
        _
      $region48: #{encoder_stage_forward.4} parent=39 // pred_fallthru
        _
    $region40: #{encoder_stage_forward.4} parent=5 // pred_fallthru
      _
    %p1920 = scmp.le.s32.totalorder 2, %s13
    // Predicated region
    $region49: #{encoder_stage_forward.4} parent=5 // pred_check
      %p1921 = pneg %p1920
    $region50: #{encoder_stage_forward.4} parent=5 // pred_check_branch
      %1923 = sbr.rel (%p1921) target = $region52
    $region51: #{encoder_stage_forward.4} parent=5 // pred_region
      %s1924 = ssub.s32 %s13, 2
      // Predicated region
      $region53: #{encoder_stage_forward.4} parent=51 // pred_check
        %p1925 = pneg %p152
      $region54: #{encoder_stage_forward.4} parent=51 // pred_check_branch
        %1927 = sbr.rel (%p1925) target = $region56
      $region55: #{encoder_stage_forward.4} parent=51 // pred_region
        %p1928 = scmp.lt.s32.totalorder %s19, 1
        %s1929 = scalar_select %p1928, %s19, 1
        %s1930 = smul.addr %s1929, 4
        %s1931 = smul.addr %s1930, 8
        %s1932 = scalar_lea.vmem %s5, %s1931
      $region56: #{encoder_stage_forward.4} parent=51 // pred_fallthru
        _
      // Predicated region
      $region57: #{encoder_stage_forward.4} parent=51 // pred_check
        %p1933 = pneg %p178
      $region58: #{encoder_stage_forward.4} parent=51 // pred_check_branch
        %1935 = sbr.rel (%p1933) target = $region60
      $region59: #{encoder_stage_forward.4} parent=51 // pred_region
        %p1936 = scmp.lt.s32.totalorder %s19, 1
        %s1937 = scalar_select %p1936, %s19, 1
        %s1938 = smul.addr %s1937, 8
        %s1939 = scalar_lea.vmem %s6, %s1938
      $region60: #{encoder_stage_forward.4} parent=51 // pred_fallthru
        _
    $region52: #{encoder_stage_forward.4} parent=5 // pred_fallthru
      _
  $region6: #{encoder_stage_forward.4} parent=0 // loop_footer
    %s17 = sadd.s32 1, %s13
  $region7: #{encoder_stage_forward.4} parent=0 // loop_footer_branch
    %12 = sbr.rel target = $region3
  $region8: #{encoder_stage_forward.4} parent=0 // loop_exit
    _

// kernel: encoder_stage_forward.5
$region0: #{encoder_stage_forward.5}
  #allocation0 [shape = 'u32[]', space=smem, size = 0x4, offset = 0x4, fixed_abs, tag = 'smem constant byte address 0x4 - core index']
  #allocation1 [shape = 'u32[72,128]{1,0:T(1,128)}', space=vmem, size = 0x9000, scoped, tag = 'internal scratch']
  #allocation2 [shape = 'f32[12,512]{1,0:T(8,128)}', space=vmem, size = 0x8000, scoped, tag = 'scratch operand']
  %s0 = inlined_call_operand.vmem [shape: f32[2,8,512], index: 0, kind: input, shape index: {}]
  %s1 = inlined_call_operand.vmem [shape: bf16[3,512,512], index: 1, kind: input, shape index: {}]
  %s2 = inlined_call_operand.vmem [shape: f32[1,512], index: 2, kind: input, shape index: {}]
  %s3 = inlined_call_operand.vmem [shape: f32[1,512], index: 3, kind: input, shape index: {}]
  %s4 = inlined_call_operand.vmem [shape: f32[1,512], index: 4, kind: input, shape index: {}]
  %s5 = inlined_call_operand.vmem [shape: f32[2,8,512], index: 5, kind: output, shape index: {0}]
  %s6 = inlined_call_operand.vmem [shape: f32[2,1,1024], index: 6, kind: output, shape index: {1}]
  %7 = xla_tuple %s5, %s6
  %s8 = sld [smem:[#allocation0]]
  $region61: #{encoder_stage_forward.5} parent=0
    _
  %s10 = ssub.s32 1, %s8
  %s11 = scalar_select 0, %s10, %s8
  loop: start=0, step=1, limit=4
  $region2: #{encoder_stage_forward.5} parent=0 // loop_pre_header
    _
  $region3: #{encoder_stage_forward.5} parent=0 // loop_header
    %s13 = sphi 0, %s17
    %p14 = scmp.ge.s32.totalorder %s13, 4
    %s23 = sphi 0, %s25
    %s26 = sphi 0, %s23
    %s27 = sphi 0, %s26
    %s43 = sphi 0, %s27
    %s47 = sphi 0, %s47
    %s49 = sphi 0, %s47
    %s50 = sphi 0, %s49
    %s64 = sphi 0, %s50
    %s68 = sphi 0, %s68
    %s70 = sphi 0, %s68
    %s71 = sphi 0, %s70
    %s85 = sphi 0, %s71
    %s89 = sphi 0, %s89
    %s91 = sphi 0, %s89
    %s92 = sphi 0, %s91
    %s106 = sphi 0, %s92
    %s110 = sphi 0, %s110
    %s112 = sphi 0, %s110
    %s113 = sphi 0, %s112
    %s127 = sphi 0, %s113
    %s133 = sphi 0, %s135
    %s136 = sphi 0, %s133
    %s137 = sphi 0, %s136
    %s153 = sphi 0, %s137
    %s159 = sphi 0, %s161
    %s162 = sphi 0, %s159
    %s163 = sphi 0, %s162
    %s179 = sphi 0, %s163
  $region4: #{encoder_stage_forward.5} parent=0 // loop_header_branch
    %16 = sbr.rel (%p14) target = $region8
  $region5: #{encoder_stage_forward.5} parent=0 // loop_body
    %s18 = ssub.s32 %s13, 1
    %s19 = ssub.s32 %s13, 2
    %s20 = sadd.s32 %s13, 1
    %s21 = ssub.s32 %s13, %s20
    %p22 = scmp.eq.s32.totalorder %s21, 0
    %s24 = sadd.s32 %s23, 1
    %s25 = scalar_select %p22, %s23, %s24
    %p28 = pneg %p22
    %p29 = scmp.eq.s32.totalorder %s13, 1
    %p30 = por %p28, %p29
    %p31 = scmp.ne.s32.totalorder %s23, %s26
    %p32 = scmp.eq.s32.totalorder %s13, 0
    %p33 = por %p31, %p32
    %p34 = scmp.ne.s32.totalorder %s23, %s26
    %p35 = scmp.eq.s32.totalorder %s18, 1
    %p36 = por %p34, %p35
    %p37 = scmp.ne.s32.totalorder %s26, %s27
    %p38 = scmp.eq.s32.totalorder %s18, 0
    %p39 = por %p37, %p38
    %p40 = scmp.ne.s32.totalorder %s26, %s27
    %p41 = scmp.eq.s32.totalorder %s19, 1
    %p42 = por %p40, %p41
    %p44 = scmp.ne.s32.totalorder %s27, %s43
    %p45 = scmp.eq.s32.totalorder %s19, 0
    %p46 = por %p44, %p45
    %s48 = sadd.s32 %s47, 1
    %p51 = scmp.eq.s32.totalorder %s13, 1
    %p52 = scmp.ne.s32.totalorder %s47, %s49
    %p53 = scmp.eq.s32.totalorder %s13, 0
    %p54 = por %p52, %p53
    %p55 = scmp.ne.s32.totalorder %s47, %s49
    %p56 = scmp.eq.s32.totalorder %s18, 1
    %p57 = por %p55, %p56
    %p58 = scmp.ne.s32.totalorder %s49, %s50
    %p59 = scmp.eq.s32.totalorder %s18, 0
    %p60 = por %p58, %p59
    %p61 = scmp.ne.s32.totalorder %s49, %s50
    %p62 = scmp.eq.s32.totalorder %s19, 1
    %p63 = por %p61, %p62
    %p65 = scmp.ne.s32.totalorder %s50, %s64
    %p66 = scmp.eq.s32.totalorder %s19, 0
    %p67 = por %p65, %p66
    %s69 = sadd.s32 %s68, 1
    %p72 = scmp.eq.s32.totalorder %s13, 1
    %p73 = scmp.ne.s32.totalorder %s68, %s70
    %p74 = scmp.eq.s32.totalorder %s13, 0
    %p75 = por %p73, %p74
    %p76 = scmp.ne.s32.totalorder %s68, %s70
    %p77 = scmp.eq.s32.totalorder %s18, 1
    %p78 = por %p76, %p77
    %p79 = scmp.ne.s32.totalorder %s70, %s71
    %p80 = scmp.eq.s32.totalorder %s18, 0
    %p81 = por %p79, %p80
    %p82 = scmp.ne.s32.totalorder %s70, %s71
    %p83 = scmp.eq.s32.totalorder %s19, 1
    %p84 = por %p82, %p83
    %p86 = scmp.ne.s32.totalorder %s71, %s85
    %p87 = scmp.eq.s32.totalorder %s19, 0
    %p88 = por %p86, %p87
    %s90 = sadd.s32 %s89, 1
    %p93 = scmp.eq.s32.totalorder %s13, 1
    %p94 = scmp.ne.s32.totalorder %s89, %s91
    %p95 = scmp.eq.s32.totalorder %s13, 0
    %p96 = por %p94, %p95
    %p97 = scmp.ne.s32.totalorder %s89, %s91
    %p98 = scmp.eq.s32.totalorder %s18, 1
    %p99 = por %p97, %p98
    %p100 = scmp.ne.s32.totalorder %s91, %s92
    %p101 = scmp.eq.s32.totalorder %s18, 0
    %p102 = por %p100, %p101
    %p103 = scmp.ne.s32.totalorder %s91, %s92
    %p104 = scmp.eq.s32.totalorder %s19, 1
    %p105 = por %p103, %p104
    %p107 = scmp.ne.s32.totalorder %s92, %s106
    %p108 = scmp.eq.s32.totalorder %s19, 0
    %p109 = por %p107, %p108
    %s111 = sadd.s32 %s110, 1
    %p114 = scmp.eq.s32.totalorder %s13, 1
    %p115 = scmp.ne.s32.totalorder %s110, %s112
    %p116 = scmp.eq.s32.totalorder %s13, 0
    %p117 = por %p115, %p116
    %p118 = scmp.ne.s32.totalorder %s110, %s112
    %p119 = scmp.eq.s32.totalorder %s18, 1
    %p120 = por %p118, %p119
    %p121 = scmp.ne.s32.totalorder %s112, %s113
    %p122 = scmp.eq.s32.totalorder %s18, 0
    %p123 = por %p121, %p122
    %p124 = scmp.ne.s32.totalorder %s112, %s113
    %p125 = scmp.eq.s32.totalorder %s19, 1
    %p126 = por %p124, %p125
    %p128 = scmp.ne.s32.totalorder %s113, %s127
    %p129 = scmp.eq.s32.totalorder %s19, 0
    %p130 = por %p128, %p129
    %s131 = ssub.s32 %s13, %s20
    %p132 = scmp.eq.s32.totalorder %s131, 0
    %s134 = sadd.s32 %s133, 1
    %s135 = scalar_select %p132, %s133, %s134
    %p138 = pneg %p132
    %p139 = scmp.eq.s32.totalorder %s13, 1
    %p140 = por %p138, %p139
    %p141 = scmp.ne.s32.totalorder %s133, %s136
    %p142 = scmp.eq.s32.totalorder %s13, 0
    %p143 = por %p141, %p142
    %p144 = scmp.ne.s32.totalorder %s133, %s136
    %p145 = scmp.eq.s32.totalorder %s18, 1
    %p146 = por %p144, %p145
    %p147 = scmp.ne.s32.totalorder %s136, %s137
    %p148 = scmp.eq.s32.totalorder %s18, 0
    %p149 = por %p147, %p148
    %p150 = scmp.ne.s32.totalorder %s136, %s137
    %p151 = scmp.eq.s32.totalorder %s19, 1
    %p152 = por %p150, %p151
    %p154 = scmp.ne.s32.totalorder %s137, %s153
    %p155 = scmp.eq.s32.totalorder %s19, 0
    %p156 = por %p154, %p155
    %s157 = ssub.s32 %s13, %s20
    %p158 = scmp.eq.s32.totalorder %s157, 0
    %s160 = sadd.s32 %s159, 1
    %s161 = scalar_select %p158, %s159, %s160
    %p164 = pneg %p158
    %p165 = scmp.eq.s32.totalorder %s13, 1
    %p166 = por %p164, %p165
    %p167 = scmp.ne.s32.totalorder %s159, %s162
    %p168 = scmp.eq.s32.totalorder %s13, 0
    %p169 = por %p167, %p168
    %p170 = scmp.ne.s32.totalorder %s159, %s162
    %p171 = scmp.eq.s32.totalorder %s18, 1
    %p172 = por %p170, %p171
    %p173 = scmp.ne.s32.totalorder %s162, %s163
    %p174 = scmp.eq.s32.totalorder %s18, 0
    %p175 = por %p173, %p174
    %p176 = scmp.ne.s32.totalorder %s162, %s163
    %p177 = scmp.eq.s32.totalorder %s19, 1
    %p178 = por %p176, %p177
    %p180 = scmp.ne.s32.totalorder %s163, %s179
    %p181 = scmp.eq.s32.totalorder %s19, 0
    %p182 = por %p180, %p181
    %p183 = scmp.le.s32.totalorder 1, %s13
    %p184 = scmp.lt.s32.totalorder %s13, 3
    %p185 = pnand %p183, %p184
    %p186 = pneg %p185
    // Predicated region
    $region9: #{encoder_stage_forward.5} parent=5 // pred_check
      _
    $region10: #{encoder_stage_forward.5} parent=5 // pred_check_branch
      %188 = sbr.rel (%p185) target = $region12
    $region11: #{encoder_stage_forward.5} parent=5 // pred_region
      %s189 = ssub.s32 %s13, 1
      // Predicated region
      $region13: #{encoder_stage_forward.5} parent=11 // pred_check
        %p190 = pneg %p60
      $region14: #{encoder_stage_forward.5} parent=11 // pred_check_branch
        %192 = sbr.rel (%p190) target = $region16
      $region15: #{encoder_stage_forward.5} parent=11 // pred_region
        _
      $region16: #{encoder_stage_forward.5} parent=11 // pred_fallthru
        _
      // Predicated region
      $region17: #{encoder_stage_forward.5} parent=11 // pred_check
        %p193 = pneg %p81
      $region18: #{encoder_stage_forward.5} parent=11 // pred_check_branch
        %195 = sbr.rel (%p193) target = $region20
      $region19: #{encoder_stage_forward.5} parent=11 // pred_region
        _
      $region20: #{encoder_stage_forward.5} parent=11 // pred_fallthru
        _
      // Predicated region
      $region21: #{encoder_stage_forward.5} parent=11 // pred_check
        %p196 = pneg %p102
      $region22: #{encoder_stage_forward.5} parent=11 // pred_check_branch
        %198 = sbr.rel (%p196) target = $region24
      $region23: #{encoder_stage_forward.5} parent=11 // pred_region
        _
      $region24: #{encoder_stage_forward.5} parent=11 // pred_fallthru
        _
      // Predicated region
      $region25: #{encoder_stage_forward.5} parent=11 // pred_check
        %p199 = pneg %p123
      $region26: #{encoder_stage_forward.5} parent=11 // pred_check_branch
        %201 = sbr.rel (%p199) target = $region28
      $region27: #{encoder_stage_forward.5} parent=11 // pred_region
        _
      $region28: #{encoder_stage_forward.5} parent=11 // pred_fallthru
        _
    $region12: #{encoder_stage_forward.5} parent=5 // pred_fallthru
      _
    %p202 = scmp.lt.s32.totalorder %s13, 2
    // Predicated region
    $region29: #{encoder_stage_forward.5} parent=5 // pred_check
      %p203 = pneg %p202
    $region30: #{encoder_stage_forward.5} parent=5 // pred_check_branch
      %205 = sbr.rel (%p203) target = $region32
    $region31: #{encoder_stage_forward.5} parent=5 // pred_region
      // Predicated region
      $region33: #{encoder_stage_forward.5} parent=31 // pred_check
        %p206 = pneg %p33
      $region34: #{encoder_stage_forward.5} parent=31 // pred_check_branch
        %208 = sbr.rel (%p206) target = $region36
      $region35: #{encoder_stage_forward.5} parent=31 // pred_region
        %p209 = scmp.lt.s32.totalorder %s13, 1
        %s210 = scalar_select %p209, %s13, 1
        %s211 = smul.addr %s210, 4
        %s212 = smul.addr %s211, 8
        %s213 = scalar_lea.vmem %s0, %s212
      $region36: #{encoder_stage_forward.5} parent=31 // pred_fallthru
        _
    $region32: #{encoder_stage_forward.5} parent=5 // pred_fallthru
      _
    %p214 = scmp.le.s32.totalorder 1, %s13
    %p215 = scmp.lt.s32.totalorder %s13, 3
    %p216 = pnand %p214, %p215
    %p217 = pneg %p216
    // Predicated region
    $region37: #{encoder_stage_forward.5} parent=5 // pred_check
      _
    $region38: #{encoder_stage_forward.5} parent=5 // pred_check_branch
      %219 = sbr.rel (%p216) target = $region40
    $region39: #{encoder_stage_forward.5} parent=5 // pred_region
      %s220 = ssub.s32 %s13, 1
      %p221 = scmp.lt.s32.totalorder %s18, 1
      %s222 = scalar_select %p221, %s18, 1
      %s223 = smul.addr %s222, 4
      %s224 = smul.addr %s223, 8
      %s225 = scalar_lea.vmem %s0, %s224
      %p226 = pneg %p39
      %p227 = pneg %p36
      %p228 = pneg %p60
      %p229 = pneg %p57
      %p230 = pneg %p81
      %p231 = pneg %p78
      %p232 = pneg %p102
      %p233 = pneg %p99
      %p234 = pneg %p123
      %p235 = pneg %p120
      %p236 = pneg %p149
      %p237 = pneg %p146
      %p238 = scmp.lt.s32.totalorder %s18, 1
      %s239 = scalar_select %p238, %s18, 1
      %s240 = smul.addr %s239, 4
      %s241 = smul.addr %s240, 8
      %s242 = scalar_lea.vmem %s5, %s241
      %p243 = pneg %p175
      %p244 = pneg %p172
      %p245 = scmp.lt.s32.totalorder %s18, 1
      %s246 = scalar_select %p245, %s18, 1
      %s247 = smul.addr %s246, 8
      %s248 = scalar_lea.vmem %s6, %s247
      %p249 = scmp.lt.s32.totalorder %s18, 1
      %s250 = scalar_select %p249, %s18, 1
      %s251 = smul.addr %s250, 4
      %s252 = smul.addr %s251, 8
      %s253 = scalar_lea.vmem %s0, %s252
      %p254 = scmp.lt.s32.totalorder %s18, 1
      %s255 = scalar_select %p254, %s18, 1
      %s256 = smul.addr %s255, 4
      %s257 = smul.addr %s256, 8
      %s258 = scalar_lea.vmem %s5, %s257
      %p259 = scmp.lt.s32.totalorder %s18, 1
      %s260 = scalar_select %p259, %s18, 1
      %s261 = smul.addr %s260, 8
      %s262 = scalar_lea.vmem %s6, %s261
      %v263 = vld [vmem:[%s253] sm:$0xff]
      %v264 = vld [vmem:[%s253 + $0x8] sm:$0xff]
      %v265 = vld [vmem:[%s253 + $0x10] sm:$0xff]
      %v266 = vld [vmem:[%s253 + $0x18] sm:$0xff]
      %v267 = vld [vmem:[%s2] sm:$0xf]
      %v269 = vperm.slane %v267, 0
      %v270 = vperm.slane %v267, 1
      %v271 = vperm.slane %v267, 2
      %v272 = vperm.slane %v267, 3
      %v277 = vmul.f32 %v263, %v269
      %v278 = vmul.f32 %v264, %v270
      %v279 = vmul.f32 %v265, %v271
      %v280 = vmul.f32 %v266, %v272
      %v281 = vld [vmem:[%s3] sm:$0xf]
      %v283 = vperm.slane %v281, 0
      %v284 = vperm.slane %v281, 1
      %v285 = vperm.slane %v281, 2
      %v286 = vperm.slane %v281, 3
      %v291 = vadd.f32 %v277, %v283
      %v292 = vadd.f32 %v278, %v284
      %v293 = vadd.f32 %v279, %v285
      %v294 = vadd.f32 %v280, %v286
      %vm295 = vcmp.ge.f32.partialorder %v291, 0.0
      %vm296 = vcmp.ge.f32.partialorder %v292, 0.0
      %vm297 = vcmp.ge.f32.partialorder %v293, 0.0
      %vm298 = vcmp.ge.f32.partialorder %v294, 0.0
      %v299 = vld [vmem:[%s4] sm:$0xf]
      %v301 = vperm.slane %v299, 0
      %v302 = vperm.slane %v299, 1
      %v303 = vperm.slane %v299, 2
      %v304 = vperm.slane %v299, 3
      %v309 = vmul.f32 %v301, %v291
      %v310 = vmul.f32 %v302, %v292
      %v311 = vmul.f32 %v303, %v293
      %v312 = vmul.f32 %v304, %v294
      %v313 = vsel %vm295, %v291, %v309
      %v314 = vsel %vm296, %v292, %v310
      %v315 = vsel %vm297, %v293, %v311
      %v316 = vsel %vm298, %v294, %v312
      %317 = vst [vmem:[#allocation2] sm:$0x3] 0.0
      %318 = vst [vmem:[#allocation2 + $0x8] sm:$0x3] 0.0
      %319 = vst [vmem:[#allocation2 + $0x10] sm:$0x3] 0.0
      %320 = vst [vmem:[#allocation2 + $0x18] sm:$0x3] 0.0
      %321 = vst [vmem:[#allocation2 + $0x20] sm:$0xc] 0.0
      %322 = vst [vmem:[#allocation2 + $0x28] sm:$0xc] 0.0
      %323 = vst [vmem:[#allocation2 + $0x30] sm:$0xc] 0.0
      %324 = vst [vmem:[#allocation2 + $0x38] sm:$0xc] 0.0
      %v329 = vrot.slane %v313, 6
      %v330 = vrot.slane %v314, 6
      %v331 = vrot.slane %v315, 6
      %v332 = vrot.slane %v316, 6
      %337 = vst [vmem:[#allocation2] sm:$0xfc] %v329
      %338 = vst [vmem:[#allocation2 + $0x8] sm:$0xfc] %v330
      %339 = vst [vmem:[#allocation2 + $0x10] sm:$0xfc] %v331
      %340 = vst [vmem:[#allocation2 + $0x18] sm:$0xfc] %v332
      %341 = vst [vmem:[#allocation2 + $0x20] sm:$0x3] %v329
      %342 = vst [vmem:[#allocation2 + $0x28] sm:$0x3] %v330
      %343 = vst [vmem:[#allocation2 + $0x30] sm:$0x3] %v331
      %344 = vst [vmem:[#allocation2 + $0x38] sm:$0x3] %v332
      %v345 = vld [vmem:[#allocation2] sm:$0xff]
      %v346 = vld [vmem:[#allocation2 + $0x8] sm:$0xff]
      %v347 = vld [vmem:[#allocation2 + $0x10] sm:$0xff]
      %v348 = vld [vmem:[#allocation2 + $0x18] sm:$0xff]
      %v349 = vpack.c.bf16 %v345, %v345
      %v350 = vpack.c.bf16 %v346, %v346
      %v351 = vpack.c.bf16 %v347, %v347
      %v352 = vpack.c.bf16 %v348, %v348
      %v353 = vld [vmem:[%s1] sm:$0xff]
      %v354 = vld [vmem:[%s1 + $0x8] sm:$0xff]
      %v355 = vld [vmem:[%s1 + $0x10] sm:$0xff]
      %v356 = vld [vmem:[%s1 + $0x18] sm:$0xff]
      %v357 = vld [vmem:[%s1 + $0x20] sm:$0xff]
      %v358 = vld [vmem:[%s1 + $0x28] sm:$0xff]
      %v359 = vld [vmem:[%s1 + $0x30] sm:$0xff]
      %v360 = vld [vmem:[%s1 + $0x38] sm:$0xff]
      %v361 = vld [vmem:[%s1 + $0x40] sm:$0xff]
      %v362 = vld [vmem:[%s1 + $0x48] sm:$0xff]
      %v363 = vld [vmem:[%s1 + $0x50] sm:$0xff]
      %v364 = vld [vmem:[%s1 + $0x58] sm:$0xff]
      %v365 = vld [vmem:[%s1 + $0x60] sm:$0xff]
      %v366 = vld [vmem:[%s1 + $0x68] sm:$0xff]
      %v367 = vld [vmem:[%s1 + $0x70] sm:$0xff]
      %v368 = vld [vmem:[%s1 + $0x78] sm:$0xff]
      %v369 = vld [vmem:[%s1 + $0x80] sm:$0xff]
      %v370 = vld [vmem:[%s1 + $0x88] sm:$0xff]
      %v371 = vld [vmem:[%s1 + $0x90] sm:$0xff]
      %v372 = vld [vmem:[%s1 + $0x98] sm:$0xff]
      %v373 = vld [vmem:[%s1 + $0xa0] sm:$0xff]
      %v374 = vld [vmem:[%s1 + $0xa8] sm:$0xff]
      %v375 = vld [vmem:[%s1 + $0xb0] sm:$0xff]
      %v376 = vld [vmem:[%s1 + $0xb8] sm:$0xff]
      %v377 = vld [vmem:[%s1 + $0xc0] sm:$0xff]
      %v378 = vld [vmem:[%s1 + $0xc8] sm:$0xff]
      %v379 = vld [vmem:[%s1 + $0xd0] sm:$0xff]
      %v380 = vld [vmem:[%s1 + $0xd8] sm:$0xff]
      %v381 = vld [vmem:[%s1 + $0xe0] sm:$0xff]
      %v382 = vld [vmem:[%s1 + $0xe8] sm:$0xff]
      %v383 = vld [vmem:[%s1 + $0xf0] sm:$0xff]
      %v384 = vld [vmem:[%s1 + $0xf8] sm:$0xff]
      %v385 = vld [vmem:[%s1 + $0x100] sm:$0xff]
      %v386 = vld [vmem:[%s1 + $0x108] sm:$0xff]
      %v387 = vld [vmem:[%s1 + $0x110] sm:$0xff]
      %v388 = vld [vmem:[%s1 + $0x118] sm:$0xff]
      %v389 = vld [vmem:[%s1 + $0x120] sm:$0xff]
      %v390 = vld [vmem:[%s1 + $0x128] sm:$0xff]
      %v391 = vld [vmem:[%s1 + $0x130] sm:$0xff]
      %v392 = vld [vmem:[%s1 + $0x138] sm:$0xff]
      %v393 = vld [vmem:[%s1 + $0x140] sm:$0xff]
      %v394 = vld [vmem:[%s1 + $0x148] sm:$0xff]
      %v395 = vld [vmem:[%s1 + $0x150] sm:$0xff]
      %v396 = vld [vmem:[%s1 + $0x158] sm:$0xff]
      %v397 = vld [vmem:[%s1 + $0x160] sm:$0xff]
      %v398 = vld [vmem:[%s1 + $0x168] sm:$0xff]
      %v399 = vld [vmem:[%s1 + $0x170] sm:$0xff]
      %v400 = vld [vmem:[%s1 + $0x178] sm:$0xff]
      %v401 = vld [vmem:[%s1 + $0x180] sm:$0xff]
      %v402 = vld [vmem:[%s1 + $0x188] sm:$0xff]
      %v403 = vld [vmem:[%s1 + $0x190] sm:$0xff]
      %v404 = vld [vmem:[%s1 + $0x198] sm:$0xff]
      %v405 = vld [vmem:[%s1 + $0x1a0] sm:$0xff]
      %v406 = vld [vmem:[%s1 + $0x1a8] sm:$0xff]
      %v407 = vld [vmem:[%s1 + $0x1b0] sm:$0xff]
      %v408 = vld [vmem:[%s1 + $0x1b8] sm:$0xff]
      %v409 = vld [vmem:[%s1 + $0x1c0] sm:$0xff]
      %v410 = vld [vmem:[%s1 + $0x1c8] sm:$0xff]
      %v411 = vld [vmem:[%s1 + $0x1d0] sm:$0xff]
      %v412 = vld [vmem:[%s1 + $0x1d8] sm:$0xff]
      %v413 = vld [vmem:[%s1 + $0x1e0] sm:$0xff]
      %v414 = vld [vmem:[%s1 + $0x1e8] sm:$0xff]
      %v415 = vld [vmem:[%s1 + $0x1f0] sm:$0xff]
      %v416 = vld [vmem:[%s1 + $0x1f8] sm:$0xff]
      %v417 = vld [vmem:[%s1 + $0x200] sm:$0xff]
      %v418 = vld [vmem:[%s1 + $0x208] sm:$0xff]
      %v419 = vld [vmem:[%s1 + $0x210] sm:$0xff]
      %v420 = vld [vmem:[%s1 + $0x218] sm:$0xff]
      %v421 = vld [vmem:[%s1 + $0x220] sm:$0xff]
      %v422 = vld [vmem:[%s1 + $0x228] sm:$0xff]
      %v423 = vld [vmem:[%s1 + $0x230] sm:$0xff]
      %v424 = vld [vmem:[%s1 + $0x238] sm:$0xff]
      %v425 = vld [vmem:[%s1 + $0x240] sm:$0xff]
      %v426 = vld [vmem:[%s1 + $0x248] sm:$0xff]
      %v427 = vld [vmem:[%s1 + $0x250] sm:$0xff]
      %v428 = vld [vmem:[%s1 + $0x258] sm:$0xff]
      %v429 = vld [vmem:[%s1 + $0x260] sm:$0xff]
      %v430 = vld [vmem:[%s1 + $0x268] sm:$0xff]
      %v431 = vld [vmem:[%s1 + $0x270] sm:$0xff]
      %v432 = vld [vmem:[%s1 + $0x278] sm:$0xff]
      %v433 = vld [vmem:[%s1 + $0x280] sm:$0xff]
      %v434 = vld [vmem:[%s1 + $0x288] sm:$0xff]
      %v435 = vld [vmem:[%s1 + $0x290] sm:$0xff]
      %v436 = vld [vmem:[%s1 + $0x298] sm:$0xff]
      %v437 = vld [vmem:[%s1 + $0x2a0] sm:$0xff]
      %v438 = vld [vmem:[%s1 + $0x2a8] sm:$0xff]
      %v439 = vld [vmem:[%s1 + $0x2b0] sm:$0xff]
      %v440 = vld [vmem:[%s1 + $0x2b8] sm:$0xff]
      %v441 = vld [vmem:[%s1 + $0x2c0] sm:$0xff]
      %v442 = vld [vmem:[%s1 + $0x2c8] sm:$0xff]
      %v443 = vld [vmem:[%s1 + $0x2d0] sm:$0xff]
      %v444 = vld [vmem:[%s1 + $0x2d8] sm:$0xff]
      %v445 = vld [vmem:[%s1 + $0x2e0] sm:$0xff]
      %v446 = vld [vmem:[%s1 + $0x2e8] sm:$0xff]
      %v447 = vld [vmem:[%s1 + $0x2f0] sm:$0xff]
      %v448 = vld [vmem:[%s1 + $0x2f8] sm:$0xff]
      %v449 = vld [vmem:[%s1 + $0x300] sm:$0xff]
      %v450 = vld [vmem:[%s1 + $0x308] sm:$0xff]
      %v451 = vld [vmem:[%s1 + $0x310] sm:$0xff]
      %v452 = vld [vmem:[%s1 + $0x318] sm:$0xff]
      %v453 = vld [vmem:[%s1 + $0x320] sm:$0xff]
      %v454 = vld [vmem:[%s1 + $0x328] sm:$0xff]
      %v455 = vld [vmem:[%s1 + $0x330] sm:$0xff]
      %v456 = vld [vmem:[%s1 + $0x338] sm:$0xff]
      %v457 = vld [vmem:[%s1 + $0x340] sm:$0xff]
      %v458 = vld [vmem:[%s1 + $0x348] sm:$0xff]
      %v459 = vld [vmem:[%s1 + $0x350] sm:$0xff]
      %v460 = vld [vmem:[%s1 + $0x358] sm:$0xff]
      %v461 = vld [vmem:[%s1 + $0x360] sm:$0xff]
      %v462 = vld [vmem:[%s1 + $0x368] sm:$0xff]
      %v463 = vld [vmem:[%s1 + $0x370] sm:$0xff]
      %v464 = vld [vmem:[%s1 + $0x378] sm:$0xff]
      %v465 = vld [vmem:[%s1 + $0x380] sm:$0xff]
      %v466 = vld [vmem:[%s1 + $0x388] sm:$0xff]
      %v467 = vld [vmem:[%s1 + $0x390] sm:$0xff]
      %v468 = vld [vmem:[%s1 + $0x398] sm:$0xff]
      %v469 = vld [vmem:[%s1 + $0x3a0] sm:$0xff]
      %v470 = vld [vmem:[%s1 + $0x3a8] sm:$0xff]
      %v471 = vld [vmem:[%s1 + $0x3b0] sm:$0xff]
      %v472 = vld [vmem:[%s1 + $0x3b8] sm:$0xff]
      %v473 = vld [vmem:[%s1 + $0x3c0] sm:$0xff]
      %v474 = vld [vmem:[%s1 + $0x3c8] sm:$0xff]
      %v475 = vld [vmem:[%s1 + $0x3d0] sm:$0xff]
      %v476 = vld [vmem:[%s1 + $0x3d8] sm:$0xff]
      %v477 = vld [vmem:[%s1 + $0x3e0] sm:$0xff]
      %v478 = vld [vmem:[%s1 + $0x3e8] sm:$0xff]
      %v479 = vld [vmem:[%s1 + $0x3f0] sm:$0xff]
      %v480 = vld [vmem:[%s1 + $0x3f8] sm:$0xff]
      %v481 = vld [vmem:[#allocation2] sm:$0xfc]
      %v482 = vld [vmem:[#allocation2 + $0x8] sm:$0xfc]
      %v483 = vld [vmem:[#allocation2 + $0x10] sm:$0xfc]
      %v484 = vld [vmem:[#allocation2 + $0x18] sm:$0xfc]
      %v485 = vld [vmem:[#allocation2 + $0x20] sm:$0x3]
      %v486 = vld [vmem:[#allocation2 + $0x28] sm:$0x3]
      %v487 = vld [vmem:[#allocation2 + $0x30] sm:$0x3]
      %v488 = vld [vmem:[#allocation2 + $0x38] sm:$0x3]
      %v489 = vpack.c.bf16 %v485, %v481
      %v490 = vpack.c.bf16 %v486, %v482
      %v491 = vpack.c.bf16 %v487, %v483
      %v492 = vpack.c.bf16 %v488, %v484
      %s493 = scalar_lea.vmem %s1, 1024
      %v494 = vld [vmem:[%s493] sm:$0xff]
      %v495 = vld [vmem:[%s493 + $0x8] sm:$0xff]
      %v496 = vld [vmem:[%s493 + $0x10] sm:$0xff]
      %v497 = vld [vmem:[%s493 + $0x18] sm:$0xff]
      %v498 = vld [vmem:[%s493 + $0x20] sm:$0xff]
      %v499 = vld [vmem:[%s493 + $0x28] sm:$0xff]
      %v500 = vld [vmem:[%s493 + $0x30] sm:$0xff]
      %v501 = vld [vmem:[%s493 + $0x38] sm:$0xff]
      %v502 = vld [vmem:[%s493 + $0x40] sm:$0xff]
      %v503 = vld [vmem:[%s493 + $0x48] sm:$0xff]
      %v504 = vld [vmem:[%s493 + $0x50] sm:$0xff]
      %v505 = vld [vmem:[%s493 + $0x58] sm:$0xff]
      %v506 = vld [vmem:[%s493 + $0x60] sm:$0xff]
      %v507 = vld [vmem:[%s493 + $0x68] sm:$0xff]
      %v508 = vld [vmem:[%s493 + $0x70] sm:$0xff]
      %v509 = vld [vmem:[%s493 + $0x78] sm:$0xff]
      %v510 = vld [vmem:[%s493 + $0x80] sm:$0xff]
      %v511 = vld [vmem:[%s493 + $0x88] sm:$0xff]
      %v512 = vld [vmem:[%s493 + $0x90] sm:$0xff]
      %v513 = vld [vmem:[%s493 + $0x98] sm:$0xff]
      %v514 = vld [vmem:[%s493 + $0xa0] sm:$0xff]
      %v515 = vld [vmem:[%s493 + $0xa8] sm:$0xff]
      %v516 = vld [vmem:[%s493 + $0xb0] sm:$0xff]
      %v517 = vld [vmem:[%s493 + $0xb8] sm:$0xff]
      %v518 = vld [vmem:[%s493 + $0xc0] sm:$0xff]
      %v519 = vld [vmem:[%s493 + $0xc8] sm:$0xff]
      %v520 = vld [vmem:[%s493 + $0xd0] sm:$0xff]
      %v521 = vld [vmem:[%s493 + $0xd8] sm:$0xff]
      %v522 = vld [vmem:[%s493 + $0xe0] sm:$0xff]
      %v523 = vld [vmem:[%s493 + $0xe8] sm:$0xff]
      %v524 = vld [vmem:[%s493 + $0xf0] sm:$0xff]
      %v525 = vld [vmem:[%s493 + $0xf8] sm:$0xff]
      %v526 = vld [vmem:[%s493 + $0x100] sm:$0xff]
      %v527 = vld [vmem:[%s493 + $0x108] sm:$0xff]
      %v528 = vld [vmem:[%s493 + $0x110] sm:$0xff]
      %v529 = vld [vmem:[%s493 + $0x118] sm:$0xff]
      %v530 = vld [vmem:[%s493 + $0x120] sm:$0xff]
      %v531 = vld [vmem:[%s493 + $0x128] sm:$0xff]
      %v532 = vld [vmem:[%s493 + $0x130] sm:$0xff]
      %v533 = vld [vmem:[%s493 + $0x138] sm:$0xff]
      %v534 = vld [vmem:[%s493 + $0x140] sm:$0xff]
      %v535 = vld [vmem:[%s493 + $0x148] sm:$0xff]
      %v536 = vld [vmem:[%s493 + $0x150] sm:$0xff]
      %v537 = vld [vmem:[%s493 + $0x158] sm:$0xff]
      %v538 = vld [vmem:[%s493 + $0x160] sm:$0xff]
      %v539 = vld [vmem:[%s493 + $0x168] sm:$0xff]
      %v540 = vld [vmem:[%s493 + $0x170] sm:$0xff]
      %v541 = vld [vmem:[%s493 + $0x178] sm:$0xff]
      %v542 = vld [vmem:[%s493 + $0x180] sm:$0xff]
      %v543 = vld [vmem:[%s493 + $0x188] sm:$0xff]
      %v544 = vld [vmem:[%s493 + $0x190] sm:$0xff]
      %v545 = vld [vmem:[%s493 + $0x198] sm:$0xff]
      %v546 = vld [vmem:[%s493 + $0x1a0] sm:$0xff]
      %v547 = vld [vmem:[%s493 + $0x1a8] sm:$0xff]
      %v548 = vld [vmem:[%s493 + $0x1b0] sm:$0xff]
      %v549 = vld [vmem:[%s493 + $0x1b8] sm:$0xff]
      %v550 = vld [vmem:[%s493 + $0x1c0] sm:$0xff]
      %v551 = vld [vmem:[%s493 + $0x1c8] sm:$0xff]
      %v552 = vld [vmem:[%s493 + $0x1d0] sm:$0xff]
      %v553 = vld [vmem:[%s493 + $0x1d8] sm:$0xff]
      %v554 = vld [vmem:[%s493 + $0x1e0] sm:$0xff]
      %v555 = vld [vmem:[%s493 + $0x1e8] sm:$0xff]
      %v556 = vld [vmem:[%s493 + $0x1f0] sm:$0xff]
      %v557 = vld [vmem:[%s493 + $0x1f8] sm:$0xff]
      %v558 = vld [vmem:[%s493 + $0x200] sm:$0xff]
      %v559 = vld [vmem:[%s493 + $0x208] sm:$0xff]
      %v560 = vld [vmem:[%s493 + $0x210] sm:$0xff]
      %v561 = vld [vmem:[%s493 + $0x218] sm:$0xff]
      %v562 = vld [vmem:[%s493 + $0x220] sm:$0xff]
      %v563 = vld [vmem:[%s493 + $0x228] sm:$0xff]
      %v564 = vld [vmem:[%s493 + $0x230] sm:$0xff]
      %v565 = vld [vmem:[%s493 + $0x238] sm:$0xff]
      %v566 = vld [vmem:[%s493 + $0x240] sm:$0xff]
      %v567 = vld [vmem:[%s493 + $0x248] sm:$0xff]
      %v568 = vld [vmem:[%s493 + $0x250] sm:$0xff]
      %v569 = vld [vmem:[%s493 + $0x258] sm:$0xff]
      %v570 = vld [vmem:[%s493 + $0x260] sm:$0xff]
      %v571 = vld [vmem:[%s493 + $0x268] sm:$0xff]
      %v572 = vld [vmem:[%s493 + $0x270] sm:$0xff]
      %v573 = vld [vmem:[%s493 + $0x278] sm:$0xff]
      %v574 = vld [vmem:[%s493 + $0x280] sm:$0xff]
      %v575 = vld [vmem:[%s493 + $0x288] sm:$0xff]
      %v576 = vld [vmem:[%s493 + $0x290] sm:$0xff]
      %v577 = vld [vmem:[%s493 + $0x298] sm:$0xff]
      %v578 = vld [vmem:[%s493 + $0x2a0] sm:$0xff]
      %v579 = vld [vmem:[%s493 + $0x2a8] sm:$0xff]
      %v580 = vld [vmem:[%s493 + $0x2b0] sm:$0xff]
      %v581 = vld [vmem:[%s493 + $0x2b8] sm:$0xff]
      %v582 = vld [vmem:[%s493 + $0x2c0] sm:$0xff]
      %v583 = vld [vmem:[%s493 + $0x2c8] sm:$0xff]
      %v584 = vld [vmem:[%s493 + $0x2d0] sm:$0xff]
      %v585 = vld [vmem:[%s493 + $0x2d8] sm:$0xff]
      %v586 = vld [vmem:[%s493 + $0x2e0] sm:$0xff]
      %v587 = vld [vmem:[%s493 + $0x2e8] sm:$0xff]
      %v588 = vld [vmem:[%s493 + $0x2f0] sm:$0xff]
      %v589 = vld [vmem:[%s493 + $0x2f8] sm:$0xff]
      %v590 = vld [vmem:[%s493 + $0x300] sm:$0xff]
      %v591 = vld [vmem:[%s493 + $0x308] sm:$0xff]
      %v592 = vld [vmem:[%s493 + $0x310] sm:$0xff]
      %v593 = vld [vmem:[%s493 + $0x318] sm:$0xff]
      %v594 = vld [vmem:[%s493 + $0x320] sm:$0xff]
      %v595 = vld [vmem:[%s493 + $0x328] sm:$0xff]
      %v596 = vld [vmem:[%s493 + $0x330] sm:$0xff]
      %v597 = vld [vmem:[%s493 + $0x338] sm:$0xff]
      %v598 = vld [vmem:[%s493 + $0x340] sm:$0xff]
      %v599 = vld [vmem:[%s493 + $0x348] sm:$0xff]
      %v600 = vld [vmem:[%s493 + $0x350] sm:$0xff]
      %v601 = vld [vmem:[%s493 + $0x358] sm:$0xff]
      %v602 = vld [vmem:[%s493 + $0x360] sm:$0xff]
      %v603 = vld [vmem:[%s493 + $0x368] sm:$0xff]
      %v604 = vld [vmem:[%s493 + $0x370] sm:$0xff]
      %v605 = vld [vmem:[%s493 + $0x378] sm:$0xff]
      %v606 = vld [vmem:[%s493 + $0x380] sm:$0xff]
      %v607 = vld [vmem:[%s493 + $0x388] sm:$0xff]
      %v608 = vld [vmem:[%s493 + $0x390] sm:$0xff]
      %v609 = vld [vmem:[%s493 + $0x398] sm:$0xff]
      %v610 = vld [vmem:[%s493 + $0x3a0] sm:$0xff]
      %v611 = vld [vmem:[%s493 + $0x3a8] sm:$0xff]
      %v612 = vld [vmem:[%s493 + $0x3b0] sm:$0xff]
      %v613 = vld [vmem:[%s493 + $0x3b8] sm:$0xff]
      %v614 = vld [vmem:[%s493 + $0x3c0] sm:$0xff]
      %v615 = vld [vmem:[%s493 + $0x3c8] sm:$0xff]
      %v616 = vld [vmem:[%s493 + $0x3d0] sm:$0xff]
      %v617 = vld [vmem:[%s493 + $0x3d8] sm:$0xff]
      %v618 = vld [vmem:[%s493 + $0x3e0] sm:$0xff]
      %v619 = vld [vmem:[%s493 + $0x3e8] sm:$0xff]
      %v620 = vld [vmem:[%s493 + $0x3f0] sm:$0xff]
      %v621 = vld [vmem:[%s493 + $0x3f8] sm:$0xff]
      %v626 = vrot.slane %v489, 1
      %v627 = vrot.slane %v490, 1
      %v628 = vrot.slane %v491, 1
      %v629 = vrot.slane %v492, 1
      %v762 = vunpack.c.l.b16 %v494
      %v763 = vunpack.c.h.b16 %v494
      %v764 = vunpack.c.l.b16 %v495
      %v765 = vunpack.c.h.b16 %v495
      %v766 = vunpack.c.l.b16 %v496
      %v767 = vunpack.c.h.b16 %v496
      %v768 = vunpack.c.l.b16 %v497
      %v769 = vunpack.c.h.b16 %v497
      %v770 = vunpack.c.l.b16 %v498
      %v771 = vunpack.c.h.b16 %v498
      %v772 = vunpack.c.l.b16 %v499
      %v773 = vunpack.c.h.b16 %v499
      %v774 = vunpack.c.l.b16 %v500
      %v775 = vunpack.c.h.b16 %v500
      %v776 = vunpack.c.l.b16 %v501
      %v777 = vunpack.c.h.b16 %v501
      %v778 = vunpack.c.l.b16 %v502
      %v779 = vunpack.c.h.b16 %v502
      %v780 = vunpack.c.l.b16 %v503
      %v781 = vunpack.c.h.b16 %v503
      %v782 = vunpack.c.l.b16 %v504
      %v783 = vunpack.c.h.b16 %v504
      %v784 = vunpack.c.l.b16 %v505
      %v785 = vunpack.c.h.b16 %v505
      %v786 = vunpack.c.l.b16 %v506
      %v787 = vunpack.c.h.b16 %v506
      %v788 = vunpack.c.l.b16 %v507
      %v789 = vunpack.c.h.b16 %v507
      %v790 = vunpack.c.l.b16 %v508
      %v791 = vunpack.c.h.b16 %v508
      %v792 = vunpack.c.l.b16 %v509
      %v793 = vunpack.c.h.b16 %v509
      %v794 = vunpack.c.l.b16 %v510
      %v795 = vunpack.c.h.b16 %v510
      %v796 = vunpack.c.l.b16 %v511
      %v797 = vunpack.c.h.b16 %v511
      %v798 = vunpack.c.l.b16 %v512
      %v799 = vunpack.c.h.b16 %v512
      %v800 = vunpack.c.l.b16 %v513
      %v801 = vunpack.c.h.b16 %v513
      %v802 = vunpack.c.l.b16 %v514
      %v803 = vunpack.c.h.b16 %v514
      %v804 = vunpack.c.l.b16 %v515
      %v805 = vunpack.c.h.b16 %v515
      %v806 = vunpack.c.l.b16 %v516
      %v807 = vunpack.c.h.b16 %v516
      %v808 = vunpack.c.l.b16 %v517
      %v809 = vunpack.c.h.b16 %v517
      %v810 = vunpack.c.l.b16 %v518
      %v811 = vunpack.c.h.b16 %v518
      %v812 = vunpack.c.l.b16 %v519
      %v813 = vunpack.c.h.b16 %v519
      %v814 = vunpack.c.l.b16 %v520
      %v815 = vunpack.c.h.b16 %v520
      %v816 = vunpack.c.l.b16 %v521
      %v817 = vunpack.c.h.b16 %v521
      %v818 = vunpack.c.l.b16 %v522
      %v819 = vunpack.c.h.b16 %v522
      %v820 = vunpack.c.l.b16 %v523
      %v821 = vunpack.c.h.b16 %v523
      %v822 = vunpack.c.l.b16 %v524
      %v823 = vunpack.c.h.b16 %v524
      %v824 = vunpack.c.l.b16 %v525
      %v825 = vunpack.c.h.b16 %v525
      %v826 = vunpack.c.l.b16 %v526
      %v827 = vunpack.c.h.b16 %v526
      %v828 = vunpack.c.l.b16 %v527
      %v829 = vunpack.c.h.b16 %v527
      %v830 = vunpack.c.l.b16 %v528
      %v831 = vunpack.c.h.b16 %v528
      %v832 = vunpack.c.l.b16 %v529
      %v833 = vunpack.c.h.b16 %v529
      %v834 = vunpack.c.l.b16 %v530
      %v835 = vunpack.c.h.b16 %v530
      %v836 = vunpack.c.l.b16 %v531
      %v837 = vunpack.c.h.b16 %v531
      %v838 = vunpack.c.l.b16 %v532
      %v839 = vunpack.c.h.b16 %v532
      %v840 = vunpack.c.l.b16 %v533
      %v841 = vunpack.c.h.b16 %v533
      %v842 = vunpack.c.l.b16 %v534
      %v843 = vunpack.c.h.b16 %v534
      %v844 = vunpack.c.l.b16 %v535
      %v845 = vunpack.c.h.b16 %v535
      %v846 = vunpack.c.l.b16 %v536
      %v847 = vunpack.c.h.b16 %v536
      %v848 = vunpack.c.l.b16 %v537
      %v849 = vunpack.c.h.b16 %v537
      %v850 = vunpack.c.l.b16 %v538
      %v851 = vunpack.c.h.b16 %v538
      %v852 = vunpack.c.l.b16 %v539
      %v853 = vunpack.c.h.b16 %v539
      %v854 = vunpack.c.l.b16 %v540
      %v855 = vunpack.c.h.b16 %v540
      %v856 = vunpack.c.l.b16 %v541
      %v857 = vunpack.c.h.b16 %v541
      %v858 = vunpack.c.l.b16 %v542
      %v859 = vunpack.c.h.b16 %v542
      %v860 = vunpack.c.l.b16 %v543
      %v861 = vunpack.c.h.b16 %v543
      %v862 = vunpack.c.l.b16 %v544
      %v863 = vunpack.c.h.b16 %v544
      %v864 = vunpack.c.l.b16 %v545
      %v865 = vunpack.c.h.b16 %v545
      %v866 = vunpack.c.l.b16 %v546
      %v867 = vunpack.c.h.b16 %v546
      %v868 = vunpack.c.l.b16 %v547
      %v869 = vunpack.c.h.b16 %v547
      %v870 = vunpack.c.l.b16 %v548
      %v871 = vunpack.c.h.b16 %v548
      %v872 = vunpack.c.l.b16 %v549
      %v873 = vunpack.c.h.b16 %v549
      %v874 = vunpack.c.l.b16 %v550
      %v875 = vunpack.c.h.b16 %v550
      %v876 = vunpack.c.l.b16 %v551
      %v877 = vunpack.c.h.b16 %v551
      %v878 = vunpack.c.l.b16 %v552
      %v879 = vunpack.c.h.b16 %v552
      %v880 = vunpack.c.l.b16 %v553
      %v881 = vunpack.c.h.b16 %v553
      %v882 = vunpack.c.l.b16 %v554
      %v883 = vunpack.c.h.b16 %v554
      %v884 = vunpack.c.l.b16 %v555
      %v885 = vunpack.c.h.b16 %v555
      %v886 = vunpack.c.l.b16 %v556
      %v887 = vunpack.c.h.b16 %v556
      %v888 = vunpack.c.l.b16 %v557
      %v889 = vunpack.c.h.b16 %v557
      %v890 = vunpack.c.l.b16 %v558
      %v891 = vunpack.c.h.b16 %v558
      %v892 = vunpack.c.l.b16 %v559
      %v893 = vunpack.c.h.b16 %v559
      %v894 = vunpack.c.l.b16 %v560
      %v895 = vunpack.c.h.b16 %v560
      %v896 = vunpack.c.l.b16 %v561
      %v897 = vunpack.c.h.b16 %v561
      %v898 = vunpack.c.l.b16 %v562
      %v899 = vunpack.c.h.b16 %v562
      %v900 = vunpack.c.l.b16 %v563
      %v901 = vunpack.c.h.b16 %v563
      %v902 = vunpack.c.l.b16 %v564
      %v903 = vunpack.c.h.b16 %v564
      %v904 = vunpack.c.l.b16 %v565
      %v905 = vunpack.c.h.b16 %v565
      %v906 = vunpack.c.l.b16 %v566
      %v907 = vunpack.c.h.b16 %v566
      %v908 = vunpack.c.l.b16 %v567
      %v909 = vunpack.c.h.b16 %v567
      %v910 = vunpack.c.l.b16 %v568
      %v911 = vunpack.c.h.b16 %v568
      %v912 = vunpack.c.l.b16 %v569
      %v913 = vunpack.c.h.b16 %v569
      %v914 = vunpack.c.l.b16 %v570
      %v915 = vunpack.c.h.b16 %v570
      %v916 = vunpack.c.l.b16 %v571
      %v917 = vunpack.c.h.b16 %v571
      %v918 = vunpack.c.l.b16 %v572
      %v919 = vunpack.c.h.b16 %v572
      %v920 = vunpack.c.l.b16 %v573
      %v921 = vunpack.c.h.b16 %v573
      %v922 = vunpack.c.l.b16 %v574
      %v923 = vunpack.c.h.b16 %v574
      %v924 = vunpack.c.l.b16 %v575
      %v925 = vunpack.c.h.b16 %v575
      %v926 = vunpack.c.l.b16 %v576
      %v927 = vunpack.c.h.b16 %v576
      %v928 = vunpack.c.l.b16 %v577
      %v929 = vunpack.c.h.b16 %v577
      %v930 = vunpack.c.l.b16 %v578
      %v931 = vunpack.c.h.b16 %v578
      %v932 = vunpack.c.l.b16 %v579
      %v933 = vunpack.c.h.b16 %v579
      %v934 = vunpack.c.l.b16 %v580
      %v935 = vunpack.c.h.b16 %v580
      %v936 = vunpack.c.l.b16 %v581
      %v937 = vunpack.c.h.b16 %v581
      %v938 = vunpack.c.l.b16 %v582
      %v939 = vunpack.c.h.b16 %v582
      %v940 = vunpack.c.l.b16 %v583
      %v941 = vunpack.c.h.b16 %v583
      %v942 = vunpack.c.l.b16 %v584
      %v943 = vunpack.c.h.b16 %v584
      %v944 = vunpack.c.l.b16 %v585
      %v945 = vunpack.c.h.b16 %v585
      %v946 = vunpack.c.l.b16 %v586
      %v947 = vunpack.c.h.b16 %v586
      %v948 = vunpack.c.l.b16 %v587
      %v949 = vunpack.c.h.b16 %v587
      %v950 = vunpack.c.l.b16 %v588
      %v951 = vunpack.c.h.b16 %v588
      %v952 = vunpack.c.l.b16 %v589
      %v953 = vunpack.c.h.b16 %v589
      %v954 = vunpack.c.l.b16 %v590
      %v955 = vunpack.c.h.b16 %v590
      %v956 = vunpack.c.l.b16 %v591
      %v957 = vunpack.c.h.b16 %v591
      %v958 = vunpack.c.l.b16 %v592
      %v959 = vunpack.c.h.b16 %v592
      %v960 = vunpack.c.l.b16 %v593
      %v961 = vunpack.c.h.b16 %v593
      %v962 = vunpack.c.l.b16 %v594
      %v963 = vunpack.c.h.b16 %v594
      %v964 = vunpack.c.l.b16 %v595
      %v965 = vunpack.c.h.b16 %v595
      %v966 = vunpack.c.l.b16 %v596
      %v967 = vunpack.c.h.b16 %v596
      %v968 = vunpack.c.l.b16 %v597
      %v969 = vunpack.c.h.b16 %v597
      %v970 = vunpack.c.l.b16 %v598
      %v971 = vunpack.c.h.b16 %v598
      %v972 = vunpack.c.l.b16 %v599
      %v973 = vunpack.c.h.b16 %v599
      %v974 = vunpack.c.l.b16 %v600
      %v975 = vunpack.c.h.b16 %v600
      %v976 = vunpack.c.l.b16 %v601
      %v977 = vunpack.c.h.b16 %v601
      %v978 = vunpack.c.l.b16 %v602
      %v979 = vunpack.c.h.b16 %v602
      %v980 = vunpack.c.l.b16 %v603
      %v981 = vunpack.c.h.b16 %v603
      %v982 = vunpack.c.l.b16 %v604
      %v983 = vunpack.c.h.b16 %v604
      %v984 = vunpack.c.l.b16 %v605
      %v985 = vunpack.c.h.b16 %v605
      %v986 = vunpack.c.l.b16 %v606
      %v987 = vunpack.c.h.b16 %v606
      %v988 = vunpack.c.l.b16 %v607
      %v989 = vunpack.c.h.b16 %v607
      %v990 = vunpack.c.l.b16 %v608
      %v991 = vunpack.c.h.b16 %v608
      %v992 = vunpack.c.l.b16 %v609
      %v993 = vunpack.c.h.b16 %v609
      %v994 = vunpack.c.l.b16 %v610
      %v995 = vunpack.c.h.b16 %v610
      %v996 = vunpack.c.l.b16 %v611
      %v997 = vunpack.c.h.b16 %v611
      %v998 = vunpack.c.l.b16 %v612
      %v999 = vunpack.c.h.b16 %v612
      %v1000 = vunpack.c.l.b16 %v613
      %v1001 = vunpack.c.h.b16 %v613
      %v1002 = vunpack.c.l.b16 %v614
      %v1003 = vunpack.c.h.b16 %v614
      %v1004 = vunpack.c.l.b16 %v615
      %v1005 = vunpack.c.h.b16 %v615
      %v1006 = vunpack.c.l.b16 %v616
      %v1007 = vunpack.c.h.b16 %v616
      %v1008 = vunpack.c.l.b16 %v617
      %v1009 = vunpack.c.h.b16 %v617
      %v1010 = vunpack.c.l.b16 %v618
      %v1011 = vunpack.c.h.b16 %v618
      %v1012 = vunpack.c.l.b16 %v619
      %v1013 = vunpack.c.h.b16 %v619
      %v1014 = vunpack.c.l.b16 %v620
      %v1015 = vunpack.c.h.b16 %v620
      %v1016 = vunpack.c.l.b16 %v621
      %v1017 = vunpack.c.h.b16 %v621
      %v1018 = vpack.c.b16 %v766, %v762
      %v1019 = vpack.c.b16 %v767, %v763
      %v1020 = vpack.c.b16 %v768, %v764
      %v1021 = vpack.c.b16 %v769, %v765
      %v1022 = vpack.c.b16 %v774, %v770
      %v1023 = vpack.c.b16 %v775, %v771
      %v1024 = vpack.c.b16 %v776, %v772
      %v1025 = vpack.c.b16 %v777, %v773
      %v1026 = vpack.c.b16 %v782, %v778
      %v1027 = vpack.c.b16 %v783, %v779
      %v1028 = vpack.c.b16 %v784, %v780
      %v1029 = vpack.c.b16 %v785, %v781
      %v1030 = vpack.c.b16 %v790, %v786
      %v1031 = vpack.c.b16 %v791, %v787
      %v1032 = vpack.c.b16 %v792, %v788
      %v1033 = vpack.c.b16 %v793, %v789
      %v1034 = vpack.c.b16 %v798, %v794
      %v1035 = vpack.c.b16 %v799, %v795
      %v1036 = vpack.c.b16 %v800, %v796
      %v1037 = vpack.c.b16 %v801, %v797
      %v1038 = vpack.c.b16 %v806, %v802
      %v1039 = vpack.c.b16 %v807, %v803
      %v1040 = vpack.c.b16 %v808, %v804
      %v1041 = vpack.c.b16 %v809, %v805
      %v1042 = vpack.c.b16 %v814, %v810
      %v1043 = vpack.c.b16 %v815, %v811
      %v1044 = vpack.c.b16 %v816, %v812
      %v1045 = vpack.c.b16 %v817, %v813
      %v1046 = vpack.c.b16 %v822, %v818
      %v1047 = vpack.c.b16 %v823, %v819
      %v1048 = vpack.c.b16 %v824, %v820
      %v1049 = vpack.c.b16 %v825, %v821
      %v1050 = vpack.c.b16 %v830, %v826
      %v1051 = vpack.c.b16 %v831, %v827
      %v1052 = vpack.c.b16 %v832, %v828
      %v1053 = vpack.c.b16 %v833, %v829
      %v1054 = vpack.c.b16 %v838, %v834
      %v1055 = vpack.c.b16 %v839, %v835
      %v1056 = vpack.c.b16 %v840, %v836
      %v1057 = vpack.c.b16 %v841, %v837
      %v1058 = vpack.c.b16 %v846, %v842
      %v1059 = vpack.c.b16 %v847, %v843
      %v1060 = vpack.c.b16 %v848, %v844
      %v1061 = vpack.c.b16 %v849, %v845
      %v1062 = vpack.c.b16 %v854, %v850
      %v1063 = vpack.c.b16 %v855, %v851
      %v1064 = vpack.c.b16 %v856, %v852
      %v1065 = vpack.c.b16 %v857, %v853
      %v1066 = vpack.c.b16 %v862, %v858
      %v1067 = vpack.c.b16 %v863, %v859
      %v1068 = vpack.c.b16 %v864, %v860
      %v1069 = vpack.c.b16 %v865, %v861
      %v1070 = vpack.c.b16 %v870, %v866
      %v1071 = vpack.c.b16 %v871, %v867
      %v1072 = vpack.c.b16 %v872, %v868
      %v1073 = vpack.c.b16 %v873, %v869
      %v1074 = vpack.c.b16 %v878, %v874
      %v1075 = vpack.c.b16 %v879, %v875
      %v1076 = vpack.c.b16 %v880, %v876
      %v1077 = vpack.c.b16 %v881, %v877
      %v1078 = vpack.c.b16 %v886, %v882
      %v1079 = vpack.c.b16 %v887, %v883
      %v1080 = vpack.c.b16 %v888, %v884
      %v1081 = vpack.c.b16 %v889, %v885
      %v1082 = vpack.c.b16 %v894, %v890
      %v1083 = vpack.c.b16 %v895, %v891
      %v1084 = vpack.c.b16 %v896, %v892
      %v1085 = vpack.c.b16 %v897, %v893
      %v1086 = vpack.c.b16 %v902, %v898
      %v1087 = vpack.c.b16 %v903, %v899
      %v1088 = vpack.c.b16 %v904, %v900
      %v1089 = vpack.c.b16 %v905, %v901
      %v1090 = vpack.c.b16 %v910, %v906
      %v1091 = vpack.c.b16 %v911, %v907
      %v1092 = vpack.c.b16 %v912, %v908
      %v1093 = vpack.c.b16 %v913, %v909
      %v1094 = vpack.c.b16 %v918, %v914
      %v1095 = vpack.c.b16 %v919, %v915
      %v1096 = vpack.c.b16 %v920, %v916
      %v1097 = vpack.c.b16 %v921, %v917
      %v1098 = vpack.c.b16 %v926, %v922
      %v1099 = vpack.c.b16 %v927, %v923
      %v1100 = vpack.c.b16 %v928, %v924
      %v1101 = vpack.c.b16 %v929, %v925
      %v1102 = vpack.c.b16 %v934, %v930
      %v1103 = vpack.c.b16 %v935, %v931
      %v1104 = vpack.c.b16 %v936, %v932
      %v1105 = vpack.c.b16 %v937, %v933
      %v1106 = vpack.c.b16 %v942, %v938
      %v1107 = vpack.c.b16 %v943, %v939
      %v1108 = vpack.c.b16 %v944, %v940
      %v1109 = vpack.c.b16 %v945, %v941
      %v1110 = vpack.c.b16 %v950, %v946
      %v1111 = vpack.c.b16 %v951, %v947
      %v1112 = vpack.c.b16 %v952, %v948
      %v1113 = vpack.c.b16 %v953, %v949
      %v1114 = vpack.c.b16 %v958, %v954
      %v1115 = vpack.c.b16 %v959, %v955
      %v1116 = vpack.c.b16 %v960, %v956
      %v1117 = vpack.c.b16 %v961, %v957
      %v1118 = vpack.c.b16 %v966, %v962
      %v1119 = vpack.c.b16 %v967, %v963
      %v1120 = vpack.c.b16 %v968, %v964
      %v1121 = vpack.c.b16 %v969, %v965
      %v1122 = vpack.c.b16 %v974, %v970
      %v1123 = vpack.c.b16 %v975, %v971
      %v1124 = vpack.c.b16 %v976, %v972
      %v1125 = vpack.c.b16 %v977, %v973
      %v1126 = vpack.c.b16 %v982, %v978
      %v1127 = vpack.c.b16 %v983, %v979
      %v1128 = vpack.c.b16 %v984, %v980
      %v1129 = vpack.c.b16 %v985, %v981
      %v1130 = vpack.c.b16 %v990, %v986
      %v1131 = vpack.c.b16 %v991, %v987
      %v1132 = vpack.c.b16 %v992, %v988
      %v1133 = vpack.c.b16 %v993, %v989
      %v1134 = vpack.c.b16 %v998, %v994
      %v1135 = vpack.c.b16 %v999, %v995
      %v1136 = vpack.c.b16 %v1000, %v996
      %v1137 = vpack.c.b16 %v1001, %v997
      %v1138 = vpack.c.b16 %v1006, %v1002
      %v1139 = vpack.c.b16 %v1007, %v1003
      %v1140 = vpack.c.b16 %v1008, %v1004
      %v1141 = vpack.c.b16 %v1009, %v1005
      %v1142 = vpack.c.b16 %v1014, %v1010
      %v1143 = vpack.c.b16 %v1015, %v1011
      %v1144 = vpack.c.b16 %v1016, %v1012
      %v1145 = vpack.c.b16 %v1017, %v1013
      %1274 = vmatpush.bf16.msra.mxu0 %v1046
      %1275 = vmatpush.bf16.msra.mxu0 %v1042
      %1276 = vmatpush.bf16.msra.mxu0 %v1038
      %1277 = vmatpush.bf16.msra.mxu0 %v1034
      %1278 = vmatpush.bf16.msra.mxu0 %v1030
      %1279 = vmatpush.bf16.msra.mxu0 %v1026
      %1280 = vmatpush.bf16.msra.mxu0 %v1022
      %1281 = vmatpush.bf16.msra.mxu0 %v1018
      %1282 = vmatmul.bf16.gmra.mxu0 %v626
      %v1283 = vpop.f32.mrf.mxu0
      %v1284 = vadd.f32 0.0, %v1283
      %v1285 = vpop.f32.mrf.mxu0
      %1286 = vdwg.mxu0
      %1287 = vmatpush.bf16.msra.mxu0 %v1078
      %1288 = vmatpush.bf16.msra.mxu0 %v1074
      %1289 = vmatpush.bf16.msra.mxu0 %v1070
      %1290 = vmatpush.bf16.msra.mxu0 %v1066
      %1291 = vmatpush.bf16.msra.mxu0 %v1062
      %1292 = vmatpush.bf16.msra.mxu0 %v1058
      %1293 = vmatpush.bf16.msra.mxu0 %v1054
      %1294 = vmatpush.bf16.msra.mxu0 %v1050
      %1295 = vmatmul.bf16.gmra.mxu0 %v627
      %v1296 = vpop.f32.mrf.mxu0
      %v1297 = vadd.f32 %v1284, %v1296
      %v1298 = vpop.f32.mrf.mxu0
      %1299 = vdwg.mxu0
      %1300 = vmatpush.bf16.msra.mxu0 %v1110
      %1301 = vmatpush.bf16.msra.mxu0 %v1106
      %1302 = vmatpush.bf16.msra.mxu0 %v1102
      %1303 = vmatpush.bf16.msra.mxu0 %v1098
      %1304 = vmatpush.bf16.msra.mxu0 %v1094
      %1305 = vmatpush.bf16.msra.mxu0 %v1090
      %1306 = vmatpush.bf16.msra.mxu0 %v1086
      %1307 = vmatpush.bf16.msra.mxu0 %v1082
      %1308 = vmatmul.bf16.gmra.mxu0 %v628
      %v1309 = vpop.f32.mrf.mxu0
      %v1310 = vadd.f32 %v1297, %v1309
      %v1311 = vpop.f32.mrf.mxu0
      %1312 = vdwg.mxu0
      %1313 = vmatpush.bf16.msra.mxu0 %v1142
      %1314 = vmatpush.bf16.msra.mxu0 %v1138
      %1315 = vmatpush.bf16.msra.mxu0 %v1134
      %1316 = vmatpush.bf16.msra.mxu0 %v1130
      %1317 = vmatpush.bf16.msra.mxu0 %v1126
      %1318 = vmatpush.bf16.msra.mxu0 %v1122
      %1319 = vmatpush.bf16.msra.mxu0 %v1118
      %1320 = vmatpush.bf16.msra.mxu0 %v1114
      %1321 = vmatmul.bf16.gmra.mxu0 %v629
      %v1322 = vpop.f32.mrf.mxu0
      %v1323 = vadd.f32 %v1310, %v1322
      %v1324 = vpop.f32.mrf.mxu0
      %1325 = vdwg.mxu0
      %1326 = vmatpush.bf16.msra.mxu0 %v1047
      %1327 = vmatpush.bf16.msra.mxu0 %v1043
      %1328 = vmatpush.bf16.msra.mxu0 %v1039
      %1329 = vmatpush.bf16.msra.mxu0 %v1035
      %1330 = vmatpush.bf16.msra.mxu0 %v1031
      %1331 = vmatpush.bf16.msra.mxu0 %v1027
      %1332 = vmatpush.bf16.msra.mxu0 %v1023
      %1333 = vmatpush.bf16.msra.mxu0 %v1019
      %1334 = vmatmul.bf16.gmra.mxu0 %v626
      %v1335 = vpop.f32.mrf.mxu0
      %v1336 = vadd.f32 0.0, %v1335
      %v1337 = vpop.f32.mrf.mxu0
      %1338 = vdwg.mxu0
      %1339 = vmatpush.bf16.msra.mxu0 %v1079
      %1340 = vmatpush.bf16.msra.mxu0 %v1075
      %1341 = vmatpush.bf16.msra.mxu0 %v1071
      %1342 = vmatpush.bf16.msra.mxu0 %v1067
      %1343 = vmatpush.bf16.msra.mxu0 %v1063
      %1344 = vmatpush.bf16.msra.mxu0 %v1059
      %1345 = vmatpush.bf16.msra.mxu0 %v1055
      %1346 = vmatpush.bf16.msra.mxu0 %v1051
      %1347 = vmatmul.bf16.gmra.mxu0 %v627
      %v1348 = vpop.f32.mrf.mxu0
      %v1349 = vadd.f32 %v1336, %v1348
      %v1350 = vpop.f32.mrf.mxu0
      %1351 = vdwg.mxu0
      %1352 = vmatpush.bf16.msra.mxu0 %v1111
      %1353 = vmatpush.bf16.msra.mxu0 %v1107
      %1354 = vmatpush.bf16.msra.mxu0 %v1103
      %1355 = vmatpush.bf16.msra.mxu0 %v1099
      %1356 = vmatpush.bf16.msra.mxu0 %v1095
      %1357 = vmatpush.bf16.msra.mxu0 %v1091
      %1358 = vmatpush.bf16.msra.mxu0 %v1087
      %1359 = vmatpush.bf16.msra.mxu0 %v1083
      %1360 = vmatmul.bf16.gmra.mxu0 %v628
      %v1361 = vpop.f32.mrf.mxu0
      %v1362 = vadd.f32 %v1349, %v1361
      %v1363 = vpop.f32.mrf.mxu0
      %1364 = vdwg.mxu0
      %1365 = vmatpush.bf16.msra.mxu0 %v1143
      %1366 = vmatpush.bf16.msra.mxu0 %v1139
      %1367 = vmatpush.bf16.msra.mxu0 %v1135
      %1368 = vmatpush.bf16.msra.mxu0 %v1131
      %1369 = vmatpush.bf16.msra.mxu0 %v1127
      %1370 = vmatpush.bf16.msra.mxu0 %v1123
      %1371 = vmatpush.bf16.msra.mxu0 %v1119
      %1372 = vmatpush.bf16.msra.mxu0 %v1115
      %1373 = vmatmul.bf16.gmra.mxu0 %v629
      %v1374 = vpop.f32.mrf.mxu0
      %v1375 = vadd.f32 %v1362, %v1374
      %v1376 = vpop.f32.mrf.mxu0
      %1377 = vdwg.mxu0
      %1378 = vmatpush.bf16.msra.mxu0 %v1048
      %1379 = vmatpush.bf16.msra.mxu0 %v1044
      %1380 = vmatpush.bf16.msra.mxu0 %v1040
      %1381 = vmatpush.bf16.msra.mxu0 %v1036
      %1382 = vmatpush.bf16.msra.mxu0 %v1032
      %1383 = vmatpush.bf16.msra.mxu0 %v1028
      %1384 = vmatpush.bf16.msra.mxu0 %v1024
      %1385 = vmatpush.bf16.msra.mxu0 %v1020
      %1386 = vmatmul.bf16.gmra.mxu0 %v626
      %v1387 = vpop.f32.mrf.mxu0
      %v1388 = vadd.f32 0.0, %v1387
      %v1389 = vpop.f32.mrf.mxu0
      %1390 = vdwg.mxu0
      %1391 = vmatpush.bf16.msra.mxu0 %v1080
      %1392 = vmatpush.bf16.msra.mxu0 %v1076
      %1393 = vmatpush.bf16.msra.mxu0 %v1072
      %1394 = vmatpush.bf16.msra.mxu0 %v1068
      %1395 = vmatpush.bf16.msra.mxu0 %v1064
      %1396 = vmatpush.bf16.msra.mxu0 %v1060
      %1397 = vmatpush.bf16.msra.mxu0 %v1056
      %1398 = vmatpush.bf16.msra.mxu0 %v1052
      %1399 = vmatmul.bf16.gmra.mxu0 %v627
      %v1400 = vpop.f32.mrf.mxu0
      %v1401 = vadd.f32 %v1388, %v1400
      %v1402 = vpop.f32.mrf.mxu0
      %1403 = vdwg.mxu0
      %1404 = vmatpush.bf16.msra.mxu0 %v1112
      %1405 = vmatpush.bf16.msra.mxu0 %v1108
      %1406 = vmatpush.bf16.msra.mxu0 %v1104
      %1407 = vmatpush.bf16.msra.mxu0 %v1100
      %1408 = vmatpush.bf16.msra.mxu0 %v1096
      %1409 = vmatpush.bf16.msra.mxu0 %v1092
      %1410 = vmatpush.bf16.msra.mxu0 %v1088
      %1411 = vmatpush.bf16.msra.mxu0 %v1084
      %1412 = vmatmul.bf16.gmra.mxu0 %v628
      %v1413 = vpop.f32.mrf.mxu0
      %v1414 = vadd.f32 %v1401, %v1413
      %v1415 = vpop.f32.mrf.mxu0
      %1416 = vdwg.mxu0
      %1417 = vmatpush.bf16.msra.mxu0 %v1144
      %1418 = vmatpush.bf16.msra.mxu0 %v1140
      %1419 = vmatpush.bf16.msra.mxu0 %v1136
      %1420 = vmatpush.bf16.msra.mxu0 %v1132
      %1421 = vmatpush.bf16.msra.mxu0 %v1128
      %1422 = vmatpush.bf16.msra.mxu0 %v1124
      %1423 = vmatpush.bf16.msra.mxu0 %v1120
      %1424 = vmatpush.bf16.msra.mxu0 %v1116
      %1425 = vmatmul.bf16.gmra.mxu0 %v629
      %v1426 = vpop.f32.mrf.mxu0
      %v1427 = vadd.f32 %v1414, %v1426
      %v1428 = vpop.f32.mrf.mxu0
      %1429 = vdwg.mxu0
      %1430 = vmatpush.bf16.msra.mxu0 %v1049
      %1431 = vmatpush.bf16.msra.mxu0 %v1045
      %1432 = vmatpush.bf16.msra.mxu0 %v1041
      %1433 = vmatpush.bf16.msra.mxu0 %v1037
      %1434 = vmatpush.bf16.msra.mxu0 %v1033
      %1435 = vmatpush.bf16.msra.mxu0 %v1029
      %1436 = vmatpush.bf16.msra.mxu0 %v1025
      %1437 = vmatpush.bf16.msra.mxu0 %v1021
      %1438 = vmatmul.bf16.gmra.mxu0 %v626
      %v1439 = vpop.f32.mrf.mxu0
      %v1440 = vadd.f32 0.0, %v1439
      %v1441 = vpop.f32.mrf.mxu0
      %1442 = vdwg.mxu0
      %1443 = vmatpush.bf16.msra.mxu0 %v1081
      %1444 = vmatpush.bf16.msra.mxu0 %v1077
      %1445 = vmatpush.bf16.msra.mxu0 %v1073
      %1446 = vmatpush.bf16.msra.mxu0 %v1069
      %1447 = vmatpush.bf16.msra.mxu0 %v1065
      %1448 = vmatpush.bf16.msra.mxu0 %v1061
      %1449 = vmatpush.bf16.msra.mxu0 %v1057
      %1450 = vmatpush.bf16.msra.mxu0 %v1053
      %1451 = vmatmul.bf16.gmra.mxu0 %v627
      %v1452 = vpop.f32.mrf.mxu0
      %v1453 = vadd.f32 %v1440, %v1452
      %v1454 = vpop.f32.mrf.mxu0
      %1455 = vdwg.mxu0
      %1456 = vmatpush.bf16.msra.mxu0 %v1113
      %1457 = vmatpush.bf16.msra.mxu0 %v1109
      %1458 = vmatpush.bf16.msra.mxu0 %v1105
      %1459 = vmatpush.bf16.msra.mxu0 %v1101
      %1460 = vmatpush.bf16.msra.mxu0 %v1097
      %1461 = vmatpush.bf16.msra.mxu0 %v1093
      %1462 = vmatpush.bf16.msra.mxu0 %v1089
      %1463 = vmatpush.bf16.msra.mxu0 %v1085
      %1464 = vmatmul.bf16.gmra.mxu0 %v628
      %v1465 = vpop.f32.mrf.mxu0
      %v1466 = vadd.f32 %v1453, %v1465
      %v1467 = vpop.f32.mrf.mxu0
      %1468 = vdwg.mxu0
      %1469 = vmatpush.bf16.msra.mxu0 %v1145
      %1470 = vmatpush.bf16.msra.mxu0 %v1141
      %1471 = vmatpush.bf16.msra.mxu0 %v1137
      %1472 = vmatpush.bf16.msra.mxu0 %v1133
      %1473 = vmatpush.bf16.msra.mxu0 %v1129
      %1474 = vmatpush.bf16.msra.mxu0 %v1125
      %1475 = vmatpush.bf16.msra.mxu0 %v1121
      %1476 = vmatpush.bf16.msra.mxu0 %v1117
      %1477 = vmatmul.bf16.gmra.mxu0 %v629
      %v1478 = vpop.f32.mrf.mxu0
      %v1479 = vadd.f32 %v1466, %v1478
      %v1480 = vpop.f32.mrf.mxu0
      %1481 = vdwg.mxu0
      %v1610 = vunpack.c.l.b16 %v353
      %v1611 = vunpack.c.h.b16 %v353
      %v1612 = vunpack.c.l.b16 %v354
      %v1613 = vunpack.c.h.b16 %v354
      %v1614 = vunpack.c.l.b16 %v355
      %v1615 = vunpack.c.h.b16 %v355
      %v1616 = vunpack.c.l.b16 %v356
      %v1617 = vunpack.c.h.b16 %v356
      %v1618 = vunpack.c.l.b16 %v357
      %v1619 = vunpack.c.h.b16 %v357
      %v1620 = vunpack.c.l.b16 %v358
      %v1621 = vunpack.c.h.b16 %v358
      %v1622 = vunpack.c.l.b16 %v359
      %v1623 = vunpack.c.h.b16 %v359
      %v1624 = vunpack.c.l.b16 %v360
      %v1625 = vunpack.c.h.b16 %v360
      %v1626 = vunpack.c.l.b16 %v361
      %v1627 = vunpack.c.h.b16 %v361
      %v1628 = vunpack.c.l.b16 %v362
      %v1629 = vunpack.c.h.b16 %v362
      %v1630 = vunpack.c.l.b16 %v363
      %v1631 = vunpack.c.h.b16 %v363
      %v1632 = vunpack.c.l.b16 %v364
      %v1633 = vunpack.c.h.b16 %v364
      %v1634 = vunpack.c.l.b16 %v365
      %v1635 = vunpack.c.h.b16 %v365
      %v1636 = vunpack.c.l.b16 %v366
      %v1637 = vunpack.c.h.b16 %v366
      %v1638 = vunpack.c.l.b16 %v367
      %v1639 = vunpack.c.h.b16 %v367
      %v1640 = vunpack.c.l.b16 %v368
      %v1641 = vunpack.c.h.b16 %v368
      %v1642 = vunpack.c.l.b16 %v369
      %v1643 = vunpack.c.h.b16 %v369
      %v1644 = vunpack.c.l.b16 %v370
      %v1645 = vunpack.c.h.b16 %v370
      %v1646 = vunpack.c.l.b16 %v371
      %v1647 = vunpack.c.h.b16 %v371
      %v1648 = vunpack.c.l.b16 %v372
      %v1649 = vunpack.c.h.b16 %v372
      %v1650 = vunpack.c.l.b16 %v373
      %v1651 = vunpack.c.h.b16 %v373
      %v1652 = vunpack.c.l.b16 %v374
      %v1653 = vunpack.c.h.b16 %v374
      %v1654 = vunpack.c.l.b16 %v375
      %v1655 = vunpack.c.h.b16 %v375
      %v1656 = vunpack.c.l.b16 %v376
      %v1657 = vunpack.c.h.b16 %v376
      %v1658 = vunpack.c.l.b16 %v377
      %v1659 = vunpack.c.h.b16 %v377
      %v1660 = vunpack.c.l.b16 %v378
      %v1661 = vunpack.c.h.b16 %v378
      %v1662 = vunpack.c.l.b16 %v379
      %v1663 = vunpack.c.h.b16 %v379
      %v1664 = vunpack.c.l.b16 %v380
      %v1665 = vunpack.c.h.b16 %v380
      %v1666 = vunpack.c.l.b16 %v381
      %v1667 = vunpack.c.h.b16 %v381
      %v1668 = vunpack.c.l.b16 %v382
      %v1669 = vunpack.c.h.b16 %v382
      %v1670 = vunpack.c.l.b16 %v383
      %v1671 = vunpack.c.h.b16 %v383
      %v1672 = vunpack.c.l.b16 %v384
      %v1673 = vunpack.c.h.b16 %v384
      %v1674 = vunpack.c.l.b16 %v385
      %v1675 = vunpack.c.h.b16 %v385
      %v1676 = vunpack.c.l.b16 %v386
      %v1677 = vunpack.c.h.b16 %v386
      %v1678 = vunpack.c.l.b16 %v387
      %v1679 = vunpack.c.h.b16 %v387
      %v1680 = vunpack.c.l.b16 %v388
      %v1681 = vunpack.c.h.b16 %v388
      %v1682 = vunpack.c.l.b16 %v389
      %v1683 = vunpack.c.h.b16 %v389
      %v1684 = vunpack.c.l.b16 %v390
      %v1685 = vunpack.c.h.b16 %v390
      %v1686 = vunpack.c.l.b16 %v391
      %v1687 = vunpack.c.h.b16 %v391
      %v1688 = vunpack.c.l.b16 %v392
      %v1689 = vunpack.c.h.b16 %v392
      %v1690 = vunpack.c.l.b16 %v393
      %v1691 = vunpack.c.h.b16 %v393
      %v1692 = vunpack.c.l.b16 %v394
      %v1693 = vunpack.c.h.b16 %v394
      %v1694 = vunpack.c.l.b16 %v395
      %v1695 = vunpack.c.h.b16 %v395
      %v1696 = vunpack.c.l.b16 %v396
      %v1697 = vunpack.c.h.b16 %v396
      %v1698 = vunpack.c.l.b16 %v397
      %v1699 = vunpack.c.h.b16 %v397
      %v1700 = vunpack.c.l.b16 %v398
      %v1701 = vunpack.c.h.b16 %v398
      %v1702 = vunpack.c.l.b16 %v399
      %v1703 = vunpack.c.h.b16 %v399
      %v1704 = vunpack.c.l.b16 %v400
      %v1705 = vunpack.c.h.b16 %v400
      %v1706 = vunpack.c.l.b16 %v401
      %v1707 = vunpack.c.h.b16 %v401
      %v1708 = vunpack.c.l.b16 %v402
      %v1709 = vunpack.c.h.b16 %v402
      %v1710 = vunpack.c.l.b16 %v403
      %v1711 = vunpack.c.h.b16 %v403
      %v1712 = vunpack.c.l.b16 %v404
      %v1713 = vunpack.c.h.b16 %v404
      %v1714 = vunpack.c.l.b16 %v405
      %v1715 = vunpack.c.h.b16 %v405
      %v1716 = vunpack.c.l.b16 %v406
      %v1717 = vunpack.c.h.b16 %v406
      %v1718 = vunpack.c.l.b16 %v407
      %v1719 = vunpack.c.h.b16 %v407
      %v1720 = vunpack.c.l.b16 %v408
      %v1721 = vunpack.c.h.b16 %v408
      %v1722 = vunpack.c.l.b16 %v409
      %v1723 = vunpack.c.h.b16 %v409
      %v1724 = vunpack.c.l.b16 %v410
      %v1725 = vunpack.c.h.b16 %v410
      %v1726 = vunpack.c.l.b16 %v411
      %v1727 = vunpack.c.h.b16 %v411
      %v1728 = vunpack.c.l.b16 %v412
      %v1729 = vunpack.c.h.b16 %v412
      %v1730 = vunpack.c.l.b16 %v413
      %v1731 = vunpack.c.h.b16 %v413
      %v1732 = vunpack.c.l.b16 %v414
      %v1733 = vunpack.c.h.b16 %v414
      %v1734 = vunpack.c.l.b16 %v415
      %v1735 = vunpack.c.h.b16 %v415
      %v1736 = vunpack.c.l.b16 %v416
      %v1737 = vunpack.c.h.b16 %v416
      %v1738 = vunpack.c.l.b16 %v417
      %v1739 = vunpack.c.h.b16 %v417
      %v1740 = vunpack.c.l.b16 %v418
      %v1741 = vunpack.c.h.b16 %v418
      %v1742 = vunpack.c.l.b16 %v419
      %v1743 = vunpack.c.h.b16 %v419
      %v1744 = vunpack.c.l.b16 %v420
      %v1745 = vunpack.c.h.b16 %v420
      %v1746 = vunpack.c.l.b16 %v421
      %v1747 = vunpack.c.h.b16 %v421
      %v1748 = vunpack.c.l.b16 %v422
      %v1749 = vunpack.c.h.b16 %v422
      %v1750 = vunpack.c.l.b16 %v423
      %v1751 = vunpack.c.h.b16 %v423
      %v1752 = vunpack.c.l.b16 %v424
      %v1753 = vunpack.c.h.b16 %v424
      %v1754 = vunpack.c.l.b16 %v425
      %v1755 = vunpack.c.h.b16 %v425
      %v1756 = vunpack.c.l.b16 %v426
      %v1757 = vunpack.c.h.b16 %v426
      %v1758 = vunpack.c.l.b16 %v427
      %v1759 = vunpack.c.h.b16 %v427
      %v1760 = vunpack.c.l.b16 %v428
      %v1761 = vunpack.c.h.b16 %v428
      %v1762 = vunpack.c.l.b16 %v429
      %v1763 = vunpack.c.h.b16 %v429
      %v1764 = vunpack.c.l.b16 %v430
      %v1765 = vunpack.c.h.b16 %v430
      %v1766 = vunpack.c.l.b16 %v431
      %v1767 = vunpack.c.h.b16 %v431
      %v1768 = vunpack.c.l.b16 %v432
      %v1769 = vunpack.c.h.b16 %v432
      %v1770 = vunpack.c.l.b16 %v433
      %v1771 = vunpack.c.h.b16 %v433
      %v1772 = vunpack.c.l.b16 %v434
      %v1773 = vunpack.c.h.b16 %v434
      %v1774 = vunpack.c.l.b16 %v435
      %v1775 = vunpack.c.h.b16 %v435
      %v1776 = vunpack.c.l.b16 %v436
      %v1777 = vunpack.c.h.b16 %v436
      %v1778 = vunpack.c.l.b16 %v437
      %v1779 = vunpack.c.h.b16 %v437
      %v1780 = vunpack.c.l.b16 %v438
      %v1781 = vunpack.c.h.b16 %v438
      %v1782 = vunpack.c.l.b16 %v439
      %v1783 = vunpack.c.h.b16 %v439
      %v1784 = vunpack.c.l.b16 %v440
      %v1785 = vunpack.c.h.b16 %v440
      %v1786 = vunpack.c.l.b16 %v441
      %v1787 = vunpack.c.h.b16 %v441
      %v1788 = vunpack.c.l.b16 %v442
      %v1789 = vunpack.c.h.b16 %v442
      %v1790 = vunpack.c.l.b16 %v443
      %v1791 = vunpack.c.h.b16 %v443
      %v1792 = vunpack.c.l.b16 %v444
      %v1793 = vunpack.c.h.b16 %v444
      %v1794 = vunpack.c.l.b16 %v445
      %v1795 = vunpack.c.h.b16 %v445
      %v1796 = vunpack.c.l.b16 %v446
      %v1797 = vunpack.c.h.b16 %v446
      %v1798 = vunpack.c.l.b16 %v447
      %v1799 = vunpack.c.h.b16 %v447
      %v1800 = vunpack.c.l.b16 %v448
      %v1801 = vunpack.c.h.b16 %v448
      %v1802 = vunpack.c.l.b16 %v449
      %v1803 = vunpack.c.h.b16 %v449
      %v1804 = vunpack.c.l.b16 %v450
      %v1805 = vunpack.c.h.b16 %v450
      %v1806 = vunpack.c.l.b16 %v451
      %v1807 = vunpack.c.h.b16 %v451
      %v1808 = vunpack.c.l.b16 %v452
      %v1809 = vunpack.c.h.b16 %v452
      %v1810 = vunpack.c.l.b16 %v453
      %v1811 = vunpack.c.h.b16 %v453
      %v1812 = vunpack.c.l.b16 %v454
      %v1813 = vunpack.c.h.b16 %v454
      %v1814 = vunpack.c.l.b16 %v455
      %v1815 = vunpack.c.h.b16 %v455
      %v1816 = vunpack.c.l.b16 %v456
      %v1817 = vunpack.c.h.b16 %v456
      %v1818 = vunpack.c.l.b16 %v457
      %v1819 = vunpack.c.h.b16 %v457
      %v1820 = vunpack.c.l.b16 %v458
      %v1821 = vunpack.c.h.b16 %v458
      %v1822 = vunpack.c.l.b16 %v459
      %v1823 = vunpack.c.h.b16 %v459
      %v1824 = vunpack.c.l.b16 %v460
      %v1825 = vunpack.c.h.b16 %v460
      %v1826 = vunpack.c.l.b16 %v461
      %v1827 = vunpack.c.h.b16 %v461
      %v1828 = vunpack.c.l.b16 %v462
      %v1829 = vunpack.c.h.b16 %v462
      %v1830 = vunpack.c.l.b16 %v463
      %v1831 = vunpack.c.h.b16 %v463
      %v1832 = vunpack.c.l.b16 %v464
      %v1833 = vunpack.c.h.b16 %v464
      %v1834 = vunpack.c.l.b16 %v465
      %v1835 = vunpack.c.h.b16 %v465
      %v1836 = vunpack.c.l.b16 %v466
      %v1837 = vunpack.c.h.b16 %v466
      %v1838 = vunpack.c.l.b16 %v467
      %v1839 = vunpack.c.h.b16 %v467
      %v1840 = vunpack.c.l.b16 %v468
      %v1841 = vunpack.c.h.b16 %v468
      %v1842 = vunpack.c.l.b16 %v469
      %v1843 = vunpack.c.h.b16 %v469
      %v1844 = vunpack.c.l.b16 %v470
      %v1845 = vunpack.c.h.b16 %v470
      %v1846 = vunpack.c.l.b16 %v471
      %v1847 = vunpack.c.h.b16 %v471
      %v1848 = vunpack.c.l.b16 %v472
      %v1849 = vunpack.c.h.b16 %v472
      %v1850 = vunpack.c.l.b16 %v473
      %v1851 = vunpack.c.h.b16 %v473
      %v1852 = vunpack.c.l.b16 %v474
      %v1853 = vunpack.c.h.b16 %v474
      %v1854 = vunpack.c.l.b16 %v475
      %v1855 = vunpack.c.h.b16 %v475
      %v1856 = vunpack.c.l.b16 %v476
      %v1857 = vunpack.c.h.b16 %v476
      %v1858 = vunpack.c.l.b16 %v477
      %v1859 = vunpack.c.h.b16 %v477
      %v1860 = vunpack.c.l.b16 %v478
      %v1861 = vunpack.c.h.b16 %v478
      %v1862 = vunpack.c.l.b16 %v479
      %v1863 = vunpack.c.h.b16 %v479
      %v1864 = vunpack.c.l.b16 %v480
      %v1865 = vunpack.c.h.b16 %v480
      %v1866 = vpack.c.b16 %v1614, %v1610
      %v1867 = vpack.c.b16 %v1615, %v1611
      %v1868 = vpack.c.b16 %v1616, %v1612
      %v1869 = vpack.c.b16 %v1617, %v1613
      %v1870 = vpack.c.b16 %v1622, %v1618
      %v1871 = vpack.c.b16 %v1623, %v1619
      %v1872 = vpack.c.b16 %v1624, %v1620
      %v1873 = vpack.c.b16 %v1625, %v1621
      %v1874 = vpack.c.b16 %v1630, %v1626
      %v1875 = vpack.c.b16 %v1631, %v1627
      %v1876 = vpack.c.b16 %v1632, %v1628
      %v1877 = vpack.c.b16 %v1633, %v1629
      %v1878 = vpack.c.b16 %v1638, %v1634
      %v1879 = vpack.c.b16 %v1639, %v1635
      %v1880 = vpack.c.b16 %v1640, %v1636
      %v1881 = vpack.c.b16 %v1641, %v1637
      %v1882 = vpack.c.b16 %v1646, %v1642
      %v1883 = vpack.c.b16 %v1647, %v1643
      %v1884 = vpack.c.b16 %v1648, %v1644
      %v1885 = vpack.c.b16 %v1649, %v1645
      %v1886 = vpack.c.b16 %v1654, %v1650
      %v1887 = vpack.c.b16 %v1655, %v1651
      %v1888 = vpack.c.b16 %v1656, %v1652
      %v1889 = vpack.c.b16 %v1657, %v1653
      %v1890 = vpack.c.b16 %v1662, %v1658
      %v1891 = vpack.c.b16 %v1663, %v1659
      %v1892 = vpack.c.b16 %v1664, %v1660
      %v1893 = vpack.c.b16 %v1665, %v1661
      %v1894 = vpack.c.b16 %v1670, %v1666
      %v1895 = vpack.c.b16 %v1671, %v1667
      %v1896 = vpack.c.b16 %v1672, %v1668
      %v1897 = vpack.c.b16 %v1673, %v1669
      %v1898 = vpack.c.b16 %v1678, %v1674
      %v1899 = vpack.c.b16 %v1679, %v1675
      %v1900 = vpack.c.b16 %v1680, %v1676
      %v1901 = vpack.c.b16 %v1681, %v1677
      %v1902 = vpack.c.b16 %v1686, %v1682
      %v1903 = vpack.c.b16 %v1687, %v1683
      %v1904 = vpack.c.b16 %v1688, %v1684
      %v1905 = vpack.c.b16 %v1689, %v1685
      %v1906 = vpack.c.b16 %v1694, %v1690
      %v1907 = vpack.c.b16 %v1695, %v1691
      %v1908 = vpack.c.b16 %v1696, %v1692
      %v1909 = vpack.c.b16 %v1697, %v1693
      %v1910 = vpack.c.b16 %v1702, %v1698
      %v1911 = vpack.c.b16 %v1703, %v1699
      %v1912 = vpack.c.b16 %v1704, %v1700
      %v1913 = vpack.c.b16 %v1705, %v1701
      %v1914 = vpack.c.b16 %v1710, %v1706
      %v1915 = vpack.c.b16 %v1711, %v1707
      %v1916 = vpack.c.b16 %v1712, %v1708
      %v1917 = vpack.c.b16 %v1713, %v1709
      %v1918 = vpack.c.b16 %v1718, %v1714
      %v1919 = vpack.c.b16 %v1719, %v1715
      %v1920 = vpack.c.b16 %v1720, %v1716
      %v1921 = vpack.c.b16 %v1721, %v1717
      %v1922 = vpack.c.b16 %v1726, %v1722
      %v1923 = vpack.c.b16 %v1727, %v1723
      %v1924 = vpack.c.b16 %v1728, %v1724
      %v1925 = vpack.c.b16 %v1729, %v1725
      %v1926 = vpack.c.b16 %v1734, %v1730
      %v1927 = vpack.c.b16 %v1735, %v1731
      %v1928 = vpack.c.b16 %v1736, %v1732
      %v1929 = vpack.c.b16 %v1737, %v1733
      %v1930 = vpack.c.b16 %v1742, %v1738
      %v1931 = vpack.c.b16 %v1743, %v1739
      %v1932 = vpack.c.b16 %v1744, %v1740
      %v1933 = vpack.c.b16 %v1745, %v1741
      %v1934 = vpack.c.b16 %v1750, %v1746
      %v1935 = vpack.c.b16 %v1751, %v1747
      %v1936 = vpack.c.b16 %v1752, %v1748
      %v1937 = vpack.c.b16 %v1753, %v1749
      %v1938 = vpack.c.b16 %v1758, %v1754
      %v1939 = vpack.c.b16 %v1759, %v1755
      %v1940 = vpack.c.b16 %v1760, %v1756
      %v1941 = vpack.c.b16 %v1761, %v1757
      %v1942 = vpack.c.b16 %v1766, %v1762
      %v1943 = vpack.c.b16 %v1767, %v1763
      %v1944 = vpack.c.b16 %v1768, %v1764
      %v1945 = vpack.c.b16 %v1769, %v1765
      %v1946 = vpack.c.b16 %v1774, %v1770
      %v1947 = vpack.c.b16 %v1775, %v1771
      %v1948 = vpack.c.b16 %v1776, %v1772
      %v1949 = vpack.c.b16 %v1777, %v1773
      %v1950 = vpack.c.b16 %v1782, %v1778
      %v1951 = vpack.c.b16 %v1783, %v1779
      %v1952 = vpack.c.b16 %v1784, %v1780
      %v1953 = vpack.c.b16 %v1785, %v1781
      %v1954 = vpack.c.b16 %v1790, %v1786
      %v1955 = vpack.c.b16 %v1791, %v1787
      %v1956 = vpack.c.b16 %v1792, %v1788
      %v1957 = vpack.c.b16 %v1793, %v1789
      %v1958 = vpack.c.b16 %v1798, %v1794
      %v1959 = vpack.c.b16 %v1799, %v1795
      %v1960 = vpack.c.b16 %v1800, %v1796
      %v1961 = vpack.c.b16 %v1801, %v1797
      %v1962 = vpack.c.b16 %v1806, %v1802
      %v1963 = vpack.c.b16 %v1807, %v1803
      %v1964 = vpack.c.b16 %v1808, %v1804
      %v1965 = vpack.c.b16 %v1809, %v1805
      %v1966 = vpack.c.b16 %v1814, %v1810
      %v1967 = vpack.c.b16 %v1815, %v1811
      %v1968 = vpack.c.b16 %v1816, %v1812
      %v1969 = vpack.c.b16 %v1817, %v1813
      %v1970 = vpack.c.b16 %v1822, %v1818
      %v1971 = vpack.c.b16 %v1823, %v1819
      %v1972 = vpack.c.b16 %v1824, %v1820
      %v1973 = vpack.c.b16 %v1825, %v1821
      %v1974 = vpack.c.b16 %v1830, %v1826
      %v1975 = vpack.c.b16 %v1831, %v1827
      %v1976 = vpack.c.b16 %v1832, %v1828
      %v1977 = vpack.c.b16 %v1833, %v1829
      %v1978 = vpack.c.b16 %v1838, %v1834
      %v1979 = vpack.c.b16 %v1839, %v1835
      %v1980 = vpack.c.b16 %v1840, %v1836
      %v1981 = vpack.c.b16 %v1841, %v1837
      %v1982 = vpack.c.b16 %v1846, %v1842
      %v1983 = vpack.c.b16 %v1847, %v1843
      %v1984 = vpack.c.b16 %v1848, %v1844
      %v1985 = vpack.c.b16 %v1849, %v1845
      %v1986 = vpack.c.b16 %v1854, %v1850
      %v1987 = vpack.c.b16 %v1855, %v1851
      %v1988 = vpack.c.b16 %v1856, %v1852
      %v1989 = vpack.c.b16 %v1857, %v1853
      %v1990 = vpack.c.b16 %v1862, %v1858
      %v1991 = vpack.c.b16 %v1863, %v1859
      %v1992 = vpack.c.b16 %v1864, %v1860
      %v1993 = vpack.c.b16 %v1865, %v1861
      %2122 = vmatpush.bf16.msra.mxu0 %v1894
      %2123 = vmatpush.bf16.msra.mxu0 %v1890
      %2124 = vmatpush.bf16.msra.mxu0 %v1886
      %2125 = vmatpush.bf16.msra.mxu0 %v1882
      %2126 = vmatpush.bf16.msra.mxu0 %v1878
      %2127 = vmatpush.bf16.msra.mxu0 %v1874
      %2128 = vmatpush.bf16.msra.mxu0 %v1870
      %2129 = vmatpush.bf16.msra.mxu0 %v1866
      %2130 = vmatmul.bf16.gmra.mxu0 %v349
      %v2131 = vpop.f32.mrf.mxu0
      %v2132 = vadd.f32 %v1323, %v2131
      %v2133 = vpop.f32.mrf.mxu0
      %2134 = vdwg.mxu0
      %2135 = vmatpush.bf16.msra.mxu0 %v1926
      %2136 = vmatpush.bf16.msra.mxu0 %v1922
      %2137 = vmatpush.bf16.msra.mxu0 %v1918
      %2138 = vmatpush.bf16.msra.mxu0 %v1914
      %2139 = vmatpush.bf16.msra.mxu0 %v1910
      %2140 = vmatpush.bf16.msra.mxu0 %v1906
      %2141 = vmatpush.bf16.msra.mxu0 %v1902
      %2142 = vmatpush.bf16.msra.mxu0 %v1898
      %2143 = vmatmul.bf16.gmra.mxu0 %v350
      %v2144 = vpop.f32.mrf.mxu0
      %v2145 = vadd.f32 %v2132, %v2144
      %v2146 = vpop.f32.mrf.mxu0
      %2147 = vdwg.mxu0
      %2148 = vmatpush.bf16.msra.mxu0 %v1958
      %2149 = vmatpush.bf16.msra.mxu0 %v1954
      %2150 = vmatpush.bf16.msra.mxu0 %v1950
      %2151 = vmatpush.bf16.msra.mxu0 %v1946
      %2152 = vmatpush.bf16.msra.mxu0 %v1942
      %2153 = vmatpush.bf16.msra.mxu0 %v1938
      %2154 = vmatpush.bf16.msra.mxu0 %v1934
      %2155 = vmatpush.bf16.msra.mxu0 %v1930
      %2156 = vmatmul.bf16.gmra.mxu0 %v351
      %v2157 = vpop.f32.mrf.mxu0
      %v2158 = vadd.f32 %v2145, %v2157
      %v2159 = vpop.f32.mrf.mxu0
      %2160 = vdwg.mxu0
      %2161 = vmatpush.bf16.msra.mxu0 %v1990
      %2162 = vmatpush.bf16.msra.mxu0 %v1986
      %2163 = vmatpush.bf16.msra.mxu0 %v1982
      %2164 = vmatpush.bf16.msra.mxu0 %v1978
      %2165 = vmatpush.bf16.msra.mxu0 %v1974
      %2166 = vmatpush.bf16.msra.mxu0 %v1970
      %2167 = vmatpush.bf16.msra.mxu0 %v1966
      %2168 = vmatpush.bf16.msra.mxu0 %v1962
      %2169 = vmatmul.bf16.gmra.mxu0 %v352
      %v2170 = vpop.f32.mrf.mxu0
      %v2171 = vadd.f32 %v2158, %v2170
      %v2172 = vpop.f32.mrf.mxu0
      %2173 = vdwg.mxu0
      %2174 = vmatpush.bf16.msra.mxu0 %v1895
      %2175 = vmatpush.bf16.msra.mxu0 %v1891
      %2176 = vmatpush.bf16.msra.mxu0 %v1887
      %2177 = vmatpush.bf16.msra.mxu0 %v1883
      %2178 = vmatpush.bf16.msra.mxu0 %v1879
      %2179 = vmatpush.bf16.msra.mxu0 %v1875
      %2180 = vmatpush.bf16.msra.mxu0 %v1871
      %2181 = vmatpush.bf16.msra.mxu0 %v1867
      %2182 = vmatmul.bf16.gmra.mxu0 %v349
      %v2183 = vpop.f32.mrf.mxu0
      %v2184 = vadd.f32 %v1375, %v2183
      %v2185 = vpop.f32.mrf.mxu0
      %2186 = vdwg.mxu0
      %2187 = vmatpush.bf16.msra.mxu0 %v1927
      %2188 = vmatpush.bf16.msra.mxu0 %v1923
      %2189 = vmatpush.bf16.msra.mxu0 %v1919
      %2190 = vmatpush.bf16.msra.mxu0 %v1915
      %2191 = vmatpush.bf16.msra.mxu0 %v1911
      %2192 = vmatpush.bf16.msra.mxu0 %v1907
      %2193 = vmatpush.bf16.msra.mxu0 %v1903
      %2194 = vmatpush.bf16.msra.mxu0 %v1899
      %2195 = vmatmul.bf16.gmra.mxu0 %v350
      %v2196 = vpop.f32.mrf.mxu0
      %v2197 = vadd.f32 %v2184, %v2196
      %v2198 = vpop.f32.mrf.mxu0
      %2199 = vdwg.mxu0
      %2200 = vmatpush.bf16.msra.mxu0 %v1959
      %2201 = vmatpush.bf16.msra.mxu0 %v1955
      %2202 = vmatpush.bf16.msra.mxu0 %v1951
      %2203 = vmatpush.bf16.msra.mxu0 %v1947
      %2204 = vmatpush.bf16.msra.mxu0 %v1943
      %2205 = vmatpush.bf16.msra.mxu0 %v1939
      %2206 = vmatpush.bf16.msra.mxu0 %v1935
      %2207 = vmatpush.bf16.msra.mxu0 %v1931
      %2208 = vmatmul.bf16.gmra.mxu0 %v351
      %v2209 = vpop.f32.mrf.mxu0
      %v2210 = vadd.f32 %v2197, %v2209
      %v2211 = vpop.f32.mrf.mxu0
      %2212 = vdwg.mxu0
      %2213 = vmatpush.bf16.msra.mxu0 %v1991
      %2214 = vmatpush.bf16.msra.mxu0 %v1987
      %2215 = vmatpush.bf16.msra.mxu0 %v1983
      %2216 = vmatpush.bf16.msra.mxu0 %v1979
      %2217 = vmatpush.bf16.msra.mxu0 %v1975
      %2218 = vmatpush.bf16.msra.mxu0 %v1971
      %2219 = vmatpush.bf16.msra.mxu0 %v1967
      %2220 = vmatpush.bf16.msra.mxu0 %v1963
      %2221 = vmatmul.bf16.gmra.mxu0 %v352
      %v2222 = vpop.f32.mrf.mxu0
      %v2223 = vadd.f32 %v2210, %v2222
      %v2224 = vpop.f32.mrf.mxu0
      %2225 = vdwg.mxu0
      %2226 = vmatpush.bf16.msra.mxu0 %v1896
      %2227 = vmatpush.bf16.msra.mxu0 %v1892
      %2228 = vmatpush.bf16.msra.mxu0 %v1888
      %2229 = vmatpush.bf16.msra.mxu0 %v1884
      %2230 = vmatpush.bf16.msra.mxu0 %v1880
      %2231 = vmatpush.bf16.msra.mxu0 %v1876
      %2232 = vmatpush.bf16.msra.mxu0 %v1872
      %2233 = vmatpush.bf16.msra.mxu0 %v1868
      %2234 = vmatmul.bf16.gmra.mxu0 %v349
      %v2235 = vpop.f32.mrf.mxu0
      %v2236 = vadd.f32 %v1427, %v2235
      %v2237 = vpop.f32.mrf.mxu0
      %2238 = vdwg.mxu0
      %2239 = vmatpush.bf16.msra.mxu0 %v1928
      %2240 = vmatpush.bf16.msra.mxu0 %v1924
      %2241 = vmatpush.bf16.msra.mxu0 %v1920
      %2242 = vmatpush.bf16.msra.mxu0 %v1916
      %2243 = vmatpush.bf16.msra.mxu0 %v1912
      %2244 = vmatpush.bf16.msra.mxu0 %v1908
      %2245 = vmatpush.bf16.msra.mxu0 %v1904
      %2246 = vmatpush.bf16.msra.mxu0 %v1900
      %2247 = vmatmul.bf16.gmra.mxu0 %v350
      %v2248 = vpop.f32.mrf.mxu0
      %v2249 = vadd.f32 %v2236, %v2248
      %v2250 = vpop.f32.mrf.mxu0
      %2251 = vdwg.mxu0
      %2252 = vmatpush.bf16.msra.mxu0 %v1960
      %2253 = vmatpush.bf16.msra.mxu0 %v1956
      %2254 = vmatpush.bf16.msra.mxu0 %v1952
      %2255 = vmatpush.bf16.msra.mxu0 %v1948
      %2256 = vmatpush.bf16.msra.mxu0 %v1944
      %2257 = vmatpush.bf16.msra.mxu0 %v1940
      %2258 = vmatpush.bf16.msra.mxu0 %v1936
      %2259 = vmatpush.bf16.msra.mxu0 %v1932
      %2260 = vmatmul.bf16.gmra.mxu0 %v351
      %v2261 = vpop.f32.mrf.mxu0
      %v2262 = vadd.f32 %v2249, %v2261
      %v2263 = vpop.f32.mrf.mxu0
      %2264 = vdwg.mxu0
      %2265 = vmatpush.bf16.msra.mxu0 %v1992
      %2266 = vmatpush.bf16.msra.mxu0 %v1988
      %2267 = vmatpush.bf16.msra.mxu0 %v1984
      %2268 = vmatpush.bf16.msra.mxu0 %v1980
      %2269 = vmatpush.bf16.msra.mxu0 %v1976
      %2270 = vmatpush.bf16.msra.mxu0 %v1972
      %2271 = vmatpush.bf16.msra.mxu0 %v1968
      %2272 = vmatpush.bf16.msra.mxu0 %v1964
      %2273 = vmatmul.bf16.gmra.mxu0 %v352
      %v2274 = vpop.f32.mrf.mxu0
      %v2275 = vadd.f32 %v2262, %v2274
      %v2276 = vpop.f32.mrf.mxu0
      %2277 = vdwg.mxu0
      %2278 = vmatpush.bf16.msra.mxu0 %v1897
      %2279 = vmatpush.bf16.msra.mxu0 %v1893
      %2280 = vmatpush.bf16.msra.mxu0 %v1889
      %2281 = vmatpush.bf16.msra.mxu0 %v1885
      %2282 = vmatpush.bf16.msra.mxu0 %v1881
      %2283 = vmatpush.bf16.msra.mxu0 %v1877
      %2284 = vmatpush.bf16.msra.mxu0 %v1873
      %2285 = vmatpush.bf16.msra.mxu0 %v1869
      %2286 = vmatmul.bf16.gmra.mxu0 %v349
      %v2287 = vpop.f32.mrf.mxu0
      %v2288 = vadd.f32 %v1479, %v2287
      %v2289 = vpop.f32.mrf.mxu0
      %2290 = vdwg.mxu0
      %2291 = vmatpush.bf16.msra.mxu0 %v1929
      %2292 = vmatpush.bf16.msra.mxu0 %v1925
      %2293 = vmatpush.bf16.msra.mxu0 %v1921
      %2294 = vmatpush.bf16.msra.mxu0 %v1917
      %2295 = vmatpush.bf16.msra.mxu0 %v1913
      %2296 = vmatpush.bf16.msra.mxu0 %v1909
      %2297 = vmatpush.bf16.msra.mxu0 %v1905
      %2298 = vmatpush.bf16.msra.mxu0 %v1901
      %2299 = vmatmul.bf16.gmra.mxu0 %v350
      %v2300 = vpop.f32.mrf.mxu0
      %v2301 = vadd.f32 %v2288, %v2300
      %v2302 = vpop.f32.mrf.mxu0
      %2303 = vdwg.mxu0
      %2304 = vmatpush.bf16.msra.mxu0 %v1961
      %2305 = vmatpush.bf16.msra.mxu0 %v1957
      %2306 = vmatpush.bf16.msra.mxu0 %v1953
      %2307 = vmatpush.bf16.msra.mxu0 %v1949
      %2308 = vmatpush.bf16.msra.mxu0 %v1945
      %2309 = vmatpush.bf16.msra.mxu0 %v1941
      %2310 = vmatpush.bf16.msra.mxu0 %v1937
      %2311 = vmatpush.bf16.msra.mxu0 %v1933
      %2312 = vmatmul.bf16.gmra.mxu0 %v351
      %v2313 = vpop.f32.mrf.mxu0
      %v2314 = vadd.f32 %v2301, %v2313
      %v2315 = vpop.f32.mrf.mxu0
      %2316 = vdwg.mxu0
      %2317 = vmatpush.bf16.msra.mxu0 %v1993
      %2318 = vmatpush.bf16.msra.mxu0 %v1989
      %2319 = vmatpush.bf16.msra.mxu0 %v1985
      %2320 = vmatpush.bf16.msra.mxu0 %v1981
      %2321 = vmatpush.bf16.msra.mxu0 %v1977
      %2322 = vmatpush.bf16.msra.mxu0 %v1973
      %2323 = vmatpush.bf16.msra.mxu0 %v1969
      %2324 = vmatpush.bf16.msra.mxu0 %v1965
      %2325 = vmatmul.bf16.gmra.mxu0 %v352
      %v2326 = vpop.f32.mrf.mxu0
      %v2327 = vadd.f32 %v2314, %v2326
      %v2328 = vpop.f32.mrf.mxu0
      %2329 = vdwg.mxu0
      %v2330 = vld [vmem:[#allocation2] sm:$0xf0]
      %v2331 = vld [vmem:[#allocation2 + $0x8] sm:$0xf0]
      %v2332 = vld [vmem:[#allocation2 + $0x10] sm:$0xf0]
      %v2333 = vld [vmem:[#allocation2 + $0x18] sm:$0xf0]
      %v2334 = vld [vmem:[#allocation2 + $0x20] sm:$0xf]
      %v2335 = vld [vmem:[#allocation2 + $0x28] sm:$0xf]
      %v2336 = vld [vmem:[#allocation2 + $0x30] sm:$0xf]
      %v2337 = vld [vmem:[#allocation2 + $0x38] sm:$0xf]
      %v2338 = vpack.c.bf16 %v2334, %v2330
      %v2339 = vpack.c.bf16 %v2335, %v2331
      %v2340 = vpack.c.bf16 %v2336, %v2332
      %v2341 = vpack.c.bf16 %v2337, %v2333
      %s2342 = scalar_lea.vmem %s1, 2048
      %v2343 = vld [vmem:[%s2342] sm:$0xff]
      %v2344 = vld [vmem:[%s2342 + $0x8] sm:$0xff]
      %v2345 = vld [vmem:[%s2342 + $0x10] sm:$0xff]
      %v2346 = vld [vmem:[%s2342 + $0x18] sm:$0xff]
      %v2347 = vld [vmem:[%s2342 + $0x20] sm:$0xff]
      %v2348 = vld [vmem:[%s2342 + $0x28] sm:$0xff]
      %v2349 = vld [vmem:[%s2342 + $0x30] sm:$0xff]
      %v2350 = vld [vmem:[%s2342 + $0x38] sm:$0xff]
      %v2351 = vld [vmem:[%s2342 + $0x40] sm:$0xff]
      %v2352 = vld [vmem:[%s2342 + $0x48] sm:$0xff]
      %v2353 = vld [vmem:[%s2342 + $0x50] sm:$0xff]
      %v2354 = vld [vmem:[%s2342 + $0x58] sm:$0xff]
      %v2355 = vld [vmem:[%s2342 + $0x60] sm:$0xff]
      %v2356 = vld [vmem:[%s2342 + $0x68] sm:$0xff]
      %v2357 = vld [vmem:[%s2342 + $0x70] sm:$0xff]
      %v2358 = vld [vmem:[%s2342 + $0x78] sm:$0xff]
      %v2359 = vld [vmem:[%s2342 + $0x80] sm:$0xff]
      %v2360 = vld [vmem:[%s2342 + $0x88] sm:$0xff]
      %v2361 = vld [vmem:[%s2342 + $0x90] sm:$0xff]
      %v2362 = vld [vmem:[%s2342 + $0x98] sm:$0xff]
      %v2363 = vld [vmem:[%s2342 + $0xa0] sm:$0xff]
      %v2364 = vld [vmem:[%s2342 + $0xa8] sm:$0xff]
      %v2365 = vld [vmem:[%s2342 + $0xb0] sm:$0xff]
      %v2366 = vld [vmem:[%s2342 + $0xb8] sm:$0xff]
      %v2367 = vld [vmem:[%s2342 + $0xc0] sm:$0xff]
      %v2368 = vld [vmem:[%s2342 + $0xc8] sm:$0xff]
      %v2369 = vld [vmem:[%s2342 + $0xd0] sm:$0xff]
      %v2370 = vld [vmem:[%s2342 + $0xd8] sm:$0xff]
      %v2371 = vld [vmem:[%s2342 + $0xe0] sm:$0xff]
      %v2372 = vld [vmem:[%s2342 + $0xe8] sm:$0xff]
      %v2373 = vld [vmem:[%s2342 + $0xf0] sm:$0xff]
      %v2374 = vld [vmem:[%s2342 + $0xf8] sm:$0xff]
      %v2375 = vld [vmem:[%s2342 + $0x100] sm:$0xff]
      %v2376 = vld [vmem:[%s2342 + $0x108] sm:$0xff]
      %v2377 = vld [vmem:[%s2342 + $0x110] sm:$0xff]
      %v2378 = vld [vmem:[%s2342 + $0x118] sm:$0xff]
      %v2379 = vld [vmem:[%s2342 + $0x120] sm:$0xff]
      %v2380 = vld [vmem:[%s2342 + $0x128] sm:$0xff]
      %v2381 = vld [vmem:[%s2342 + $0x130] sm:$0xff]
      %v2382 = vld [vmem:[%s2342 + $0x138] sm:$0xff]
      %v2383 = vld [vmem:[%s2342 + $0x140] sm:$0xff]
      %v2384 = vld [vmem:[%s2342 + $0x148] sm:$0xff]
      %v2385 = vld [vmem:[%s2342 + $0x150] sm:$0xff]
      %v2386 = vld [vmem:[%s2342 + $0x158] sm:$0xff]
      %v2387 = vld [vmem:[%s2342 + $0x160] sm:$0xff]
      %v2388 = vld [vmem:[%s2342 + $0x168] sm:$0xff]
      %v2389 = vld [vmem:[%s2342 + $0x170] sm:$0xff]
      %v2390 = vld [vmem:[%s2342 + $0x178] sm:$0xff]
      %v2391 = vld [vmem:[%s2342 + $0x180] sm:$0xff]
      %v2392 = vld [vmem:[%s2342 + $0x188] sm:$0xff]
      %v2393 = vld [vmem:[%s2342 + $0x190] sm:$0xff]
      %v2394 = vld [vmem:[%s2342 + $0x198] sm:$0xff]
      %v2395 = vld [vmem:[%s2342 + $0x1a0] sm:$0xff]
      %v2396 = vld [vmem:[%s2342 + $0x1a8] sm:$0xff]
      %v2397 = vld [vmem:[%s2342 + $0x1b0] sm:$0xff]
      %v2398 = vld [vmem:[%s2342 + $0x1b8] sm:$0xff]
      %v2399 = vld [vmem:[%s2342 + $0x1c0] sm:$0xff]
      %v2400 = vld [vmem:[%s2342 + $0x1c8] sm:$0xff]
      %v2401 = vld [vmem:[%s2342 + $0x1d0] sm:$0xff]
      %v2402 = vld [vmem:[%s2342 + $0x1d8] sm:$0xff]
      %v2403 = vld [vmem:[%s2342 + $0x1e0] sm:$0xff]
      %v2404 = vld [vmem:[%s2342 + $0x1e8] sm:$0xff]
      %v2405 = vld [vmem:[%s2342 + $0x1f0] sm:$0xff]
      %v2406 = vld [vmem:[%s2342 + $0x1f8] sm:$0xff]
      %v2407 = vld [vmem:[%s2342 + $0x200] sm:$0xff]
      %v2408 = vld [vmem:[%s2342 + $0x208] sm:$0xff]
      %v2409 = vld [vmem:[%s2342 + $0x210] sm:$0xff]
      %v2410 = vld [vmem:[%s2342 + $0x218] sm:$0xff]
      %v2411 = vld [vmem:[%s2342 + $0x220] sm:$0xff]
      %v2412 = vld [vmem:[%s2342 + $0x228] sm:$0xff]
      %v2413 = vld [vmem:[%s2342 + $0x230] sm:$0xff]
      %v2414 = vld [vmem:[%s2342 + $0x238] sm:$0xff]
      %v2415 = vld [vmem:[%s2342 + $0x240] sm:$0xff]
      %v2416 = vld [vmem:[%s2342 + $0x248] sm:$0xff]
      %v2417 = vld [vmem:[%s2342 + $0x250] sm:$0xff]
      %v2418 = vld [vmem:[%s2342 + $0x258] sm:$0xff]
      %v2419 = vld [vmem:[%s2342 + $0x260] sm:$0xff]
      %v2420 = vld [vmem:[%s2342 + $0x268] sm:$0xff]
      %v2421 = vld [vmem:[%s2342 + $0x270] sm:$0xff]
      %v2422 = vld [vmem:[%s2342 + $0x278] sm:$0xff]
      %v2423 = vld [vmem:[%s2342 + $0x280] sm:$0xff]
      %v2424 = vld [vmem:[%s2342 + $0x288] sm:$0xff]
      %v2425 = vld [vmem:[%s2342 + $0x290] sm:$0xff]
      %v2426 = vld [vmem:[%s2342 + $0x298] sm:$0xff]
      %v2427 = vld [vmem:[%s2342 + $0x2a0] sm:$0xff]
      %v2428 = vld [vmem:[%s2342 + $0x2a8] sm:$0xff]
      %v2429 = vld [vmem:[%s2342 + $0x2b0] sm:$0xff]
      %v2430 = vld [vmem:[%s2342 + $0x2b8] sm:$0xff]
      %v2431 = vld [vmem:[%s2342 + $0x2c0] sm:$0xff]
      %v2432 = vld [vmem:[%s2342 + $0x2c8] sm:$0xff]
      %v2433 = vld [vmem:[%s2342 + $0x2d0] sm:$0xff]
      %v2434 = vld [vmem:[%s2342 + $0x2d8] sm:$0xff]
      %v2435 = vld [vmem:[%s2342 + $0x2e0] sm:$0xff]
      %v2436 = vld [vmem:[%s2342 + $0x2e8] sm:$0xff]
      %v2437 = vld [vmem:[%s2342 + $0x2f0] sm:$0xff]
      %v2438 = vld [vmem:[%s2342 + $0x2f8] sm:$0xff]
      %v2439 = vld [vmem:[%s2342 + $0x300] sm:$0xff]
      %v2440 = vld [vmem:[%s2342 + $0x308] sm:$0xff]
      %v2441 = vld [vmem:[%s2342 + $0x310] sm:$0xff]
      %v2442 = vld [vmem:[%s2342 + $0x318] sm:$0xff]
      %v2443 = vld [vmem:[%s2342 + $0x320] sm:$0xff]
      %v2444 = vld [vmem:[%s2342 + $0x328] sm:$0xff]
      %v2445 = vld [vmem:[%s2342 + $0x330] sm:$0xff]
      %v2446 = vld [vmem:[%s2342 + $0x338] sm:$0xff]
      %v2447 = vld [vmem:[%s2342 + $0x340] sm:$0xff]
      %v2448 = vld [vmem:[%s2342 + $0x348] sm:$0xff]
      %v2449 = vld [vmem:[%s2342 + $0x350] sm:$0xff]
      %v2450 = vld [vmem:[%s2342 + $0x358] sm:$0xff]
      %v2451 = vld [vmem:[%s2342 + $0x360] sm:$0xff]
      %v2452 = vld [vmem:[%s2342 + $0x368] sm:$0xff]
      %v2453 = vld [vmem:[%s2342 + $0x370] sm:$0xff]
      %v2454 = vld [vmem:[%s2342 + $0x378] sm:$0xff]
      %v2455 = vld [vmem:[%s2342 + $0x380] sm:$0xff]
      %v2456 = vld [vmem:[%s2342 + $0x388] sm:$0xff]
      %v2457 = vld [vmem:[%s2342 + $0x390] sm:$0xff]
      %v2458 = vld [vmem:[%s2342 + $0x398] sm:$0xff]
      %v2459 = vld [vmem:[%s2342 + $0x3a0] sm:$0xff]
      %v2460 = vld [vmem:[%s2342 + $0x3a8] sm:$0xff]
      %v2461 = vld [vmem:[%s2342 + $0x3b0] sm:$0xff]
      %v2462 = vld [vmem:[%s2342 + $0x3b8] sm:$0xff]
      %v2463 = vld [vmem:[%s2342 + $0x3c0] sm:$0xff]
      %v2464 = vld [vmem:[%s2342 + $0x3c8] sm:$0xff]
      %v2465 = vld [vmem:[%s2342 + $0x3d0] sm:$0xff]
      %v2466 = vld [vmem:[%s2342 + $0x3d8] sm:$0xff]
      %v2467 = vld [vmem:[%s2342 + $0x3e0] sm:$0xff]
      %v2468 = vld [vmem:[%s2342 + $0x3e8] sm:$0xff]
      %v2469 = vld [vmem:[%s2342 + $0x3f0] sm:$0xff]
      %v2470 = vld [vmem:[%s2342 + $0x3f8] sm:$0xff]
      %v2475 = vrot.slane %v2338, 2
      %v2476 = vrot.slane %v2339, 2
      %v2477 = vrot.slane %v2340, 2
      %v2478 = vrot.slane %v2341, 2
      %v2611 = vunpack.c.l.b16 %v2343
      %v2612 = vunpack.c.h.b16 %v2343
      %v2613 = vunpack.c.l.b16 %v2344
      %v2614 = vunpack.c.h.b16 %v2344
      %v2615 = vunpack.c.l.b16 %v2345
      %v2616 = vunpack.c.h.b16 %v2345
      %v2617 = vunpack.c.l.b16 %v2346
      %v2618 = vunpack.c.h.b16 %v2346
      %v2619 = vunpack.c.l.b16 %v2347
      %v2620 = vunpack.c.h.b16 %v2347
      %v2621 = vunpack.c.l.b16 %v2348
      %v2622 = vunpack.c.h.b16 %v2348
      %v2623 = vunpack.c.l.b16 %v2349
      %v2624 = vunpack.c.h.b16 %v2349
      %v2625 = vunpack.c.l.b16 %v2350
      %v2626 = vunpack.c.h.b16 %v2350
      %v2627 = vunpack.c.l.b16 %v2351
      %v2628 = vunpack.c.h.b16 %v2351
      %v2629 = vunpack.c.l.b16 %v2352
      %v2630 = vunpack.c.h.b16 %v2352
      %v2631 = vunpack.c.l.b16 %v2353
      %v2632 = vunpack.c.h.b16 %v2353
      %v2633 = vunpack.c.l.b16 %v2354
      %v2634 = vunpack.c.h.b16 %v2354
      %v2635 = vunpack.c.l.b16 %v2355
      %v2636 = vunpack.c.h.b16 %v2355
      %v2637 = vunpack.c.l.b16 %v2356
      %v2638 = vunpack.c.h.b16 %v2356
      %v2639 = vunpack.c.l.b16 %v2357
      %v2640 = vunpack.c.h.b16 %v2357
      %v2641 = vunpack.c.l.b16 %v2358
      %v2642 = vunpack.c.h.b16 %v2358
      %v2643 = vunpack.c.l.b16 %v2359
      %v2644 = vunpack.c.h.b16 %v2359
      %v2645 = vunpack.c.l.b16 %v2360
      %v2646 = vunpack.c.h.b16 %v2360
      %v2647 = vunpack.c.l.b16 %v2361
      %v2648 = vunpack.c.h.b16 %v2361
      %v2649 = vunpack.c.l.b16 %v2362
      %v2650 = vunpack.c.h.b16 %v2362
      %v2651 = vunpack.c.l.b16 %v2363
      %v2652 = vunpack.c.h.b16 %v2363
      %v2653 = vunpack.c.l.b16 %v2364
      %v2654 = vunpack.c.h.b16 %v2364
      %v2655 = vunpack.c.l.b16 %v2365
      %v2656 = vunpack.c.h.b16 %v2365
      %v2657 = vunpack.c.l.b16 %v2366
      %v2658 = vunpack.c.h.b16 %v2366
      %v2659 = vunpack.c.l.b16 %v2367
      %v2660 = vunpack.c.h.b16 %v2367
      %v2661 = vunpack.c.l.b16 %v2368
      %v2662 = vunpack.c.h.b16 %v2368
      %v2663 = vunpack.c.l.b16 %v2369
      %v2664 = vunpack.c.h.b16 %v2369
      %v2665 = vunpack.c.l.b16 %v2370
      %v2666 = vunpack.c.h.b16 %v2370
      %v2667 = vunpack.c.l.b16 %v2371
      %v2668 = vunpack.c.h.b16 %v2371
      %v2669 = vunpack.c.l.b16 %v2372
      %v2670 = vunpack.c.h.b16 %v2372
      %v2671 = vunpack.c.l.b16 %v2373
      %v2672 = vunpack.c.h.b16 %v2373
      %v2673 = vunpack.c.l.b16 %v2374
      %v2674 = vunpack.c.h.b16 %v2374
      %v2675 = vunpack.c.l.b16 %v2375
      %v2676 = vunpack.c.h.b16 %v2375
      %v2677 = vunpack.c.l.b16 %v2376
      %v2678 = vunpack.c.h.b16 %v2376
      %v2679 = vunpack.c.l.b16 %v2377
      %v2680 = vunpack.c.h.b16 %v2377
      %v2681 = vunpack.c.l.b16 %v2378
      %v2682 = vunpack.c.h.b16 %v2378
      %v2683 = vunpack.c.l.b16 %v2379
      %v2684 = vunpack.c.h.b16 %v2379
      %v2685 = vunpack.c.l.b16 %v2380
      %v2686 = vunpack.c.h.b16 %v2380
      %v2687 = vunpack.c.l.b16 %v2381
      %v2688 = vunpack.c.h.b16 %v2381
      %v2689 = vunpack.c.l.b16 %v2382
      %v2690 = vunpack.c.h.b16 %v2382
      %v2691 = vunpack.c.l.b16 %v2383
      %v2692 = vunpack.c.h.b16 %v2383
      %v2693 = vunpack.c.l.b16 %v2384
      %v2694 = vunpack.c.h.b16 %v2384
      %v2695 = vunpack.c.l.b16 %v2385
      %v2696 = vunpack.c.h.b16 %v2385
      %v2697 = vunpack.c.l.b16 %v2386
      %v2698 = vunpack.c.h.b16 %v2386
      %v2699 = vunpack.c.l.b16 %v2387
      %v2700 = vunpack.c.h.b16 %v2387
      %v2701 = vunpack.c.l.b16 %v2388
      %v2702 = vunpack.c.h.b16 %v2388
      %v2703 = vunpack.c.l.b16 %v2389
      %v2704 = vunpack.c.h.b16 %v2389
      %v2705 = vunpack.c.l.b16 %v2390
      %v2706 = vunpack.c.h.b16 %v2390
      %v2707 = vunpack.c.l.b16 %v2391
      %v2708 = vunpack.c.h.b16 %v2391
      %v2709 = vunpack.c.l.b16 %v2392
      %v2710 = vunpack.c.h.b16 %v2392
      %v2711 = vunpack.c.l.b16 %v2393
      %v2712 = vunpack.c.h.b16 %v2393
      %v2713 = vunpack.c.l.b16 %v2394
      %v2714 = vunpack.c.h.b16 %v2394
      %v2715 = vunpack.c.l.b16 %v2395
      %v2716 = vunpack.c.h.b16 %v2395
      %v2717 = vunpack.c.l.b16 %v2396
      %v2718 = vunpack.c.h.b16 %v2396
      %v2719 = vunpack.c.l.b16 %v2397
      %v2720 = vunpack.c.h.b16 %v2397
      %v2721 = vunpack.c.l.b16 %v2398
      %v2722 = vunpack.c.h.b16 %v2398
      %v2723 = vunpack.c.l.b16 %v2399
      %v2724 = vunpack.c.h.b16 %v2399
      %v2725 = vunpack.c.l.b16 %v2400
      %v2726 = vunpack.c.h.b16 %v2400
      %v2727 = vunpack.c.l.b16 %v2401
      %v2728 = vunpack.c.h.b16 %v2401
      %v2729 = vunpack.c.l.b16 %v2402
      %v2730 = vunpack.c.h.b16 %v2402
      %v2731 = vunpack.c.l.b16 %v2403
      %v2732 = vunpack.c.h.b16 %v2403
      %v2733 = vunpack.c.l.b16 %v2404
      %v2734 = vunpack.c.h.b16 %v2404
      %v2735 = vunpack.c.l.b16 %v2405
      %v2736 = vunpack.c.h.b16 %v2405
      %v2737 = vunpack.c.l.b16 %v2406
      %v2738 = vunpack.c.h.b16 %v2406
      %v2739 = vunpack.c.l.b16 %v2407
      %v2740 = vunpack.c.h.b16 %v2407
      %v2741 = vunpack.c.l.b16 %v2408
      %v2742 = vunpack.c.h.b16 %v2408
      %v2743 = vunpack.c.l.b16 %v2409
      %v2744 = vunpack.c.h.b16 %v2409
      %v2745 = vunpack.c.l.b16 %v2410
      %v2746 = vunpack.c.h.b16 %v2410
      %v2747 = vunpack.c.l.b16 %v2411
      %v2748 = vunpack.c.h.b16 %v2411
      %v2749 = vunpack.c.l.b16 %v2412
      %v2750 = vunpack.c.h.b16 %v2412
      %v2751 = vunpack.c.l.b16 %v2413
      %v2752 = vunpack.c.h.b16 %v2413
      %v2753 = vunpack.c.l.b16 %v2414
      %v2754 = vunpack.c.h.b16 %v2414
      %v2755 = vunpack.c.l.b16 %v2415
      %v2756 = vunpack.c.h.b16 %v2415
      %v2757 = vunpack.c.l.b16 %v2416
      %v2758 = vunpack.c.h.b16 %v2416
      %v2759 = vunpack.c.l.b16 %v2417
      %v2760 = vunpack.c.h.b16 %v2417
      %v2761 = vunpack.c.l.b16 %v2418
      %v2762 = vunpack.c.h.b16 %v2418
      %v2763 = vunpack.c.l.b16 %v2419
      %v2764 = vunpack.c.h.b16 %v2419
      %v2765 = vunpack.c.l.b16 %v2420
      %v2766 = vunpack.c.h.b16 %v2420
      %v2767 = vunpack.c.l.b16 %v2421
      %v2768 = vunpack.c.h.b16 %v2421
      %v2769 = vunpack.c.l.b16 %v2422
      %v2770 = vunpack.c.h.b16 %v2422
      %v2771 = vunpack.c.l.b16 %v2423
      %v2772 = vunpack.c.h.b16 %v2423
      %v2773 = vunpack.c.l.b16 %v2424
      %v2774 = vunpack.c.h.b16 %v2424
      %v2775 = vunpack.c.l.b16 %v2425
      %v2776 = vunpack.c.h.b16 %v2425
      %v2777 = vunpack.c.l.b16 %v2426
      %v2778 = vunpack.c.h.b16 %v2426
      %v2779 = vunpack.c.l.b16 %v2427
      %v2780 = vunpack.c.h.b16 %v2427
      %v2781 = vunpack.c.l.b16 %v2428
      %v2782 = vunpack.c.h.b16 %v2428
      %v2783 = vunpack.c.l.b16 %v2429
      %v2784 = vunpack.c.h.b16 %v2429
      %v2785 = vunpack.c.l.b16 %v2430
      %v2786 = vunpack.c.h.b16 %v2430
      %v2787 = vunpack.c.l.b16 %v2431
      %v2788 = vunpack.c.h.b16 %v2431
      %v2789 = vunpack.c.l.b16 %v2432
      %v2790 = vunpack.c.h.b16 %v2432
      %v2791 = vunpack.c.l.b16 %v2433
      %v2792 = vunpack.c.h.b16 %v2433
      %v2793 = vunpack.c.l.b16 %v2434
      %v2794 = vunpack.c.h.b16 %v2434
      %v2795 = vunpack.c.l.b16 %v2435
      %v2796 = vunpack.c.h.b16 %v2435
      %v2797 = vunpack.c.l.b16 %v2436
      %v2798 = vunpack.c.h.b16 %v2436
      %v2799 = vunpack.c.l.b16 %v2437
      %v2800 = vunpack.c.h.b16 %v2437
      %v2801 = vunpack.c.l.b16 %v2438
      %v2802 = vunpack.c.h.b16 %v2438
      %v2803 = vunpack.c.l.b16 %v2439
      %v2804 = vunpack.c.h.b16 %v2439
      %v2805 = vunpack.c.l.b16 %v2440
      %v2806 = vunpack.c.h.b16 %v2440
      %v2807 = vunpack.c.l.b16 %v2441
      %v2808 = vunpack.c.h.b16 %v2441
      %v2809 = vunpack.c.l.b16 %v2442
      %v2810 = vunpack.c.h.b16 %v2442
      %v2811 = vunpack.c.l.b16 %v2443
      %v2812 = vunpack.c.h.b16 %v2443
      %v2813 = vunpack.c.l.b16 %v2444
      %v2814 = vunpack.c.h.b16 %v2444
      %v2815 = vunpack.c.l.b16 %v2445
      %v2816 = vunpack.c.h.b16 %v2445
      %v2817 = vunpack.c.l.b16 %v2446
      %v2818 = vunpack.c.h.b16 %v2446
      %v2819 = vunpack.c.l.b16 %v2447
      %v2820 = vunpack.c.h.b16 %v2447
      %v2821 = vunpack.c.l.b16 %v2448
      %v2822 = vunpack.c.h.b16 %v2448
      %v2823 = vunpack.c.l.b16 %v2449
      %v2824 = vunpack.c.h.b16 %v2449
      %v2825 = vunpack.c.l.b16 %v2450
      %v2826 = vunpack.c.h.b16 %v2450
      %v2827 = vunpack.c.l.b16 %v2451
      %v2828 = vunpack.c.h.b16 %v2451
      %v2829 = vunpack.c.l.b16 %v2452
      %v2830 = vunpack.c.h.b16 %v2452
      %v2831 = vunpack.c.l.b16 %v2453
      %v2832 = vunpack.c.h.b16 %v2453
      %v2833 = vunpack.c.l.b16 %v2454
      %v2834 = vunpack.c.h.b16 %v2454
      %v2835 = vunpack.c.l.b16 %v2455
      %v2836 = vunpack.c.h.b16 %v2455
      %v2837 = vunpack.c.l.b16 %v2456
      %v2838 = vunpack.c.h.b16 %v2456
      %v2839 = vunpack.c.l.b16 %v2457
      %v2840 = vunpack.c.h.b16 %v2457
      %v2841 = vunpack.c.l.b16 %v2458
      %v2842 = vunpack.c.h.b16 %v2458
      %v2843 = vunpack.c.l.b16 %v2459
      %v2844 = vunpack.c.h.b16 %v2459
      %v2845 = vunpack.c.l.b16 %v2460
      %v2846 = vunpack.c.h.b16 %v2460
      %v2847 = vunpack.c.l.b16 %v2461
      %v2848 = vunpack.c.h.b16 %v2461
      %v2849 = vunpack.c.l.b16 %v2462
      %v2850 = vunpack.c.h.b16 %v2462
      %v2851 = vunpack.c.l.b16 %v2463
      %v2852 = vunpack.c.h.b16 %v2463
      %v2853 = vunpack.c.l.b16 %v2464
      %v2854 = vunpack.c.h.b16 %v2464
      %v2855 = vunpack.c.l.b16 %v2465
      %v2856 = vunpack.c.h.b16 %v2465
      %v2857 = vunpack.c.l.b16 %v2466
      %v2858 = vunpack.c.h.b16 %v2466
      %v2859 = vunpack.c.l.b16 %v2467
      %v2860 = vunpack.c.h.b16 %v2467
      %v2861 = vunpack.c.l.b16 %v2468
      %v2862 = vunpack.c.h.b16 %v2468
      %v2863 = vunpack.c.l.b16 %v2469
      %v2864 = vunpack.c.h.b16 %v2469
      %v2865 = vunpack.c.l.b16 %v2470
      %v2866 = vunpack.c.h.b16 %v2470
      %v2867 = vpack.c.b16 %v2615, %v2611
      %v2868 = vpack.c.b16 %v2616, %v2612
      %v2869 = vpack.c.b16 %v2617, %v2613
      %v2870 = vpack.c.b16 %v2618, %v2614
      %v2871 = vpack.c.b16 %v2623, %v2619
      %v2872 = vpack.c.b16 %v2624, %v2620
      %v2873 = vpack.c.b16 %v2625, %v2621
      %v2874 = vpack.c.b16 %v2626, %v2622
      %v2875 = vpack.c.b16 %v2631, %v2627
      %v2876 = vpack.c.b16 %v2632, %v2628
      %v2877 = vpack.c.b16 %v2633, %v2629
      %v2878 = vpack.c.b16 %v2634, %v2630
      %v2879 = vpack.c.b16 %v2639, %v2635
      %v2880 = vpack.c.b16 %v2640, %v2636
      %v2881 = vpack.c.b16 %v2641, %v2637
      %v2882 = vpack.c.b16 %v2642, %v2638
      %v2883 = vpack.c.b16 %v2647, %v2643
      %v2884 = vpack.c.b16 %v2648, %v2644
      %v2885 = vpack.c.b16 %v2649, %v2645
      %v2886 = vpack.c.b16 %v2650, %v2646
      %v2887 = vpack.c.b16 %v2655, %v2651
      %v2888 = vpack.c.b16 %v2656, %v2652
      %v2889 = vpack.c.b16 %v2657, %v2653
      %v2890 = vpack.c.b16 %v2658, %v2654
      %v2891 = vpack.c.b16 %v2663, %v2659
      %v2892 = vpack.c.b16 %v2664, %v2660
      %v2893 = vpack.c.b16 %v2665, %v2661
      %v2894 = vpack.c.b16 %v2666, %v2662
      %v2895 = vpack.c.b16 %v2671, %v2667
      %v2896 = vpack.c.b16 %v2672, %v2668
      %v2897 = vpack.c.b16 %v2673, %v2669
      %v2898 = vpack.c.b16 %v2674, %v2670
      %v2899 = vpack.c.b16 %v2679, %v2675
      %v2900 = vpack.c.b16 %v2680, %v2676
      %v2901 = vpack.c.b16 %v2681, %v2677
      %v2902 = vpack.c.b16 %v2682, %v2678
      %v2903 = vpack.c.b16 %v2687, %v2683
      %v2904 = vpack.c.b16 %v2688, %v2684
      %v2905 = vpack.c.b16 %v2689, %v2685
      %v2906 = vpack.c.b16 %v2690, %v2686
      %v2907 = vpack.c.b16 %v2695, %v2691
      %v2908 = vpack.c.b16 %v2696, %v2692
      %v2909 = vpack.c.b16 %v2697, %v2693
      %v2910 = vpack.c.b16 %v2698, %v2694
      %v2911 = vpack.c.b16 %v2703, %v2699
      %v2912 = vpack.c.b16 %v2704, %v2700
      %v2913 = vpack.c.b16 %v2705, %v2701
      %v2914 = vpack.c.b16 %v2706, %v2702
      %v2915 = vpack.c.b16 %v2711, %v2707
      %v2916 = vpack.c.b16 %v2712, %v2708
      %v2917 = vpack.c.b16 %v2713, %v2709
      %v2918 = vpack.c.b16 %v2714, %v2710
      %v2919 = vpack.c.b16 %v2719, %v2715
      %v2920 = vpack.c.b16 %v2720, %v2716
      %v2921 = vpack.c.b16 %v2721, %v2717
      %v2922 = vpack.c.b16 %v2722, %v2718
      %v2923 = vpack.c.b16 %v2727, %v2723
      %v2924 = vpack.c.b16 %v2728, %v2724
      %v2925 = vpack.c.b16 %v2729, %v2725
      %v2926 = vpack.c.b16 %v2730, %v2726
      %v2927 = vpack.c.b16 %v2735, %v2731
      %v2928 = vpack.c.b16 %v2736, %v2732
      %v2929 = vpack.c.b16 %v2737, %v2733
      %v2930 = vpack.c.b16 %v2738, %v2734
      %v2931 = vpack.c.b16 %v2743, %v2739
      %v2932 = vpack.c.b16 %v2744, %v2740
      %v2933 = vpack.c.b16 %v2745, %v2741
      %v2934 = vpack.c.b16 %v2746, %v2742
      %v2935 = vpack.c.b16 %v2751, %v2747
      %v2936 = vpack.c.b16 %v2752, %v2748
      %v2937 = vpack.c.b16 %v2753, %v2749
      %v2938 = vpack.c.b16 %v2754, %v2750
      %v2939 = vpack.c.b16 %v2759, %v2755
      %v2940 = vpack.c.b16 %v2760, %v2756
      %v2941 = vpack.c.b16 %v2761, %v2757
      %v2942 = vpack.c.b16 %v2762, %v2758
      %v2943 = vpack.c.b16 %v2767, %v2763
      %v2944 = vpack.c.b16 %v2768, %v2764
      %v2945 = vpack.c.b16 %v2769, %v2765
      %v2946 = vpack.c.b16 %v2770, %v2766
      %v2947 = vpack.c.b16 %v2775, %v2771
      %v2948 = vpack.c.b16 %v2776, %v2772
      %v2949 = vpack.c.b16 %v2777, %v2773
      %v2950 = vpack.c.b16 %v2778, %v2774
      %v2951 = vpack.c.b16 %v2783, %v2779
      %v2952 = vpack.c.b16 %v2784, %v2780
      %v2953 = vpack.c.b16 %v2785, %v2781
      %v2954 = vpack.c.b16 %v2786, %v2782
      %v2955 = vpack.c.b16 %v2791, %v2787
      %v2956 = vpack.c.b16 %v2792, %v2788
      %v2957 = vpack.c.b16 %v2793, %v2789
      %v2958 = vpack.c.b16 %v2794, %v2790
      %v2959 = vpack.c.b16 %v2799, %v2795
      %v2960 = vpack.c.b16 %v2800, %v2796
      %v2961 = vpack.c.b16 %v2801, %v2797
      %v2962 = vpack.c.b16 %v2802, %v2798
      %v2963 = vpack.c.b16 %v2807, %v2803
      %v2964 = vpack.c.b16 %v2808, %v2804
      %v2965 = vpack.c.b16 %v2809, %v2805
      %v2966 = vpack.c.b16 %v2810, %v2806
      %v2967 = vpack.c.b16 %v2815, %v2811
      %v2968 = vpack.c.b16 %v2816, %v2812
      %v2969 = vpack.c.b16 %v2817, %v2813
      %v2970 = vpack.c.b16 %v2818, %v2814
      %v2971 = vpack.c.b16 %v2823, %v2819
      %v2972 = vpack.c.b16 %v2824, %v2820
      %v2973 = vpack.c.b16 %v2825, %v2821
      %v2974 = vpack.c.b16 %v2826, %v2822
      %v2975 = vpack.c.b16 %v2831, %v2827
      %v2976 = vpack.c.b16 %v2832, %v2828
      %v2977 = vpack.c.b16 %v2833, %v2829
      %v2978 = vpack.c.b16 %v2834, %v2830
      %v2979 = vpack.c.b16 %v2839, %v2835
      %v2980 = vpack.c.b16 %v2840, %v2836
      %v2981 = vpack.c.b16 %v2841, %v2837
      %v2982 = vpack.c.b16 %v2842, %v2838
      %v2983 = vpack.c.b16 %v2847, %v2843
      %v2984 = vpack.c.b16 %v2848, %v2844
      %v2985 = vpack.c.b16 %v2849, %v2845
      %v2986 = vpack.c.b16 %v2850, %v2846
      %v2987 = vpack.c.b16 %v2855, %v2851
      %v2988 = vpack.c.b16 %v2856, %v2852
      %v2989 = vpack.c.b16 %v2857, %v2853
      %v2990 = vpack.c.b16 %v2858, %v2854
      %v2991 = vpack.c.b16 %v2863, %v2859
      %v2992 = vpack.c.b16 %v2864, %v2860
      %v2993 = vpack.c.b16 %v2865, %v2861
      %v2994 = vpack.c.b16 %v2866, %v2862
      %3123 = vmatpush.bf16.msra.mxu0 %v2895
      %3124 = vmatpush.bf16.msra.mxu0 %v2891
      %3125 = vmatpush.bf16.msra.mxu0 %v2887
      %3126 = vmatpush.bf16.msra.mxu0 %v2883
      %3127 = vmatpush.bf16.msra.mxu0 %v2879
      %3128 = vmatpush.bf16.msra.mxu0 %v2875
      %3129 = vmatpush.bf16.msra.mxu0 %v2871
      %3130 = vmatpush.bf16.msra.mxu0 %v2867
      %3131 = vmatmul.bf16.gmra.mxu0 %v2475
      %v3132 = vpop.f32.mrf.mxu0
      %v3133 = vadd.f32 0.0, %v3132
      %v3134 = vpop.f32.mrf.mxu0
      %3135 = vdwg.mxu0
      %3136 = vmatpush.bf16.msra.mxu0 %v2927
      %3137 = vmatpush.bf16.msra.mxu0 %v2923
      %3138 = vmatpush.bf16.msra.mxu0 %v2919
      %3139 = vmatpush.bf16.msra.mxu0 %v2915
      %3140 = vmatpush.bf16.msra.mxu0 %v2911
      %3141 = vmatpush.bf16.msra.mxu0 %v2907
      %3142 = vmatpush.bf16.msra.mxu0 %v2903
      %3143 = vmatpush.bf16.msra.mxu0 %v2899
      %3144 = vmatmul.bf16.gmra.mxu0 %v2476
      %v3145 = vpop.f32.mrf.mxu0
      %v3146 = vadd.f32 %v3133, %v3145
      %v3147 = vpop.f32.mrf.mxu0
      %3148 = vdwg.mxu0
      %3149 = vmatpush.bf16.msra.mxu0 %v2959
      %3150 = vmatpush.bf16.msra.mxu0 %v2955
      %3151 = vmatpush.bf16.msra.mxu0 %v2951
      %3152 = vmatpush.bf16.msra.mxu0 %v2947
      %3153 = vmatpush.bf16.msra.mxu0 %v2943
      %3154 = vmatpush.bf16.msra.mxu0 %v2939
      %3155 = vmatpush.bf16.msra.mxu0 %v2935
      %3156 = vmatpush.bf16.msra.mxu0 %v2931
      %3157 = vmatmul.bf16.gmra.mxu0 %v2477
      %v3158 = vpop.f32.mrf.mxu0
      %v3159 = vadd.f32 %v3146, %v3158
      %v3160 = vpop.f32.mrf.mxu0
      %3161 = vdwg.mxu0
      %3162 = vmatpush.bf16.msra.mxu0 %v2991
      %3163 = vmatpush.bf16.msra.mxu0 %v2987
      %3164 = vmatpush.bf16.msra.mxu0 %v2983
      %3165 = vmatpush.bf16.msra.mxu0 %v2979
      %3166 = vmatpush.bf16.msra.mxu0 %v2975
      %3167 = vmatpush.bf16.msra.mxu0 %v2971
      %3168 = vmatpush.bf16.msra.mxu0 %v2967
      %3169 = vmatpush.bf16.msra.mxu0 %v2963
      %3170 = vmatmul.bf16.gmra.mxu0 %v2478
      %v3171 = vpop.f32.mrf.mxu0
      %v3172 = vadd.f32 %v3159, %v3171
      %v3173 = vpop.f32.mrf.mxu0
      %3174 = vdwg.mxu0
      %3175 = vmatpush.bf16.msra.mxu0 %v2896
      %3176 = vmatpush.bf16.msra.mxu0 %v2892
      %3177 = vmatpush.bf16.msra.mxu0 %v2888
      %3178 = vmatpush.bf16.msra.mxu0 %v2884
      %3179 = vmatpush.bf16.msra.mxu0 %v2880
      %3180 = vmatpush.bf16.msra.mxu0 %v2876
      %3181 = vmatpush.bf16.msra.mxu0 %v2872
      %3182 = vmatpush.bf16.msra.mxu0 %v2868
      %3183 = vmatmul.bf16.gmra.mxu0 %v2475
      %v3184 = vpop.f32.mrf.mxu0
      %v3185 = vadd.f32 0.0, %v3184
      %v3186 = vpop.f32.mrf.mxu0
      %3187 = vdwg.mxu0
      %3188 = vmatpush.bf16.msra.mxu0 %v2928
      %3189 = vmatpush.bf16.msra.mxu0 %v2924
      %3190 = vmatpush.bf16.msra.mxu0 %v2920
      %3191 = vmatpush.bf16.msra.mxu0 %v2916
      %3192 = vmatpush.bf16.msra.mxu0 %v2912
      %3193 = vmatpush.bf16.msra.mxu0 %v2908
      %3194 = vmatpush.bf16.msra.mxu0 %v2904
      %3195 = vmatpush.bf16.msra.mxu0 %v2900
      %3196 = vmatmul.bf16.gmra.mxu0 %v2476
      %v3197 = vpop.f32.mrf.mxu0
      %v3198 = vadd.f32 %v3185, %v3197
      %v3199 = vpop.f32.mrf.mxu0
      %3200 = vdwg.mxu0
      %3201 = vmatpush.bf16.msra.mxu0 %v2960
      %3202 = vmatpush.bf16.msra.mxu0 %v2956
      %3203 = vmatpush.bf16.msra.mxu0 %v2952
      %3204 = vmatpush.bf16.msra.mxu0 %v2948
      %3205 = vmatpush.bf16.msra.mxu0 %v2944
      %3206 = vmatpush.bf16.msra.mxu0 %v2940
      %3207 = vmatpush.bf16.msra.mxu0 %v2936
      %3208 = vmatpush.bf16.msra.mxu0 %v2932
      %3209 = vmatmul.bf16.gmra.mxu0 %v2477
      %v3210 = vpop.f32.mrf.mxu0
      %v3211 = vadd.f32 %v3198, %v3210
      %v3212 = vpop.f32.mrf.mxu0
      %3213 = vdwg.mxu0
      %3214 = vmatpush.bf16.msra.mxu0 %v2992
      %3215 = vmatpush.bf16.msra.mxu0 %v2988
      %3216 = vmatpush.bf16.msra.mxu0 %v2984
      %3217 = vmatpush.bf16.msra.mxu0 %v2980
      %3218 = vmatpush.bf16.msra.mxu0 %v2976
      %3219 = vmatpush.bf16.msra.mxu0 %v2972
      %3220 = vmatpush.bf16.msra.mxu0 %v2968
      %3221 = vmatpush.bf16.msra.mxu0 %v2964
      %3222 = vmatmul.bf16.gmra.mxu0 %v2478
      %v3223 = vpop.f32.mrf.mxu0
      %v3224 = vadd.f32 %v3211, %v3223
      %v3225 = vpop.f32.mrf.mxu0
      %3226 = vdwg.mxu0
      %3227 = vmatpush.bf16.msra.mxu0 %v2897
      %3228 = vmatpush.bf16.msra.mxu0 %v2893
      %3229 = vmatpush.bf16.msra.mxu0 %v2889
      %3230 = vmatpush.bf16.msra.mxu0 %v2885
      %3231 = vmatpush.bf16.msra.mxu0 %v2881
      %3232 = vmatpush.bf16.msra.mxu0 %v2877
      %3233 = vmatpush.bf16.msra.mxu0 %v2873
      %3234 = vmatpush.bf16.msra.mxu0 %v2869
      %3235 = vmatmul.bf16.gmra.mxu0 %v2475
      %v3236 = vpop.f32.mrf.mxu0
      %v3237 = vadd.f32 0.0, %v3236
      %v3238 = vpop.f32.mrf.mxu0
      %3239 = vdwg.mxu0
      %3240 = vmatpush.bf16.msra.mxu0 %v2929
      %3241 = vmatpush.bf16.msra.mxu0 %v2925
      %3242 = vmatpush.bf16.msra.mxu0 %v2921
      %3243 = vmatpush.bf16.msra.mxu0 %v2917
      %3244 = vmatpush.bf16.msra.mxu0 %v2913
      %3245 = vmatpush.bf16.msra.mxu0 %v2909
      %3246 = vmatpush.bf16.msra.mxu0 %v2905
      %3247 = vmatpush.bf16.msra.mxu0 %v2901
      %3248 = vmatmul.bf16.gmra.mxu0 %v2476
      %v3249 = vpop.f32.mrf.mxu0
      %v3250 = vadd.f32 %v3237, %v3249
      %v3251 = vpop.f32.mrf.mxu0
      %3252 = vdwg.mxu0
      %3253 = vmatpush.bf16.msra.mxu0 %v2961
      %3254 = vmatpush.bf16.msra.mxu0 %v2957
      %3255 = vmatpush.bf16.msra.mxu0 %v2953
      %3256 = vmatpush.bf16.msra.mxu0 %v2949
      %3257 = vmatpush.bf16.msra.mxu0 %v2945
      %3258 = vmatpush.bf16.msra.mxu0 %v2941
      %3259 = vmatpush.bf16.msra.mxu0 %v2937
      %3260 = vmatpush.bf16.msra.mxu0 %v2933
      %3261 = vmatmul.bf16.gmra.mxu0 %v2477
      %v3262 = vpop.f32.mrf.mxu0
      %v3263 = vadd.f32 %v3250, %v3262
      %v3264 = vpop.f32.mrf.mxu0
      %3265 = vdwg.mxu0
      %3266 = vmatpush.bf16.msra.mxu0 %v2993
      %3267 = vmatpush.bf16.msra.mxu0 %v2989
      %3268 = vmatpush.bf16.msra.mxu0 %v2985
      %3269 = vmatpush.bf16.msra.mxu0 %v2981
      %3270 = vmatpush.bf16.msra.mxu0 %v2977
      %3271 = vmatpush.bf16.msra.mxu0 %v2973
      %3272 = vmatpush.bf16.msra.mxu0 %v2969
      %3273 = vmatpush.bf16.msra.mxu0 %v2965
      %3274 = vmatmul.bf16.gmra.mxu0 %v2478
      %v3275 = vpop.f32.mrf.mxu0
      %v3276 = vadd.f32 %v3263, %v3275
      %v3277 = vpop.f32.mrf.mxu0
      %3278 = vdwg.mxu0
      %3279 = vmatpush.bf16.msra.mxu0 %v2898
      %3280 = vmatpush.bf16.msra.mxu0 %v2894
      %3281 = vmatpush.bf16.msra.mxu0 %v2890
      %3282 = vmatpush.bf16.msra.mxu0 %v2886
      %3283 = vmatpush.bf16.msra.mxu0 %v2882
      %3284 = vmatpush.bf16.msra.mxu0 %v2878
      %3285 = vmatpush.bf16.msra.mxu0 %v2874
      %3286 = vmatpush.bf16.msra.mxu0 %v2870
      %3287 = vmatmul.bf16.gmra.mxu0 %v2475
      %v3288 = vpop.f32.mrf.mxu0
      %v3289 = vadd.f32 0.0, %v3288
      %v3290 = vpop.f32.mrf.mxu0
      %3291 = vdwg.mxu0
      %3292 = vmatpush.bf16.msra.mxu0 %v2930
      %3293 = vmatpush.bf16.msra.mxu0 %v2926
      %3294 = vmatpush.bf16.msra.mxu0 %v2922
      %3295 = vmatpush.bf16.msra.mxu0 %v2918
      %3296 = vmatpush.bf16.msra.mxu0 %v2914
      %3297 = vmatpush.bf16.msra.mxu0 %v2910
      %3298 = vmatpush.bf16.msra.mxu0 %v2906
      %3299 = vmatpush.bf16.msra.mxu0 %v2902
      %3300 = vmatmul.bf16.gmra.mxu0 %v2476
      %v3301 = vpop.f32.mrf.mxu0
      %v3302 = vadd.f32 %v3289, %v3301
      %v3303 = vpop.f32.mrf.mxu0
      %3304 = vdwg.mxu0
      %3305 = vmatpush.bf16.msra.mxu0 %v2962
      %3306 = vmatpush.bf16.msra.mxu0 %v2958
      %3307 = vmatpush.bf16.msra.mxu0 %v2954
      %3308 = vmatpush.bf16.msra.mxu0 %v2950
      %3309 = vmatpush.bf16.msra.mxu0 %v2946
      %3310 = vmatpush.bf16.msra.mxu0 %v2942
      %3311 = vmatpush.bf16.msra.mxu0 %v2938
      %3312 = vmatpush.bf16.msra.mxu0 %v2934
      %3313 = vmatmul.bf16.gmra.mxu0 %v2477
      %v3314 = vpop.f32.mrf.mxu0
      %v3315 = vadd.f32 %v3302, %v3314
      %v3316 = vpop.f32.mrf.mxu0
      %3317 = vdwg.mxu0
      %3318 = vmatpush.bf16.msra.mxu0 %v2994
      %3319 = vmatpush.bf16.msra.mxu0 %v2990
      %3320 = vmatpush.bf16.msra.mxu0 %v2986
      %3321 = vmatpush.bf16.msra.mxu0 %v2982
      %3322 = vmatpush.bf16.msra.mxu0 %v2978
      %3323 = vmatpush.bf16.msra.mxu0 %v2974
      %3324 = vmatpush.bf16.msra.mxu0 %v2970
      %3325 = vmatpush.bf16.msra.mxu0 %v2966
      %3326 = vmatmul.bf16.gmra.mxu0 %v2478
      %v3327 = vpop.f32.mrf.mxu0
      %v3328 = vadd.f32 %v3315, %v3327
      %v3329 = vpop.f32.mrf.mxu0
      %3330 = vdwg.mxu0
      %v3331 = vadd.f32 %v2171, %v3172
      %v3332 = vadd.f32 %v2223, %v3224
      %v3333 = vadd.f32 %v2275, %v3276
      %v3334 = vadd.f32 %v2327, %v3328
      %3335 = vst [vmem:[%s258] sm:$0xff] %v3331
      %3336 = vst [vmem:[%s258 + $0x8] sm:$0xff] %v3332
      %3337 = vst [vmem:[%s258 + $0x10] sm:$0xff] %v3333
      %3338 = vst [vmem:[%s258 + $0x18] sm:$0xff] %v3334
      %v3339 = vrot.slane %v3331, 4
      %v3340 = vadd.f32 %v3331, %v3339
      %v3341 = vrot.slane %v3340, 2
      %v3342 = vadd.f32 %v3340, %v3341
      %v3343 = vrot.slane %v3342, 1
      %v3344 = vadd.f32 %v3342, %v3343
      %v3345 = vrot.slane %v3332, 4
      %v3346 = vadd.f32 %v3332, %v3345
      %v3347 = vrot.slane %v3346, 2
      %v3348 = vadd.f32 %v3346, %v3347
      %v3349 = vrot.slane %v3348, 1
      %v3350 = vadd.f32 %v3348, %v3349
      %v3351 = vrot.slane %v3333, 4
      %v3352 = vadd.f32 %v3333, %v3351
      %v3353 = vrot.slane %v3352, 2
      %v3354 = vadd.f32 %v3352, %v3353
      %v3355 = vrot.slane %v3354, 1
      %v3356 = vadd.f32 %v3354, %v3355
      %v3357 = vrot.slane %v3334, 4
      %v3358 = vadd.f32 %v3334, %v3357
      %v3359 = vrot.slane %v3358, 2
      %v3360 = vadd.f32 %v3358, %v3359
      %v3361 = vrot.slane %v3360, 1
      %v3362 = vadd.f32 %v3360, %v3361
      %v3367 = vrot.slane %v3350, 7
      %v3368 = vrot.slane %v3356, 6
      %v3369 = vrot.slane %v3362, 5
      %vm3370 = vcmask 1040384
      %v3371 = vsel %vm3370, %v3344, %v3367
      %vm3372 = vcmask 1042434
      %v3373 = vsel %vm3372, %v3368, %v3369
      %vm3374 = vcmask 1041408
      %v3375 = vsel %vm3374, %v3371, %v3373
      %v3377 = vlaneseq
      %vm3378 = vcmp.ge.s32.totalorder %v3377, 0
      %vm3379 = vcmp.lt.s32.totalorder %v3377, 512
      %vm3380 = vmand %vm3378, %vm3379
      %3381 = vst.msk [vmem:[%s262] sm:$0xf] %vm3380, %v3375
      %v3382 = vmul.f32 %v3331, %v3331
      %v3383 = vmul.f32 %v3332, %v3332
      %v3384 = vmul.f32 %v3333, %v3333
      %v3385 = vmul.f32 %v3334, %v3334
      %v3386 = vrot.slane %v3382, 4
      %v3387 = vadd.f32 %v3382, %v3386
      %v3388 = vrot.slane %v3387, 2
      %v3389 = vadd.f32 %v3387, %v3388
      %v3390 = vrot.slane %v3389, 1
      %v3391 = vadd.f32 %v3389, %v3390
      %v3392 = vrot.slane %v3383, 4
      %v3393 = vadd.f32 %v3383, %v3392
      %v3394 = vrot.slane %v3393, 2
      %v3395 = vadd.f32 %v3393, %v3394
      %v3396 = vrot.slane %v3395, 1
      %v3397 = vadd.f32 %v3395, %v3396
      %v3398 = vrot.slane %v3384, 4
      %v3399 = vadd.f32 %v3384, %v3398
      %v3400 = vrot.slane %v3399, 2
      %v3401 = vadd.f32 %v3399, %v3400
      %v3402 = vrot.slane %v3401, 1
      %v3403 = vadd.f32 %v3401, %v3402
      %v3404 = vrot.slane %v3385, 4
      %v3405 = vadd.f32 %v3385, %v3404
      %v3406 = vrot.slane %v3405, 2
      %v3407 = vadd.f32 %v3405, %v3406
      %v3408 = vrot.slane %v3407, 1
      %v3409 = vadd.f32 %v3407, %v3408
      %v3414 = vrot.slane %v3397, 7
      %v3415 = vrot.slane %v3403, 6
      %v3416 = vrot.slane %v3409, 5
      %v3417 = vsel %vm3370, %v3391, %v3414
      %v3418 = vsel %vm3372, %v3415, %v3416
      %v3419 = vsel %vm3374, %v3417, %v3418
      %3421 = vst.msk [vmem:[%s262 + $0x4] sm:$0xf] %vm3380, %v3419
      %p3422 = scmp.lt.s32.totalorder %s18, 1
      %s3423 = scalar_select %p3422, %s18, 1
      %s3424 = smul.addr %s3423, 4
      %s3425 = smul.addr %s3424, 8
      %s3426 = scalar_lea.vmem %s5, %s3425
      %p3427 = scmp.lt.s32.totalorder %s18, 1
      %s3428 = scalar_select %p3427, %s18, 1
      %s3429 = smul.addr %s3428, 8
      %s3430 = scalar_lea.vmem %s6, %s3429
      // Predicated region
      $region41: #{encoder_stage_forward.5} parent=39 // pred_check
        %p3431 = pneg %p146
      $region42: #{encoder_stage_forward.5} parent=39 // pred_check_branch
        %3433 = sbr.rel (%p3431) target = $region44
      $region43: #{encoder_stage_forward.5} parent=39 // pred_region
        _
      $region44: #{encoder_stage_forward.5} parent=39 // pred_fallthru
        _
      // Predicated region
      $region45: #{encoder_stage_forward.5} parent=39 // pred_check
        %p3434 = pneg %p172
      $region46: #{encoder_stage_forward.5} parent=39 // pred_check_branch
        %3436 = sbr.rel (%p3434) target = $region48
      $region47: #{encoder_stage_forward.5} parent=39 // pred_region
        _
      $region48: #{encoder_stage_forward.5} parent=39 // pred_fallthru
        _
    $region40: #{encoder_stage_forward.5} parent=5 // pred_fallthru
      _
    %p3437 = scmp.le.s32.totalorder 2, %s13
    // Predicated region
    $region49: #{encoder_stage_forward.5} parent=5 // pred_check
      %p3438 = pneg %p3437
    $region50: #{encoder_stage_forward.5} parent=5 // pred_check_branch
      %3440 = sbr.rel (%p3438) target = $region52
    $region51: #{encoder_stage_forward.5} parent=5 // pred_region
      %s3441 = ssub.s32 %s13, 2
      // Predicated region
      $region53: #{encoder_stage_forward.5} parent=51 // pred_check
        %p3442 = pneg %p152
      $region54: #{encoder_stage_forward.5} parent=51 // pred_check_branch
        %3444 = sbr.rel (%p3442) target = $region56
      $region55: #{encoder_stage_forward.5} parent=51 // pred_region
        %p3445 = scmp.lt.s32.totalorder %s19, 1
        %s3446 = scalar_select %p3445, %s19, 1
        %s3447 = smul.addr %s3446, 4
        %s3448 = smul.addr %s3447, 8
        %s3449 = scalar_lea.vmem %s5, %s3448
      $region56: #{encoder_stage_forward.5} parent=51 // pred_fallthru
        _
      // Predicated region
      $region57: #{encoder_stage_forward.5} parent=51 // pred_check
        %p3450 = pneg %p178
      $region58: #{encoder_stage_forward.5} parent=51 // pred_check_branch
        %3452 = sbr.rel (%p3450) target = $region60
      $region59: #{encoder_stage_forward.5} parent=51 // pred_region
        %p3453 = scmp.lt.s32.totalorder %s19, 1
        %s3454 = scalar_select %p3453, %s19, 1
        %s3455 = smul.addr %s3454, 8
        %s3456 = scalar_lea.vmem %s6, %s3455
      $region60: #{encoder_stage_forward.5} parent=51 // pred_fallthru
        _
    $region52: #{encoder_stage_forward.5} parent=5 // pred_fallthru
      _
  $region6: #{encoder_stage_forward.5} parent=0 // loop_footer
    %s17 = sadd.s32 1, %s13
  $region7: #{encoder_stage_forward.5} parent=0 // loop_footer_branch
    %12 = sbr.rel target = $region3
  $region8: #{encoder_stage_forward.5} parent=0 // loop_exit
    _

// kernel: encoder_stage_forward.7
$region0: #{encoder_stage_forward.7}
  #allocation0 [shape = 'u32[]', space=smem, size = 0x4, offset = 0x4, fixed_abs, tag = 'smem constant byte address 0x4 - core index']
  #allocation1 [shape = 'u32[72,128]{1,0:T(1,128)}', space=vmem, size = 0x9000, scoped, tag = 'internal scratch']
  %s0 = inlined_call_operand.vmem [shape: f32[2,8,512], index: 0, kind: input, shape index: {}]
  %s1 = inlined_call_operand.vmem [shape: f32[1,512], index: 1, kind: input, shape index: {}]
  %s2 = inlined_call_operand.vmem [shape: f32[1,512], index: 2, kind: input, shape index: {}]
  %s3 = inlined_call_operand.vmem [shape: f32[1,512], index: 3, kind: input, shape index: {}]
  %s4 = inlined_call_operand.vmem [shape: f32[2,8,512], index: 4, kind: output, shape index: {}]
  %s5 = sld [smem:[#allocation0]]
  $region49: #{encoder_stage_forward.7} parent=0
    _
  %s7 = ssub.s32 1, %s5
  %s8 = scalar_select 0, %s7, %s5
  loop: start=0, step=1, limit=4
  $region2: #{encoder_stage_forward.7} parent=0 // loop_pre_header
    _
  $region3: #{encoder_stage_forward.7} parent=0 // loop_header
    %s10 = sphi 0, %s14
    %p11 = scmp.ge.s32.totalorder %s10, 4
    %s20 = sphi 0, %s22
    %s23 = sphi 0, %s20
    %s24 = sphi 0, %s23
    %s40 = sphi 0, %s24
    %s44 = sphi 0, %s44
    %s46 = sphi 0, %s44
    %s47 = sphi 0, %s46
    %s61 = sphi 0, %s47
    %s65 = sphi 0, %s65
    %s67 = sphi 0, %s65
    %s68 = sphi 0, %s67
    %s82 = sphi 0, %s68
    %s86 = sphi 0, %s86
    %s88 = sphi 0, %s86
    %s89 = sphi 0, %s88
    %s103 = sphi 0, %s89
    %s109 = sphi 0, %s111
    %s112 = sphi 0, %s109
    %s113 = sphi 0, %s112
    %s129 = sphi 0, %s113
  $region4: #{encoder_stage_forward.7} parent=0 // loop_header_branch
    %13 = sbr.rel (%p11) target = $region8
  $region5: #{encoder_stage_forward.7} parent=0 // loop_body
    %s15 = ssub.s32 %s10, 1
    %s16 = ssub.s32 %s10, 2
    %s17 = sadd.s32 %s10, 1
    %s18 = ssub.s32 %s10, %s17
    %p19 = scmp.eq.s32.totalorder %s18, 0
    %s21 = sadd.s32 %s20, 1
    %s22 = scalar_select %p19, %s20, %s21
    %p25 = pneg %p19
    %p26 = scmp.eq.s32.totalorder %s10, 1
    %p27 = por %p25, %p26
    %p28 = scmp.ne.s32.totalorder %s20, %s23
    %p29 = scmp.eq.s32.totalorder %s10, 0
    %p30 = por %p28, %p29
    %p31 = scmp.ne.s32.totalorder %s20, %s23
    %p32 = scmp.eq.s32.totalorder %s15, 1
    %p33 = por %p31, %p32
    %p34 = scmp.ne.s32.totalorder %s23, %s24
    %p35 = scmp.eq.s32.totalorder %s15, 0
    %p36 = por %p34, %p35
    %p37 = scmp.ne.s32.totalorder %s23, %s24
    %p38 = scmp.eq.s32.totalorder %s16, 1
    %p39 = por %p37, %p38
    %p41 = scmp.ne.s32.totalorder %s24, %s40
    %p42 = scmp.eq.s32.totalorder %s16, 0
    %p43 = por %p41, %p42
    %s45 = sadd.s32 %s44, 1
    %p48 = scmp.eq.s32.totalorder %s10, 1
    %p49 = scmp.ne.s32.totalorder %s44, %s46
    %p50 = scmp.eq.s32.totalorder %s10, 0
    %p51 = por %p49, %p50
    %p52 = scmp.ne.s32.totalorder %s44, %s46
    %p53 = scmp.eq.s32.totalorder %s15, 1
    %p54 = por %p52, %p53
    %p55 = scmp.ne.s32.totalorder %s46, %s47
    %p56 = scmp.eq.s32.totalorder %s15, 0
    %p57 = por %p55, %p56
    %p58 = scmp.ne.s32.totalorder %s46, %s47
    %p59 = scmp.eq.s32.totalorder %s16, 1
    %p60 = por %p58, %p59
    %p62 = scmp.ne.s32.totalorder %s47, %s61
    %p63 = scmp.eq.s32.totalorder %s16, 0
    %p64 = por %p62, %p63
    %s66 = sadd.s32 %s65, 1
    %p69 = scmp.eq.s32.totalorder %s10, 1
    %p70 = scmp.ne.s32.totalorder %s65, %s67
    %p71 = scmp.eq.s32.totalorder %s10, 0
    %p72 = por %p70, %p71
    %p73 = scmp.ne.s32.totalorder %s65, %s67
    %p74 = scmp.eq.s32.totalorder %s15, 1
    %p75 = por %p73, %p74
    %p76 = scmp.ne.s32.totalorder %s67, %s68
    %p77 = scmp.eq.s32.totalorder %s15, 0
    %p78 = por %p76, %p77
    %p79 = scmp.ne.s32.totalorder %s67, %s68
    %p80 = scmp.eq.s32.totalorder %s16, 1
    %p81 = por %p79, %p80
    %p83 = scmp.ne.s32.totalorder %s68, %s82
    %p84 = scmp.eq.s32.totalorder %s16, 0
    %p85 = por %p83, %p84
    %s87 = sadd.s32 %s86, 1
    %p90 = scmp.eq.s32.totalorder %s10, 1
    %p91 = scmp.ne.s32.totalorder %s86, %s88
    %p92 = scmp.eq.s32.totalorder %s10, 0
    %p93 = por %p91, %p92
    %p94 = scmp.ne.s32.totalorder %s86, %s88
    %p95 = scmp.eq.s32.totalorder %s15, 1
    %p96 = por %p94, %p95
    %p97 = scmp.ne.s32.totalorder %s88, %s89
    %p98 = scmp.eq.s32.totalorder %s15, 0
    %p99 = por %p97, %p98
    %p100 = scmp.ne.s32.totalorder %s88, %s89
    %p101 = scmp.eq.s32.totalorder %s16, 1
    %p102 = por %p100, %p101
    %p104 = scmp.ne.s32.totalorder %s89, %s103
    %p105 = scmp.eq.s32.totalorder %s16, 0
    %p106 = por %p104, %p105
    %s107 = ssub.s32 %s10, %s17
    %p108 = scmp.eq.s32.totalorder %s107, 0
    %s110 = sadd.s32 %s109, 1
    %s111 = scalar_select %p108, %s109, %s110
    %p114 = pneg %p108
    %p115 = scmp.eq.s32.totalorder %s10, 1
    %p116 = por %p114, %p115
    %p117 = scmp.ne.s32.totalorder %s109, %s112
    %p118 = scmp.eq.s32.totalorder %s10, 0
    %p119 = por %p117, %p118
    %p120 = scmp.ne.s32.totalorder %s109, %s112
    %p121 = scmp.eq.s32.totalorder %s15, 1
    %p122 = por %p120, %p121
    %p123 = scmp.ne.s32.totalorder %s112, %s113
    %p124 = scmp.eq.s32.totalorder %s15, 0
    %p125 = por %p123, %p124
    %p126 = scmp.ne.s32.totalorder %s112, %s113
    %p127 = scmp.eq.s32.totalorder %s16, 1
    %p128 = por %p126, %p127
    %p130 = scmp.ne.s32.totalorder %s113, %s129
    %p131 = scmp.eq.s32.totalorder %s16, 0
    %p132 = por %p130, %p131
    %p133 = scmp.le.s32.totalorder 1, %s10
    %p134 = scmp.lt.s32.totalorder %s10, 3
    %p135 = pnand %p133, %p134
    %p136 = pneg %p135
    // Predicated region
    $region9: #{encoder_stage_forward.7} parent=5 // pred_check
      _
    $region10: #{encoder_stage_forward.7} parent=5 // pred_check_branch
      %138 = sbr.rel (%p135) target = $region12
    $region11: #{encoder_stage_forward.7} parent=5 // pred_region
      %s139 = ssub.s32 %s10, 1
      // Predicated region
      $region13: #{encoder_stage_forward.7} parent=11 // pred_check
        %p140 = pneg %p57
      $region14: #{encoder_stage_forward.7} parent=11 // pred_check_branch
        %142 = sbr.rel (%p140) target = $region16
      $region15: #{encoder_stage_forward.7} parent=11 // pred_region
        _
      $region16: #{encoder_stage_forward.7} parent=11 // pred_fallthru
        _
      // Predicated region
      $region17: #{encoder_stage_forward.7} parent=11 // pred_check
        %p143 = pneg %p78
      $region18: #{encoder_stage_forward.7} parent=11 // pred_check_branch
        %145 = sbr.rel (%p143) target = $region20
      $region19: #{encoder_stage_forward.7} parent=11 // pred_region
        _
      $region20: #{encoder_stage_forward.7} parent=11 // pred_fallthru
        _
      // Predicated region
      $region21: #{encoder_stage_forward.7} parent=11 // pred_check
        %p146 = pneg %p99
      $region22: #{encoder_stage_forward.7} parent=11 // pred_check_branch
        %148 = sbr.rel (%p146) target = $region24
      $region23: #{encoder_stage_forward.7} parent=11 // pred_region
        _
      $region24: #{encoder_stage_forward.7} parent=11 // pred_fallthru
        _
    $region12: #{encoder_stage_forward.7} parent=5 // pred_fallthru
      _
    %p149 = scmp.lt.s32.totalorder %s10, 2
    // Predicated region
    $region25: #{encoder_stage_forward.7} parent=5 // pred_check
      %p150 = pneg %p149
    $region26: #{encoder_stage_forward.7} parent=5 // pred_check_branch
      %152 = sbr.rel (%p150) target = $region28
    $region27: #{encoder_stage_forward.7} parent=5 // pred_region
      // Predicated region
      $region29: #{encoder_stage_forward.7} parent=27 // pred_check
        %p153 = pneg %p30
      $region30: #{encoder_stage_forward.7} parent=27 // pred_check_branch
        %155 = sbr.rel (%p153) target = $region32
      $region31: #{encoder_stage_forward.7} parent=27 // pred_region
        %p156 = scmp.lt.s32.totalorder %s10, 1
        %s157 = scalar_select %p156, %s10, 1
        %s158 = smul.addr %s157, 4
        %s159 = smul.addr %s158, 8
        %s160 = scalar_lea.vmem %s0, %s159
      $region32: #{encoder_stage_forward.7} parent=27 // pred_fallthru
        _
    $region28: #{encoder_stage_forward.7} parent=5 // pred_fallthru
      _
    %p161 = scmp.le.s32.totalorder 1, %s10
    %p162 = scmp.lt.s32.totalorder %s10, 3
    %p163 = pnand %p161, %p162
    %p164 = pneg %p163
    // Predicated region
    $region33: #{encoder_stage_forward.7} parent=5 // pred_check
      _
    $region34: #{encoder_stage_forward.7} parent=5 // pred_check_branch
      %166 = sbr.rel (%p163) target = $region36
    $region35: #{encoder_stage_forward.7} parent=5 // pred_region
      %s167 = ssub.s32 %s10, 1
      %p168 = scmp.lt.s32.totalorder %s15, 1
      %s169 = scalar_select %p168, %s15, 1
      %s170 = smul.addr %s169, 4
      %s171 = smul.addr %s170, 8
      %s172 = scalar_lea.vmem %s0, %s171
      %p173 = pneg %p36
      %p174 = pneg %p33
      %p175 = pneg %p57
      %p176 = pneg %p54
      %p177 = pneg %p78
      %p178 = pneg %p75
      %p179 = pneg %p99
      %p180 = pneg %p96
      %p181 = pneg %p125
      %p182 = pneg %p122
      %p183 = scmp.lt.s32.totalorder %s15, 1
      %s184 = scalar_select %p183, %s15, 1
      %s185 = smul.addr %s184, 4
      %s186 = smul.addr %s185, 8
      %s187 = scalar_lea.vmem %s4, %s186
      %p188 = scmp.lt.s32.totalorder %s15, 1
      %s189 = scalar_select %p188, %s15, 1
      %s190 = smul.addr %s189, 4
      %s191 = smul.addr %s190, 8
      %s192 = scalar_lea.vmem %s0, %s191
      %p193 = scmp.lt.s32.totalorder %s15, 1
      %s194 = scalar_select %p193, %s15, 1
      %s195 = smul.addr %s194, 4
      %s196 = smul.addr %s195, 8
      %s197 = scalar_lea.vmem %s4, %s196
      %v198 = vld [vmem:[%s192] sm:$0xff]
      %v199 = vld [vmem:[%s192 + $0x8] sm:$0xff]
      %v200 = vld [vmem:[%s192 + $0x10] sm:$0xff]
      %v201 = vld [vmem:[%s192 + $0x18] sm:$0xff]
      %v202 = vld [vmem:[%s1] sm:$0xf]
      %v204 = vperm.slane %v202, 0
      %v205 = vperm.slane %v202, 1
      %v206 = vperm.slane %v202, 2
      %v207 = vperm.slane %v202, 3
      %v212 = vmul.f32 %v198, %v204
      %v213 = vmul.f32 %v199, %v205
      %v214 = vmul.f32 %v200, %v206
      %v215 = vmul.f32 %v201, %v207
      %v216 = vld [vmem:[%s2] sm:$0xf]
      %v218 = vperm.slane %v216, 0
      %v219 = vperm.slane %v216, 1
      %v220 = vperm.slane %v216, 2
      %v221 = vperm.slane %v216, 3
      %v226 = vadd.f32 %v212, %v218
      %v227 = vadd.f32 %v213, %v219
      %v228 = vadd.f32 %v214, %v220
      %v229 = vadd.f32 %v215, %v221
      %vm230 = vcmp.ge.f32.partialorder %v226, 0.0
      %vm231 = vcmp.ge.f32.partialorder %v227, 0.0
      %vm232 = vcmp.ge.f32.partialorder %v228, 0.0
      %vm233 = vcmp.ge.f32.partialorder %v229, 0.0
      %v234 = vld [vmem:[%s3] sm:$0xf]
      %v236 = vperm.slane %v234, 0
      %v237 = vperm.slane %v234, 1
      %v238 = vperm.slane %v234, 2
      %v239 = vperm.slane %v234, 3
      %v244 = vmul.f32 %v236, %v226
      %v245 = vmul.f32 %v237, %v227
      %v246 = vmul.f32 %v238, %v228
      %v247 = vmul.f32 %v239, %v229
      %v248 = vsel %vm230, %v226, %v244
      %v249 = vsel %vm231, %v227, %v245
      %v250 = vsel %vm232, %v228, %v246
      %v251 = vsel %vm233, %v229, %v247
      %252 = vst [vmem:[%s197] sm:$0xff] %v248
      %253 = vst [vmem:[%s197 + $0x8] sm:$0xff] %v249
      %254 = vst [vmem:[%s197 + $0x10] sm:$0xff] %v250
      %255 = vst [vmem:[%s197 + $0x18] sm:$0xff] %v251
      %p256 = scmp.lt.s32.totalorder %s15, 1
      %s257 = scalar_select %p256, %s15, 1
      %s258 = smul.addr %s257, 4
      %s259 = smul.addr %s258, 8
      %s260 = scalar_lea.vmem %s4, %s259
      // Predicated region
      $region37: #{encoder_stage_forward.7} parent=35 // pred_check
        %p261 = pneg %p122
      $region38: #{encoder_stage_forward.7} parent=35 // pred_check_branch
        %263 = sbr.rel (%p261) target = $region40
      $region39: #{encoder_stage_forward.7} parent=35 // pred_region
        _
      $region40: #{encoder_stage_forward.7} parent=35 // pred_fallthru
        _
    $region36: #{encoder_stage_forward.7} parent=5 // pred_fallthru
      _
    %p264 = scmp.le.s32.totalorder 2, %s10
    // Predicated region
    $region41: #{encoder_stage_forward.7} parent=5 // pred_check
      %p265 = pneg %p264
    $region42: #{encoder_stage_forward.7} parent=5 // pred_check_branch
      %267 = sbr.rel (%p265) target = $region44
    $region43: #{encoder_stage_forward.7} parent=5 // pred_region
      %s268 = ssub.s32 %s10, 2
      // Predicated region
      $region45: #{encoder_stage_forward.7} parent=43 // pred_check
        %p269 = pneg %p128
      $region46: #{encoder_stage_forward.7} parent=43 // pred_check_branch
        %271 = sbr.rel (%p269) target = $region48
      $region47: #{encoder_stage_forward.7} parent=43 // pred_region
        %p272 = scmp.lt.s32.totalorder %s16, 1
        %s273 = scalar_select %p272, %s16, 1
        %s274 = smul.addr %s273, 4
        %s275 = smul.addr %s274, 8
        %s276 = scalar_lea.vmem %s4, %s275
      $region48: #{encoder_stage_forward.7} parent=43 // pred_fallthru
        _
    $region44: #{encoder_stage_forward.7} parent=5 // pred_fallthru
      _
  $region6: #{encoder_stage_forward.7} parent=0 // loop_footer
    %s14 = sadd.s32 1, %s10
  $region7: #{encoder_stage_forward.7} parent=0 // loop_footer_branch
    %9 = sbr.rel target = $region3
  $region8: #{encoder_stage_forward.7} parent=0 // loop_exit
    _

// kernel: encoder_stage_forward.6
$region0: #{encoder_stage_forward.6}
  #allocation0 [shape = 'u32[]', space=smem, size = 0x4, offset = 0x4, fixed_abs, tag = 'smem constant byte address 0x4 - core index']
  #allocation1 [shape = 'u32[72,128]{1,0:T(1,128)}', space=vmem, size = 0x9000, scoped, tag = 'internal scratch']
  #allocation2 [shape = 'f32[16,512]{1,0:T(8,128)}', space=vmem, size = 0x8000, scoped, tag = 'scratch operand']
  %s0 = inlined_call_operand.vmem [shape: f32[2,8,512], index: 0, kind: input, shape index: {}]
  %s1 = inlined_call_operand.vmem [shape: bf16[3,512,512], index: 1, kind: input, shape index: {}]
  %s2 = inlined_call_operand.vmem [shape: f32[1,512], index: 2, kind: input, shape index: {}]
  %s3 = inlined_call_operand.vmem [shape: f32[1,512], index: 3, kind: input, shape index: {}]
  %s4 = inlined_call_operand.vmem [shape: f32[1,512], index: 4, kind: input, shape index: {}]
  %s5 = inlined_call_operand.vmem [shape: f32[2,8,512], index: 5, kind: output, shape index: {0}]
  %s6 = inlined_call_operand.vmem [shape: f32[2,1,1024], index: 6, kind: output, shape index: {1}]
  %7 = xla_tuple %s5, %s6
  %s8 = sld [smem:[#allocation0]]
  $region61: #{encoder_stage_forward.6} parent=0
    _
  %s10 = ssub.s32 1, %s8
  %s11 = scalar_select 0, %s10, %s8
  loop: start=0, step=1, limit=4
  $region2: #{encoder_stage_forward.6} parent=0 // loop_pre_header
    _
  $region3: #{encoder_stage_forward.6} parent=0 // loop_header
    %s13 = sphi 0, %s17
    %p14 = scmp.ge.s32.totalorder %s13, 4
    %s23 = sphi 0, %s25
    %s26 = sphi 0, %s23
    %s27 = sphi 0, %s26
    %s43 = sphi 0, %s27
    %s47 = sphi 0, %s47
    %s49 = sphi 0, %s47
    %s50 = sphi 0, %s49
    %s64 = sphi 0, %s50
    %s68 = sphi 0, %s68
    %s70 = sphi 0, %s68
    %s71 = sphi 0, %s70
    %s85 = sphi 0, %s71
    %s89 = sphi 0, %s89
    %s91 = sphi 0, %s89
    %s92 = sphi 0, %s91
    %s106 = sphi 0, %s92
    %s110 = sphi 0, %s110
    %s112 = sphi 0, %s110
    %s113 = sphi 0, %s112
    %s127 = sphi 0, %s113
    %s133 = sphi 0, %s135
    %s136 = sphi 0, %s133
    %s137 = sphi 0, %s136
    %s153 = sphi 0, %s137
    %s159 = sphi 0, %s161
    %s162 = sphi 0, %s159
    %s163 = sphi 0, %s162
    %s179 = sphi 0, %s163
  $region4: #{encoder_stage_forward.6} parent=0 // loop_header_branch
    %16 = sbr.rel (%p14) target = $region8
  $region5: #{encoder_stage_forward.6} parent=0 // loop_body
    %s18 = ssub.s32 %s13, 1
    %s19 = ssub.s32 %s13, 2
    %s20 = sadd.s32 %s13, 1
    %s21 = ssub.s32 %s13, %s20
    %p22 = scmp.eq.s32.totalorder %s21, 0
    %s24 = sadd.s32 %s23, 1
    %s25 = scalar_select %p22, %s23, %s24
    %p28 = pneg %p22
    %p29 = scmp.eq.s32.totalorder %s13, 1
    %p30 = por %p28, %p29
    %p31 = scmp.ne.s32.totalorder %s23, %s26
    %p32 = scmp.eq.s32.totalorder %s13, 0
    %p33 = por %p31, %p32
    %p34 = scmp.ne.s32.totalorder %s23, %s26
    %p35 = scmp.eq.s32.totalorder %s18, 1
    %p36 = por %p34, %p35
    %p37 = scmp.ne.s32.totalorder %s26, %s27
    %p38 = scmp.eq.s32.totalorder %s18, 0
    %p39 = por %p37, %p38
    %p40 = scmp.ne.s32.totalorder %s26, %s27
    %p41 = scmp.eq.s32.totalorder %s19, 1
    %p42 = por %p40, %p41
    %p44 = scmp.ne.s32.totalorder %s27, %s43
    %p45 = scmp.eq.s32.totalorder %s19, 0
    %p46 = por %p44, %p45
    %s48 = sadd.s32 %s47, 1
    %p51 = scmp.eq.s32.totalorder %s13, 1
    %p52 = scmp.ne.s32.totalorder %s47, %s49
    %p53 = scmp.eq.s32.totalorder %s13, 0
    %p54 = por %p52, %p53
    %p55 = scmp.ne.s32.totalorder %s47, %s49
    %p56 = scmp.eq.s32.totalorder %s18, 1
    %p57 = por %p55, %p56
    %p58 = scmp.ne.s32.totalorder %s49, %s50
    %p59 = scmp.eq.s32.totalorder %s18, 0
    %p60 = por %p58, %p59
    %p61 = scmp.ne.s32.totalorder %s49, %s50
    %p62 = scmp.eq.s32.totalorder %s19, 1
    %p63 = por %p61, %p62
    %p65 = scmp.ne.s32.totalorder %s50, %s64
    %p66 = scmp.eq.s32.totalorder %s19, 0
    %p67 = por %p65, %p66
    %s69 = sadd.s32 %s68, 1
    %p72 = scmp.eq.s32.totalorder %s13, 1
    %p73 = scmp.ne.s32.totalorder %s68, %s70
    %p74 = scmp.eq.s32.totalorder %s13, 0
    %p75 = por %p73, %p74
    %p76 = scmp.ne.s32.totalorder %s68, %s70
    %p77 = scmp.eq.s32.totalorder %s18, 1
    %p78 = por %p76, %p77
    %p79 = scmp.ne.s32.totalorder %s70, %s71
    %p80 = scmp.eq.s32.totalorder %s18, 0
    %p81 = por %p79, %p80
    %p82 = scmp.ne.s32.totalorder %s70, %s71
    %p83 = scmp.eq.s32.totalorder %s19, 1
    %p84 = por %p82, %p83
    %p86 = scmp.ne.s32.totalorder %s71, %s85
    %p87 = scmp.eq.s32.totalorder %s19, 0
    %p88 = por %p86, %p87
    %s90 = sadd.s32 %s89, 1
    %p93 = scmp.eq.s32.totalorder %s13, 1
    %p94 = scmp.ne.s32.totalorder %s89, %s91
    %p95 = scmp.eq.s32.totalorder %s13, 0
    %p96 = por %p94, %p95
    %p97 = scmp.ne.s32.totalorder %s89, %s91
    %p98 = scmp.eq.s32.totalorder %s18, 1
    %p99 = por %p97, %p98
    %p100 = scmp.ne.s32.totalorder %s91, %s92
    %p101 = scmp.eq.s32.totalorder %s18, 0
    %p102 = por %p100, %p101
    %p103 = scmp.ne.s32.totalorder %s91, %s92
    %p104 = scmp.eq.s32.totalorder %s19, 1
    %p105 = por %p103, %p104
    %p107 = scmp.ne.s32.totalorder %s92, %s106
    %p108 = scmp.eq.s32.totalorder %s19, 0
    %p109 = por %p107, %p108
    %s111 = sadd.s32 %s110, 1
    %p114 = scmp.eq.s32.totalorder %s13, 1
    %p115 = scmp.ne.s32.totalorder %s110, %s112
    %p116 = scmp.eq.s32.totalorder %s13, 0
    %p117 = por %p115, %p116
    %p118 = scmp.ne.s32.totalorder %s110, %s112
    %p119 = scmp.eq.s32.totalorder %s18, 1
    %p120 = por %p118, %p119
    %p121 = scmp.ne.s32.totalorder %s112, %s113
    %p122 = scmp.eq.s32.totalorder %s18, 0
    %p123 = por %p121, %p122
    %p124 = scmp.ne.s32.totalorder %s112, %s113
    %p125 = scmp.eq.s32.totalorder %s19, 1
    %p126 = por %p124, %p125
    %p128 = scmp.ne.s32.totalorder %s113, %s127
    %p129 = scmp.eq.s32.totalorder %s19, 0
    %p130 = por %p128, %p129
    %s131 = ssub.s32 %s13, %s20
    %p132 = scmp.eq.s32.totalorder %s131, 0
    %s134 = sadd.s32 %s133, 1
    %s135 = scalar_select %p132, %s133, %s134
    %p138 = pneg %p132
    %p139 = scmp.eq.s32.totalorder %s13, 1
    %p140 = por %p138, %p139
    %p141 = scmp.ne.s32.totalorder %s133, %s136
    %p142 = scmp.eq.s32.totalorder %s13, 0
    %p143 = por %p141, %p142
    %p144 = scmp.ne.s32.totalorder %s133, %s136
    %p145 = scmp.eq.s32.totalorder %s18, 1
    %p146 = por %p144, %p145
    %p147 = scmp.ne.s32.totalorder %s136, %s137
    %p148 = scmp.eq.s32.totalorder %s18, 0
    %p149 = por %p147, %p148
    %p150 = scmp.ne.s32.totalorder %s136, %s137
    %p151 = scmp.eq.s32.totalorder %s19, 1
    %p152 = por %p150, %p151
    %p154 = scmp.ne.s32.totalorder %s137, %s153
    %p155 = scmp.eq.s32.totalorder %s19, 0
    %p156 = por %p154, %p155
    %s157 = ssub.s32 %s13, %s20
    %p158 = scmp.eq.s32.totalorder %s157, 0
    %s160 = sadd.s32 %s159, 1
    %s161 = scalar_select %p158, %s159, %s160
    %p164 = pneg %p158
    %p165 = scmp.eq.s32.totalorder %s13, 1
    %p166 = por %p164, %p165
    %p167 = scmp.ne.s32.totalorder %s159, %s162
    %p168 = scmp.eq.s32.totalorder %s13, 0
    %p169 = por %p167, %p168
    %p170 = scmp.ne.s32.totalorder %s159, %s162
    %p171 = scmp.eq.s32.totalorder %s18, 1
    %p172 = por %p170, %p171
    %p173 = scmp.ne.s32.totalorder %s162, %s163
    %p174 = scmp.eq.s32.totalorder %s18, 0
    %p175 = por %p173, %p174
    %p176 = scmp.ne.s32.totalorder %s162, %s163
    %p177 = scmp.eq.s32.totalorder %s19, 1
    %p178 = por %p176, %p177
    %p180 = scmp.ne.s32.totalorder %s163, %s179
    %p181 = scmp.eq.s32.totalorder %s19, 0
    %p182 = por %p180, %p181
    %p183 = scmp.le.s32.totalorder 1, %s13
    %p184 = scmp.lt.s32.totalorder %s13, 3
    %p185 = pnand %p183, %p184
    %p186 = pneg %p185
    // Predicated region
    $region9: #{encoder_stage_forward.6} parent=5 // pred_check
      _
    $region10: #{encoder_stage_forward.6} parent=5 // pred_check_branch
      %188 = sbr.rel (%p185) target = $region12
    $region11: #{encoder_stage_forward.6} parent=5 // pred_region
      %s189 = ssub.s32 %s13, 1
      // Predicated region
      $region13: #{encoder_stage_forward.6} parent=11 // pred_check
        %p190 = pneg %p60
      $region14: #{encoder_stage_forward.6} parent=11 // pred_check_branch
        %192 = sbr.rel (%p190) target = $region16
      $region15: #{encoder_stage_forward.6} parent=11 // pred_region
        _
      $region16: #{encoder_stage_forward.6} parent=11 // pred_fallthru
        _
      // Predicated region
      $region17: #{encoder_stage_forward.6} parent=11 // pred_check
        %p193 = pneg %p81
      $region18: #{encoder_stage_forward.6} parent=11 // pred_check_branch
        %195 = sbr.rel (%p193) target = $region20
      $region19: #{encoder_stage_forward.6} parent=11 // pred_region
        _
      $region20: #{encoder_stage_forward.6} parent=11 // pred_fallthru
        _
      // Predicated region
      $region21: #{encoder_stage_forward.6} parent=11 // pred_check
        %p196 = pneg %p102
      $region22: #{encoder_stage_forward.6} parent=11 // pred_check_branch
        %198 = sbr.rel (%p196) target = $region24
      $region23: #{encoder_stage_forward.6} parent=11 // pred_region
        _
      $region24: #{encoder_stage_forward.6} parent=11 // pred_fallthru
        _
      // Predicated region
      $region25: #{encoder_stage_forward.6} parent=11 // pred_check
        %p199 = pneg %p123
      $region26: #{encoder_stage_forward.6} parent=11 // pred_check_branch
        %201 = sbr.rel (%p199) target = $region28
      $region27: #{encoder_stage_forward.6} parent=11 // pred_region
        _
      $region28: #{encoder_stage_forward.6} parent=11 // pred_fallthru
        _
    $region12: #{encoder_stage_forward.6} parent=5 // pred_fallthru
      _
    %p202 = scmp.lt.s32.totalorder %s13, 2
    // Predicated region
    $region29: #{encoder_stage_forward.6} parent=5 // pred_check
      %p203 = pneg %p202
    $region30: #{encoder_stage_forward.6} parent=5 // pred_check_branch
      %205 = sbr.rel (%p203) target = $region32
    $region31: #{encoder_stage_forward.6} parent=5 // pred_region
      // Predicated region
      $region33: #{encoder_stage_forward.6} parent=31 // pred_check
        %p206 = pneg %p33
      $region34: #{encoder_stage_forward.6} parent=31 // pred_check_branch
        %208 = sbr.rel (%p206) target = $region36
      $region35: #{encoder_stage_forward.6} parent=31 // pred_region
        %p209 = scmp.lt.s32.totalorder %s13, 1
        %s210 = scalar_select %p209, %s13, 1
        %s211 = smul.addr %s210, 4
        %s212 = smul.addr %s211, 8
        %s213 = scalar_lea.vmem %s0, %s212
      $region36: #{encoder_stage_forward.6} parent=31 // pred_fallthru
        _
    $region32: #{encoder_stage_forward.6} parent=5 // pred_fallthru
      _
    %p214 = scmp.le.s32.totalorder 1, %s13
    %p215 = scmp.lt.s32.totalorder %s13, 3
    %p216 = pnand %p214, %p215
    %p217 = pneg %p216
    // Predicated region
    $region37: #{encoder_stage_forward.6} parent=5 // pred_check
      _
    $region38: #{encoder_stage_forward.6} parent=5 // pred_check_branch
      %219 = sbr.rel (%p216) target = $region40
    $region39: #{encoder_stage_forward.6} parent=5 // pred_region
      %s220 = ssub.s32 %s13, 1
      %p221 = scmp.lt.s32.totalorder %s18, 1
      %s222 = scalar_select %p221, %s18, 1
      %s223 = smul.addr %s222, 4
      %s224 = smul.addr %s223, 8
      %s225 = scalar_lea.vmem %s0, %s224
      %p226 = pneg %p39
      %p227 = pneg %p36
      %p228 = pneg %p60
      %p229 = pneg %p57
      %p230 = pneg %p81
      %p231 = pneg %p78
      %p232 = pneg %p102
      %p233 = pneg %p99
      %p234 = pneg %p123
      %p235 = pneg %p120
      %p236 = pneg %p149
      %p237 = pneg %p146
      %p238 = scmp.lt.s32.totalorder %s18, 1
      %s239 = scalar_select %p238, %s18, 1
      %s240 = smul.addr %s239, 4
      %s241 = smul.addr %s240, 8
      %s242 = scalar_lea.vmem %s5, %s241
      %p243 = pneg %p175
      %p244 = pneg %p172
      %p245 = scmp.lt.s32.totalorder %s18, 1
      %s246 = scalar_select %p245, %s18, 1
      %s247 = smul.addr %s246, 8
      %s248 = scalar_lea.vmem %s6, %s247
      %p249 = scmp.lt.s32.totalorder %s18, 1
      %s250 = scalar_select %p249, %s18, 1
      %s251 = smul.addr %s250, 4
      %s252 = smul.addr %s251, 8
      %s253 = scalar_lea.vmem %s0, %s252
      %p254 = scmp.lt.s32.totalorder %s18, 1
      %s255 = scalar_select %p254, %s18, 1
      %s256 = smul.addr %s255, 4
      %s257 = smul.addr %s256, 8
      %s258 = scalar_lea.vmem %s5, %s257
      %p259 = scmp.lt.s32.totalorder %s18, 1
      %s260 = scalar_select %p259, %s18, 1
      %s261 = smul.addr %s260, 8
      %s262 = scalar_lea.vmem %s6, %s261
      %v263 = vld [vmem:[%s253] sm:$0xff]
      %v264 = vld [vmem:[%s253 + $0x8] sm:$0xff]
      %v265 = vld [vmem:[%s253 + $0x10] sm:$0xff]
      %v266 = vld [vmem:[%s253 + $0x18] sm:$0xff]
      %v267 = vld [vmem:[%s2] sm:$0xf]
      %v269 = vperm.slane %v267, 0
      %v270 = vperm.slane %v267, 1
      %v271 = vperm.slane %v267, 2
      %v272 = vperm.slane %v267, 3
      %v277 = vmul.f32 %v263, %v269
      %v278 = vmul.f32 %v264, %v270
      %v279 = vmul.f32 %v265, %v271
      %v280 = vmul.f32 %v266, %v272
      %v281 = vld [vmem:[%s3] sm:$0xf]
      %v283 = vperm.slane %v281, 0
      %v284 = vperm.slane %v281, 1
      %v285 = vperm.slane %v281, 2
      %v286 = vperm.slane %v281, 3
      %v291 = vadd.f32 %v277, %v283
      %v292 = vadd.f32 %v278, %v284
      %v293 = vadd.f32 %v279, %v285
      %v294 = vadd.f32 %v280, %v286
      %vm295 = vcmp.ge.f32.partialorder %v291, 0.0
      %vm296 = vcmp.ge.f32.partialorder %v292, 0.0
      %vm297 = vcmp.ge.f32.partialorder %v293, 0.0
      %vm298 = vcmp.ge.f32.partialorder %v294, 0.0
      %v299 = vld [vmem:[%s4] sm:$0xf]
      %v301 = vperm.slane %v299, 0
      %v302 = vperm.slane %v299, 1
      %v303 = vperm.slane %v299, 2
      %v304 = vperm.slane %v299, 3
      %v309 = vmul.f32 %v301, %v291
      %v310 = vmul.f32 %v302, %v292
      %v311 = vmul.f32 %v303, %v293
      %v312 = vmul.f32 %v304, %v294
      %v313 = vsel %vm295, %v291, %v309
      %v314 = vsel %vm296, %v292, %v310
      %v315 = vsel %vm297, %v293, %v311
      %v316 = vsel %vm298, %v294, %v312
      %317 = vst [vmem:[#allocation2] sm:$0xf] 0.0
      %318 = vst [vmem:[#allocation2 + $0x8] sm:$0xf] 0.0
      %319 = vst [vmem:[#allocation2 + $0x10] sm:$0xf] 0.0
      %320 = vst [vmem:[#allocation2 + $0x18] sm:$0xf] 0.0
      %321 = vst [vmem:[#allocation2 + $0x20] sm:$0xf0] 0.0
      %322 = vst [vmem:[#allocation2 + $0x28] sm:$0xf0] 0.0
      %323 = vst [vmem:[#allocation2 + $0x30] sm:$0xf0] 0.0
      %324 = vst [vmem:[#allocation2 + $0x38] sm:$0xf0] 0.0
      %v329 = vrot.slane %v313, 4
      %v330 = vrot.slane %v314, 4
      %v331 = vrot.slane %v315, 4
      %v332 = vrot.slane %v316, 4
      %337 = vst [vmem:[#allocation2] sm:$0xf0] %v329
      %338 = vst [vmem:[#allocation2 + $0x8] sm:$0xf0] %v330
      %339 = vst [vmem:[#allocation2 + $0x10] sm:$0xf0] %v331
      %340 = vst [vmem:[#allocation2 + $0x18] sm:$0xf0] %v332
      %341 = vst [vmem:[#allocation2 + $0x20] sm:$0xf] %v329
      %342 = vst [vmem:[#allocation2 + $0x28] sm:$0xf] %v330
      %343 = vst [vmem:[#allocation2 + $0x30] sm:$0xf] %v331
      %344 = vst [vmem:[#allocation2 + $0x38] sm:$0xf] %v332
      %v345 = vld [vmem:[#allocation2] sm:$0xff]
      %v346 = vld [vmem:[#allocation2 + $0x8] sm:$0xff]
      %v347 = vld [vmem:[#allocation2 + $0x10] sm:$0xff]
      %v348 = vld [vmem:[#allocation2 + $0x18] sm:$0xff]
      %v349 = vpack.c.bf16 %v345, %v345
      %v350 = vpack.c.bf16 %v346, %v346
      %v351 = vpack.c.bf16 %v347, %v347
      %v352 = vpack.c.bf16 %v348, %v348
      %v353 = vld [vmem:[%s1] sm:$0xff]
      %v354 = vld [vmem:[%s1 + $0x8] sm:$0xff]
      %v355 = vld [vmem:[%s1 + $0x10] sm:$0xff]
      %v356 = vld [vmem:[%s1 + $0x18] sm:$0xff]
      %v357 = vld [vmem:[%s1 + $0x20] sm:$0xff]
      %v358 = vld [vmem:[%s1 + $0x28] sm:$0xff]
      %v359 = vld [vmem:[%s1 + $0x30] sm:$0xff]
      %v360 = vld [vmem:[%s1 + $0x38] sm:$0xff]
      %v361 = vld [vmem:[%s1 + $0x40] sm:$0xff]
      %v362 = vld [vmem:[%s1 + $0x48] sm:$0xff]
      %v363 = vld [vmem:[%s1 + $0x50] sm:$0xff]
      %v364 = vld [vmem:[%s1 + $0x58] sm:$0xff]
      %v365 = vld [vmem:[%s1 + $0x60] sm:$0xff]
      %v366 = vld [vmem:[%s1 + $0x68] sm:$0xff]
      %v367 = vld [vmem:[%s1 + $0x70] sm:$0xff]
      %v368 = vld [vmem:[%s1 + $0x78] sm:$0xff]
      %v369 = vld [vmem:[%s1 + $0x80] sm:$0xff]
      %v370 = vld [vmem:[%s1 + $0x88] sm:$0xff]
      %v371 = vld [vmem:[%s1 + $0x90] sm:$0xff]
      %v372 = vld [vmem:[%s1 + $0x98] sm:$0xff]
      %v373 = vld [vmem:[%s1 + $0xa0] sm:$0xff]
      %v374 = vld [vmem:[%s1 + $0xa8] sm:$0xff]
      %v375 = vld [vmem:[%s1 + $0xb0] sm:$0xff]
      %v376 = vld [vmem:[%s1 + $0xb8] sm:$0xff]
      %v377 = vld [vmem:[%s1 + $0xc0] sm:$0xff]
      %v378 = vld [vmem:[%s1 + $0xc8] sm:$0xff]
      %v379 = vld [vmem:[%s1 + $0xd0] sm:$0xff]
      %v380 = vld [vmem:[%s1 + $0xd8] sm:$0xff]
      %v381 = vld [vmem:[%s1 + $0xe0] sm:$0xff]
      %v382 = vld [vmem:[%s1 + $0xe8] sm:$0xff]
      %v383 = vld [vmem:[%s1 + $0xf0] sm:$0xff]
      %v384 = vld [vmem:[%s1 + $0xf8] sm:$0xff]
      %v385 = vld [vmem:[%s1 + $0x100] sm:$0xff]
      %v386 = vld [vmem:[%s1 + $0x108] sm:$0xff]
      %v387 = vld [vmem:[%s1 + $0x110] sm:$0xff]
      %v388 = vld [vmem:[%s1 + $0x118] sm:$0xff]
      %v389 = vld [vmem:[%s1 + $0x120] sm:$0xff]
      %v390 = vld [vmem:[%s1 + $0x128] sm:$0xff]
      %v391 = vld [vmem:[%s1 + $0x130] sm:$0xff]
      %v392 = vld [vmem:[%s1 + $0x138] sm:$0xff]
      %v393 = vld [vmem:[%s1 + $0x140] sm:$0xff]
      %v394 = vld [vmem:[%s1 + $0x148] sm:$0xff]
      %v395 = vld [vmem:[%s1 + $0x150] sm:$0xff]
      %v396 = vld [vmem:[%s1 + $0x158] sm:$0xff]
      %v397 = vld [vmem:[%s1 + $0x160] sm:$0xff]
      %v398 = vld [vmem:[%s1 + $0x168] sm:$0xff]
      %v399 = vld [vmem:[%s1 + $0x170] sm:$0xff]
      %v400 = vld [vmem:[%s1 + $0x178] sm:$0xff]
      %v401 = vld [vmem:[%s1 + $0x180] sm:$0xff]
      %v402 = vld [vmem:[%s1 + $0x188] sm:$0xff]
      %v403 = vld [vmem:[%s1 + $0x190] sm:$0xff]
      %v404 = vld [vmem:[%s1 + $0x198] sm:$0xff]
      %v405 = vld [vmem:[%s1 + $0x1a0] sm:$0xff]
      %v406 = vld [vmem:[%s1 + $0x1a8] sm:$0xff]
      %v407 = vld [vmem:[%s1 + $0x1b0] sm:$0xff]
      %v408 = vld [vmem:[%s1 + $0x1b8] sm:$0xff]
      %v409 = vld [vmem:[%s1 + $0x1c0] sm:$0xff]
      %v410 = vld [vmem:[%s1 + $0x1c8] sm:$0xff]
      %v411 = vld [vmem:[%s1 + $0x1d0] sm:$0xff]
      %v412 = vld [vmem:[%s1 + $0x1d8] sm:$0xff]
      %v413 = vld [vmem:[%s1 + $0x1e0] sm:$0xff]
      %v414 = vld [vmem:[%s1 + $0x1e8] sm:$0xff]
      %v415 = vld [vmem:[%s1 + $0x1f0] sm:$0xff]
      %v416 = vld [vmem:[%s1 + $0x1f8] sm:$0xff]
      %v417 = vld [vmem:[%s1 + $0x200] sm:$0xff]
      %v418 = vld [vmem:[%s1 + $0x208] sm:$0xff]
      %v419 = vld [vmem:[%s1 + $0x210] sm:$0xff]
      %v420 = vld [vmem:[%s1 + $0x218] sm:$0xff]
      %v421 = vld [vmem:[%s1 + $0x220] sm:$0xff]
      %v422 = vld [vmem:[%s1 + $0x228] sm:$0xff]
      %v423 = vld [vmem:[%s1 + $0x230] sm:$0xff]
      %v424 = vld [vmem:[%s1 + $0x238] sm:$0xff]
      %v425 = vld [vmem:[%s1 + $0x240] sm:$0xff]
      %v426 = vld [vmem:[%s1 + $0x248] sm:$0xff]
      %v427 = vld [vmem:[%s1 + $0x250] sm:$0xff]
      %v428 = vld [vmem:[%s1 + $0x258] sm:$0xff]
      %v429 = vld [vmem:[%s1 + $0x260] sm:$0xff]
      %v430 = vld [vmem:[%s1 + $0x268] sm:$0xff]
      %v431 = vld [vmem:[%s1 + $0x270] sm:$0xff]
      %v432 = vld [vmem:[%s1 + $0x278] sm:$0xff]
      %v433 = vld [vmem:[%s1 + $0x280] sm:$0xff]
      %v434 = vld [vmem:[%s1 + $0x288] sm:$0xff]
      %v435 = vld [vmem:[%s1 + $0x290] sm:$0xff]
      %v436 = vld [vmem:[%s1 + $0x298] sm:$0xff]
      %v437 = vld [vmem:[%s1 + $0x2a0] sm:$0xff]
      %v438 = vld [vmem:[%s1 + $0x2a8] sm:$0xff]
      %v439 = vld [vmem:[%s1 + $0x2b0] sm:$0xff]
      %v440 = vld [vmem:[%s1 + $0x2b8] sm:$0xff]
      %v441 = vld [vmem:[%s1 + $0x2c0] sm:$0xff]
      %v442 = vld [vmem:[%s1 + $0x2c8] sm:$0xff]
      %v443 = vld [vmem:[%s1 + $0x2d0] sm:$0xff]
      %v444 = vld [vmem:[%s1 + $0x2d8] sm:$0xff]
      %v445 = vld [vmem:[%s1 + $0x2e0] sm:$0xff]
      %v446 = vld [vmem:[%s1 + $0x2e8] sm:$0xff]
      %v447 = vld [vmem:[%s1 + $0x2f0] sm:$0xff]
      %v448 = vld [vmem:[%s1 + $0x2f8] sm:$0xff]
      %v449 = vld [vmem:[%s1 + $0x300] sm:$0xff]
      %v450 = vld [vmem:[%s1 + $0x308] sm:$0xff]
      %v451 = vld [vmem:[%s1 + $0x310] sm:$0xff]
      %v452 = vld [vmem:[%s1 + $0x318] sm:$0xff]
      %v453 = vld [vmem:[%s1 + $0x320] sm:$0xff]
      %v454 = vld [vmem:[%s1 + $0x328] sm:$0xff]
      %v455 = vld [vmem:[%s1 + $0x330] sm:$0xff]
      %v456 = vld [vmem:[%s1 + $0x338] sm:$0xff]
      %v457 = vld [vmem:[%s1 + $0x340] sm:$0xff]
      %v458 = vld [vmem:[%s1 + $0x348] sm:$0xff]
      %v459 = vld [vmem:[%s1 + $0x350] sm:$0xff]
      %v460 = vld [vmem:[%s1 + $0x358] sm:$0xff]
      %v461 = vld [vmem:[%s1 + $0x360] sm:$0xff]
      %v462 = vld [vmem:[%s1 + $0x368] sm:$0xff]
      %v463 = vld [vmem:[%s1 + $0x370] sm:$0xff]
      %v464 = vld [vmem:[%s1 + $0x378] sm:$0xff]
      %v465 = vld [vmem:[%s1 + $0x380] sm:$0xff]
      %v466 = vld [vmem:[%s1 + $0x388] sm:$0xff]
      %v467 = vld [vmem:[%s1 + $0x390] sm:$0xff]
      %v468 = vld [vmem:[%s1 + $0x398] sm:$0xff]
      %v469 = vld [vmem:[%s1 + $0x3a0] sm:$0xff]
      %v470 = vld [vmem:[%s1 + $0x3a8] sm:$0xff]
      %v471 = vld [vmem:[%s1 + $0x3b0] sm:$0xff]
      %v472 = vld [vmem:[%s1 + $0x3b8] sm:$0xff]
      %v473 = vld [vmem:[%s1 + $0x3c0] sm:$0xff]
      %v474 = vld [vmem:[%s1 + $0x3c8] sm:$0xff]
      %v475 = vld [vmem:[%s1 + $0x3d0] sm:$0xff]
      %v476 = vld [vmem:[%s1 + $0x3d8] sm:$0xff]
      %v477 = vld [vmem:[%s1 + $0x3e0] sm:$0xff]
      %v478 = vld [vmem:[%s1 + $0x3e8] sm:$0xff]
      %v479 = vld [vmem:[%s1 + $0x3f0] sm:$0xff]
      %v480 = vld [vmem:[%s1 + $0x3f8] sm:$0xff]
      %v481 = vld [vmem:[#allocation2] sm:$0xf0]
      %v482 = vld [vmem:[#allocation2 + $0x8] sm:$0xf0]
      %v483 = vld [vmem:[#allocation2 + $0x10] sm:$0xf0]
      %v484 = vld [vmem:[#allocation2 + $0x18] sm:$0xf0]
      %v485 = vld [vmem:[#allocation2 + $0x20] sm:$0xf]
      %v486 = vld [vmem:[#allocation2 + $0x28] sm:$0xf]
      %v487 = vld [vmem:[#allocation2 + $0x30] sm:$0xf]
      %v488 = vld [vmem:[#allocation2 + $0x38] sm:$0xf]
      %v489 = vpack.c.bf16 %v485, %v481
      %v490 = vpack.c.bf16 %v486, %v482
      %v491 = vpack.c.bf16 %v487, %v483
      %v492 = vpack.c.bf16 %v488, %v484
      %s493 = scalar_lea.vmem %s1, 1024
      %v494 = vld [vmem:[%s493] sm:$0xff]
      %v495 = vld [vmem:[%s493 + $0x8] sm:$0xff]
      %v496 = vld [vmem:[%s493 + $0x10] sm:$0xff]
      %v497 = vld [vmem:[%s493 + $0x18] sm:$0xff]
      %v498 = vld [vmem:[%s493 + $0x20] sm:$0xff]
      %v499 = vld [vmem:[%s493 + $0x28] sm:$0xff]
      %v500 = vld [vmem:[%s493 + $0x30] sm:$0xff]
      %v501 = vld [vmem:[%s493 + $0x38] sm:$0xff]
      %v502 = vld [vmem:[%s493 + $0x40] sm:$0xff]
      %v503 = vld [vmem:[%s493 + $0x48] sm:$0xff]
      %v504 = vld [vmem:[%s493 + $0x50] sm:$0xff]
      %v505 = vld [vmem:[%s493 + $0x58] sm:$0xff]
      %v506 = vld [vmem:[%s493 + $0x60] sm:$0xff]
      %v507 = vld [vmem:[%s493 + $0x68] sm:$0xff]
      %v508 = vld [vmem:[%s493 + $0x70] sm:$0xff]
      %v509 = vld [vmem:[%s493 + $0x78] sm:$0xff]
      %v510 = vld [vmem:[%s493 + $0x80] sm:$0xff]
      %v511 = vld [vmem:[%s493 + $0x88] sm:$0xff]
      %v512 = vld [vmem:[%s493 + $0x90] sm:$0xff]
      %v513 = vld [vmem:[%s493 + $0x98] sm:$0xff]
      %v514 = vld [vmem:[%s493 + $0xa0] sm:$0xff]
      %v515 = vld [vmem:[%s493 + $0xa8] sm:$0xff]
      %v516 = vld [vmem:[%s493 + $0xb0] sm:$0xff]
      %v517 = vld [vmem:[%s493 + $0xb8] sm:$0xff]
      %v518 = vld [vmem:[%s493 + $0xc0] sm:$0xff]
      %v519 = vld [vmem:[%s493 + $0xc8] sm:$0xff]
      %v520 = vld [vmem:[%s493 + $0xd0] sm:$0xff]
      %v521 = vld [vmem:[%s493 + $0xd8] sm:$0xff]
      %v522 = vld [vmem:[%s493 + $0xe0] sm:$0xff]
      %v523 = vld [vmem:[%s493 + $0xe8] sm:$0xff]
      %v524 = vld [vmem:[%s493 + $0xf0] sm:$0xff]
      %v525 = vld [vmem:[%s493 + $0xf8] sm:$0xff]
      %v526 = vld [vmem:[%s493 + $0x100] sm:$0xff]
      %v527 = vld [vmem:[%s493 + $0x108] sm:$0xff]
      %v528 = vld [vmem:[%s493 + $0x110] sm:$0xff]
      %v529 = vld [vmem:[%s493 + $0x118] sm:$0xff]
      %v530 = vld [vmem:[%s493 + $0x120] sm:$0xff]
      %v531 = vld [vmem:[%s493 + $0x128] sm:$0xff]
      %v532 = vld [vmem:[%s493 + $0x130] sm:$0xff]
      %v533 = vld [vmem:[%s493 + $0x138] sm:$0xff]
      %v534 = vld [vmem:[%s493 + $0x140] sm:$0xff]
      %v535 = vld [vmem:[%s493 + $0x148] sm:$0xff]
      %v536 = vld [vmem:[%s493 + $0x150] sm:$0xff]
      %v537 = vld [vmem:[%s493 + $0x158] sm:$0xff]
      %v538 = vld [vmem:[%s493 + $0x160] sm:$0xff]
      %v539 = vld [vmem:[%s493 + $0x168] sm:$0xff]
      %v540 = vld [vmem:[%s493 + $0x170] sm:$0xff]
      %v541 = vld [vmem:[%s493 + $0x178] sm:$0xff]
      %v542 = vld [vmem:[%s493 + $0x180] sm:$0xff]
      %v543 = vld [vmem:[%s493 + $0x188] sm:$0xff]
      %v544 = vld [vmem:[%s493 + $0x190] sm:$0xff]
      %v545 = vld [vmem:[%s493 + $0x198] sm:$0xff]
      %v546 = vld [vmem:[%s493 + $0x1a0] sm:$0xff]
      %v547 = vld [vmem:[%s493 + $0x1a8] sm:$0xff]
      %v548 = vld [vmem:[%s493 + $0x1b0] sm:$0xff]
      %v549 = vld [vmem:[%s493 + $0x1b8] sm:$0xff]
      %v550 = vld [vmem:[%s493 + $0x1c0] sm:$0xff]
      %v551 = vld [vmem:[%s493 + $0x1c8] sm:$0xff]
      %v552 = vld [vmem:[%s493 + $0x1d0] sm:$0xff]
      %v553 = vld [vmem:[%s493 + $0x1d8] sm:$0xff]
      %v554 = vld [vmem:[%s493 + $0x1e0] sm:$0xff]
      %v555 = vld [vmem:[%s493 + $0x1e8] sm:$0xff]
      %v556 = vld [vmem:[%s493 + $0x1f0] sm:$0xff]
      %v557 = vld [vmem:[%s493 + $0x1f8] sm:$0xff]
      %v558 = vld [vmem:[%s493 + $0x200] sm:$0xff]
      %v559 = vld [vmem:[%s493 + $0x208] sm:$0xff]
      %v560 = vld [vmem:[%s493 + $0x210] sm:$0xff]
      %v561 = vld [vmem:[%s493 + $0x218] sm:$0xff]
      %v562 = vld [vmem:[%s493 + $0x220] sm:$0xff]
      %v563 = vld [vmem:[%s493 + $0x228] sm:$0xff]
      %v564 = vld [vmem:[%s493 + $0x230] sm:$0xff]
      %v565 = vld [vmem:[%s493 + $0x238] sm:$0xff]
      %v566 = vld [vmem:[%s493 + $0x240] sm:$0xff]
      %v567 = vld [vmem:[%s493 + $0x248] sm:$0xff]
      %v568 = vld [vmem:[%s493 + $0x250] sm:$0xff]
      %v569 = vld [vmem:[%s493 + $0x258] sm:$0xff]
      %v570 = vld [vmem:[%s493 + $0x260] sm:$0xff]
      %v571 = vld [vmem:[%s493 + $0x268] sm:$0xff]
      %v572 = vld [vmem:[%s493 + $0x270] sm:$0xff]
      %v573 = vld [vmem:[%s493 + $0x278] sm:$0xff]
      %v574 = vld [vmem:[%s493 + $0x280] sm:$0xff]
      %v575 = vld [vmem:[%s493 + $0x288] sm:$0xff]
      %v576 = vld [vmem:[%s493 + $0x290] sm:$0xff]
      %v577 = vld [vmem:[%s493 + $0x298] sm:$0xff]
      %v578 = vld [vmem:[%s493 + $0x2a0] sm:$0xff]
      %v579 = vld [vmem:[%s493 + $0x2a8] sm:$0xff]
      %v580 = vld [vmem:[%s493 + $0x2b0] sm:$0xff]
      %v581 = vld [vmem:[%s493 + $0x2b8] sm:$0xff]
      %v582 = vld [vmem:[%s493 + $0x2c0] sm:$0xff]
      %v583 = vld [vmem:[%s493 + $0x2c8] sm:$0xff]
      %v584 = vld [vmem:[%s493 + $0x2d0] sm:$0xff]
      %v585 = vld [vmem:[%s493 + $0x2d8] sm:$0xff]
      %v586 = vld [vmem:[%s493 + $0x2e0] sm:$0xff]
      %v587 = vld [vmem:[%s493 + $0x2e8] sm:$0xff]
      %v588 = vld [vmem:[%s493 + $0x2f0] sm:$0xff]
      %v589 = vld [vmem:[%s493 + $0x2f8] sm:$0xff]
      %v590 = vld [vmem:[%s493 + $0x300] sm:$0xff]
      %v591 = vld [vmem:[%s493 + $0x308] sm:$0xff]
      %v592 = vld [vmem:[%s493 + $0x310] sm:$0xff]
      %v593 = vld [vmem:[%s493 + $0x318] sm:$0xff]
      %v594 = vld [vmem:[%s493 + $0x320] sm:$0xff]
      %v595 = vld [vmem:[%s493 + $0x328] sm:$0xff]
      %v596 = vld [vmem:[%s493 + $0x330] sm:$0xff]
      %v597 = vld [vmem:[%s493 + $0x338] sm:$0xff]
      %v598 = vld [vmem:[%s493 + $0x340] sm:$0xff]
      %v599 = vld [vmem:[%s493 + $0x348] sm:$0xff]
      %v600 = vld [vmem:[%s493 + $0x350] sm:$0xff]
      %v601 = vld [vmem:[%s493 + $0x358] sm:$0xff]
      %v602 = vld [vmem:[%s493 + $0x360] sm:$0xff]
      %v603 = vld [vmem:[%s493 + $0x368] sm:$0xff]
      %v604 = vld [vmem:[%s493 + $0x370] sm:$0xff]
      %v605 = vld [vmem:[%s493 + $0x378] sm:$0xff]
      %v606 = vld [vmem:[%s493 + $0x380] sm:$0xff]
      %v607 = vld [vmem:[%s493 + $0x388] sm:$0xff]
      %v608 = vld [vmem:[%s493 + $0x390] sm:$0xff]
      %v609 = vld [vmem:[%s493 + $0x398] sm:$0xff]
      %v610 = vld [vmem:[%s493 + $0x3a0] sm:$0xff]
      %v611 = vld [vmem:[%s493 + $0x3a8] sm:$0xff]
      %v612 = vld [vmem:[%s493 + $0x3b0] sm:$0xff]
      %v613 = vld [vmem:[%s493 + $0x3b8] sm:$0xff]
      %v614 = vld [vmem:[%s493 + $0x3c0] sm:$0xff]
      %v615 = vld [vmem:[%s493 + $0x3c8] sm:$0xff]
      %v616 = vld [vmem:[%s493 + $0x3d0] sm:$0xff]
      %v617 = vld [vmem:[%s493 + $0x3d8] sm:$0xff]
      %v618 = vld [vmem:[%s493 + $0x3e0] sm:$0xff]
      %v619 = vld [vmem:[%s493 + $0x3e8] sm:$0xff]
      %v620 = vld [vmem:[%s493 + $0x3f0] sm:$0xff]
      %v621 = vld [vmem:[%s493 + $0x3f8] sm:$0xff]
      %v626 = vrot.slane %v489, 2
      %v627 = vrot.slane %v490, 2
      %v628 = vrot.slane %v491, 2
      %v629 = vrot.slane %v492, 2
      %v762 = vunpack.c.l.b16 %v494
      %v763 = vunpack.c.h.b16 %v494
      %v764 = vunpack.c.l.b16 %v495
      %v765 = vunpack.c.h.b16 %v495
      %v766 = vunpack.c.l.b16 %v496
      %v767 = vunpack.c.h.b16 %v496
      %v768 = vunpack.c.l.b16 %v497
      %v769 = vunpack.c.h.b16 %v497
      %v770 = vunpack.c.l.b16 %v498
      %v771 = vunpack.c.h.b16 %v498
      %v772 = vunpack.c.l.b16 %v499
      %v773 = vunpack.c.h.b16 %v499
      %v774 = vunpack.c.l.b16 %v500
      %v775 = vunpack.c.h.b16 %v500
      %v776 = vunpack.c.l.b16 %v501
      %v777 = vunpack.c.h.b16 %v501
      %v778 = vunpack.c.l.b16 %v502
      %v779 = vunpack.c.h.b16 %v502
      %v780 = vunpack.c.l.b16 %v503
      %v781 = vunpack.c.h.b16 %v503
      %v782 = vunpack.c.l.b16 %v504
      %v783 = vunpack.c.h.b16 %v504
      %v784 = vunpack.c.l.b16 %v505
      %v785 = vunpack.c.h.b16 %v505
      %v786 = vunpack.c.l.b16 %v506
      %v787 = vunpack.c.h.b16 %v506
      %v788 = vunpack.c.l.b16 %v507
      %v789 = vunpack.c.h.b16 %v507
      %v790 = vunpack.c.l.b16 %v508
      %v791 = vunpack.c.h.b16 %v508
      %v792 = vunpack.c.l.b16 %v509
      %v793 = vunpack.c.h.b16 %v509
      %v794 = vunpack.c.l.b16 %v510
      %v795 = vunpack.c.h.b16 %v510
      %v796 = vunpack.c.l.b16 %v511
      %v797 = vunpack.c.h.b16 %v511
      %v798 = vunpack.c.l.b16 %v512
      %v799 = vunpack.c.h.b16 %v512
      %v800 = vunpack.c.l.b16 %v513
      %v801 = vunpack.c.h.b16 %v513
      %v802 = vunpack.c.l.b16 %v514
      %v803 = vunpack.c.h.b16 %v514
      %v804 = vunpack.c.l.b16 %v515
      %v805 = vunpack.c.h.b16 %v515
      %v806 = vunpack.c.l.b16 %v516
      %v807 = vunpack.c.h.b16 %v516
      %v808 = vunpack.c.l.b16 %v517
      %v809 = vunpack.c.h.b16 %v517
      %v810 = vunpack.c.l.b16 %v518
      %v811 = vunpack.c.h.b16 %v518
      %v812 = vunpack.c.l.b16 %v519
      %v813 = vunpack.c.h.b16 %v519
      %v814 = vunpack.c.l.b16 %v520
      %v815 = vunpack.c.h.b16 %v520
      %v816 = vunpack.c.l.b16 %v521
      %v817 = vunpack.c.h.b16 %v521
      %v818 = vunpack.c.l.b16 %v522
      %v819 = vunpack.c.h.b16 %v522
      %v820 = vunpack.c.l.b16 %v523
      %v821 = vunpack.c.h.b16 %v523
      %v822 = vunpack.c.l.b16 %v524
      %v823 = vunpack.c.h.b16 %v524
      %v824 = vunpack.c.l.b16 %v525
      %v825 = vunpack.c.h.b16 %v525
      %v826 = vunpack.c.l.b16 %v526
      %v827 = vunpack.c.h.b16 %v526
      %v828 = vunpack.c.l.b16 %v527
      %v829 = vunpack.c.h.b16 %v527
      %v830 = vunpack.c.l.b16 %v528
      %v831 = vunpack.c.h.b16 %v528
      %v832 = vunpack.c.l.b16 %v529
      %v833 = vunpack.c.h.b16 %v529
      %v834 = vunpack.c.l.b16 %v530
      %v835 = vunpack.c.h.b16 %v530
      %v836 = vunpack.c.l.b16 %v531
      %v837 = vunpack.c.h.b16 %v531
      %v838 = vunpack.c.l.b16 %v532
      %v839 = vunpack.c.h.b16 %v532
      %v840 = vunpack.c.l.b16 %v533
      %v841 = vunpack.c.h.b16 %v533
      %v842 = vunpack.c.l.b16 %v534
      %v843 = vunpack.c.h.b16 %v534
      %v844 = vunpack.c.l.b16 %v535
      %v845 = vunpack.c.h.b16 %v535
      %v846 = vunpack.c.l.b16 %v536
      %v847 = vunpack.c.h.b16 %v536
      %v848 = vunpack.c.l.b16 %v537
      %v849 = vunpack.c.h.b16 %v537
      %v850 = vunpack.c.l.b16 %v538
      %v851 = vunpack.c.h.b16 %v538
      %v852 = vunpack.c.l.b16 %v539
      %v853 = vunpack.c.h.b16 %v539
      %v854 = vunpack.c.l.b16 %v540
      %v855 = vunpack.c.h.b16 %v540
      %v856 = vunpack.c.l.b16 %v541
      %v857 = vunpack.c.h.b16 %v541
      %v858 = vunpack.c.l.b16 %v542
      %v859 = vunpack.c.h.b16 %v542
      %v860 = vunpack.c.l.b16 %v543
      %v861 = vunpack.c.h.b16 %v543
      %v862 = vunpack.c.l.b16 %v544
      %v863 = vunpack.c.h.b16 %v544
      %v864 = vunpack.c.l.b16 %v545
      %v865 = vunpack.c.h.b16 %v545
      %v866 = vunpack.c.l.b16 %v546
      %v867 = vunpack.c.h.b16 %v546
      %v868 = vunpack.c.l.b16 %v547
      %v869 = vunpack.c.h.b16 %v547
      %v870 = vunpack.c.l.b16 %v548
      %v871 = vunpack.c.h.b16 %v548
      %v872 = vunpack.c.l.b16 %v549
      %v873 = vunpack.c.h.b16 %v549
      %v874 = vunpack.c.l.b16 %v550
      %v875 = vunpack.c.h.b16 %v550
      %v876 = vunpack.c.l.b16 %v551
      %v877 = vunpack.c.h.b16 %v551
      %v878 = vunpack.c.l.b16 %v552
      %v879 = vunpack.c.h.b16 %v552
      %v880 = vunpack.c.l.b16 %v553
      %v881 = vunpack.c.h.b16 %v553
      %v882 = vunpack.c.l.b16 %v554
      %v883 = vunpack.c.h.b16 %v554
      %v884 = vunpack.c.l.b16 %v555
      %v885 = vunpack.c.h.b16 %v555
      %v886 = vunpack.c.l.b16 %v556
      %v887 = vunpack.c.h.b16 %v556
      %v888 = vunpack.c.l.b16 %v557
      %v889 = vunpack.c.h.b16 %v557
      %v890 = vunpack.c.l.b16 %v558
      %v891 = vunpack.c.h.b16 %v558
      %v892 = vunpack.c.l.b16 %v559
      %v893 = vunpack.c.h.b16 %v559
      %v894 = vunpack.c.l.b16 %v560
      %v895 = vunpack.c.h.b16 %v560
      %v896 = vunpack.c.l.b16 %v561
      %v897 = vunpack.c.h.b16 %v561
      %v898 = vunpack.c.l.b16 %v562
      %v899 = vunpack.c.h.b16 %v562
      %v900 = vunpack.c.l.b16 %v563
      %v901 = vunpack.c.h.b16 %v563
      %v902 = vunpack.c.l.b16 %v564
      %v903 = vunpack.c.h.b16 %v564
      %v904 = vunpack.c.l.b16 %v565
      %v905 = vunpack.c.h.b16 %v565
      %v906 = vunpack.c.l.b16 %v566
      %v907 = vunpack.c.h.b16 %v566
      %v908 = vunpack.c.l.b16 %v567
      %v909 = vunpack.c.h.b16 %v567
      %v910 = vunpack.c.l.b16 %v568
      %v911 = vunpack.c.h.b16 %v568
      %v912 = vunpack.c.l.b16 %v569
      %v913 = vunpack.c.h.b16 %v569
      %v914 = vunpack.c.l.b16 %v570
      %v915 = vunpack.c.h.b16 %v570
      %v916 = vunpack.c.l.b16 %v571
      %v917 = vunpack.c.h.b16 %v571
      %v918 = vunpack.c.l.b16 %v572
      %v919 = vunpack.c.h.b16 %v572
      %v920 = vunpack.c.l.b16 %v573
      %v921 = vunpack.c.h.b16 %v573
      %v922 = vunpack.c.l.b16 %v574
      %v923 = vunpack.c.h.b16 %v574
      %v924 = vunpack.c.l.b16 %v575
      %v925 = vunpack.c.h.b16 %v575
      %v926 = vunpack.c.l.b16 %v576
      %v927 = vunpack.c.h.b16 %v576
      %v928 = vunpack.c.l.b16 %v577
      %v929 = vunpack.c.h.b16 %v577
      %v930 = vunpack.c.l.b16 %v578
      %v931 = vunpack.c.h.b16 %v578
      %v932 = vunpack.c.l.b16 %v579
      %v933 = vunpack.c.h.b16 %v579
      %v934 = vunpack.c.l.b16 %v580
      %v935 = vunpack.c.h.b16 %v580
      %v936 = vunpack.c.l.b16 %v581
      %v937 = vunpack.c.h.b16 %v581
      %v938 = vunpack.c.l.b16 %v582
      %v939 = vunpack.c.h.b16 %v582
      %v940 = vunpack.c.l.b16 %v583
      %v941 = vunpack.c.h.b16 %v583
      %v942 = vunpack.c.l.b16 %v584
      %v943 = vunpack.c.h.b16 %v584
      %v944 = vunpack.c.l.b16 %v585
      %v945 = vunpack.c.h.b16 %v585
      %v946 = vunpack.c.l.b16 %v586
      %v947 = vunpack.c.h.b16 %v586
      %v948 = vunpack.c.l.b16 %v587
      %v949 = vunpack.c.h.b16 %v587
      %v950 = vunpack.c.l.b16 %v588
      %v951 = vunpack.c.h.b16 %v588
      %v952 = vunpack.c.l.b16 %v589
      %v953 = vunpack.c.h.b16 %v589
      %v954 = vunpack.c.l.b16 %v590
      %v955 = vunpack.c.h.b16 %v590
      %v956 = vunpack.c.l.b16 %v591
      %v957 = vunpack.c.h.b16 %v591
      %v958 = vunpack.c.l.b16 %v592
      %v959 = vunpack.c.h.b16 %v592
      %v960 = vunpack.c.l.b16 %v593
      %v961 = vunpack.c.h.b16 %v593
      %v962 = vunpack.c.l.b16 %v594
      %v963 = vunpack.c.h.b16 %v594
      %v964 = vunpack.c.l.b16 %v595
      %v965 = vunpack.c.h.b16 %v595
      %v966 = vunpack.c.l.b16 %v596
      %v967 = vunpack.c.h.b16 %v596
      %v968 = vunpack.c.l.b16 %v597
      %v969 = vunpack.c.h.b16 %v597
      %v970 = vunpack.c.l.b16 %v598
      %v971 = vunpack.c.h.b16 %v598
      %v972 = vunpack.c.l.b16 %v599
      %v973 = vunpack.c.h.b16 %v599
      %v974 = vunpack.c.l.b16 %v600
      %v975 = vunpack.c.h.b16 %v600
      %v976 = vunpack.c.l.b16 %v601
      %v977 = vunpack.c.h.b16 %v601
      %v978 = vunpack.c.l.b16 %v602
      %v979 = vunpack.c.h.b16 %v602
      %v980 = vunpack.c.l.b16 %v603
      %v981 = vunpack.c.h.b16 %v603
      %v982 = vunpack.c.l.b16 %v604
      %v983 = vunpack.c.h.b16 %v604
      %v984 = vunpack.c.l.b16 %v605
      %v985 = vunpack.c.h.b16 %v605
      %v986 = vunpack.c.l.b16 %v606
      %v987 = vunpack.c.h.b16 %v606
      %v988 = vunpack.c.l.b16 %v607
      %v989 = vunpack.c.h.b16 %v607
      %v990 = vunpack.c.l.b16 %v608
      %v991 = vunpack.c.h.b16 %v608
      %v992 = vunpack.c.l.b16 %v609
      %v993 = vunpack.c.h.b16 %v609
      %v994 = vunpack.c.l.b16 %v610
      %v995 = vunpack.c.h.b16 %v610
      %v996 = vunpack.c.l.b16 %v611
      %v997 = vunpack.c.h.b16 %v611
      %v998 = vunpack.c.l.b16 %v612
      %v999 = vunpack.c.h.b16 %v612
      %v1000 = vunpack.c.l.b16 %v613
      %v1001 = vunpack.c.h.b16 %v613
      %v1002 = vunpack.c.l.b16 %v614
      %v1003 = vunpack.c.h.b16 %v614
      %v1004 = vunpack.c.l.b16 %v615
      %v1005 = vunpack.c.h.b16 %v615
      %v1006 = vunpack.c.l.b16 %v616
      %v1007 = vunpack.c.h.b16 %v616
      %v1008 = vunpack.c.l.b16 %v617
      %v1009 = vunpack.c.h.b16 %v617
      %v1010 = vunpack.c.l.b16 %v618
      %v1011 = vunpack.c.h.b16 %v618
      %v1012 = vunpack.c.l.b16 %v619
      %v1013 = vunpack.c.h.b16 %v619
      %v1014 = vunpack.c.l.b16 %v620
      %v1015 = vunpack.c.h.b16 %v620
      %v1016 = vunpack.c.l.b16 %v621
      %v1017 = vunpack.c.h.b16 %v621
      %v1018 = vpack.c.b16 %v766, %v762
      %v1019 = vpack.c.b16 %v767, %v763
      %v1020 = vpack.c.b16 %v768, %v764
      %v1021 = vpack.c.b16 %v769, %v765
      %v1022 = vpack.c.b16 %v774, %v770
      %v1023 = vpack.c.b16 %v775, %v771
      %v1024 = vpack.c.b16 %v776, %v772
      %v1025 = vpack.c.b16 %v777, %v773
      %v1026 = vpack.c.b16 %v782, %v778
      %v1027 = vpack.c.b16 %v783, %v779
      %v1028 = vpack.c.b16 %v784, %v780
      %v1029 = vpack.c.b16 %v785, %v781
      %v1030 = vpack.c.b16 %v790, %v786
      %v1031 = vpack.c.b16 %v791, %v787
      %v1032 = vpack.c.b16 %v792, %v788
      %v1033 = vpack.c.b16 %v793, %v789
      %v1034 = vpack.c.b16 %v798, %v794
      %v1035 = vpack.c.b16 %v799, %v795
      %v1036 = vpack.c.b16 %v800, %v796
      %v1037 = vpack.c.b16 %v801, %v797
      %v1038 = vpack.c.b16 %v806, %v802
      %v1039 = vpack.c.b16 %v807, %v803
      %v1040 = vpack.c.b16 %v808, %v804
      %v1041 = vpack.c.b16 %v809, %v805
      %v1042 = vpack.c.b16 %v814, %v810
      %v1043 = vpack.c.b16 %v815, %v811
      %v1044 = vpack.c.b16 %v816, %v812
      %v1045 = vpack.c.b16 %v817, %v813
      %v1046 = vpack.c.b16 %v822, %v818
      %v1047 = vpack.c.b16 %v823, %v819
      %v1048 = vpack.c.b16 %v824, %v820
      %v1049 = vpack.c.b16 %v825, %v821
      %v1050 = vpack.c.b16 %v830, %v826
      %v1051 = vpack.c.b16 %v831, %v827
      %v1052 = vpack.c.b16 %v832, %v828
      %v1053 = vpack.c.b16 %v833, %v829
      %v1054 = vpack.c.b16 %v838, %v834
      %v1055 = vpack.c.b16 %v839, %v835
      %v1056 = vpack.c.b16 %v840, %v836
      %v1057 = vpack.c.b16 %v841, %v837
      %v1058 = vpack.c.b16 %v846, %v842
      %v1059 = vpack.c.b16 %v847, %v843
      %v1060 = vpack.c.b16 %v848, %v844
      %v1061 = vpack.c.b16 %v849, %v845
      %v1062 = vpack.c.b16 %v854, %v850
      %v1063 = vpack.c.b16 %v855, %v851
      %v1064 = vpack.c.b16 %v856, %v852
      %v1065 = vpack.c.b16 %v857, %v853
      %v1066 = vpack.c.b16 %v862, %v858
      %v1067 = vpack.c.b16 %v863, %v859
      %v1068 = vpack.c.b16 %v864, %v860
      %v1069 = vpack.c.b16 %v865, %v861
      %v1070 = vpack.c.b16 %v870, %v866
      %v1071 = vpack.c.b16 %v871, %v867
      %v1072 = vpack.c.b16 %v872, %v868
      %v1073 = vpack.c.b16 %v873, %v869
      %v1074 = vpack.c.b16 %v878, %v874
      %v1075 = vpack.c.b16 %v879, %v875
      %v1076 = vpack.c.b16 %v880, %v876
      %v1077 = vpack.c.b16 %v881, %v877
      %v1078 = vpack.c.b16 %v886, %v882
      %v1079 = vpack.c.b16 %v887, %v883
      %v1080 = vpack.c.b16 %v888, %v884
      %v1081 = vpack.c.b16 %v889, %v885
      %v1082 = vpack.c.b16 %v894, %v890
      %v1083 = vpack.c.b16 %v895, %v891
      %v1084 = vpack.c.b16 %v896, %v892
      %v1085 = vpack.c.b16 %v897, %v893
      %v1086 = vpack.c.b16 %v902, %v898
      %v1087 = vpack.c.b16 %v903, %v899
      %v1088 = vpack.c.b16 %v904, %v900
      %v1089 = vpack.c.b16 %v905, %v901
      %v1090 = vpack.c.b16 %v910, %v906
      %v1091 = vpack.c.b16 %v911, %v907
      %v1092 = vpack.c.b16 %v912, %v908
      %v1093 = vpack.c.b16 %v913, %v909
      %v1094 = vpack.c.b16 %v918, %v914
      %v1095 = vpack.c.b16 %v919, %v915
      %v1096 = vpack.c.b16 %v920, %v916
      %v1097 = vpack.c.b16 %v921, %v917
      %v1098 = vpack.c.b16 %v926, %v922
      %v1099 = vpack.c.b16 %v927, %v923
      %v1100 = vpack.c.b16 %v928, %v924
      %v1101 = vpack.c.b16 %v929, %v925
      %v1102 = vpack.c.b16 %v934, %v930
      %v1103 = vpack.c.b16 %v935, %v931
      %v1104 = vpack.c.b16 %v936, %v932
      %v1105 = vpack.c.b16 %v937, %v933
      %v1106 = vpack.c.b16 %v942, %v938
      %v1107 = vpack.c.b16 %v943, %v939
      %v1108 = vpack.c.b16 %v944, %v940
      %v1109 = vpack.c.b16 %v945, %v941
      %v1110 = vpack.c.b16 %v950, %v946
      %v1111 = vpack.c.b16 %v951, %v947
      %v1112 = vpack.c.b16 %v952, %v948
      %v1113 = vpack.c.b16 %v953, %v949
      %v1114 = vpack.c.b16 %v958, %v954
      %v1115 = vpack.c.b16 %v959, %v955
      %v1116 = vpack.c.b16 %v960, %v956
      %v1117 = vpack.c.b16 %v961, %v957
      %v1118 = vpack.c.b16 %v966, %v962
      %v1119 = vpack.c.b16 %v967, %v963
      %v1120 = vpack.c.b16 %v968, %v964
      %v1121 = vpack.c.b16 %v969, %v965
      %v1122 = vpack.c.b16 %v974, %v970
      %v1123 = vpack.c.b16 %v975, %v971
      %v1124 = vpack.c.b16 %v976, %v972
      %v1125 = vpack.c.b16 %v977, %v973
      %v1126 = vpack.c.b16 %v982, %v978
      %v1127 = vpack.c.b16 %v983, %v979
      %v1128 = vpack.c.b16 %v984, %v980
      %v1129 = vpack.c.b16 %v985, %v981
      %v1130 = vpack.c.b16 %v990, %v986
      %v1131 = vpack.c.b16 %v991, %v987
      %v1132 = vpack.c.b16 %v992, %v988
      %v1133 = vpack.c.b16 %v993, %v989
      %v1134 = vpack.c.b16 %v998, %v994
      %v1135 = vpack.c.b16 %v999, %v995
      %v1136 = vpack.c.b16 %v1000, %v996
      %v1137 = vpack.c.b16 %v1001, %v997
      %v1138 = vpack.c.b16 %v1006, %v1002
      %v1139 = vpack.c.b16 %v1007, %v1003
      %v1140 = vpack.c.b16 %v1008, %v1004
      %v1141 = vpack.c.b16 %v1009, %v1005
      %v1142 = vpack.c.b16 %v1014, %v1010
      %v1143 = vpack.c.b16 %v1015, %v1011
      %v1144 = vpack.c.b16 %v1016, %v1012
      %v1145 = vpack.c.b16 %v1017, %v1013
      %1274 = vmatpush.bf16.msra.mxu0 %v1046
      %1275 = vmatpush.bf16.msra.mxu0 %v1042
      %1276 = vmatpush.bf16.msra.mxu0 %v1038
      %1277 = vmatpush.bf16.msra.mxu0 %v1034
      %1278 = vmatpush.bf16.msra.mxu0 %v1030
      %1279 = vmatpush.bf16.msra.mxu0 %v1026
      %1280 = vmatpush.bf16.msra.mxu0 %v1022
      %1281 = vmatpush.bf16.msra.mxu0 %v1018
      %1282 = vmatmul.bf16.gmra.mxu0 %v626
      %v1283 = vpop.f32.mrf.mxu0
      %v1284 = vadd.f32 0.0, %v1283
      %v1285 = vpop.f32.mrf.mxu0
      %1286 = vdwg.mxu0
      %1287 = vmatpush.bf16.msra.mxu0 %v1078
      %1288 = vmatpush.bf16.msra.mxu0 %v1074
      %1289 = vmatpush.bf16.msra.mxu0 %v1070
      %1290 = vmatpush.bf16.msra.mxu0 %v1066
      %1291 = vmatpush.bf16.msra.mxu0 %v1062
      %1292 = vmatpush.bf16.msra.mxu0 %v1058
      %1293 = vmatpush.bf16.msra.mxu0 %v1054
      %1294 = vmatpush.bf16.msra.mxu0 %v1050
      %1295 = vmatmul.bf16.gmra.mxu0 %v627
      %v1296 = vpop.f32.mrf.mxu0
      %v1297 = vadd.f32 %v1284, %v1296
      %v1298 = vpop.f32.mrf.mxu0
      %1299 = vdwg.mxu0
      %1300 = vmatpush.bf16.msra.mxu0 %v1110
      %1301 = vmatpush.bf16.msra.mxu0 %v1106
      %1302 = vmatpush.bf16.msra.mxu0 %v1102
      %1303 = vmatpush.bf16.msra.mxu0 %v1098
      %1304 = vmatpush.bf16.msra.mxu0 %v1094
      %1305 = vmatpush.bf16.msra.mxu0 %v1090
      %1306 = vmatpush.bf16.msra.mxu0 %v1086
      %1307 = vmatpush.bf16.msra.mxu0 %v1082
      %1308 = vmatmul.bf16.gmra.mxu0 %v628
      %v1309 = vpop.f32.mrf.mxu0
      %v1310 = vadd.f32 %v1297, %v1309
      %v1311 = vpop.f32.mrf.mxu0
      %1312 = vdwg.mxu0
      %1313 = vmatpush.bf16.msra.mxu0 %v1142
      %1314 = vmatpush.bf16.msra.mxu0 %v1138
      %1315 = vmatpush.bf16.msra.mxu0 %v1134
      %1316 = vmatpush.bf16.msra.mxu0 %v1130
      %1317 = vmatpush.bf16.msra.mxu0 %v1126
      %1318 = vmatpush.bf16.msra.mxu0 %v1122
      %1319 = vmatpush.bf16.msra.mxu0 %v1118
      %1320 = vmatpush.bf16.msra.mxu0 %v1114
      %1321 = vmatmul.bf16.gmra.mxu0 %v629
      %v1322 = vpop.f32.mrf.mxu0
      %v1323 = vadd.f32 %v1310, %v1322
      %v1324 = vpop.f32.mrf.mxu0
      %1325 = vdwg.mxu0
      %1326 = vmatpush.bf16.msra.mxu0 %v1047
      %1327 = vmatpush.bf16.msra.mxu0 %v1043
      %1328 = vmatpush.bf16.msra.mxu0 %v1039
      %1329 = vmatpush.bf16.msra.mxu0 %v1035
      %1330 = vmatpush.bf16.msra.mxu0 %v1031
      %1331 = vmatpush.bf16.msra.mxu0 %v1027
      %1332 = vmatpush.bf16.msra.mxu0 %v1023
      %1333 = vmatpush.bf16.msra.mxu0 %v1019
      %1334 = vmatmul.bf16.gmra.mxu0 %v626
      %v1335 = vpop.f32.mrf.mxu0
      %v1336 = vadd.f32 0.0, %v1335
      %v1337 = vpop.f32.mrf.mxu0
      %1338 = vdwg.mxu0
      %1339 = vmatpush.bf16.msra.mxu0 %v1079
      %1340 = vmatpush.bf16.msra.mxu0 %v1075
      %1341 = vmatpush.bf16.msra.mxu0 %v1071
      %1342 = vmatpush.bf16.msra.mxu0 %v1067
      %1343 = vmatpush.bf16.msra.mxu0 %v1063
      %1344 = vmatpush.bf16.msra.mxu0 %v1059
      %1345 = vmatpush.bf16.msra.mxu0 %v1055
      %1346 = vmatpush.bf16.msra.mxu0 %v1051
      %1347 = vmatmul.bf16.gmra.mxu0 %v627
      %v1348 = vpop.f32.mrf.mxu0
      %v1349 = vadd.f32 %v1336, %v1348
      %v1350 = vpop.f32.mrf.mxu0
      %1351 = vdwg.mxu0
      %1352 = vmatpush.bf16.msra.mxu0 %v1111
      %1353 = vmatpush.bf16.msra.mxu0 %v1107
      %1354 = vmatpush.bf16.msra.mxu0 %v1103
      %1355 = vmatpush.bf16.msra.mxu0 %v1099
      %1356 = vmatpush.bf16.msra.mxu0 %v1095
      %1357 = vmatpush.bf16.msra.mxu0 %v1091
      %1358 = vmatpush.bf16.msra.mxu0 %v1087
      %1359 = vmatpush.bf16.msra.mxu0 %v1083
      %1360 = vmatmul.bf16.gmra.mxu0 %v628
      %v1361 = vpop.f32.mrf.mxu0
      %v1362 = vadd.f32 %v1349, %v1361
      %v1363 = vpop.f32.mrf.mxu0
      %1364 = vdwg.mxu0
      %1365 = vmatpush.bf16.msra.mxu0 %v1143
      %1366 = vmatpush.bf16.msra.mxu0 %v1139
      %1367 = vmatpush.bf16.msra.mxu0 %v1135
      %1368 = vmatpush.bf16.msra.mxu0 %v1131
      %1369 = vmatpush.bf16.msra.mxu0 %v1127
      %1370 = vmatpush.bf16.msra.mxu0 %v1123
      %1371 = vmatpush.bf16.msra.mxu0 %v1119
      %1372 = vmatpush.bf16.msra.mxu0 %v1115
      %1373 = vmatmul.bf16.gmra.mxu0 %v629
      %v1374 = vpop.f32.mrf.mxu0
      %v1375 = vadd.f32 %v1362, %v1374
      %v1376 = vpop.f32.mrf.mxu0
      %1377 = vdwg.mxu0
      %1378 = vmatpush.bf16.msra.mxu0 %v1048
      %1379 = vmatpush.bf16.msra.mxu0 %v1044
      %1380 = vmatpush.bf16.msra.mxu0 %v1040
      %1381 = vmatpush.bf16.msra.mxu0 %v1036
      %1382 = vmatpush.bf16.msra.mxu0 %v1032
      %1383 = vmatpush.bf16.msra.mxu0 %v1028
      %1384 = vmatpush.bf16.msra.mxu0 %v1024
      %1385 = vmatpush.bf16.msra.mxu0 %v1020
      %1386 = vmatmul.bf16.gmra.mxu0 %v626
      %v1387 = vpop.f32.mrf.mxu0
      %v1388 = vadd.f32 0.0, %v1387
      %v1389 = vpop.f32.mrf.mxu0
      %1390 = vdwg.mxu0
      %1391 = vmatpush.bf16.msra.mxu0 %v1080
      %1392 = vmatpush.bf16.msra.mxu0 %v1076
      %1393 = vmatpush.bf16.msra.mxu0 %v1072
      %1394 = vmatpush.bf16.msra.mxu0 %v1068
      %1395 = vmatpush.bf16.msra.mxu0 %v1064
      %1396 = vmatpush.bf16.msra.mxu0 %v1060
      %1397 = vmatpush.bf16.msra.mxu0 %v1056
      %1398 = vmatpush.bf16.msra.mxu0 %v1052
      %1399 = vmatmul.bf16.gmra.mxu0 %v627
      %v1400 = vpop.f32.mrf.mxu0
      %v1401 = vadd.f32 %v1388, %v1400
      %v1402 = vpop.f32.mrf.mxu0
      %1403 = vdwg.mxu0
      %1404 = vmatpush.bf16.msra.mxu0 %v1112
      %1405 = vmatpush.bf16.msra.mxu0 %v1108
      %1406 = vmatpush.bf16.msra.mxu0 %v1104
      %1407 = vmatpush.bf16.msra.mxu0 %v1100
      %1408 = vmatpush.bf16.msra.mxu0 %v1096
      %1409 = vmatpush.bf16.msra.mxu0 %v1092
      %1410 = vmatpush.bf16.msra.mxu0 %v1088
      %1411 = vmatpush.bf16.msra.mxu0 %v1084
      %1412 = vmatmul.bf16.gmra.mxu0 %v628
      %v1413 = vpop.f32.mrf.mxu0
      %v1414 = vadd.f32 %v1401, %v1413
      %v1415 = vpop.f32.mrf.mxu0
      %1416 = vdwg.mxu0
      %1417 = vmatpush.bf16.msra.mxu0 %v1144
      %1418 = vmatpush.bf16.msra.mxu0 %v1140
      %1419 = vmatpush.bf16.msra.mxu0 %v1136
      %1420 = vmatpush.bf16.msra.mxu0 %v1132
      %1421 = vmatpush.bf16.msra.mxu0 %v1128
      %1422 = vmatpush.bf16.msra.mxu0 %v1124
      %1423 = vmatpush.bf16.msra.mxu0 %v1120
      %1424 = vmatpush.bf16.msra.mxu0 %v1116
      %1425 = vmatmul.bf16.gmra.mxu0 %v629
      %v1426 = vpop.f32.mrf.mxu0
      %v1427 = vadd.f32 %v1414, %v1426
      %v1428 = vpop.f32.mrf.mxu0
      %1429 = vdwg.mxu0
      %1430 = vmatpush.bf16.msra.mxu0 %v1049
      %1431 = vmatpush.bf16.msra.mxu0 %v1045
      %1432 = vmatpush.bf16.msra.mxu0 %v1041
      %1433 = vmatpush.bf16.msra.mxu0 %v1037
      %1434 = vmatpush.bf16.msra.mxu0 %v1033
      %1435 = vmatpush.bf16.msra.mxu0 %v1029
      %1436 = vmatpush.bf16.msra.mxu0 %v1025
      %1437 = vmatpush.bf16.msra.mxu0 %v1021
      %1438 = vmatmul.bf16.gmra.mxu0 %v626
      %v1439 = vpop.f32.mrf.mxu0
      %v1440 = vadd.f32 0.0, %v1439
      %v1441 = vpop.f32.mrf.mxu0
      %1442 = vdwg.mxu0
      %1443 = vmatpush.bf16.msra.mxu0 %v1081
      %1444 = vmatpush.bf16.msra.mxu0 %v1077
      %1445 = vmatpush.bf16.msra.mxu0 %v1073
      %1446 = vmatpush.bf16.msra.mxu0 %v1069
      %1447 = vmatpush.bf16.msra.mxu0 %v1065
      %1448 = vmatpush.bf16.msra.mxu0 %v1061
      %1449 = vmatpush.bf16.msra.mxu0 %v1057
      %1450 = vmatpush.bf16.msra.mxu0 %v1053
      %1451 = vmatmul.bf16.gmra.mxu0 %v627
      %v1452 = vpop.f32.mrf.mxu0
      %v1453 = vadd.f32 %v1440, %v1452
      %v1454 = vpop.f32.mrf.mxu0
      %1455 = vdwg.mxu0
      %1456 = vmatpush.bf16.msra.mxu0 %v1113
      %1457 = vmatpush.bf16.msra.mxu0 %v1109
      %1458 = vmatpush.bf16.msra.mxu0 %v1105
      %1459 = vmatpush.bf16.msra.mxu0 %v1101
      %1460 = vmatpush.bf16.msra.mxu0 %v1097
      %1461 = vmatpush.bf16.msra.mxu0 %v1093
      %1462 = vmatpush.bf16.msra.mxu0 %v1089
      %1463 = vmatpush.bf16.msra.mxu0 %v1085
      %1464 = vmatmul.bf16.gmra.mxu0 %v628
      %v1465 = vpop.f32.mrf.mxu0
      %v1466 = vadd.f32 %v1453, %v1465
      %v1467 = vpop.f32.mrf.mxu0
      %1468 = vdwg.mxu0
      %1469 = vmatpush.bf16.msra.mxu0 %v1145
      %1470 = vmatpush.bf16.msra.mxu0 %v1141
      %1471 = vmatpush.bf16.msra.mxu0 %v1137
      %1472 = vmatpush.bf16.msra.mxu0 %v1133
      %1473 = vmatpush.bf16.msra.mxu0 %v1129
      %1474 = vmatpush.bf16.msra.mxu0 %v1125
      %1475 = vmatpush.bf16.msra.mxu0 %v1121
      %1476 = vmatpush.bf16.msra.mxu0 %v1117
      %1477 = vmatmul.bf16.gmra.mxu0 %v629
      %v1478 = vpop.f32.mrf.mxu0
      %v1479 = vadd.f32 %v1466, %v1478
      %v1480 = vpop.f32.mrf.mxu0
      %1481 = vdwg.mxu0
      %v1610 = vunpack.c.l.b16 %v353
      %v1611 = vunpack.c.h.b16 %v353
      %v1612 = vunpack.c.l.b16 %v354
      %v1613 = vunpack.c.h.b16 %v354
      %v1614 = vunpack.c.l.b16 %v355
      %v1615 = vunpack.c.h.b16 %v355
      %v1616 = vunpack.c.l.b16 %v356
      %v1617 = vunpack.c.h.b16 %v356
      %v1618 = vunpack.c.l.b16 %v357
      %v1619 = vunpack.c.h.b16 %v357
      %v1620 = vunpack.c.l.b16 %v358
      %v1621 = vunpack.c.h.b16 %v358
      %v1622 = vunpack.c.l.b16 %v359
      %v1623 = vunpack.c.h.b16 %v359
      %v1624 = vunpack.c.l.b16 %v360
      %v1625 = vunpack.c.h.b16 %v360
      %v1626 = vunpack.c.l.b16 %v361
      %v1627 = vunpack.c.h.b16 %v361
      %v1628 = vunpack.c.l.b16 %v362
      %v1629 = vunpack.c.h.b16 %v362
      %v1630 = vunpack.c.l.b16 %v363
      %v1631 = vunpack.c.h.b16 %v363
      %v1632 = vunpack.c.l.b16 %v364
      %v1633 = vunpack.c.h.b16 %v364
      %v1634 = vunpack.c.l.b16 %v365
      %v1635 = vunpack.c.h.b16 %v365
      %v1636 = vunpack.c.l.b16 %v366
      %v1637 = vunpack.c.h.b16 %v366
      %v1638 = vunpack.c.l.b16 %v367
      %v1639 = vunpack.c.h.b16 %v367
      %v1640 = vunpack.c.l.b16 %v368
      %v1641 = vunpack.c.h.b16 %v368
      %v1642 = vunpack.c.l.b16 %v369
      %v1643 = vunpack.c.h.b16 %v369
      %v1644 = vunpack.c.l.b16 %v370
      %v1645 = vunpack.c.h.b16 %v370
      %v1646 = vunpack.c.l.b16 %v371
      %v1647 = vunpack.c.h.b16 %v371
      %v1648 = vunpack.c.l.b16 %v372
      %v1649 = vunpack.c.h.b16 %v372
      %v1650 = vunpack.c.l.b16 %v373
      %v1651 = vunpack.c.h.b16 %v373
      %v1652 = vunpack.c.l.b16 %v374
      %v1653 = vunpack.c.h.b16 %v374
      %v1654 = vunpack.c.l.b16 %v375
      %v1655 = vunpack.c.h.b16 %v375
      %v1656 = vunpack.c.l.b16 %v376
      %v1657 = vunpack.c.h.b16 %v376
      %v1658 = vunpack.c.l.b16 %v377
      %v1659 = vunpack.c.h.b16 %v377
      %v1660 = vunpack.c.l.b16 %v378
      %v1661 = vunpack.c.h.b16 %v378
      %v1662 = vunpack.c.l.b16 %v379
      %v1663 = vunpack.c.h.b16 %v379
      %v1664 = vunpack.c.l.b16 %v380
      %v1665 = vunpack.c.h.b16 %v380
      %v1666 = vunpack.c.l.b16 %v381
      %v1667 = vunpack.c.h.b16 %v381
      %v1668 = vunpack.c.l.b16 %v382
      %v1669 = vunpack.c.h.b16 %v382
      %v1670 = vunpack.c.l.b16 %v383
      %v1671 = vunpack.c.h.b16 %v383
      %v1672 = vunpack.c.l.b16 %v384
      %v1673 = vunpack.c.h.b16 %v384
      %v1674 = vunpack.c.l.b16 %v385
      %v1675 = vunpack.c.h.b16 %v385
      %v1676 = vunpack.c.l.b16 %v386
      %v1677 = vunpack.c.h.b16 %v386
      %v1678 = vunpack.c.l.b16 %v387
      %v1679 = vunpack.c.h.b16 %v387
      %v1680 = vunpack.c.l.b16 %v388
      %v1681 = vunpack.c.h.b16 %v388
      %v1682 = vunpack.c.l.b16 %v389
      %v1683 = vunpack.c.h.b16 %v389
      %v1684 = vunpack.c.l.b16 %v390
      %v1685 = vunpack.c.h.b16 %v390
      %v1686 = vunpack.c.l.b16 %v391
      %v1687 = vunpack.c.h.b16 %v391
      %v1688 = vunpack.c.l.b16 %v392
      %v1689 = vunpack.c.h.b16 %v392
      %v1690 = vunpack.c.l.b16 %v393
      %v1691 = vunpack.c.h.b16 %v393
      %v1692 = vunpack.c.l.b16 %v394
      %v1693 = vunpack.c.h.b16 %v394
      %v1694 = vunpack.c.l.b16 %v395
      %v1695 = vunpack.c.h.b16 %v395
      %v1696 = vunpack.c.l.b16 %v396
      %v1697 = vunpack.c.h.b16 %v396
      %v1698 = vunpack.c.l.b16 %v397
      %v1699 = vunpack.c.h.b16 %v397
      %v1700 = vunpack.c.l.b16 %v398
      %v1701 = vunpack.c.h.b16 %v398
      %v1702 = vunpack.c.l.b16 %v399
      %v1703 = vunpack.c.h.b16 %v399
      %v1704 = vunpack.c.l.b16 %v400
      %v1705 = vunpack.c.h.b16 %v400
      %v1706 = vunpack.c.l.b16 %v401
      %v1707 = vunpack.c.h.b16 %v401
      %v1708 = vunpack.c.l.b16 %v402
      %v1709 = vunpack.c.h.b16 %v402
      %v1710 = vunpack.c.l.b16 %v403
      %v1711 = vunpack.c.h.b16 %v403
      %v1712 = vunpack.c.l.b16 %v404
      %v1713 = vunpack.c.h.b16 %v404
      %v1714 = vunpack.c.l.b16 %v405
      %v1715 = vunpack.c.h.b16 %v405
      %v1716 = vunpack.c.l.b16 %v406
      %v1717 = vunpack.c.h.b16 %v406
      %v1718 = vunpack.c.l.b16 %v407
      %v1719 = vunpack.c.h.b16 %v407
      %v1720 = vunpack.c.l.b16 %v408
      %v1721 = vunpack.c.h.b16 %v408
      %v1722 = vunpack.c.l.b16 %v409
      %v1723 = vunpack.c.h.b16 %v409
      %v1724 = vunpack.c.l.b16 %v410
      %v1725 = vunpack.c.h.b16 %v410
      %v1726 = vunpack.c.l.b16 %v411
      %v1727 = vunpack.c.h.b16 %v411
      %v1728 = vunpack.c.l.b16 %v412
      %v1729 = vunpack.c.h.b16 %v412
      %v1730 = vunpack.c.l.b16 %v413
      %v1731 = vunpack.c.h.b16 %v413
      %v1732 = vunpack.c.l.b16 %v414
      %v1733 = vunpack.c.h.b16 %v414
      %v1734 = vunpack.c.l.b16 %v415
      %v1735 = vunpack.c.h.b16 %v415
      %v1736 = vunpack.c.l.b16 %v416
      %v1737 = vunpack.c.h.b16 %v416
      %v1738 = vunpack.c.l.b16 %v417
      %v1739 = vunpack.c.h.b16 %v417
      %v1740 = vunpack.c.l.b16 %v418
      %v1741 = vunpack.c.h.b16 %v418
      %v1742 = vunpack.c.l.b16 %v419
      %v1743 = vunpack.c.h.b16 %v419
      %v1744 = vunpack.c.l.b16 %v420
      %v1745 = vunpack.c.h.b16 %v420
      %v1746 = vunpack.c.l.b16 %v421
      %v1747 = vunpack.c.h.b16 %v421
      %v1748 = vunpack.c.l.b16 %v422
      %v1749 = vunpack.c.h.b16 %v422
      %v1750 = vunpack.c.l.b16 %v423
      %v1751 = vunpack.c.h.b16 %v423
      %v1752 = vunpack.c.l.b16 %v424
      %v1753 = vunpack.c.h.b16 %v424
      %v1754 = vunpack.c.l.b16 %v425
      %v1755 = vunpack.c.h.b16 %v425
      %v1756 = vunpack.c.l.b16 %v426
      %v1757 = vunpack.c.h.b16 %v426
      %v1758 = vunpack.c.l.b16 %v427
      %v1759 = vunpack.c.h.b16 %v427
      %v1760 = vunpack.c.l.b16 %v428
      %v1761 = vunpack.c.h.b16 %v428
      %v1762 = vunpack.c.l.b16 %v429
      %v1763 = vunpack.c.h.b16 %v429
      %v1764 = vunpack.c.l.b16 %v430
      %v1765 = vunpack.c.h.b16 %v430
      %v1766 = vunpack.c.l.b16 %v431
      %v1767 = vunpack.c.h.b16 %v431
      %v1768 = vunpack.c.l.b16 %v432
      %v1769 = vunpack.c.h.b16 %v432
      %v1770 = vunpack.c.l.b16 %v433
      %v1771 = vunpack.c.h.b16 %v433
      %v1772 = vunpack.c.l.b16 %v434
      %v1773 = vunpack.c.h.b16 %v434
      %v1774 = vunpack.c.l.b16 %v435
      %v1775 = vunpack.c.h.b16 %v435
      %v1776 = vunpack.c.l.b16 %v436
      %v1777 = vunpack.c.h.b16 %v436
      %v1778 = vunpack.c.l.b16 %v437
      %v1779 = vunpack.c.h.b16 %v437
      %v1780 = vunpack.c.l.b16 %v438
      %v1781 = vunpack.c.h.b16 %v438
      %v1782 = vunpack.c.l.b16 %v439
      %v1783 = vunpack.c.h.b16 %v439
      %v1784 = vunpack.c.l.b16 %v440
      %v1785 = vunpack.c.h.b16 %v440
      %v1786 = vunpack.c.l.b16 %v441
      %v1787 = vunpack.c.h.b16 %v441
      %v1788 = vunpack.c.l.b16 %v442
      %v1789 = vunpack.c.h.b16 %v442
      %v1790 = vunpack.c.l.b16 %v443
      %v1791 = vunpack.c.h.b16 %v443
      %v1792 = vunpack.c.l.b16 %v444
      %v1793 = vunpack.c.h.b16 %v444
      %v1794 = vunpack.c.l.b16 %v445
      %v1795 = vunpack.c.h.b16 %v445
      %v1796 = vunpack.c.l.b16 %v446
      %v1797 = vunpack.c.h.b16 %v446
      %v1798 = vunpack.c.l.b16 %v447
      %v1799 = vunpack.c.h.b16 %v447
      %v1800 = vunpack.c.l.b16 %v448
      %v1801 = vunpack.c.h.b16 %v448
      %v1802 = vunpack.c.l.b16 %v449
      %v1803 = vunpack.c.h.b16 %v449
      %v1804 = vunpack.c.l.b16 %v450
      %v1805 = vunpack.c.h.b16 %v450
      %v1806 = vunpack.c.l.b16 %v451
      %v1807 = vunpack.c.h.b16 %v451
      %v1808 = vunpack.c.l.b16 %v452
      %v1809 = vunpack.c.h.b16 %v452
      %v1810 = vunpack.c.l.b16 %v453
      %v1811 = vunpack.c.h.b16 %v453
      %v1812 = vunpack.c.l.b16 %v454
      %v1813 = vunpack.c.h.b16 %v454
      %v1814 = vunpack.c.l.b16 %v455
      %v1815 = vunpack.c.h.b16 %v455
      %v1816 = vunpack.c.l.b16 %v456
      %v1817 = vunpack.c.h.b16 %v456
      %v1818 = vunpack.c.l.b16 %v457
      %v1819 = vunpack.c.h.b16 %v457
      %v1820 = vunpack.c.l.b16 %v458
      %v1821 = vunpack.c.h.b16 %v458
      %v1822 = vunpack.c.l.b16 %v459
      %v1823 = vunpack.c.h.b16 %v459
      %v1824 = vunpack.c.l.b16 %v460
      %v1825 = vunpack.c.h.b16 %v460
      %v1826 = vunpack.c.l.b16 %v461
      %v1827 = vunpack.c.h.b16 %v461
      %v1828 = vunpack.c.l.b16 %v462
      %v1829 = vunpack.c.h.b16 %v462
      %v1830 = vunpack.c.l.b16 %v463
      %v1831 = vunpack.c.h.b16 %v463
      %v1832 = vunpack.c.l.b16 %v464
      %v1833 = vunpack.c.h.b16 %v464
      %v1834 = vunpack.c.l.b16 %v465
      %v1835 = vunpack.c.h.b16 %v465
      %v1836 = vunpack.c.l.b16 %v466
      %v1837 = vunpack.c.h.b16 %v466
      %v1838 = vunpack.c.l.b16 %v467
      %v1839 = vunpack.c.h.b16 %v467
      %v1840 = vunpack.c.l.b16 %v468
      %v1841 = vunpack.c.h.b16 %v468
      %v1842 = vunpack.c.l.b16 %v469
      %v1843 = vunpack.c.h.b16 %v469
      %v1844 = vunpack.c.l.b16 %v470
      %v1845 = vunpack.c.h.b16 %v470
      %v1846 = vunpack.c.l.b16 %v471
      %v1847 = vunpack.c.h.b16 %v471
      %v1848 = vunpack.c.l.b16 %v472
      %v1849 = vunpack.c.h.b16 %v472
      %v1850 = vunpack.c.l.b16 %v473
      %v1851 = vunpack.c.h.b16 %v473
      %v1852 = vunpack.c.l.b16 %v474
      %v1853 = vunpack.c.h.b16 %v474
      %v1854 = vunpack.c.l.b16 %v475
      %v1855 = vunpack.c.h.b16 %v475
      %v1856 = vunpack.c.l.b16 %v476
      %v1857 = vunpack.c.h.b16 %v476
      %v1858 = vunpack.c.l.b16 %v477
      %v1859 = vunpack.c.h.b16 %v477
      %v1860 = vunpack.c.l.b16 %v478
      %v1861 = vunpack.c.h.b16 %v478
      %v1862 = vunpack.c.l.b16 %v479
      %v1863 = vunpack.c.h.b16 %v479
      %v1864 = vunpack.c.l.b16 %v480
      %v1865 = vunpack.c.h.b16 %v480
      %v1866 = vpack.c.b16 %v1614, %v1610
      %v1867 = vpack.c.b16 %v1615, %v1611
      %v1868 = vpack.c.b16 %v1616, %v1612
      %v1869 = vpack.c.b16 %v1617, %v1613
      %v1870 = vpack.c.b16 %v1622, %v1618
      %v1871 = vpack.c.b16 %v1623, %v1619
      %v1872 = vpack.c.b16 %v1624, %v1620
      %v1873 = vpack.c.b16 %v1625, %v1621
      %v1874 = vpack.c.b16 %v1630, %v1626
      %v1875 = vpack.c.b16 %v1631, %v1627
      %v1876 = vpack.c.b16 %v1632, %v1628
      %v1877 = vpack.c.b16 %v1633, %v1629
      %v1878 = vpack.c.b16 %v1638, %v1634
      %v1879 = vpack.c.b16 %v1639, %v1635
      %v1880 = vpack.c.b16 %v1640, %v1636
      %v1881 = vpack.c.b16 %v1641, %v1637
      %v1882 = vpack.c.b16 %v1646, %v1642
      %v1883 = vpack.c.b16 %v1647, %v1643
      %v1884 = vpack.c.b16 %v1648, %v1644
      %v1885 = vpack.c.b16 %v1649, %v1645
      %v1886 = vpack.c.b16 %v1654, %v1650
      %v1887 = vpack.c.b16 %v1655, %v1651
      %v1888 = vpack.c.b16 %v1656, %v1652
      %v1889 = vpack.c.b16 %v1657, %v1653
      %v1890 = vpack.c.b16 %v1662, %v1658
      %v1891 = vpack.c.b16 %v1663, %v1659
      %v1892 = vpack.c.b16 %v1664, %v1660
      %v1893 = vpack.c.b16 %v1665, %v1661
      %v1894 = vpack.c.b16 %v1670, %v1666
      %v1895 = vpack.c.b16 %v1671, %v1667
      %v1896 = vpack.c.b16 %v1672, %v1668
      %v1897 = vpack.c.b16 %v1673, %v1669
      %v1898 = vpack.c.b16 %v1678, %v1674
      %v1899 = vpack.c.b16 %v1679, %v1675
      %v1900 = vpack.c.b16 %v1680, %v1676
      %v1901 = vpack.c.b16 %v1681, %v1677
      %v1902 = vpack.c.b16 %v1686, %v1682
      %v1903 = vpack.c.b16 %v1687, %v1683
      %v1904 = vpack.c.b16 %v1688, %v1684
      %v1905 = vpack.c.b16 %v1689, %v1685
      %v1906 = vpack.c.b16 %v1694, %v1690
      %v1907 = vpack.c.b16 %v1695, %v1691
      %v1908 = vpack.c.b16 %v1696, %v1692
      %v1909 = vpack.c.b16 %v1697, %v1693
      %v1910 = vpack.c.b16 %v1702, %v1698
      %v1911 = vpack.c.b16 %v1703, %v1699
      %v1912 = vpack.c.b16 %v1704, %v1700
      %v1913 = vpack.c.b16 %v1705, %v1701
      %v1914 = vpack.c.b16 %v1710, %v1706
      %v1915 = vpack.c.b16 %v1711, %v1707
      %v1916 = vpack.c.b16 %v1712, %v1708
      %v1917 = vpack.c.b16 %v1713, %v1709
      %v1918 = vpack.c.b16 %v1718, %v1714
      %v1919 = vpack.c.b16 %v1719, %v1715
      %v1920 = vpack.c.b16 %v1720, %v1716
      %v1921 = vpack.c.b16 %v1721, %v1717
      %v1922 = vpack.c.b16 %v1726, %v1722
      %v1923 = vpack.c.b16 %v1727, %v1723
      %v1924 = vpack.c.b16 %v1728, %v1724
      %v1925 = vpack.c.b16 %v1729, %v1725
      %v1926 = vpack.c.b16 %v1734, %v1730
      %v1927 = vpack.c.b16 %v1735, %v1731
      %v1928 = vpack.c.b16 %v1736, %v1732
      %v1929 = vpack.c.b16 %v1737, %v1733
      %v1930 = vpack.c.b16 %v1742, %v1738
      %v1931 = vpack.c.b16 %v1743, %v1739
      %v1932 = vpack.c.b16 %v1744, %v1740
      %v1933 = vpack.c.b16 %v1745, %v1741
      %v1934 = vpack.c.b16 %v1750, %v1746
      %v1935 = vpack.c.b16 %v1751, %v1747
      %v1936 = vpack.c.b16 %v1752, %v1748
      %v1937 = vpack.c.b16 %v1753, %v1749
      %v1938 = vpack.c.b16 %v1758, %v1754
      %v1939 = vpack.c.b16 %v1759, %v1755
      %v1940 = vpack.c.b16 %v1760, %v1756
      %v1941 = vpack.c.b16 %v1761, %v1757
      %v1942 = vpack.c.b16 %v1766, %v1762
      %v1943 = vpack.c.b16 %v1767, %v1763
      %v1944 = vpack.c.b16 %v1768, %v1764
      %v1945 = vpack.c.b16 %v1769, %v1765
      %v1946 = vpack.c.b16 %v1774, %v1770
      %v1947 = vpack.c.b16 %v1775, %v1771
      %v1948 = vpack.c.b16 %v1776, %v1772
      %v1949 = vpack.c.b16 %v1777, %v1773
      %v1950 = vpack.c.b16 %v1782, %v1778
      %v1951 = vpack.c.b16 %v1783, %v1779
      %v1952 = vpack.c.b16 %v1784, %v1780
      %v1953 = vpack.c.b16 %v1785, %v1781
      %v1954 = vpack.c.b16 %v1790, %v1786
      %v1955 = vpack.c.b16 %v1791, %v1787
      %v1956 = vpack.c.b16 %v1792, %v1788
      %v1957 = vpack.c.b16 %v1793, %v1789
      %v1958 = vpack.c.b16 %v1798, %v1794
      %v1959 = vpack.c.b16 %v1799, %v1795
      %v1960 = vpack.c.b16 %v1800, %v1796
      %v1961 = vpack.c.b16 %v1801, %v1797
      %v1962 = vpack.c.b16 %v1806, %v1802
      %v1963 = vpack.c.b16 %v1807, %v1803
      %v1964 = vpack.c.b16 %v1808, %v1804
      %v1965 = vpack.c.b16 %v1809, %v1805
      %v1966 = vpack.c.b16 %v1814, %v1810
      %v1967 = vpack.c.b16 %v1815, %v1811
      %v1968 = vpack.c.b16 %v1816, %v1812
      %v1969 = vpack.c.b16 %v1817, %v1813
      %v1970 = vpack.c.b16 %v1822, %v1818
      %v1971 = vpack.c.b16 %v1823, %v1819
      %v1972 = vpack.c.b16 %v1824, %v1820
      %v1973 = vpack.c.b16 %v1825, %v1821
      %v1974 = vpack.c.b16 %v1830, %v1826
      %v1975 = vpack.c.b16 %v1831, %v1827
      %v1976 = vpack.c.b16 %v1832, %v1828
      %v1977 = vpack.c.b16 %v1833, %v1829
      %v1978 = vpack.c.b16 %v1838, %v1834
      %v1979 = vpack.c.b16 %v1839, %v1835
      %v1980 = vpack.c.b16 %v1840, %v1836
      %v1981 = vpack.c.b16 %v1841, %v1837
      %v1982 = vpack.c.b16 %v1846, %v1842
      %v1983 = vpack.c.b16 %v1847, %v1843
      %v1984 = vpack.c.b16 %v1848, %v1844
      %v1985 = vpack.c.b16 %v1849, %v1845
      %v1986 = vpack.c.b16 %v1854, %v1850
      %v1987 = vpack.c.b16 %v1855, %v1851
      %v1988 = vpack.c.b16 %v1856, %v1852
      %v1989 = vpack.c.b16 %v1857, %v1853
      %v1990 = vpack.c.b16 %v1862, %v1858
      %v1991 = vpack.c.b16 %v1863, %v1859
      %v1992 = vpack.c.b16 %v1864, %v1860
      %v1993 = vpack.c.b16 %v1865, %v1861
      %2122 = vmatpush.bf16.msra.mxu0 %v1894
      %2123 = vmatpush.bf16.msra.mxu0 %v1890
      %2124 = vmatpush.bf16.msra.mxu0 %v1886
      %2125 = vmatpush.bf16.msra.mxu0 %v1882
      %2126 = vmatpush.bf16.msra.mxu0 %v1878
      %2127 = vmatpush.bf16.msra.mxu0 %v1874
      %2128 = vmatpush.bf16.msra.mxu0 %v1870
      %2129 = vmatpush.bf16.msra.mxu0 %v1866
      %2130 = vmatmul.bf16.gmra.mxu0 %v349
      %v2131 = vpop.f32.mrf.mxu0
      %v2132 = vadd.f32 %v1323, %v2131
      %v2133 = vpop.f32.mrf.mxu0
      %2134 = vdwg.mxu0
      %2135 = vmatpush.bf16.msra.mxu0 %v1926
      %2136 = vmatpush.bf16.msra.mxu0 %v1922
      %2137 = vmatpush.bf16.msra.mxu0 %v1918
      %2138 = vmatpush.bf16.msra.mxu0 %v1914
      %2139 = vmatpush.bf16.msra.mxu0 %v1910
      %2140 = vmatpush.bf16.msra.mxu0 %v1906
      %2141 = vmatpush.bf16.msra.mxu0 %v1902
      %2142 = vmatpush.bf16.msra.mxu0 %v1898
      %2143 = vmatmul.bf16.gmra.mxu0 %v350
      %v2144 = vpop.f32.mrf.mxu0
      %v2145 = vadd.f32 %v2132, %v2144
      %v2146 = vpop.f32.mrf.mxu0
      %2147 = vdwg.mxu0
      %2148 = vmatpush.bf16.msra.mxu0 %v1958
      %2149 = vmatpush.bf16.msra.mxu0 %v1954
      %2150 = vmatpush.bf16.msra.mxu0 %v1950
      %2151 = vmatpush.bf16.msra.mxu0 %v1946
      %2152 = vmatpush.bf16.msra.mxu0 %v1942
      %2153 = vmatpush.bf16.msra.mxu0 %v1938
      %2154 = vmatpush.bf16.msra.mxu0 %v1934
      %2155 = vmatpush.bf16.msra.mxu0 %v1930
      %2156 = vmatmul.bf16.gmra.mxu0 %v351
      %v2157 = vpop.f32.mrf.mxu0
      %v2158 = vadd.f32 %v2145, %v2157
      %v2159 = vpop.f32.mrf.mxu0
      %2160 = vdwg.mxu0
      %2161 = vmatpush.bf16.msra.mxu0 %v1990
      %2162 = vmatpush.bf16.msra.mxu0 %v1986
      %2163 = vmatpush.bf16.msra.mxu0 %v1982
      %2164 = vmatpush.bf16.msra.mxu0 %v1978
      %2165 = vmatpush.bf16.msra.mxu0 %v1974
      %2166 = vmatpush.bf16.msra.mxu0 %v1970
      %2167 = vmatpush.bf16.msra.mxu0 %v1966
      %2168 = vmatpush.bf16.msra.mxu0 %v1962
      %2169 = vmatmul.bf16.gmra.mxu0 %v352
      %v2170 = vpop.f32.mrf.mxu0
      %v2171 = vadd.f32 %v2158, %v2170
      %v2172 = vpop.f32.mrf.mxu0
      %2173 = vdwg.mxu0
      %2174 = vmatpush.bf16.msra.mxu0 %v1895
      %2175 = vmatpush.bf16.msra.mxu0 %v1891
      %2176 = vmatpush.bf16.msra.mxu0 %v1887
      %2177 = vmatpush.bf16.msra.mxu0 %v1883
      %2178 = vmatpush.bf16.msra.mxu0 %v1879
      %2179 = vmatpush.bf16.msra.mxu0 %v1875
      %2180 = vmatpush.bf16.msra.mxu0 %v1871
      %2181 = vmatpush.bf16.msra.mxu0 %v1867
      %2182 = vmatmul.bf16.gmra.mxu0 %v349
      %v2183 = vpop.f32.mrf.mxu0
      %v2184 = vadd.f32 %v1375, %v2183
      %v2185 = vpop.f32.mrf.mxu0
      %2186 = vdwg.mxu0
      %2187 = vmatpush.bf16.msra.mxu0 %v1927
      %2188 = vmatpush.bf16.msra.mxu0 %v1923
      %2189 = vmatpush.bf16.msra.mxu0 %v1919
      %2190 = vmatpush.bf16.msra.mxu0 %v1915
      %2191 = vmatpush.bf16.msra.mxu0 %v1911
      %2192 = vmatpush.bf16.msra.mxu0 %v1907
      %2193 = vmatpush.bf16.msra.mxu0 %v1903
      %2194 = vmatpush.bf16.msra.mxu0 %v1899
      %2195 = vmatmul.bf16.gmra.mxu0 %v350
      %v2196 = vpop.f32.mrf.mxu0
      %v2197 = vadd.f32 %v2184, %v2196
      %v2198 = vpop.f32.mrf.mxu0
      %2199 = vdwg.mxu0
      %2200 = vmatpush.bf16.msra.mxu0 %v1959
      %2201 = vmatpush.bf16.msra.mxu0 %v1955
      %2202 = vmatpush.bf16.msra.mxu0 %v1951
      %2203 = vmatpush.bf16.msra.mxu0 %v1947
      %2204 = vmatpush.bf16.msra.mxu0 %v1943
      %2205 = vmatpush.bf16.msra.mxu0 %v1939
      %2206 = vmatpush.bf16.msra.mxu0 %v1935
      %2207 = vmatpush.bf16.msra.mxu0 %v1931
      %2208 = vmatmul.bf16.gmra.mxu0 %v351
      %v2209 = vpop.f32.mrf.mxu0
      %v2210 = vadd.f32 %v2197, %v2209
      %v2211 = vpop.f32.mrf.mxu0
      %2212 = vdwg.mxu0
      %2213 = vmatpush.bf16.msra.mxu0 %v1991
      %2214 = vmatpush.bf16.msra.mxu0 %v1987
      %2215 = vmatpush.bf16.msra.mxu0 %v1983
      %2216 = vmatpush.bf16.msra.mxu0 %v1979
      %2217 = vmatpush.bf16.msra.mxu0 %v1975
      %2218 = vmatpush.bf16.msra.mxu0 %v1971
      %2219 = vmatpush.bf16.msra.mxu0 %v1967
      %2220 = vmatpush.bf16.msra.mxu0 %v1963
      %2221 = vmatmul.bf16.gmra.mxu0 %v352
      %v2222 = vpop.f32.mrf.mxu0
      %v2223 = vadd.f32 %v2210, %v2222
      %v2224 = vpop.f32.mrf.mxu0
      %2225 = vdwg.mxu0
      %2226 = vmatpush.bf16.msra.mxu0 %v1896
      %2227 = vmatpush.bf16.msra.mxu0 %v1892
      %2228 = vmatpush.bf16.msra.mxu0 %v1888
      %2229 = vmatpush.bf16.msra.mxu0 %v1884
      %2230 = vmatpush.bf16.msra.mxu0 %v1880
      %2231 = vmatpush.bf16.msra.mxu0 %v1876
      %2232 = vmatpush.bf16.msra.mxu0 %v1872
      %2233 = vmatpush.bf16.msra.mxu0 %v1868
      %2234 = vmatmul.bf16.gmra.mxu0 %v349
      %v2235 = vpop.f32.mrf.mxu0
      %v2236 = vadd.f32 %v1427, %v2235
      %v2237 = vpop.f32.mrf.mxu0
      %2238 = vdwg.mxu0
      %2239 = vmatpush.bf16.msra.mxu0 %v1928
      %2240 = vmatpush.bf16.msra.mxu0 %v1924
      %2241 = vmatpush.bf16.msra.mxu0 %v1920
      %2242 = vmatpush.bf16.msra.mxu0 %v1916
      %2243 = vmatpush.bf16.msra.mxu0 %v1912
      %2244 = vmatpush.bf16.msra.mxu0 %v1908
      %2245 = vmatpush.bf16.msra.mxu0 %v1904
      %2246 = vmatpush.bf16.msra.mxu0 %v1900
      %2247 = vmatmul.bf16.gmra.mxu0 %v350
      %v2248 = vpop.f32.mrf.mxu0
      %v2249 = vadd.f32 %v2236, %v2248
      %v2250 = vpop.f32.mrf.mxu0
      %2251 = vdwg.mxu0
      %2252 = vmatpush.bf16.msra.mxu0 %v1960
      %2253 = vmatpush.bf16.msra.mxu0 %v1956
      %2254 = vmatpush.bf16.msra.mxu0 %v1952
      %2255 = vmatpush.bf16.msra.mxu0 %v1948
      %2256 = vmatpush.bf16.msra.mxu0 %v1944
      %2257 = vmatpush.bf16.msra.mxu0 %v1940
      %2258 = vmatpush.bf16.msra.mxu0 %v1936
      %2259 = vmatpush.bf16.msra.mxu0 %v1932
      %2260 = vmatmul.bf16.gmra.mxu0 %v351
      %v2261 = vpop.f32.mrf.mxu0
      %v2262 = vadd.f32 %v2249, %v2261
      %v2263 = vpop.f32.mrf.mxu0
      %2264 = vdwg.mxu0
      %2265 = vmatpush.bf16.msra.mxu0 %v1992
      %2266 = vmatpush.bf16.msra.mxu0 %v1988
      %2267 = vmatpush.bf16.msra.mxu0 %v1984
      %2268 = vmatpush.bf16.msra.mxu0 %v1980
      %2269 = vmatpush.bf16.msra.mxu0 %v1976
      %2270 = vmatpush.bf16.msra.mxu0 %v1972
      %2271 = vmatpush.bf16.msra.mxu0 %v1968
      %2272 = vmatpush.bf16.msra.mxu0 %v1964
      %2273 = vmatmul.bf16.gmra.mxu0 %v352
      %v2274 = vpop.f32.mrf.mxu0
      %v2275 = vadd.f32 %v2262, %v2274
      %v2276 = vpop.f32.mrf.mxu0
      %2277 = vdwg.mxu0
      %2278 = vmatpush.bf16.msra.mxu0 %v1897
      %2279 = vmatpush.bf16.msra.mxu0 %v1893
      %2280 = vmatpush.bf16.msra.mxu0 %v1889
      %2281 = vmatpush.bf16.msra.mxu0 %v1885
      %2282 = vmatpush.bf16.msra.mxu0 %v1881
      %2283 = vmatpush.bf16.msra.mxu0 %v1877
      %2284 = vmatpush.bf16.msra.mxu0 %v1873
      %2285 = vmatpush.bf16.msra.mxu0 %v1869
      %2286 = vmatmul.bf16.gmra.mxu0 %v349
      %v2287 = vpop.f32.mrf.mxu0
      %v2288 = vadd.f32 %v1479, %v2287
      %v2289 = vpop.f32.mrf.mxu0
      %2290 = vdwg.mxu0
      %2291 = vmatpush.bf16.msra.mxu0 %v1929
      %2292 = vmatpush.bf16.msra.mxu0 %v1925
      %2293 = vmatpush.bf16.msra.mxu0 %v1921
      %2294 = vmatpush.bf16.msra.mxu0 %v1917
      %2295 = vmatpush.bf16.msra.mxu0 %v1913
      %2296 = vmatpush.bf16.msra.mxu0 %v1909
      %2297 = vmatpush.bf16.msra.mxu0 %v1905
      %2298 = vmatpush.bf16.msra.mxu0 %v1901
      %2299 = vmatmul.bf16.gmra.mxu0 %v350
      %v2300 = vpop.f32.mrf.mxu0
      %v2301 = vadd.f32 %v2288, %v2300
      %v2302 = vpop.f32.mrf.mxu0
      %2303 = vdwg.mxu0
      %2304 = vmatpush.bf16.msra.mxu0 %v1961
      %2305 = vmatpush.bf16.msra.mxu0 %v1957
      %2306 = vmatpush.bf16.msra.mxu0 %v1953
      %2307 = vmatpush.bf16.msra.mxu0 %v1949
      %2308 = vmatpush.bf16.msra.mxu0 %v1945
      %2309 = vmatpush.bf16.msra.mxu0 %v1941
      %2310 = vmatpush.bf16.msra.mxu0 %v1937
      %2311 = vmatpush.bf16.msra.mxu0 %v1933
      %2312 = vmatmul.bf16.gmra.mxu0 %v351
      %v2313 = vpop.f32.mrf.mxu0
      %v2314 = vadd.f32 %v2301, %v2313
      %v2315 = vpop.f32.mrf.mxu0
      %2316 = vdwg.mxu0
      %2317 = vmatpush.bf16.msra.mxu0 %v1993
      %2318 = vmatpush.bf16.msra.mxu0 %v1989
      %2319 = vmatpush.bf16.msra.mxu0 %v1985
      %2320 = vmatpush.bf16.msra.mxu0 %v1981
      %2321 = vmatpush.bf16.msra.mxu0 %v1977
      %2322 = vmatpush.bf16.msra.mxu0 %v1973
      %2323 = vmatpush.bf16.msra.mxu0 %v1969
      %2324 = vmatpush.bf16.msra.mxu0 %v1965
      %2325 = vmatmul.bf16.gmra.mxu0 %v352
      %v2326 = vpop.f32.mrf.mxu0
      %v2327 = vadd.f32 %v2314, %v2326
      %v2328 = vpop.f32.mrf.mxu0
      %2329 = vdwg.mxu0
      %v2330 = vld [vmem:[#allocation2 + $0x20] sm:$0xff]
      %v2331 = vld [vmem:[#allocation2 + $0x28] sm:$0xff]
      %v2332 = vld [vmem:[#allocation2 + $0x30] sm:$0xff]
      %v2333 = vld [vmem:[#allocation2 + $0x38] sm:$0xff]
      %v2334 = vpack.c.bf16 %v2330, %v2330
      %v2335 = vpack.c.bf16 %v2331, %v2331
      %v2336 = vpack.c.bf16 %v2332, %v2332
      %v2337 = vpack.c.bf16 %v2333, %v2333
      %s2338 = scalar_lea.vmem %s1, 2048
      %v2339 = vld [vmem:[%s2338] sm:$0xff]
      %v2340 = vld [vmem:[%s2338 + $0x8] sm:$0xff]
      %v2341 = vld [vmem:[%s2338 + $0x10] sm:$0xff]
      %v2342 = vld [vmem:[%s2338 + $0x18] sm:$0xff]
      %v2343 = vld [vmem:[%s2338 + $0x20] sm:$0xff]
      %v2344 = vld [vmem:[%s2338 + $0x28] sm:$0xff]
      %v2345 = vld [vmem:[%s2338 + $0x30] sm:$0xff]
      %v2346 = vld [vmem:[%s2338 + $0x38] sm:$0xff]
      %v2347 = vld [vmem:[%s2338 + $0x40] sm:$0xff]
      %v2348 = vld [vmem:[%s2338 + $0x48] sm:$0xff]
      %v2349 = vld [vmem:[%s2338 + $0x50] sm:$0xff]
      %v2350 = vld [vmem:[%s2338 + $0x58] sm:$0xff]
      %v2351 = vld [vmem:[%s2338 + $0x60] sm:$0xff]
      %v2352 = vld [vmem:[%s2338 + $0x68] sm:$0xff]
      %v2353 = vld [vmem:[%s2338 + $0x70] sm:$0xff]
      %v2354 = vld [vmem:[%s2338 + $0x78] sm:$0xff]
      %v2355 = vld [vmem:[%s2338 + $0x80] sm:$0xff]
      %v2356 = vld [vmem:[%s2338 + $0x88] sm:$0xff]
      %v2357 = vld [vmem:[%s2338 + $0x90] sm:$0xff]
      %v2358 = vld [vmem:[%s2338 + $0x98] sm:$0xff]
      %v2359 = vld [vmem:[%s2338 + $0xa0] sm:$0xff]
      %v2360 = vld [vmem:[%s2338 + $0xa8] sm:$0xff]
      %v2361 = vld [vmem:[%s2338 + $0xb0] sm:$0xff]
      %v2362 = vld [vmem:[%s2338 + $0xb8] sm:$0xff]
      %v2363 = vld [vmem:[%s2338 + $0xc0] sm:$0xff]
      %v2364 = vld [vmem:[%s2338 + $0xc8] sm:$0xff]
      %v2365 = vld [vmem:[%s2338 + $0xd0] sm:$0xff]
      %v2366 = vld [vmem:[%s2338 + $0xd8] sm:$0xff]
      %v2367 = vld [vmem:[%s2338 + $0xe0] sm:$0xff]
      %v2368 = vld [vmem:[%s2338 + $0xe8] sm:$0xff]
      %v2369 = vld [vmem:[%s2338 + $0xf0] sm:$0xff]
      %v2370 = vld [vmem:[%s2338 + $0xf8] sm:$0xff]
      %v2371 = vld [vmem:[%s2338 + $0x100] sm:$0xff]
      %v2372 = vld [vmem:[%s2338 + $0x108] sm:$0xff]
      %v2373 = vld [vmem:[%s2338 + $0x110] sm:$0xff]
      %v2374 = vld [vmem:[%s2338 + $0x118] sm:$0xff]
      %v2375 = vld [vmem:[%s2338 + $0x120] sm:$0xff]
      %v2376 = vld [vmem:[%s2338 + $0x128] sm:$0xff]
      %v2377 = vld [vmem:[%s2338 + $0x130] sm:$0xff]
      %v2378 = vld [vmem:[%s2338 + $0x138] sm:$0xff]
      %v2379 = vld [vmem:[%s2338 + $0x140] sm:$0xff]
      %v2380 = vld [vmem:[%s2338 + $0x148] sm:$0xff]
      %v2381 = vld [vmem:[%s2338 + $0x150] sm:$0xff]
      %v2382 = vld [vmem:[%s2338 + $0x158] sm:$0xff]
      %v2383 = vld [vmem:[%s2338 + $0x160] sm:$0xff]
      %v2384 = vld [vmem:[%s2338 + $0x168] sm:$0xff]
      %v2385 = vld [vmem:[%s2338 + $0x170] sm:$0xff]
      %v2386 = vld [vmem:[%s2338 + $0x178] sm:$0xff]
      %v2387 = vld [vmem:[%s2338 + $0x180] sm:$0xff]
      %v2388 = vld [vmem:[%s2338 + $0x188] sm:$0xff]
      %v2389 = vld [vmem:[%s2338 + $0x190] sm:$0xff]
      %v2390 = vld [vmem:[%s2338 + $0x198] sm:$0xff]
      %v2391 = vld [vmem:[%s2338 + $0x1a0] sm:$0xff]
      %v2392 = vld [vmem:[%s2338 + $0x1a8] sm:$0xff]
      %v2393 = vld [vmem:[%s2338 + $0x1b0] sm:$0xff]
      %v2394 = vld [vmem:[%s2338 + $0x1b8] sm:$0xff]
      %v2395 = vld [vmem:[%s2338 + $0x1c0] sm:$0xff]
      %v2396 = vld [vmem:[%s2338 + $0x1c8] sm:$0xff]
      %v2397 = vld [vmem:[%s2338 + $0x1d0] sm:$0xff]
      %v2398 = vld [vmem:[%s2338 + $0x1d8] sm:$0xff]
      %v2399 = vld [vmem:[%s2338 + $0x1e0] sm:$0xff]
      %v2400 = vld [vmem:[%s2338 + $0x1e8] sm:$0xff]
      %v2401 = vld [vmem:[%s2338 + $0x1f0] sm:$0xff]
      %v2402 = vld [vmem:[%s2338 + $0x1f8] sm:$0xff]
      %v2403 = vld [vmem:[%s2338 + $0x200] sm:$0xff]
      %v2404 = vld [vmem:[%s2338 + $0x208] sm:$0xff]
      %v2405 = vld [vmem:[%s2338 + $0x210] sm:$0xff]
      %v2406 = vld [vmem:[%s2338 + $0x218] sm:$0xff]
      %v2407 = vld [vmem:[%s2338 + $0x220] sm:$0xff]
      %v2408 = vld [vmem:[%s2338 + $0x228] sm:$0xff]
      %v2409 = vld [vmem:[%s2338 + $0x230] sm:$0xff]
      %v2410 = vld [vmem:[%s2338 + $0x238] sm:$0xff]
      %v2411 = vld [vmem:[%s2338 + $0x240] sm:$0xff]
      %v2412 = vld [vmem:[%s2338 + $0x248] sm:$0xff]
      %v2413 = vld [vmem:[%s2338 + $0x250] sm:$0xff]
      %v2414 = vld [vmem:[%s2338 + $0x258] sm:$0xff]
      %v2415 = vld [vmem:[%s2338 + $0x260] sm:$0xff]
      %v2416 = vld [vmem:[%s2338 + $0x268] sm:$0xff]
      %v2417 = vld [vmem:[%s2338 + $0x270] sm:$0xff]
      %v2418 = vld [vmem:[%s2338 + $0x278] sm:$0xff]
      %v2419 = vld [vmem:[%s2338 + $0x280] sm:$0xff]
      %v2420 = vld [vmem:[%s2338 + $0x288] sm:$0xff]
      %v2421 = vld [vmem:[%s2338 + $0x290] sm:$0xff]
      %v2422 = vld [vmem:[%s2338 + $0x298] sm:$0xff]
      %v2423 = vld [vmem:[%s2338 + $0x2a0] sm:$0xff]
      %v2424 = vld [vmem:[%s2338 + $0x2a8] sm:$0xff]
      %v2425 = vld [vmem:[%s2338 + $0x2b0] sm:$0xff]
      %v2426 = vld [vmem:[%s2338 + $0x2b8] sm:$0xff]
      %v2427 = vld [vmem:[%s2338 + $0x2c0] sm:$0xff]
      %v2428 = vld [vmem:[%s2338 + $0x2c8] sm:$0xff]
      %v2429 = vld [vmem:[%s2338 + $0x2d0] sm:$0xff]
      %v2430 = vld [vmem:[%s2338 + $0x2d8] sm:$0xff]
      %v2431 = vld [vmem:[%s2338 + $0x2e0] sm:$0xff]
      %v2432 = vld [vmem:[%s2338 + $0x2e8] sm:$0xff]
      %v2433 = vld [vmem:[%s2338 + $0x2f0] sm:$0xff]
      %v2434 = vld [vmem:[%s2338 + $0x2f8] sm:$0xff]
      %v2435 = vld [vmem:[%s2338 + $0x300] sm:$0xff]
      %v2436 = vld [vmem:[%s2338 + $0x308] sm:$0xff]
      %v2437 = vld [vmem:[%s2338 + $0x310] sm:$0xff]
      %v2438 = vld [vmem:[%s2338 + $0x318] sm:$0xff]
      %v2439 = vld [vmem:[%s2338 + $0x320] sm:$0xff]
      %v2440 = vld [vmem:[%s2338 + $0x328] sm:$0xff]
      %v2441 = vld [vmem:[%s2338 + $0x330] sm:$0xff]
      %v2442 = vld [vmem:[%s2338 + $0x338] sm:$0xff]
      %v2443 = vld [vmem:[%s2338 + $0x340] sm:$0xff]
      %v2444 = vld [vmem:[%s2338 + $0x348] sm:$0xff]
      %v2445 = vld [vmem:[%s2338 + $0x350] sm:$0xff]
      %v2446 = vld [vmem:[%s2338 + $0x358] sm:$0xff]
      %v2447 = vld [vmem:[%s2338 + $0x360] sm:$0xff]
      %v2448 = vld [vmem:[%s2338 + $0x368] sm:$0xff]
      %v2449 = vld [vmem:[%s2338 + $0x370] sm:$0xff]
      %v2450 = vld [vmem:[%s2338 + $0x378] sm:$0xff]
      %v2451 = vld [vmem:[%s2338 + $0x380] sm:$0xff]
      %v2452 = vld [vmem:[%s2338 + $0x388] sm:$0xff]
      %v2453 = vld [vmem:[%s2338 + $0x390] sm:$0xff]
      %v2454 = vld [vmem:[%s2338 + $0x398] sm:$0xff]
      %v2455 = vld [vmem:[%s2338 + $0x3a0] sm:$0xff]
      %v2456 = vld [vmem:[%s2338 + $0x3a8] sm:$0xff]
      %v2457 = vld [vmem:[%s2338 + $0x3b0] sm:$0xff]
      %v2458 = vld [vmem:[%s2338 + $0x3b8] sm:$0xff]
      %v2459 = vld [vmem:[%s2338 + $0x3c0] sm:$0xff]
      %v2460 = vld [vmem:[%s2338 + $0x3c8] sm:$0xff]
      %v2461 = vld [vmem:[%s2338 + $0x3d0] sm:$0xff]
      %v2462 = vld [vmem:[%s2338 + $0x3d8] sm:$0xff]
      %v2463 = vld [vmem:[%s2338 + $0x3e0] sm:$0xff]
      %v2464 = vld [vmem:[%s2338 + $0x3e8] sm:$0xff]
      %v2465 = vld [vmem:[%s2338 + $0x3f0] sm:$0xff]
      %v2466 = vld [vmem:[%s2338 + $0x3f8] sm:$0xff]
      %v2595 = vunpack.c.l.b16 %v2339
      %v2596 = vunpack.c.h.b16 %v2339
      %v2597 = vunpack.c.l.b16 %v2340
      %v2598 = vunpack.c.h.b16 %v2340
      %v2599 = vunpack.c.l.b16 %v2341
      %v2600 = vunpack.c.h.b16 %v2341
      %v2601 = vunpack.c.l.b16 %v2342
      %v2602 = vunpack.c.h.b16 %v2342
      %v2603 = vunpack.c.l.b16 %v2343
      %v2604 = vunpack.c.h.b16 %v2343
      %v2605 = vunpack.c.l.b16 %v2344
      %v2606 = vunpack.c.h.b16 %v2344
      %v2607 = vunpack.c.l.b16 %v2345
      %v2608 = vunpack.c.h.b16 %v2345
      %v2609 = vunpack.c.l.b16 %v2346
      %v2610 = vunpack.c.h.b16 %v2346
      %v2611 = vunpack.c.l.b16 %v2347
      %v2612 = vunpack.c.h.b16 %v2347
      %v2613 = vunpack.c.l.b16 %v2348
      %v2614 = vunpack.c.h.b16 %v2348
      %v2615 = vunpack.c.l.b16 %v2349
      %v2616 = vunpack.c.h.b16 %v2349
      %v2617 = vunpack.c.l.b16 %v2350
      %v2618 = vunpack.c.h.b16 %v2350
      %v2619 = vunpack.c.l.b16 %v2351
      %v2620 = vunpack.c.h.b16 %v2351
      %v2621 = vunpack.c.l.b16 %v2352
      %v2622 = vunpack.c.h.b16 %v2352
      %v2623 = vunpack.c.l.b16 %v2353
      %v2624 = vunpack.c.h.b16 %v2353
      %v2625 = vunpack.c.l.b16 %v2354
      %v2626 = vunpack.c.h.b16 %v2354
      %v2627 = vunpack.c.l.b16 %v2355
      %v2628 = vunpack.c.h.b16 %v2355
      %v2629 = vunpack.c.l.b16 %v2356
      %v2630 = vunpack.c.h.b16 %v2356
      %v2631 = vunpack.c.l.b16 %v2357
      %v2632 = vunpack.c.h.b16 %v2357
      %v2633 = vunpack.c.l.b16 %v2358
      %v2634 = vunpack.c.h.b16 %v2358
      %v2635 = vunpack.c.l.b16 %v2359
      %v2636 = vunpack.c.h.b16 %v2359
      %v2637 = vunpack.c.l.b16 %v2360
      %v2638 = vunpack.c.h.b16 %v2360
      %v2639 = vunpack.c.l.b16 %v2361
      %v2640 = vunpack.c.h.b16 %v2361
      %v2641 = vunpack.c.l.b16 %v2362
      %v2642 = vunpack.c.h.b16 %v2362
      %v2643 = vunpack.c.l.b16 %v2363
      %v2644 = vunpack.c.h.b16 %v2363
      %v2645 = vunpack.c.l.b16 %v2364
      %v2646 = vunpack.c.h.b16 %v2364
      %v2647 = vunpack.c.l.b16 %v2365
      %v2648 = vunpack.c.h.b16 %v2365
      %v2649 = vunpack.c.l.b16 %v2366
      %v2650 = vunpack.c.h.b16 %v2366
      %v2651 = vunpack.c.l.b16 %v2367
      %v2652 = vunpack.c.h.b16 %v2367
      %v2653 = vunpack.c.l.b16 %v2368
      %v2654 = vunpack.c.h.b16 %v2368
      %v2655 = vunpack.c.l.b16 %v2369
      %v2656 = vunpack.c.h.b16 %v2369
      %v2657 = vunpack.c.l.b16 %v2370
      %v2658 = vunpack.c.h.b16 %v2370
      %v2659 = vunpack.c.l.b16 %v2371
      %v2660 = vunpack.c.h.b16 %v2371
      %v2661 = vunpack.c.l.b16 %v2372
      %v2662 = vunpack.c.h.b16 %v2372
      %v2663 = vunpack.c.l.b16 %v2373
      %v2664 = vunpack.c.h.b16 %v2373
      %v2665 = vunpack.c.l.b16 %v2374
      %v2666 = vunpack.c.h.b16 %v2374
      %v2667 = vunpack.c.l.b16 %v2375
      %v2668 = vunpack.c.h.b16 %v2375
      %v2669 = vunpack.c.l.b16 %v2376
      %v2670 = vunpack.c.h.b16 %v2376
      %v2671 = vunpack.c.l.b16 %v2377
      %v2672 = vunpack.c.h.b16 %v2377
      %v2673 = vunpack.c.l.b16 %v2378
      %v2674 = vunpack.c.h.b16 %v2378
      %v2675 = vunpack.c.l.b16 %v2379
      %v2676 = vunpack.c.h.b16 %v2379
      %v2677 = vunpack.c.l.b16 %v2380
      %v2678 = vunpack.c.h.b16 %v2380
      %v2679 = vunpack.c.l.b16 %v2381
      %v2680 = vunpack.c.h.b16 %v2381
      %v2681 = vunpack.c.l.b16 %v2382
      %v2682 = vunpack.c.h.b16 %v2382
      %v2683 = vunpack.c.l.b16 %v2383
      %v2684 = vunpack.c.h.b16 %v2383
      %v2685 = vunpack.c.l.b16 %v2384
      %v2686 = vunpack.c.h.b16 %v2384
      %v2687 = vunpack.c.l.b16 %v2385
      %v2688 = vunpack.c.h.b16 %v2385
      %v2689 = vunpack.c.l.b16 %v2386
      %v2690 = vunpack.c.h.b16 %v2386
      %v2691 = vunpack.c.l.b16 %v2387
      %v2692 = vunpack.c.h.b16 %v2387
      %v2693 = vunpack.c.l.b16 %v2388
      %v2694 = vunpack.c.h.b16 %v2388
      %v2695 = vunpack.c.l.b16 %v2389
      %v2696 = vunpack.c.h.b16 %v2389
      %v2697 = vunpack.c.l.b16 %v2390
      %v2698 = vunpack.c.h.b16 %v2390
      %v2699 = vunpack.c.l.b16 %v2391
      %v2700 = vunpack.c.h.b16 %v2391
      %v2701 = vunpack.c.l.b16 %v2392
      %v2702 = vunpack.c.h.b16 %v2392
      %v2703 = vunpack.c.l.b16 %v2393
      %v2704 = vunpack.c.h.b16 %v2393
      %v2705 = vunpack.c.l.b16 %v2394
      %v2706 = vunpack.c.h.b16 %v2394
      %v2707 = vunpack.c.l.b16 %v2395
      %v2708 = vunpack.c.h.b16 %v2395
      %v2709 = vunpack.c.l.b16 %v2396
      %v2710 = vunpack.c.h.b16 %v2396
      %v2711 = vunpack.c.l.b16 %v2397
      %v2712 = vunpack.c.h.b16 %v2397
      %v2713 = vunpack.c.l.b16 %v2398
      %v2714 = vunpack.c.h.b16 %v2398
      %v2715 = vunpack.c.l.b16 %v2399
      %v2716 = vunpack.c.h.b16 %v2399
      %v2717 = vunpack.c.l.b16 %v2400
      %v2718 = vunpack.c.h.b16 %v2400
      %v2719 = vunpack.c.l.b16 %v2401
      %v2720 = vunpack.c.h.b16 %v2401
      %v2721 = vunpack.c.l.b16 %v2402
      %v2722 = vunpack.c.h.b16 %v2402
      %v2723 = vunpack.c.l.b16 %v2403
      %v2724 = vunpack.c.h.b16 %v2403
      %v2725 = vunpack.c.l.b16 %v2404
      %v2726 = vunpack.c.h.b16 %v2404
      %v2727 = vunpack.c.l.b16 %v2405
      %v2728 = vunpack.c.h.b16 %v2405
      %v2729 = vunpack.c.l.b16 %v2406
      %v2730 = vunpack.c.h.b16 %v2406
      %v2731 = vunpack.c.l.b16 %v2407
      %v2732 = vunpack.c.h.b16 %v2407
      %v2733 = vunpack.c.l.b16 %v2408
      %v2734 = vunpack.c.h.b16 %v2408
      %v2735 = vunpack.c.l.b16 %v2409
      %v2736 = vunpack.c.h.b16 %v2409
      %v2737 = vunpack.c.l.b16 %v2410
      %v2738 = vunpack.c.h.b16 %v2410
      %v2739 = vunpack.c.l.b16 %v2411
      %v2740 = vunpack.c.h.b16 %v2411
      %v2741 = vunpack.c.l.b16 %v2412
      %v2742 = vunpack.c.h.b16 %v2412
      %v2743 = vunpack.c.l.b16 %v2413
      %v2744 = vunpack.c.h.b16 %v2413
      %v2745 = vunpack.c.l.b16 %v2414
      %v2746 = vunpack.c.h.b16 %v2414
      %v2747 = vunpack.c.l.b16 %v2415
      %v2748 = vunpack.c.h.b16 %v2415
      %v2749 = vunpack.c.l.b16 %v2416
      %v2750 = vunpack.c.h.b16 %v2416
      %v2751 = vunpack.c.l.b16 %v2417
      %v2752 = vunpack.c.h.b16 %v2417
      %v2753 = vunpack.c.l.b16 %v2418
      %v2754 = vunpack.c.h.b16 %v2418
      %v2755 = vunpack.c.l.b16 %v2419
      %v2756 = vunpack.c.h.b16 %v2419
      %v2757 = vunpack.c.l.b16 %v2420
      %v2758 = vunpack.c.h.b16 %v2420
      %v2759 = vunpack.c.l.b16 %v2421
      %v2760 = vunpack.c.h.b16 %v2421
      %v2761 = vunpack.c.l.b16 %v2422
      %v2762 = vunpack.c.h.b16 %v2422
      %v2763 = vunpack.c.l.b16 %v2423
      %v2764 = vunpack.c.h.b16 %v2423
      %v2765 = vunpack.c.l.b16 %v2424
      %v2766 = vunpack.c.h.b16 %v2424
      %v2767 = vunpack.c.l.b16 %v2425
      %v2768 = vunpack.c.h.b16 %v2425
      %v2769 = vunpack.c.l.b16 %v2426
      %v2770 = vunpack.c.h.b16 %v2426
      %v2771 = vunpack.c.l.b16 %v2427
      %v2772 = vunpack.c.h.b16 %v2427
      %v2773 = vunpack.c.l.b16 %v2428
      %v2774 = vunpack.c.h.b16 %v2428
      %v2775 = vunpack.c.l.b16 %v2429
      %v2776 = vunpack.c.h.b16 %v2429
      %v2777 = vunpack.c.l.b16 %v2430
      %v2778 = vunpack.c.h.b16 %v2430
      %v2779 = vunpack.c.l.b16 %v2431
      %v2780 = vunpack.c.h.b16 %v2431
      %v2781 = vunpack.c.l.b16 %v2432
      %v2782 = vunpack.c.h.b16 %v2432
      %v2783 = vunpack.c.l.b16 %v2433
      %v2784 = vunpack.c.h.b16 %v2433
      %v2785 = vunpack.c.l.b16 %v2434
      %v2786 = vunpack.c.h.b16 %v2434
      %v2787 = vunpack.c.l.b16 %v2435
      %v2788 = vunpack.c.h.b16 %v2435
      %v2789 = vunpack.c.l.b16 %v2436
      %v2790 = vunpack.c.h.b16 %v2436
      %v2791 = vunpack.c.l.b16 %v2437
      %v2792 = vunpack.c.h.b16 %v2437
      %v2793 = vunpack.c.l.b16 %v2438
      %v2794 = vunpack.c.h.b16 %v2438
      %v2795 = vunpack.c.l.b16 %v2439
      %v2796 = vunpack.c.h.b16 %v2439
      %v2797 = vunpack.c.l.b16 %v2440
      %v2798 = vunpack.c.h.b16 %v2440
      %v2799 = vunpack.c.l.b16 %v2441
      %v2800 = vunpack.c.h.b16 %v2441
      %v2801 = vunpack.c.l.b16 %v2442
      %v2802 = vunpack.c.h.b16 %v2442
      %v2803 = vunpack.c.l.b16 %v2443
      %v2804 = vunpack.c.h.b16 %v2443
      %v2805 = vunpack.c.l.b16 %v2444
      %v2806 = vunpack.c.h.b16 %v2444
      %v2807 = vunpack.c.l.b16 %v2445
      %v2808 = vunpack.c.h.b16 %v2445
      %v2809 = vunpack.c.l.b16 %v2446
      %v2810 = vunpack.c.h.b16 %v2446
      %v2811 = vunpack.c.l.b16 %v2447
      %v2812 = vunpack.c.h.b16 %v2447
      %v2813 = vunpack.c.l.b16 %v2448
      %v2814 = vunpack.c.h.b16 %v2448
      %v2815 = vunpack.c.l.b16 %v2449
      %v2816 = vunpack.c.h.b16 %v2449
      %v2817 = vunpack.c.l.b16 %v2450
      %v2818 = vunpack.c.h.b16 %v2450
      %v2819 = vunpack.c.l.b16 %v2451
      %v2820 = vunpack.c.h.b16 %v2451
      %v2821 = vunpack.c.l.b16 %v2452
      %v2822 = vunpack.c.h.b16 %v2452
      %v2823 = vunpack.c.l.b16 %v2453
      %v2824 = vunpack.c.h.b16 %v2453
      %v2825 = vunpack.c.l.b16 %v2454
      %v2826 = vunpack.c.h.b16 %v2454
      %v2827 = vunpack.c.l.b16 %v2455
      %v2828 = vunpack.c.h.b16 %v2455
      %v2829 = vunpack.c.l.b16 %v2456
      %v2830 = vunpack.c.h.b16 %v2456
      %v2831 = vunpack.c.l.b16 %v2457
      %v2832 = vunpack.c.h.b16 %v2457
      %v2833 = vunpack.c.l.b16 %v2458
      %v2834 = vunpack.c.h.b16 %v2458
      %v2835 = vunpack.c.l.b16 %v2459
      %v2836 = vunpack.c.h.b16 %v2459
      %v2837 = vunpack.c.l.b16 %v2460
      %v2838 = vunpack.c.h.b16 %v2460
      %v2839 = vunpack.c.l.b16 %v2461
      %v2840 = vunpack.c.h.b16 %v2461
      %v2841 = vunpack.c.l.b16 %v2462
      %v2842 = vunpack.c.h.b16 %v2462
      %v2843 = vunpack.c.l.b16 %v2463
      %v2844 = vunpack.c.h.b16 %v2463
      %v2845 = vunpack.c.l.b16 %v2464
      %v2846 = vunpack.c.h.b16 %v2464
      %v2847 = vunpack.c.l.b16 %v2465
      %v2848 = vunpack.c.h.b16 %v2465
      %v2849 = vunpack.c.l.b16 %v2466
      %v2850 = vunpack.c.h.b16 %v2466
      %v2851 = vpack.c.b16 %v2599, %v2595
      %v2852 = vpack.c.b16 %v2600, %v2596
      %v2853 = vpack.c.b16 %v2601, %v2597
      %v2854 = vpack.c.b16 %v2602, %v2598
      %v2855 = vpack.c.b16 %v2607, %v2603
      %v2856 = vpack.c.b16 %v2608, %v2604
      %v2857 = vpack.c.b16 %v2609, %v2605
      %v2858 = vpack.c.b16 %v2610, %v2606
      %v2859 = vpack.c.b16 %v2615, %v2611
      %v2860 = vpack.c.b16 %v2616, %v2612
      %v2861 = vpack.c.b16 %v2617, %v2613
      %v2862 = vpack.c.b16 %v2618, %v2614
      %v2863 = vpack.c.b16 %v2623, %v2619
      %v2864 = vpack.c.b16 %v2624, %v2620
      %v2865 = vpack.c.b16 %v2625, %v2621
      %v2866 = vpack.c.b16 %v2626, %v2622
      %v2867 = vpack.c.b16 %v2631, %v2627
      %v2868 = vpack.c.b16 %v2632, %v2628
      %v2869 = vpack.c.b16 %v2633, %v2629
      %v2870 = vpack.c.b16 %v2634, %v2630
      %v2871 = vpack.c.b16 %v2639, %v2635
      %v2872 = vpack.c.b16 %v2640, %v2636
      %v2873 = vpack.c.b16 %v2641, %v2637
      %v2874 = vpack.c.b16 %v2642, %v2638
      %v2875 = vpack.c.b16 %v2647, %v2643
      %v2876 = vpack.c.b16 %v2648, %v2644
      %v2877 = vpack.c.b16 %v2649, %v2645
      %v2878 = vpack.c.b16 %v2650, %v2646
      %v2879 = vpack.c.b16 %v2655, %v2651
      %v2880 = vpack.c.b16 %v2656, %v2652
      %v2881 = vpack.c.b16 %v2657, %v2653
      %v2882 = vpack.c.b16 %v2658, %v2654
      %v2883 = vpack.c.b16 %v2663, %v2659
      %v2884 = vpack.c.b16 %v2664, %v2660
      %v2885 = vpack.c.b16 %v2665, %v2661
      %v2886 = vpack.c.b16 %v2666, %v2662
      %v2887 = vpack.c.b16 %v2671, %v2667
      %v2888 = vpack.c.b16 %v2672, %v2668
      %v2889 = vpack.c.b16 %v2673, %v2669
      %v2890 = vpack.c.b16 %v2674, %v2670
      %v2891 = vpack.c.b16 %v2679, %v2675
      %v2892 = vpack.c.b16 %v2680, %v2676
      %v2893 = vpack.c.b16 %v2681, %v2677
      %v2894 = vpack.c.b16 %v2682, %v2678
      %v2895 = vpack.c.b16 %v2687, %v2683
      %v2896 = vpack.c.b16 %v2688, %v2684
      %v2897 = vpack.c.b16 %v2689, %v2685
      %v2898 = vpack.c.b16 %v2690, %v2686
      %v2899 = vpack.c.b16 %v2695, %v2691
      %v2900 = vpack.c.b16 %v2696, %v2692
      %v2901 = vpack.c.b16 %v2697, %v2693
      %v2902 = vpack.c.b16 %v2698, %v2694
      %v2903 = vpack.c.b16 %v2703, %v2699
      %v2904 = vpack.c.b16 %v2704, %v2700
      %v2905 = vpack.c.b16 %v2705, %v2701
      %v2906 = vpack.c.b16 %v2706, %v2702
      %v2907 = vpack.c.b16 %v2711, %v2707
      %v2908 = vpack.c.b16 %v2712, %v2708
      %v2909 = vpack.c.b16 %v2713, %v2709
      %v2910 = vpack.c.b16 %v2714, %v2710
      %v2911 = vpack.c.b16 %v2719, %v2715
      %v2912 = vpack.c.b16 %v2720, %v2716
      %v2913 = vpack.c.b16 %v2721, %v2717
      %v2914 = vpack.c.b16 %v2722, %v2718
      %v2915 = vpack.c.b16 %v2727, %v2723
      %v2916 = vpack.c.b16 %v2728, %v2724
      %v2917 = vpack.c.b16 %v2729, %v2725
      %v2918 = vpack.c.b16 %v2730, %v2726
      %v2919 = vpack.c.b16 %v2735, %v2731
      %v2920 = vpack.c.b16 %v2736, %v2732
      %v2921 = vpack.c.b16 %v2737, %v2733
      %v2922 = vpack.c.b16 %v2738, %v2734
      %v2923 = vpack.c.b16 %v2743, %v2739
      %v2924 = vpack.c.b16 %v2744, %v2740
      %v2925 = vpack.c.b16 %v2745, %v2741
      %v2926 = vpack.c.b16 %v2746, %v2742
      %v2927 = vpack.c.b16 %v2751, %v2747
      %v2928 = vpack.c.b16 %v2752, %v2748
      %v2929 = vpack.c.b16 %v2753, %v2749
      %v2930 = vpack.c.b16 %v2754, %v2750
      %v2931 = vpack.c.b16 %v2759, %v2755
      %v2932 = vpack.c.b16 %v2760, %v2756
      %v2933 = vpack.c.b16 %v2761, %v2757
      %v2934 = vpack.c.b16 %v2762, %v2758
      %v2935 = vpack.c.b16 %v2767, %v2763
      %v2936 = vpack.c.b16 %v2768, %v2764
      %v2937 = vpack.c.b16 %v2769, %v2765
      %v2938 = vpack.c.b16 %v2770, %v2766
      %v2939 = vpack.c.b16 %v2775, %v2771
      %v2940 = vpack.c.b16 %v2776, %v2772
      %v2941 = vpack.c.b16 %v2777, %v2773
      %v2942 = vpack.c.b16 %v2778, %v2774
      %v2943 = vpack.c.b16 %v2783, %v2779
      %v2944 = vpack.c.b16 %v2784, %v2780
      %v2945 = vpack.c.b16 %v2785, %v2781
      %v2946 = vpack.c.b16 %v2786, %v2782
      %v2947 = vpack.c.b16 %v2791, %v2787
      %v2948 = vpack.c.b16 %v2792, %v2788
      %v2949 = vpack.c.b16 %v2793, %v2789
      %v2950 = vpack.c.b16 %v2794, %v2790
      %v2951 = vpack.c.b16 %v2799, %v2795
      %v2952 = vpack.c.b16 %v2800, %v2796
      %v2953 = vpack.c.b16 %v2801, %v2797
      %v2954 = vpack.c.b16 %v2802, %v2798
      %v2955 = vpack.c.b16 %v2807, %v2803
      %v2956 = vpack.c.b16 %v2808, %v2804
      %v2957 = vpack.c.b16 %v2809, %v2805
      %v2958 = vpack.c.b16 %v2810, %v2806
      %v2959 = vpack.c.b16 %v2815, %v2811
      %v2960 = vpack.c.b16 %v2816, %v2812
      %v2961 = vpack.c.b16 %v2817, %v2813
      %v2962 = vpack.c.b16 %v2818, %v2814
      %v2963 = vpack.c.b16 %v2823, %v2819
      %v2964 = vpack.c.b16 %v2824, %v2820
      %v2965 = vpack.c.b16 %v2825, %v2821
      %v2966 = vpack.c.b16 %v2826, %v2822
      %v2967 = vpack.c.b16 %v2831, %v2827
      %v2968 = vpack.c.b16 %v2832, %v2828
      %v2969 = vpack.c.b16 %v2833, %v2829
      %v2970 = vpack.c.b16 %v2834, %v2830
      %v2971 = vpack.c.b16 %v2839, %v2835
      %v2972 = vpack.c.b16 %v2840, %v2836
      %v2973 = vpack.c.b16 %v2841, %v2837
      %v2974 = vpack.c.b16 %v2842, %v2838
      %v2975 = vpack.c.b16 %v2847, %v2843
      %v2976 = vpack.c.b16 %v2848, %v2844
      %v2977 = vpack.c.b16 %v2849, %v2845
      %v2978 = vpack.c.b16 %v2850, %v2846
      %3107 = vmatpush.bf16.msra.mxu0 %v2879
      %3108 = vmatpush.bf16.msra.mxu0 %v2875
      %3109 = vmatpush.bf16.msra.mxu0 %v2871
      %3110 = vmatpush.bf16.msra.mxu0 %v2867
      %3111 = vmatpush.bf16.msra.mxu0 %v2863
      %3112 = vmatpush.bf16.msra.mxu0 %v2859
      %3113 = vmatpush.bf16.msra.mxu0 %v2855
      %3114 = vmatpush.bf16.msra.mxu0 %v2851
      %3115 = vmatmul.bf16.gmra.mxu0 %v2334
      %v3116 = vpop.f32.mrf.mxu0
      %v3117 = vadd.f32 0.0, %v3116
      %v3118 = vpop.f32.mrf.mxu0
      %3119 = vdwg.mxu0
      %3120 = vmatpush.bf16.msra.mxu0 %v2911
      %3121 = vmatpush.bf16.msra.mxu0 %v2907
      %3122 = vmatpush.bf16.msra.mxu0 %v2903
      %3123 = vmatpush.bf16.msra.mxu0 %v2899
      %3124 = vmatpush.bf16.msra.mxu0 %v2895
      %3125 = vmatpush.bf16.msra.mxu0 %v2891
      %3126 = vmatpush.bf16.msra.mxu0 %v2887
      %3127 = vmatpush.bf16.msra.mxu0 %v2883
      %3128 = vmatmul.bf16.gmra.mxu0 %v2335
      %v3129 = vpop.f32.mrf.mxu0
      %v3130 = vadd.f32 %v3117, %v3129
      %v3131 = vpop.f32.mrf.mxu0
      %3132 = vdwg.mxu0
      %3133 = vmatpush.bf16.msra.mxu0 %v2943
      %3134 = vmatpush.bf16.msra.mxu0 %v2939
      %3135 = vmatpush.bf16.msra.mxu0 %v2935
      %3136 = vmatpush.bf16.msra.mxu0 %v2931
      %3137 = vmatpush.bf16.msra.mxu0 %v2927
      %3138 = vmatpush.bf16.msra.mxu0 %v2923
      %3139 = vmatpush.bf16.msra.mxu0 %v2919
      %3140 = vmatpush.bf16.msra.mxu0 %v2915
      %3141 = vmatmul.bf16.gmra.mxu0 %v2336
      %v3142 = vpop.f32.mrf.mxu0
      %v3143 = vadd.f32 %v3130, %v3142
      %v3144 = vpop.f32.mrf.mxu0
      %3145 = vdwg.mxu0
      %3146 = vmatpush.bf16.msra.mxu0 %v2975
      %3147 = vmatpush.bf16.msra.mxu0 %v2971
      %3148 = vmatpush.bf16.msra.mxu0 %v2967
      %3149 = vmatpush.bf16.msra.mxu0 %v2963
      %3150 = vmatpush.bf16.msra.mxu0 %v2959
      %3151 = vmatpush.bf16.msra.mxu0 %v2955
      %3152 = vmatpush.bf16.msra.mxu0 %v2951
      %3153 = vmatpush.bf16.msra.mxu0 %v2947
      %3154 = vmatmul.bf16.gmra.mxu0 %v2337
      %v3155 = vpop.f32.mrf.mxu0
      %v3156 = vadd.f32 %v3143, %v3155
      %v3157 = vpop.f32.mrf.mxu0
      %3158 = vdwg.mxu0
      %3159 = vmatpush.bf16.msra.mxu0 %v2880
      %3160 = vmatpush.bf16.msra.mxu0 %v2876
      %3161 = vmatpush.bf16.msra.mxu0 %v2872
      %3162 = vmatpush.bf16.msra.mxu0 %v2868
      %3163 = vmatpush.bf16.msra.mxu0 %v2864
      %3164 = vmatpush.bf16.msra.mxu0 %v2860
      %3165 = vmatpush.bf16.msra.mxu0 %v2856
      %3166 = vmatpush.bf16.msra.mxu0 %v2852
      %3167 = vmatmul.bf16.gmra.mxu0 %v2334
      %v3168 = vpop.f32.mrf.mxu0
      %v3169 = vadd.f32 0.0, %v3168
      %v3170 = vpop.f32.mrf.mxu0
      %3171 = vdwg.mxu0
      %3172 = vmatpush.bf16.msra.mxu0 %v2912
      %3173 = vmatpush.bf16.msra.mxu0 %v2908
      %3174 = vmatpush.bf16.msra.mxu0 %v2904
      %3175 = vmatpush.bf16.msra.mxu0 %v2900
      %3176 = vmatpush.bf16.msra.mxu0 %v2896
      %3177 = vmatpush.bf16.msra.mxu0 %v2892
      %3178 = vmatpush.bf16.msra.mxu0 %v2888
      %3179 = vmatpush.bf16.msra.mxu0 %v2884
      %3180 = vmatmul.bf16.gmra.mxu0 %v2335
      %v3181 = vpop.f32.mrf.mxu0
      %v3182 = vadd.f32 %v3169, %v3181
      %v3183 = vpop.f32.mrf.mxu0
      %3184 = vdwg.mxu0
      %3185 = vmatpush.bf16.msra.mxu0 %v2944
      %3186 = vmatpush.bf16.msra.mxu0 %v2940
      %3187 = vmatpush.bf16.msra.mxu0 %v2936
      %3188 = vmatpush.bf16.msra.mxu0 %v2932
      %3189 = vmatpush.bf16.msra.mxu0 %v2928
      %3190 = vmatpush.bf16.msra.mxu0 %v2924
      %3191 = vmatpush.bf16.msra.mxu0 %v2920
      %3192 = vmatpush.bf16.msra.mxu0 %v2916
      %3193 = vmatmul.bf16.gmra.mxu0 %v2336
      %v3194 = vpop.f32.mrf.mxu0
      %v3195 = vadd.f32 %v3182, %v3194
      %v3196 = vpop.f32.mrf.mxu0
      %3197 = vdwg.mxu0
      %3198 = vmatpush.bf16.msra.mxu0 %v2976
      %3199 = vmatpush.bf16.msra.mxu0 %v2972
      %3200 = vmatpush.bf16.msra.mxu0 %v2968
      %3201 = vmatpush.bf16.msra.mxu0 %v2964
      %3202 = vmatpush.bf16.msra.mxu0 %v2960
      %3203 = vmatpush.bf16.msra.mxu0 %v2956
      %3204 = vmatpush.bf16.msra.mxu0 %v2952
      %3205 = vmatpush.bf16.msra.mxu0 %v2948
      %3206 = vmatmul.bf16.gmra.mxu0 %v2337
      %v3207 = vpop.f32.mrf.mxu0
      %v3208 = vadd.f32 %v3195, %v3207
      %v3209 = vpop.f32.mrf.mxu0
      %3210 = vdwg.mxu0
      %3211 = vmatpush.bf16.msra.mxu0 %v2881
      %3212 = vmatpush.bf16.msra.mxu0 %v2877
      %3213 = vmatpush.bf16.msra.mxu0 %v2873
      %3214 = vmatpush.bf16.msra.mxu0 %v2869
      %3215 = vmatpush.bf16.msra.mxu0 %v2865
      %3216 = vmatpush.bf16.msra.mxu0 %v2861
      %3217 = vmatpush.bf16.msra.mxu0 %v2857
      %3218 = vmatpush.bf16.msra.mxu0 %v2853
      %3219 = vmatmul.bf16.gmra.mxu0 %v2334
      %v3220 = vpop.f32.mrf.mxu0
      %v3221 = vadd.f32 0.0, %v3220
      %v3222 = vpop.f32.mrf.mxu0
      %3223 = vdwg.mxu0
      %3224 = vmatpush.bf16.msra.mxu0 %v2913
      %3225 = vmatpush.bf16.msra.mxu0 %v2909
      %3226 = vmatpush.bf16.msra.mxu0 %v2905
      %3227 = vmatpush.bf16.msra.mxu0 %v2901
      %3228 = vmatpush.bf16.msra.mxu0 %v2897
      %3229 = vmatpush.bf16.msra.mxu0 %v2893
      %3230 = vmatpush.bf16.msra.mxu0 %v2889
      %3231 = vmatpush.bf16.msra.mxu0 %v2885
      %3232 = vmatmul.bf16.gmra.mxu0 %v2335
      %v3233 = vpop.f32.mrf.mxu0
      %v3234 = vadd.f32 %v3221, %v3233
      %v3235 = vpop.f32.mrf.mxu0
      %3236 = vdwg.mxu0
      %3237 = vmatpush.bf16.msra.mxu0 %v2945
      %3238 = vmatpush.bf16.msra.mxu0 %v2941
      %3239 = vmatpush.bf16.msra.mxu0 %v2937
      %3240 = vmatpush.bf16.msra.mxu0 %v2933
      %3241 = vmatpush.bf16.msra.mxu0 %v2929
      %3242 = vmatpush.bf16.msra.mxu0 %v2925
      %3243 = vmatpush.bf16.msra.mxu0 %v2921
      %3244 = vmatpush.bf16.msra.mxu0 %v2917
      %3245 = vmatmul.bf16.gmra.mxu0 %v2336
      %v3246 = vpop.f32.mrf.mxu0
      %v3247 = vadd.f32 %v3234, %v3246
      %v3248 = vpop.f32.mrf.mxu0
      %3249 = vdwg.mxu0
      %3250 = vmatpush.bf16.msra.mxu0 %v2977
      %3251 = vmatpush.bf16.msra.mxu0 %v2973
      %3252 = vmatpush.bf16.msra.mxu0 %v2969
      %3253 = vmatpush.bf16.msra.mxu0 %v2965
      %3254 = vmatpush.bf16.msra.mxu0 %v2961
      %3255 = vmatpush.bf16.msra.mxu0 %v2957
      %3256 = vmatpush.bf16.msra.mxu0 %v2953
      %3257 = vmatpush.bf16.msra.mxu0 %v2949
      %3258 = vmatmul.bf16.gmra.mxu0 %v2337
      %v3259 = vpop.f32.mrf.mxu0
      %v3260 = vadd.f32 %v3247, %v3259
      %v3261 = vpop.f32.mrf.mxu0
      %3262 = vdwg.mxu0
      %3263 = vmatpush.bf16.msra.mxu0 %v2882
      %3264 = vmatpush.bf16.msra.mxu0 %v2878
      %3265 = vmatpush.bf16.msra.mxu0 %v2874
      %3266 = vmatpush.bf16.msra.mxu0 %v2870
      %3267 = vmatpush.bf16.msra.mxu0 %v2866
      %3268 = vmatpush.bf16.msra.mxu0 %v2862
      %3269 = vmatpush.bf16.msra.mxu0 %v2858
      %3270 = vmatpush.bf16.msra.mxu0 %v2854
      %3271 = vmatmul.bf16.gmra.mxu0 %v2334
      %v3272 = vpop.f32.mrf.mxu0
      %v3273 = vadd.f32 0.0, %v3272
      %v3274 = vpop.f32.mrf.mxu0
      %3275 = vdwg.mxu0
      %3276 = vmatpush.bf16.msra.mxu0 %v2914
      %3277 = vmatpush.bf16.msra.mxu0 %v2910
      %3278 = vmatpush.bf16.msra.mxu0 %v2906
      %3279 = vmatpush.bf16.msra.mxu0 %v2902
      %3280 = vmatpush.bf16.msra.mxu0 %v2898
      %3281 = vmatpush.bf16.msra.mxu0 %v2894
      %3282 = vmatpush.bf16.msra.mxu0 %v2890
      %3283 = vmatpush.bf16.msra.mxu0 %v2886
      %3284 = vmatmul.bf16.gmra.mxu0 %v2335
      %v3285 = vpop.f32.mrf.mxu0
      %v3286 = vadd.f32 %v3273, %v3285
      %v3287 = vpop.f32.mrf.mxu0
      %3288 = vdwg.mxu0
      %3289 = vmatpush.bf16.msra.mxu0 %v2946
      %3290 = vmatpush.bf16.msra.mxu0 %v2942
      %3291 = vmatpush.bf16.msra.mxu0 %v2938
      %3292 = vmatpush.bf16.msra.mxu0 %v2934
      %3293 = vmatpush.bf16.msra.mxu0 %v2930
      %3294 = vmatpush.bf16.msra.mxu0 %v2926
      %3295 = vmatpush.bf16.msra.mxu0 %v2922
      %3296 = vmatpush.bf16.msra.mxu0 %v2918
      %3297 = vmatmul.bf16.gmra.mxu0 %v2336
      %v3298 = vpop.f32.mrf.mxu0
      %v3299 = vadd.f32 %v3286, %v3298
      %v3300 = vpop.f32.mrf.mxu0
      %3301 = vdwg.mxu0
      %3302 = vmatpush.bf16.msra.mxu0 %v2978
      %3303 = vmatpush.bf16.msra.mxu0 %v2974
      %3304 = vmatpush.bf16.msra.mxu0 %v2970
      %3305 = vmatpush.bf16.msra.mxu0 %v2966
      %3306 = vmatpush.bf16.msra.mxu0 %v2962
      %3307 = vmatpush.bf16.msra.mxu0 %v2958
      %3308 = vmatpush.bf16.msra.mxu0 %v2954
      %3309 = vmatpush.bf16.msra.mxu0 %v2950
      %3310 = vmatmul.bf16.gmra.mxu0 %v2337
      %v3311 = vpop.f32.mrf.mxu0
      %v3312 = vadd.f32 %v3299, %v3311
      %v3313 = vpop.f32.mrf.mxu0
      %3314 = vdwg.mxu0
      %v3315 = vadd.f32 %v2171, %v3156
      %v3316 = vadd.f32 %v2223, %v3208
      %v3317 = vadd.f32 %v2275, %v3260
      %v3318 = vadd.f32 %v2327, %v3312
      %3319 = vst [vmem:[%s258] sm:$0xff] %v3315
      %3320 = vst [vmem:[%s258 + $0x8] sm:$0xff] %v3316
      %3321 = vst [vmem:[%s258 + $0x10] sm:$0xff] %v3317
      %3322 = vst [vmem:[%s258 + $0x18] sm:$0xff] %v3318
      %v3323 = vrot.slane %v3315, 4
      %v3324 = vadd.f32 %v3315, %v3323
      %v3325 = vrot.slane %v3324, 2
      %v3326 = vadd.f32 %v3324, %v3325
      %v3327 = vrot.slane %v3326, 1
      %v3328 = vadd.f32 %v3326, %v3327
      %v3329 = vrot.slane %v3316, 4
      %v3330 = vadd.f32 %v3316, %v3329
      %v3331 = vrot.slane %v3330, 2
      %v3332 = vadd.f32 %v3330, %v3331
      %v3333 = vrot.slane %v3332, 1
      %v3334 = vadd.f32 %v3332, %v3333
      %v3335 = vrot.slane %v3317, 4
      %v3336 = vadd.f32 %v3317, %v3335
      %v3337 = vrot.slane %v3336, 2
      %v3338 = vadd.f32 %v3336, %v3337
      %v3339 = vrot.slane %v3338, 1
      %v3340 = vadd.f32 %v3338, %v3339
      %v3341 = vrot.slane %v3318, 4
      %v3342 = vadd.f32 %v3318, %v3341
      %v3343 = vrot.slane %v3342, 2
      %v3344 = vadd.f32 %v3342, %v3343
      %v3345 = vrot.slane %v3344, 1
      %v3346 = vadd.f32 %v3344, %v3345
      %v3351 = vrot.slane %v3334, 7
      %v3352 = vrot.slane %v3340, 6
      %v3353 = vrot.slane %v3346, 5
      %vm3354 = vcmask 1040384
      %v3355 = vsel %vm3354, %v3328, %v3351
      %vm3356 = vcmask 1042434
      %v3357 = vsel %vm3356, %v3352, %v3353
      %vm3358 = vcmask 1041408
      %v3359 = vsel %vm3358, %v3355, %v3357
      %v3361 = vlaneseq
      %vm3362 = vcmp.ge.s32.totalorder %v3361, 0
      %vm3363 = vcmp.lt.s32.totalorder %v3361, 512
      %vm3364 = vmand %vm3362, %vm3363
      %3365 = vst.msk [vmem:[%s262] sm:$0xf] %vm3364, %v3359
      %v3366 = vmul.f32 %v3315, %v3315
      %v3367 = vmul.f32 %v3316, %v3316
      %v3368 = vmul.f32 %v3317, %v3317
      %v3369 = vmul.f32 %v3318, %v3318
      %v3370 = vrot.slane %v3366, 4
      %v3371 = vadd.f32 %v3366, %v3370
      %v3372 = vrot.slane %v3371, 2
      %v3373 = vadd.f32 %v3371, %v3372
      %v3374 = vrot.slane %v3373, 1
      %v3375 = vadd.f32 %v3373, %v3374
      %v3376 = vrot.slane %v3367, 4
      %v3377 = vadd.f32 %v3367, %v3376
      %v3378 = vrot.slane %v3377, 2
      %v3379 = vadd.f32 %v3377, %v3378
      %v3380 = vrot.slane %v3379, 1
      %v3381 = vadd.f32 %v3379, %v3380
      %v3382 = vrot.slane %v3368, 4
      %v3383 = vadd.f32 %v3368, %v3382
      %v3384 = vrot.slane %v3383, 2
      %v3385 = vadd.f32 %v3383, %v3384
      %v3386 = vrot.slane %v3385, 1
      %v3387 = vadd.f32 %v3385, %v3386
      %v3388 = vrot.slane %v3369, 4
      %v3389 = vadd.f32 %v3369, %v3388
      %v3390 = vrot.slane %v3389, 2
      %v3391 = vadd.f32 %v3389, %v3390
      %v3392 = vrot.slane %v3391, 1
      %v3393 = vadd.f32 %v3391, %v3392
      %v3398 = vrot.slane %v3381, 7
      %v3399 = vrot.slane %v3387, 6
      %v3400 = vrot.slane %v3393, 5
      %v3401 = vsel %vm3354, %v3375, %v3398
      %v3402 = vsel %vm3356, %v3399, %v3400
      %v3403 = vsel %vm3358, %v3401, %v3402
      %3405 = vst.msk [vmem:[%s262 + $0x4] sm:$0xf] %vm3364, %v3403
      %p3406 = scmp.lt.s32.totalorder %s18, 1
      %s3407 = scalar_select %p3406, %s18, 1
      %s3408 = smul.addr %s3407, 4
      %s3409 = smul.addr %s3408, 8
      %s3410 = scalar_lea.vmem %s5, %s3409
      %p3411 = scmp.lt.s32.totalorder %s18, 1
      %s3412 = scalar_select %p3411, %s18, 1
      %s3413 = smul.addr %s3412, 8
      %s3414 = scalar_lea.vmem %s6, %s3413
      // Predicated region
      $region41: #{encoder_stage_forward.6} parent=39 // pred_check
        %p3415 = pneg %p146
      $region42: #{encoder_stage_forward.6} parent=39 // pred_check_branch
        %3417 = sbr.rel (%p3415) target = $region44
      $region43: #{encoder_stage_forward.6} parent=39 // pred_region
        _
      $region44: #{encoder_stage_forward.6} parent=39 // pred_fallthru
        _
      // Predicated region
      $region45: #{encoder_stage_forward.6} parent=39 // pred_check
        %p3418 = pneg %p172
      $region46: #{encoder_stage_forward.6} parent=39 // pred_check_branch
        %3420 = sbr.rel (%p3418) target = $region48
      $region47: #{encoder_stage_forward.6} parent=39 // pred_region
        _
      $region48: #{encoder_stage_forward.6} parent=39 // pred_fallthru
        _
    $region40: #{encoder_stage_forward.6} parent=5 // pred_fallthru
      _
    %p3421 = scmp.le.s32.totalorder 2, %s13
    // Predicated region
    $region49: #{encoder_stage_forward.6} parent=5 // pred_check
      %p3422 = pneg %p3421
    $region50: #{encoder_stage_forward.6} parent=5 // pred_check_branch
      %3424 = sbr.rel (%p3422) target = $region52
    $region51: #{encoder_stage_forward.6} parent=5 // pred_region
      %s3425 = ssub.s32 %s13, 2
      // Predicated region
      $region53: #{encoder_stage_forward.6} parent=51 // pred_check
        %p3426 = pneg %p152
      $region54: #{encoder_stage_forward.6} parent=51 // pred_check_branch
        %3428 = sbr.rel (%p3426) target = $region56
      $region55: #{encoder_stage_forward.6} parent=51 // pred_region
        %p3429 = scmp.lt.s32.totalorder %s19, 1
        %s3430 = scalar_select %p3429, %s19, 1
        %s3431 = smul.addr %s3430, 4
        %s3432 = smul.addr %s3431, 8
        %s3433 = scalar_lea.vmem %s5, %s3432
      $region56: #{encoder_stage_forward.6} parent=51 // pred_fallthru
        _
      // Predicated region
      $region57: #{encoder_stage_forward.6} parent=51 // pred_check
        %p3434 = pneg %p178
      $region58: #{encoder_stage_forward.6} parent=51 // pred_check_branch
        %3436 = sbr.rel (%p3434) target = $region60
      $region59: #{encoder_stage_forward.6} parent=51 // pred_region
        %p3437 = scmp.lt.s32.totalorder %s19, 1
        %s3438 = scalar_select %p3437, %s19, 1
        %s3439 = smul.addr %s3438, 8
        %s3440 = scalar_lea.vmem %s6, %s3439
      $region60: #{encoder_stage_forward.6} parent=51 // pred_fallthru
        _
    $region52: #{encoder_stage_forward.6} parent=5 // pred_fallthru
      _
  $region6: #{encoder_stage_forward.6} parent=0 // loop_footer
    %s17 = sadd.s32 1, %s13
  $region7: #{encoder_stage_forward.6} parent=0 // loop_footer_branch
    %12 = sbr.rel target = $region3
  $region8: #{encoder_stage_forward.6} parent=0 // loop_exit
    _

</llo_original>
